<compile_context>
chip_gen: v7x
topology: tpu7x:2x2x1
jax: 0.10.0
libtpu: 0.0.40
codegen_flags: <defaults>
</compile_context>

<pallas_src>
import functools

import jax
import jax.numpy as jnp
from jax import lax
from jax.experimental import pallas as pl
from jax.experimental.pallas import tpu as pltpu

# TODO(synk): len(all_uci_codes_to_moves()) comes from an external helper not
# provided here; use the standard 1968 UCI-move count as a deterministic stand-in.
NUM_MOVES = 1968

# MXU operand dtype (accumulation is always f32).  bf16 is MXU-native on
# v5e/v6e/v7x; set to jnp.float32 for a bit-tighter numerical check.
MXU_DTYPE = jnp.bfloat16

C_IN, C1, C2 = 8, 32, 64
KH = KW = 3
FC1_IN, FC1_OUT = 512, 128
N_PAD = ((NUM_MOVES + 127) // 128) * 128          # 2048: lane-dense fc2 width


# ---------------------------- fused Pallas kernel ----------------------------

def _make_kernel(bt, H, W, mxu_dtype):
    """Fused forward kernel for a tile of `bt` samples.

    Activation layout: 2-D (bt * H*W rows, channels) with per-sample row
    stride H*W and virtual row width W.  A 3x3 valid conv is an im2col matmul
    whose lane-block t=(dy,dx) is the row-slice A[dy*W+dx : dy*W+dx + R, :].
    Rows whose spatial position is outside the valid conv output range hold
    finite "wrap" garbage and are structurally never consumed downstream
    (verified for the 8x12 -> 6x10 -> 4x8 -> 2x4 geometry).
    """
    HW = H * W
    H1c, W1c = H - KH + 1, W - KW + 1              # conv1 valid spatial (6, 10)
    H2c, W2c = H1c - KH + 1, W1c - KW + 1          # conv2 valid spatial (4, 8)
    HP, WP = H2c // 2, W2c // 2                    # pooled spatial (2, 4)
    R = bt * HW                                    # rows per grid step
    max_off = (KH - 1) * W + (KW - 1)              # largest tap row offset
    pad_rows = ((max_off + 15) // 16) * 16         # 16-aligned (bf16 packing)
    K1, K2 = KH * KW * C_IN, KH * KW * C1          # 72, 288

    def kernel(x_ref, w1_ref, b1_ref, w2_ref, b2_ref,
               wf1_ref, bf1_ref, wf2_ref, bf2_ref,
               out_ref, x_scr, h1_scr, patch_scr):
        f32 = jnp.float32

        # Stage input once in MXU dtype; zero the tiny pad tail so the last
        # sample's "wrap" rows stay finite (they are never consumed).
        x_scr[0:R, :] = x_ref[...].astype(mxu_dtype)
        x_scr[R:, :] = jnp.zeros((pad_rows, C_IN), mxu_dtype)

        # ---------------- conv1 + ReLU: one (R,72) im2col matmul ----------------
        for t in range(KH * KW):
            dy, dx = divmod(t, KW)
            off = dy * W + dx
            patch_scr[:, t * C_IN:(t + 1) * C_IN] = x_scr[off:off + R, :]
        acc1 = jnp.dot(patch_scr[:, 0:K1], w1_ref[...],
                       preferred_element_type=f32)
        h1 = jnp.maximum(acc1 + b1_ref[...], 0.0)                # (R, C1) f32

        # Stage h1 (single cast) + zero pad tail.
        h1_scr[0:R, :] = h1.astype(mxu_dtype)
        h1_scr[R:, :] = jnp.zeros((pad_rows, C1), mxu_dtype)

        # ---------------- conv2 + ReLU: one (R,288) im2col matmul ----------------
        for t in range(KH * KW):
            dy, dx = divmod(t, KW)
            off = dy * W + dx
            patch_scr[:, t * C1:(t + 1) * C1] = h1_scr[off:off + R, :]
        acc2 = jnp.dot(patch_scr[...], w2_ref[...],
                       preferred_element_type=f32)
        h2 = jnp.maximum(acc2 + b2_ref[...], 0.0)                # (R, C2) f32

        # -------- fused 2x2 max-pool + flatten (fc1 weight is pre-permuted) --------
        h2r = h2.reshape(bt, HW, C2)       # sublane split only (HW % 8 == 0)
        slabs = []
        for i in range(HP):
            for j in range(WP):
                r = (2 * i) * W + (2 * j)
                p = jnp.maximum(
                    jnp.maximum(h2r[:, r, :], h2r[:, r + 1, :]),
                    jnp.maximum(h2r[:, r + W, :], h2r[:, r + W + 1, :]))
                slabs.append(p)                                  # (bt, C2) each
        flat = jnp.concatenate(slabs, axis=1)                    # (bt, 512) f32

        # dropout1 / dropout2: identity in eval mode.
        # TODO(synk): training-mode dropout would use pltpu.prng_seed / prng_random_bits.

        # ---- fc1 -> ReLU -> fc2 -> log_softmax (padded lanes carry -1e30 bias) ----
        hfc = jnp.dot(flat.astype(mxu_dtype), wf1_ref[...],
                      preferred_element_type=f32) + bf1_ref[...]
        hfc = jnp.maximum(hfc, 0.0)
        logits = jnp.dot(hfc.astype(mxu_dtype), wf2_ref[...],
                         preferred_element_type=f32) + bf2_ref[...]
        m = jnp.max(logits, axis=1, keepdims=True)
        z = logits - m
        lse = jnp.log(jnp.sum(jnp.exp(z), axis=1, keepdims=True))
        out_ref[...] = z - lse

    return kernel, pad_rows, K2


def _net_pallas(x2d, pp, *, bt, H, W):
    HW = H * W
    B_pad = x2d.shape[0] // HW
    n_blocks = B_pad // bt
    R = bt * HW
    mxu_dtype = jnp.dtype(pp["w1"].dtype)
    kernel, pad_rows, K2 = _make_kernel(bt, H, W, mxu_dtype)

    grid_spec = pltpu.PrefetchScalarGridSpec(
        num_scalar_prefetch=0,
        grid=(n_blocks,),
        in_specs=[
            pl.BlockSpec((R, C_IN), lambda b: (b, 0)),
            # constant index maps -> weights DMA'd once, resident for all steps
            pl.BlockSpec(pp["w1"].shape, lambda b: (0, 0)),
            pl.BlockSpec(pp["b1"].shape, lambda b: (0, 0)),
            pl.BlockSpec(pp["w2"].shape, lambda b: (0, 0)),
            pl.BlockSpec(pp["b2"].shape, lambda b: (0, 0)),
            pl.BlockSpec(pp["wf1"].shape, lambda b: (0, 0)),
            pl.BlockSpec(pp["bf1"].shape, lambda b: (0, 0)),
            pl.BlockSpec(pp["wf2"].shape, lambda b: (0, 0)),
            pl.BlockSpec(pp["bf2"].shape, lambda b: (0, 0)),
        ],
        out_specs=pl.BlockSpec((bt, N_PAD), lambda b: (b, 0)),
        scratch_shapes=[
            pltpu.VMEM((R + pad_rows, C_IN), mxu_dtype),   # staged input
            pltpu.VMEM((R + pad_rows, C1), mxu_dtype),     # staged conv1 output
            pltpu.VMEM((R, K2), mxu_dtype),                # shared im2col patch
        ],
    )
    return pl.pallas_call(
        kernel,
        out_shape=jax.ShapeDtypeStruct((B_pad, N_PAD), jnp.float32),
        grid_spec=grid_spec,
        compiler_params=pltpu.CompilerParams(
            dimension_semantics=("parallel",),
            vmem_limit_bytes=56 * 1024 * 1024),
    )(x2d, pp["w1"], pp["b1"], pp["w2"], pp["b2"],
      pp["wf1"], pp["bf1"], pp["wf2"], pp["bf2"])


# ----------------------- one-time parameter preparation -----------------------

def prepare_params(p, hp=2, wp=4, mxu_dtype=MXU_DTYPE):
    """One-time re-layout of PyTorch-shaped parameters (hoisted out of the
    forward): conv OIHW -> (kh*kw*in, out), torch NCHW-flatten order folded
    into fc1's input rows, fc transposes, fc2 padded to 2048 lane-dense cols.
    MXU operands are cast to `mxu_dtype`; biases stay f32."""
    assert C2 * hp * wp == FC1_IN
    w1 = jnp.transpose(p["conv1_w"], (2, 3, 1, 0)).reshape(KH * KW * C_IN, C1)
    w2 = jnp.transpose(p["conv2_w"], (2, 3, 1, 0)).reshape(KH * KW * C1, C2)
    # kernel's flat feature index is ((i*wp + j)*C2 + c); torch's is (c*hp*wp + i*wp + j)
    wf1 = p["fc1_w"].reshape(FC1_OUT, C2, hp, wp)            # [n, c, i, j]
    wf1 = jnp.transpose(wf1, (2, 3, 1, 0)).reshape(FC1_IN, FC1_OUT)
    wf2 = jnp.pad(p["fc2_w"].T, ((0, 0), (0, N_PAD - NUM_MOVES)))
    bf2 = jnp.pad(p["fc2_b"], (0, N_PAD - NUM_MOVES), constant_values=-1e30)
    return {
        "w1": w1.astype(mxu_dtype), "b1": p["conv1_b"].reshape(1, C1),
        "w2": w2.astype(mxu_dtype), "b2": p["conv2_b"].reshape(1, C2),
        "wf1": wf1.astype(mxu_dtype), "bf1": p["fc1_b"].reshape(1, FC1_OUT),
        "wf2": wf2.astype(mxu_dtype), "bf2": bf2.reshape(1, N_PAD),
    }


# --------------------------------- forward ---------------------------------

@functools.partial(jax.jit, static_argnames=("block_b",))
def net_forward(x_nchw, prepped, block_b=128):
    B, C, H, W = x_nchw.shape
    assert C == C_IN
    hp, wp = (H - 2 * (KH - 1)) // 2, (W - 2 * (KW - 1)) // 2
    assert C2 * hp * wp == FC1_IN, "spatial dims must give 512 flattened features"
    assert block_b % 8 == 0 and block_b >= 8

    # Batch tile: multiple of 8 (clean (8,128) output blocks).  For mid-size
    # batches halve the tile so the grid has >= 2 blocks (both v7x TCs busy).
    B8 = ((B + 7) // 8) * 8
    bt = min(block_b, B8)
    if B8 >= 16 and B8 // bt < 2:
        bt = ((B8 // 2 + 7) // 8) * 8
    B_pad = ((B + bt - 1) // bt) * bt

    # tiny input-only layout conversion: NCHW -> (batch*spatial rows, channels)
    x = jnp.transpose(x_nchw, (0, 2, 3, 1)).reshape(B, H * W, C_IN)
    if B_pad != B:
        x = jnp.pad(x, ((0, B_pad - B), (0, 0), (0, 0)))
    x2d = x.reshape(B_pad * H * W, C_IN).astype(prepped["w1"].dtype)

    out = _net_pallas(x2d, prepped, bt=bt, H=H, W=W)
    return out[:B, :NUM_MOVES]


# ----------------------------- init & reference -----------------------------

def init_params(key):
    """Deterministic init matching PyTorch parameter shapes (OIHW / (out,in))."""
    ks = jax.random.split(key, 8)

    def u(k, shape, fan_in):
        bound = 1.0 / jnp.sqrt(jnp.float32(fan_in))
        return jax.random.uniform(k, shape, jnp.float32, -bound, bound)

    return {
        "conv1_w": u(ks[0], (32, 8, 3, 3), 8 * 9),
        "conv1_b": u(ks[1], (32,), 8 * 9),
        "conv2_w": u(ks[2], (64, 32, 3, 3), 32 * 9),
        "conv2_b": u(ks[3], (64,), 32 * 9),
        "fc1_w":   u(ks[4], (128, 512), 512),
        "fc1_b":   u(ks[5], (128,), 512),
        "fc2_w":   u(ks[6], (NUM_MOVES, 128), 128),
        "fc2_b":   u(ks[7], (NUM_MOVES,), 128),
    }


def reference_forward(x_nchw, p):
    """Pure-JAX reference with PyTorch NCHW/OIHW semantics (f32 math)."""
    hi = lax.Precision.HIGHEST
    y = lax.conv_general_dilated(x_nchw, p["conv1_w"], (1, 1), "VALID",
                                 dimension_numbers=("NCHW", "OIHW", "NCHW"),
                                 precision=hi)
    y = jnp.maximum(y + p["conv1_b"][None, :, None, None], 0.0)
    y = lax.conv_general_dilated(y, p["conv2_w"], (1, 1), "VALID",
                                 dimension_numbers=("NCHW", "OIHW", "NCHW"),
                                 precision=hi)
    y = jnp.maximum(y + p["conv2_b"][None, :, None, None], 0.0)
    B, C, H, W = y.shape
    y = y.reshape(B, C, H // 2, 2, W // 2, 2).max(axis=(3, 5))
    y = y.reshape(B, -1)
    y = jnp.maximum(jnp.dot(y, p["fc1_w"].T, precision=hi) + p["fc1_b"], 0.0)
    y = jnp.dot(y, p["fc2_w"].T, precision=hi) + p["fc2_b"]
    return jax.nn.log_softmax(y, axis=1)


if __name__ == "__main__":
    key = jax.random.PRNGKey(0)
    kx, kp = jax.random.split(key)
    # NCHW input: batch=2, 8 channels, spatial 8x12 so flatten == 512 (fc1 in_features)
    x = jax.random.normal(kx, (2, 8, 8, 12), jnp.float32)
    params = init_params(kp)

    H, W = x.shape[2], x.shape[3]
    prepped = prepare_params(params, hp=(H - 4) // 2, wp=(W - 4) // 2)  # one-time

    out = net_forward(x, prepped)
    out = jax.block_until_ready(out)

    ref = reference_forward(x, params)
    assert out.shape == (2, NUM_MOVES)
    max_err = float(jnp.max(jnp.abs(out - ref)))
    # bf16 MXU operands with f32 accumulation -> loosened tolerance vs pure f32.
    assert bool(jnp.allclose(out, ref, atol=5e-2, rtol=1e-2)), max_err
    print("KERNEL_OK")
</pallas_src>

<mosaic_0001>
module attributes {stable_mosaic.version = 11 : i64} {
  func.func @kernel(%arg0: i32, %arg1: memref<768x8xbf16, #tpu.memory_space<vmem>>, %arg2: memref<72x32xbf16, #tpu.memory_space<vmem>>, %arg3: memref<1x32xf32, #tpu.memory_space<vmem>>, %arg4: memref<288x64xbf16, #tpu.memory_space<vmem>>, %arg5: memref<1x64xf32, #tpu.memory_space<vmem>>, %arg6: memref<512x128xbf16, #tpu.memory_space<vmem>>, %arg7: memref<1x128xf32, #tpu.memory_space<vmem>>, %arg8: memref<128x2048xbf16, #tpu.memory_space<vmem>>, %arg9: memref<1x2048xf32, #tpu.memory_space<vmem>>, %arg10: memref<8x2048xf32, #tpu.memory_space<vmem>>, %arg11: memref<800x8xbf16, #tpu.memory_space<vmem>>, %arg12: memref<800x32xbf16, #tpu.memory_space<vmem>>, %arg13: memref<768x288xbf16, #tpu.memory_space<vmem>>) attributes {dimension_semantics = [#tpu.dimension_semantics<parallel>], iteration_bounds = array<i64: 1>, scalar_prefetch = 0 : i64, scratch_operands = 3 : i64, tpu.core_type = #tpu.core_type<tc>, window_params = [{transform_indices = @transform_0, window_bounds = array<i64: 768, 8>}, {pipeline_mode = #tpu.pipeline_mode<synchronous>, transform_indices = @transform_1, window_bounds = array<i64: 72, 32>}, {pipeline_mode = #tpu.pipeline_mode<synchronous>, transform_indices = @transform_2, window_bounds = array<i64: 1, 32>}, {pipeline_mode = #tpu.pipeline_mode<synchronous>, transform_indices = @transform_3, window_bounds = array<i64: 288, 64>}, {pipeline_mode = #tpu.pipeline_mode<synchronous>, transform_indices = @transform_4, window_bounds = array<i64: 1, 64>}, {pipeline_mode = #tpu.pipeline_mode<synchronous>, transform_indices = @transform_5, window_bounds = array<i64: 512, 128>}, {pipeline_mode = #tpu.pipeline_mode<synchronous>, transform_indices = @transform_6, window_bounds = array<i64: 1, 128>}, {pipeline_mode = #tpu.pipeline_mode<synchronous>, transform_indices = @transform_7, window_bounds = array<i64: 128, 2048>}, {pipeline_mode = #tpu.pipeline_mode<synchronous>, transform_indices = @transform_8, window_bounds = array<i64: 1, 2048>}, {transform_indices = @transform_9, window_bounds = array<i64: 8, 2048>}]} {
    %c0 = arith.constant 0 : index
    %c0_0 = arith.constant 0 : index
    %0 = vector.load %arg1[%c0, %c0_0] : memref<768x8xbf16, #tpu.memory_space<vmem>>, vector<768x8xbf16>
    %c0_1 = arith.constant 0 : index
    %c0_2 = arith.constant 0 : index
    %1 = vector.load %arg11[%c0_1, %c0_2] : memref<800x8xbf16, #tpu.memory_space<vmem>>, vector<768x8xbf16>
    tpu.vector_store %arg11[%c0_1, %c0_2], %0 {strides = array<i32>} : memref<800x8xbf16, #tpu.memory_space<vmem>>, vector<768x8xbf16>,
    %cst = arith.constant 0.000000e+00 : bf16
    %2 = vector.broadcast %cst : bf16 to vector<32x8xbf16>
    %c768 = arith.constant 768 : index
    %c0_3 = arith.constant 0 : index
    %3 = vector.load %arg11[%c768, %c0_3] : memref<800x8xbf16, #tpu.memory_space<vmem>>, vector<32x8xbf16>
    tpu.vector_store %arg11[%c768, %c0_3], %2 {strides = array<i32>} : memref<800x8xbf16, #tpu.memory_space<vmem>>, vector<32x8xbf16>,
    %c0_4 = arith.constant 0 : index
    %c0_5 = arith.constant 0 : index
    %4 = vector.load %arg11[%c0_4, %c0_5] : memref<800x8xbf16, #tpu.memory_space<vmem>>, vector<768x8xbf16>
    %c0_6 = arith.constant 0 : index
    %c0_7 = arith.constant 0 : index
    %5 = vector.load %arg13[%c0_6, %c0_7] : memref<768x288xbf16, #tpu.memory_space<vmem>>, vector<768x8xbf16>
    tpu.vector_store %arg13[%c0_6, %c0_7], %4 {strides = array<i32>} : memref<768x288xbf16, #tpu.memory_space<vmem>>, vector<768x8xbf16>,
    %c1 = arith.constant 1 : index
    %c0_8 = arith.constant 0 : index
    %6 = vector.load %arg11[%c1, %c0_8] : memref<800x8xbf16, #tpu.memory_space<vmem>>, vector<768x8xbf16>
    %c0_9 = arith.constant 0 : index
    %c8 = arith.constant 8 : index
    %7 = vector.load %arg13[%c0_9, %c8] : memref<768x288xbf16, #tpu.memory_space<vmem>>, vector<768x8xbf16>
    tpu.vector_store %arg13[%c0_9, %c8], %6 {strides = array<i32>} : memref<768x288xbf16, #tpu.memory_space<vmem>>, vector<768x8xbf16>,
    %c2 = arith.constant 2 : index
    %c0_10 = arith.constant 0 : index
    %8 = vector.load %arg11[%c2, %c0_10] : memref<800x8xbf16, #tpu.memory_space<vmem>>, vector<768x8xbf16>
    %c0_11 = arith.constant 0 : index
    %c16 = arith.constant 16 : index
    %9 = vector.load %arg13[%c0_11, %c16] : memref<768x288xbf16, #tpu.memory_space<vmem>>, vector<768x8xbf16>
    tpu.vector_store %arg13[%c0_11, %c16], %8 {strides = array<i32>} : memref<768x288xbf16, #tpu.memory_space<vmem>>, vector<768x8xbf16>,
    %c12 = arith.constant 12 : index
    %c0_12 = arith.constant 0 : index
    %10 = vector.load %arg11[%c12, %c0_12] : memref<800x8xbf16, #tpu.memory_space<vmem>>, vector<768x8xbf16>
    %c0_13 = arith.constant 0 : index
    %c24 = arith.constant 24 : index
    %11 = vector.load %arg13[%c0_13, %c24] : memref<768x288xbf16, #tpu.memory_space<vmem>>, vector<768x8xbf16>
    tpu.vector_store %arg13[%c0_13, %c24], %10 {strides = array<i32>} : memref<768x288xbf16, #tpu.memory_space<vmem>>, vector<768x8xbf16>,
    %c13 = arith.constant 13 : index
    %c0_14 = arith.constant 0 : index
    %12 = vector.load %arg11[%c13, %c0_14] : memref<800x8xbf16, #tpu.memory_space<vmem>>, vector<768x8xbf16>
    %c0_15 = arith.constant 0 : index
    %c32 = arith.constant 32 : index
    %13 = vector.load %arg13[%c0_15, %c32] : memref<768x288xbf16, #tpu.memory_space<vmem>>, vector<768x8xbf16>
    tpu.vector_store %arg13[%c0_15, %c32], %12 {strides = array<i32>} : memref<768x288xbf16, #tpu.memory_space<vmem>>, vector<768x8xbf16>,
    %c14 = arith.constant 14 : index
    %c0_16 = arith.constant 0 : index
    %14 = vector.load %arg11[%c14, %c0_16] : memref<800x8xbf16, #tpu.memory_space<vmem>>, vector<768x8xbf16>
    %c0_17 = arith.constant 0 : index
    %c40 = arith.constant 40 : index
    %15 = vector.load %arg13[%c0_17, %c40] : memref<768x288xbf16, #tpu.memory_space<vmem>>, vector<768x8xbf16>
    tpu.vector_store %arg13[%c0_17, %c40], %14 {strides = array<i32>} : memref<768x288xbf16, #tpu.memory_space<vmem>>, vector<768x8xbf16>,
    %c24_18 = arith.constant 24 : index
    %c0_19 = arith.constant 0 : index
    %16 = vector.load %arg11[%c24_18, %c0_19] : memref<800x8xbf16, #tpu.memory_space<vmem>>, vector<768x8xbf16>
    %c0_20 = arith.constant 0 : index
    %c48 = arith.constant 48 : index
    %17 = vector.load %arg13[%c0_20, %c48] : memref<768x288xbf16, #tpu.memory_space<vmem>>, vector<768x8xbf16>
    tpu.vector_store %arg13[%c0_20, %c48], %16 {strides = array<i32>} : memref<768x288xbf16, #tpu.memory_space<vmem>>, vector<768x8xbf16>,
    %c25 = arith.constant 25 : index
    %c0_21 = arith.constant 0 : index
    %18 = vector.load %arg11[%c25, %c0_21] : memref<800x8xbf16, #tpu.memory_space<vmem>>, vector<768x8xbf16>
    %c0_22 = arith.constant 0 : index
    %c56 = arith.constant 56 : index
    %19 = vector.load %arg13[%c0_22, %c56] : memref<768x288xbf16, #tpu.memory_space<vmem>>, vector<768x8xbf16>
    tpu.vector_store %arg13[%c0_22, %c56], %18 {strides = array<i32>} : memref<768x288xbf16, #tpu.memory_space<vmem>>, vector<768x8xbf16>,
    %c26 = arith.constant 26 : index
    %c0_23 = arith.constant 0 : index
    %20 = vector.load %arg11[%c26, %c0_23] : memref<800x8xbf16, #tpu.memory_space<vmem>>, vector<768x8xbf16>
    %c0_24 = arith.constant 0 : index
    %c64 = arith.constant 64 : index
    %21 = vector.load %arg13[%c0_24, %c64] : memref<768x288xbf16, #tpu.memory_space<vmem>>, vector<768x8xbf16>
    tpu.vector_store %arg13[%c0_24, %c64], %20 {strides = array<i32>} : memref<768x288xbf16, #tpu.memory_space<vmem>>, vector<768x8xbf16>,
    %c0_25 = arith.constant 0 : index
    %c0_26 = arith.constant 0 : index
    %22 = vector.load %arg13[%c0_25, %c0_26] : memref<768x288xbf16, #tpu.memory_space<vmem>>, vector<768x72xbf16>
    %c0_27 = arith.constant 0 : index
    %c0_28 = arith.constant 0 : index
    %23 = vector.load %arg2[%c0_27, %c0_28] : memref<72x32xbf16, #tpu.memory_space<vmem>>, vector<72x32xbf16>
    %cst_29 = arith.constant dense<0.000000e+00> : vector<768x32xf32>
    %24 = tpu.matmul %22, %23, %cst_29 {dimension_numbers = #tpu.dot_dimension_numbers<[1], [0], [0], [1], [0, 0, 1, 1], [], []>} : vector<768x72xbf16>, vector<72x32xbf16>, vector<768x32xf32> -> vector<768x32xf32>
    %c0_30 = arith.constant 0 : index
    %c0_31 = arith.constant 0 : index
    %25 = vector.load %arg3[%c0_30, %c0_31] : memref<1x32xf32, #tpu.memory_space<vmem>>, vector<1x32xf32>
    %26 = vector.broadcast %25 : vector<1x32xf32> to vector<768x32xf32>
    %27 = arith.addf %24, %26 : vector<768x32xf32>
    %cst_32 = arith.constant 0.000000e+00 : f32
    %28 = vector.broadcast %cst_32 : f32 to vector<768x32xf32>
    %29 = arith.maximumf %27, %28 : vector<768x32xf32>
    %30 = arith.truncf %29 : vector<768x32xf32> to vector<768x32xbf16>
    %c0_33 = arith.constant 0 : index
    %c0_34 = arith.constant 0 : index
    %31 = vector.load %arg12[%c0_33, %c0_34] : memref<800x32xbf16, #tpu.memory_space<vmem>>, vector<768x32xbf16>
    tpu.vector_store %arg12[%c0_33, %c0_34], %30 {strides = array<i32>} : memref<800x32xbf16, #tpu.memory_space<vmem>>, vector<768x32xbf16>,
    %cst_35 = arith.constant 0.000000e+00 : bf16
    %32 = vector.broadcast %cst_35 : bf16 to vector<32x32xbf16>
    %c768_36 = arith.constant 768 : index
    %c0_37 = arith.constant 0 : index
    %33 = vector.load %arg12[%c768_36, %c0_37] : memref<800x32xbf16, #tpu.memory_space<vmem>>, vector<32x32xbf16>
    tpu.vector_store %arg12[%c768_36, %c0_37], %32 {strides = array<i32>} : memref<800x32xbf16, #tpu.memory_space<vmem>>, vector<32x32xbf16>,
    %c0_38 = arith.constant 0 : index
    %c0_39 = arith.constant 0 : index
    %34 = vector.load %arg12[%c0_38, %c0_39] : memref<800x32xbf16, #tpu.memory_space<vmem>>, vector<768x32xbf16>
    %c0_40 = arith.constant 0 : index
    %c0_41 = arith.constant 0 : index
    %35 = vector.load %arg13[%c0_40, %c0_41] : memref<768x288xbf16, #tpu.memory_space<vmem>>, vector<768x32xbf16>
    tpu.vector_store %arg13[%c0_40, %c0_41], %34 {strides = array<i32>} : memref<768x288xbf16, #tpu.memory_space<vmem>>, vector<768x32xbf16>,
    %c1_42 = arith.constant 1 : index
    %c0_43 = arith.constant 0 : index
    %36 = vector.load %arg12[%c1_42, %c0_43] : memref<800x32xbf16, #tpu.memory_space<vmem>>, vector<768x32xbf16>
    %c0_44 = arith.constant 0 : index
    %c32_45 = arith.constant 32 : index
    %37 = vector.load %arg13[%c0_44, %c32_45] : memref<768x288xbf16, #tpu.memory_space<vmem>>, vector<768x32xbf16>
    tpu.vector_store %arg13[%c0_44, %c32_45], %36 {strides = array<i32>} : memref<768x288xbf16, #tpu.memory_space<vmem>>, vector<768x32xbf16>,
    %c2_46 = arith.constant 2 : index
    %c0_47 = arith.constant 0 : index
    %38 = vector.load %arg12[%c2_46, %c0_47] : memref<800x32xbf16, #tpu.memory_space<vmem>>, vector<768x32xbf16>
    %c0_48 = arith.constant 0 : index
    %c64_49 = arith.constant 64 : index
    %39 = vector.load %arg13[%c0_48, %c64_49] : memref<768x288xbf16, #tpu.memory_space<vmem>>, vector<768x32xbf16>
    tpu.vector_store %arg13[%c0_48, %c64_49], %38 {strides = array<i32>} : memref<768x288xbf16, #tpu.memory_space<vmem>>, vector<768x32xbf16>,
    %c12_50 = arith.constant 12 : index
    %c0_51 = arith.constant 0 : index
    %40 = vector.load %arg12[%c12_50, %c0_51] : memref<800x32xbf16, #tpu.memory_space<vmem>>, vector<768x32xbf16>
    %c0_52 = arith.constant 0 : index
    %c96 = arith.constant 96 : index
    %41 = vector.load %arg13[%c0_52, %c96] : memref<768x288xbf16, #tpu.memory_space<vmem>>, vector<768x32xbf16>
    tpu.vector_store %arg13[%c0_52, %c96], %40 {strides = array<i32>} : memref<768x288xbf16, #tpu.memory_space<vmem>>, vector<768x32xbf16>,
    %c13_53 = arith.constant 13 : index
    %c0_54 = arith.constant 0 : index
    %42 = vector.load %arg12[%c13_53, %c0_54] : memref<800x32xbf16, #tpu.memory_space<vmem>>, vector<768x32xbf16>
    %c0_55 = arith.constant 0 : index
    %c128 = arith.constant 128 : index
    %43 = vector.load %arg13[%c0_55, %c128] : memref<768x288xbf16, #tpu.memory_space<vmem>>, vector<768x32xbf16>
    tpu.vector_store %arg13[%c0_55, %c128], %42 {strides = array<i32>} : memref<768x288xbf16, #tpu.memory_space<vmem>>, vector<768x32xbf16>,
    %c14_56 = arith.constant 14 : index
    %c0_57 = arith.constant 0 : index
    %44 = vector.load %arg12[%c14_56, %c0_57] : memref<800x32xbf16, #tpu.memory_space<vmem>>, vector<768x32xbf16>
    %c0_58 = arith.constant 0 : index
    %c160 = arith.constant 160 : index
    %45 = vector.load %arg13[%c0_58, %c160] : memref<768x288xbf16, #tpu.memory_space<vmem>>, vector<768x32xbf16>
    tpu.vector_store %arg13[%c0_58, %c160], %44 {strides = array<i32>} : memref<768x288xbf16, #tpu.memory_space<vmem>>, vector<768x32xbf16>,
    %c24_59 = arith.constant 24 : index
    %c0_60 = arith.constant 0 : index
    %46 = vector.load %arg12[%c24_59, %c0_60] : memref<800x32xbf16, #tpu.memory_space<vmem>>, vector<768x32xbf16>
    %c0_61 = arith.constant 0 : index
    %c192 = arith.constant 192 : index
    %47 = vector.load %arg13[%c0_61, %c192] : memref<768x288xbf16, #tpu.memory_space<vmem>>, vector<768x32xbf16>
    tpu.vector_store %arg13[%c0_61, %c192], %46 {strides = array<i32>} : memref<768x288xbf16, #tpu.memory_space<vmem>>, vector<768x32xbf16>,
    %c25_62 = arith.constant 25 : index
    %c0_63 = arith.constant 0 : index
    %48 = vector.load %arg12[%c25_62, %c0_63] : memref<800x32xbf16, #tpu.memory_space<vmem>>, vector<768x32xbf16>
    %c0_64 = arith.constant 0 : index
    %c224 = arith.constant 224 : index
    %49 = vector.load %arg13[%c0_64, %c224] : memref<768x288xbf16, #tpu.memory_space<vmem>>, vector<768x32xbf16>
    tpu.vector_store %arg13[%c0_64, %c224], %48 {strides = array<i32>} : memref<768x288xbf16, #tpu.memory_space<vmem>>, vector<768x32xbf16>,
    %c26_65 = arith.constant 26 : index
    %c0_66 = arith.constant 0 : index
    %50 = vector.load %arg12[%c26_65, %c0_66] : memref<800x32xbf16, #tpu.memory_space<vmem>>, vector<768x32xbf16>
    %c0_67 = arith.constant 0 : index
    %c256 = arith.constant 256 : index
    %51 = vector.load %arg13[%c0_67, %c256] : memref<768x288xbf16, #tpu.memory_space<vmem>>, vector<768x32xbf16>
    tpu.vector_store %arg13[%c0_67, %c256], %50 {strides = array<i32>} : memref<768x288xbf16, #tpu.memory_space<vmem>>, vector<768x32xbf16>,
    %c0_68 = arith.constant 0 : index
    %c0_69 = arith.constant 0 : index
    %52 = vector.load %arg13[%c0_68, %c0_69] : memref<768x288xbf16, #tpu.memory_space<vmem>>, vector<768x288xbf16>
    %c0_70 = arith.constant 0 : index
    %c0_71 = arith.constant 0 : index
    %53 = vector.load %arg4[%c0_70, %c0_71] : memref<288x64xbf16, #tpu.memory_space<vmem>>, vector<288x64xbf16>
    %cst_72 = arith.constant dense<0.000000e+00> : vector<768x64xf32>
    %54 = tpu.matmul %52, %53, %cst_72 {dimension_numbers = #tpu.dot_dimension_numbers<[1], [0], [0], [1], [0, 0, 1, 1], [], []>} : vector<768x288xbf16>, vector<288x64xbf16>, vector<768x64xf32> -> vector<768x64xf32>
    %c0_73 = arith.constant 0 : index
    %c0_74 = arith.constant 0 : index
    %55 = vector.load %arg5[%c0_73, %c0_74] : memref<1x64xf32, #tpu.memory_space<vmem>>, vector<1x64xf32>
    %56 = vector.broadcast %55 : vector<1x64xf32> to vector<768x64xf32>
    %57 = arith.addf %54, %56 : vector<768x64xf32>
    %cst_75 = arith.constant 0.000000e+00 : f32
    %58 = vector.broadcast %cst_75 : f32 to vector<768x64xf32>
    %59 = arith.maximumf %57, %58 : vector<768x64xf32>
    %60 = vector.shape_cast %59 : vector<768x64xf32> to vector<8x96x64xf32>
    %61 = vector.extract_strided_slice %60 {offsets = [0, 0, 0], sizes = [8, 1, 64], strides = [1, 1, 1]} : vector<8x96x64xf32> to vector<8x1x64xf32>
    %62 = vector.shape_cast %61 : vector<8x1x64xf32> to vector<8x64xf32>
    %63 = vector.extract_strided_slice %60 {offsets = [0, 1, 0], sizes = [8, 1, 64], strides = [1, 1, 1]} : vector<8x96x64xf32> to vector<8x1x64xf32>
    %64 = vector.shape_cast %63 : vector<8x1x64xf32> to vector<8x64xf32>
    %65 = arith.maximumf %62, %64 : vector<8x64xf32>
    %66 = vector.extract_strided_slice %60 {offsets = [0, 12, 0], sizes = [8, 1, 64], strides = [1, 1, 1]} : vector<8x96x64xf32> to vector<8x1x64xf32>
    %67 = vector.shape_cast %66 : vector<8x1x64xf32> to vector<8x64xf32>
    %68 = vector.extract_strided_slice %60 {offsets = [0, 13, 0], sizes = [8, 1, 64], strides = [1, 1, 1]} : vector<8x96x64xf32> to vector<8x1x64xf32>
    %69 = vector.shape_cast %68 : vector<8x1x64xf32> to vector<8x64xf32>
    %70 = arith.maximumf %67, %69 : vector<8x64xf32>
    %71 = arith.maximumf %65, %70 : vector<8x64xf32>
    %72 = vector.extract_strided_slice %60 {offsets = [0, 2, 0], sizes = [8, 1, 64], strides = [1, 1, 1]} : vector<8x96x64xf32> to vector<8x1x64xf32>
    %73 = vector.shape_cast %72 : vector<8x1x64xf32> to vector<8x64xf32>
    %74 = vector.extract_strided_slice %60 {offsets = [0, 3, 0], sizes = [8, 1, 64], strides = [1, 1, 1]} : vector<8x96x64xf32> to vector<8x1x64xf32>
    %75 = vector.shape_cast %74 : vector<8x1x64xf32> to vector<8x64xf32>
    %76 = arith.maximumf %73, %75 : vector<8x64xf32>
    %77 = vector.extract_strided_slice %60 {offsets = [0, 14, 0], sizes = [8, 1, 64], strides = [1, 1, 1]} : vector<8x96x64xf32> to vector<8x1x64xf32>
    %78 = vector.shape_cast %77 : vector<8x1x64xf32> to vector<8x64xf32>
    %79 = vector.extract_strided_slice %60 {offsets = [0, 15, 0], sizes = [8, 1, 64], strides = [1, 1, 1]} : vector<8x96x64xf32> to vector<8x1x64xf32>
    %80 = vector.shape_cast %79 : vector<8x1x64xf32> to vector<8x64xf32>
    %81 = arith.maximumf %78, %80 : vector<8x64xf32>
    %82 = arith.maximumf %76, %81 : vector<8x64xf32>
    %83 = vector.extract_strided_slice %60 {offsets = [0, 4, 0], sizes = [8, 1, 64], strides = [1, 1, 1]} : vector<8x96x64xf32> to vector<8x1x64xf32>
    %84 = vector.shape_cast %83 : vector<8x1x64xf32> to vector<8x64xf32>
    %85 = vector.extract_strided_slice %60 {offsets = [0, 5, 0], sizes = [8, 1, 64], strides = [1, 1, 1]} : vector<8x96x64xf32> to vector<8x1x64xf32>
    %86 = vector.shape_cast %85 : vector<8x1x64xf32> to vector<8x64xf32>
    %87 = arith.maximumf %84, %86 : vector<8x64xf32>
    %88 = vector.extract_strided_slice %60 {offsets = [0, 16, 0], sizes = [8, 1, 64], strides = [1, 1, 1]} : vector<8x96x64xf32> to vector<8x1x64xf32>
    %89 = vector.shape_cast %88 : vector<8x1x64xf32> to vector<8x64xf32>
    %90 = vector.extract_strided_slice %60 {offsets = [0, 17, 0], sizes = [8, 1, 64], strides = [1, 1, 1]} : vector<8x96x64xf32> to vector<8x1x64xf32>
    %91 = vector.shape_cast %90 : vector<8x1x64xf32> to vector<8x64xf32>
    %92 = arith.maximumf %89, %91 : vector<8x64xf32>
    %93 = arith.maximumf %87, %92 : vector<8x64xf32>
    %94 = vector.extract_strided_slice %60 {offsets = [0, 6, 0], sizes = [8, 1, 64], strides = [1, 1, 1]} : vector<8x96x64xf32> to vector<8x1x64xf32>
    %95 = vector.shape_cast %94 : vector<8x1x64xf32> to vector<8x64xf32>
    %96 = vector.extract_strided_slice %60 {offsets = [0, 7, 0], sizes = [8, 1, 64], strides = [1, 1, 1]} : vector<8x96x64xf32> to vector<8x1x64xf32>
    %97 = vector.shape_cast %96 : vector<8x1x64xf32> to vector<8x64xf32>
    %98 = arith.maximumf %95, %97 : vector<8x64xf32>
    %99 = vector.extract_strided_slice %60 {offsets = [0, 18, 0], sizes = [8, 1, 64], strides = [1, 1, 1]} : vector<8x96x64xf32> to vector<8x1x64xf32>
    %100 = vector.shape_cast %99 : vector<8x1x64xf32> to vector<8x64xf32>
    %101 = vector.extract_strided_slice %60 {offsets = [0, 19, 0], sizes = [8, 1, 64], strides = [1, 1, 1]} : vector<8x96x64xf32> to vector<8x1x64xf32>
    %102 = vector.shape_cast %101 : vector<8x1x64xf32> to vector<8x64xf32>
    %103 = arith.maximumf %100, %102 : vector<8x64xf32>
    %104 = arith.maximumf %98, %103 : vector<8x64xf32>
    %105 = vector.extract_strided_slice %60 {offsets = [0, 24, 0], sizes = [8, 1, 64], strides = [1, 1, 1]} : vector<8x96x64xf32> to vector<8x1x64xf32>
    %106 = vector.shape_cast %105 : vector<8x1x64xf32> to vector<8x64xf32>
    %107 = vector.extract_strided_slice %60 {offsets = [0, 25, 0], sizes = [8, 1, 64], strides = [1, 1, 1]} : vector<8x96x64xf32> to vector<8x1x64xf32>
    %108 = vector.shape_cast %107 : vector<8x1x64xf32> to vector<8x64xf32>
    %109 = arith.maximumf %106, %108 : vector<8x64xf32>
    %110 = vector.extract_strided_slice %60 {offsets = [0, 36, 0], sizes = [8, 1, 64], strides = [1, 1, 1]} : vector<8x96x64xf32> to vector<8x1x64xf32>
    %111 = vector.shape_cast %110 : vector<8x1x64xf32> to vector<8x64xf32>
    %112 = vector.extract_strided_slice %60 {offsets = [0, 37, 0], sizes = [8, 1, 64], strides = [1, 1, 1]} : vector<8x96x64xf32> to vector<8x1x64xf32>
    %113 = vector.shape_cast %112 : vector<8x1x64xf32> to vector<8x64xf32>
    %114 = arith.maximumf %111, %113 : vector<8x64xf32>
    %115 = arith.maximumf %109, %114 : vector<8x64xf32>
    %116 = vector.extract_strided_slice %60 {offsets = [0, 26, 0], sizes = [8, 1, 64], strides = [1, 1, 1]} : vector<8x96x64xf32> to vector<8x1x64xf32>
    %117 = vector.shape_cast %116 : vector<8x1x64xf32> to vector<8x64xf32>
    %118 = vector.extract_strided_slice %60 {offsets = [0, 27, 0], sizes = [8, 1, 64], strides = [1, 1, 1]} : vector<8x96x64xf32> to vector<8x1x64xf32>
    %119 = vector.shape_cast %118 : vector<8x1x64xf32> to vector<8x64xf32>
    %120 = arith.maximumf %117, %119 : vector<8x64xf32>
    %121 = vector.extract_strided_slice %60 {offsets = [0, 38, 0], sizes = [8, 1, 64], strides = [1, 1, 1]} : vector<8x96x64xf32> to vector<8x1x64xf32>
    %122 = vector.shape_cast %121 : vector<8x1x64xf32> to vector<8x64xf32>
    %123 = vector.extract_strided_slice %60 {offsets = [0, 39, 0], sizes = [8, 1, 64], strides = [1, 1, 1]} : vector<8x96x64xf32> to vector<8x1x64xf32>
    %124 = vector.shape_cast %123 : vector<8x1x64xf32> to vector<8x64xf32>
    %125 = arith.maximumf %122, %124 : vector<8x64xf32>
    %126 = arith.maximumf %120, %125 : vector<8x64xf32>
    %127 = vector.extract_strided_slice %60 {offsets = [0, 28, 0], sizes = [8, 1, 64], strides = [1, 1, 1]} : vector<8x96x64xf32> to vector<8x1x64xf32>
    %128 = vector.shape_cast %127 : vector<8x1x64xf32> to vector<8x64xf32>
    %129 = vector.extract_strided_slice %60 {offsets = [0, 29, 0], sizes = [8, 1, 64], strides = [1, 1, 1]} : vector<8x96x64xf32> to vector<8x1x64xf32>
    %130 = vector.shape_cast %129 : vector<8x1x64xf32> to vector<8x64xf32>
    %131 = arith.maximumf %128, %130 : vector<8x64xf32>
    %132 = vector.extract_strided_slice %60 {offsets = [0, 40, 0], sizes = [8, 1, 64], strides = [1, 1, 1]} : vector<8x96x64xf32> to vector<8x1x64xf32>
    %133 = vector.shape_cast %132 : vector<8x1x64xf32> to vector<8x64xf32>
    %134 = vector.extract_strided_slice %60 {offsets = [0, 41, 0], sizes = [8, 1, 64], strides = [1, 1, 1]} : vector<8x96x64xf32> to vector<8x1x64xf32>
    %135 = vector.shape_cast %134 : vector<8x1x64xf32> to vector<8x64xf32>
    %136 = arith.maximumf %133, %135 : vector<8x64xf32>
    %137 = arith.maximumf %131, %136 : vector<8x64xf32>
    %138 = vector.extract_strided_slice %60 {offsets = [0, 30, 0], sizes = [8, 1, 64], strides = [1, 1, 1]} : vector<8x96x64xf32> to vector<8x1x64xf32>
    %139 = vector.shape_cast %138 : vector<8x1x64xf32> to vector<8x64xf32>
    %140 = vector.extract_strided_slice %60 {offsets = [0, 31, 0], sizes = [8, 1, 64], strides = [1, 1, 1]} : vector<8x96x64xf32> to vector<8x1x64xf32>
    %141 = vector.shape_cast %140 : vector<8x1x64xf32> to vector<8x64xf32>
    %142 = arith.maximumf %139, %141 : vector<8x64xf32>
    %143 = vector.extract_strided_slice %60 {offsets = [0, 42, 0], sizes = [8, 1, 64], strides = [1, 1, 1]} : vector<8x96x64xf32> to vector<8x1x64xf32>
    %144 = vector.shape_cast %143 : vector<8x1x64xf32> to vector<8x64xf32>
    %145 = vector.extract_strided_slice %60 {offsets = [0, 43, 0], sizes = [8, 1, 64], strides = [1, 1, 1]} : vector<8x96x64xf32> to vector<8x1x64xf32>
    %146 = vector.shape_cast %145 : vector<8x1x64xf32> to vector<8x64xf32>
    %147 = arith.maximumf %144, %146 : vector<8x64xf32>
    %148 = arith.maximumf %142, %147 : vector<8x64xf32>
    %149 = tpu.concatenate %71, %82, %93, %104, %115, %126, %137, %148 in 1 : vector<8x64xf32>, vector<8x64xf32>, vector<8x64xf32>, vector<8x64xf32>, vector<8x64xf32>, vector<8x64xf32>, vector<8x64xf32>, vector<8x64xf32> -> vector<8x512xf32>
    %150 = arith.truncf %149 : vector<8x512xf32> to vector<8x512xbf16>
    %c0_76 = arith.constant 0 : index
    %c0_77 = arith.constant 0 : index
    %151 = vector.load %arg6[%c0_76, %c0_77] : memref<512x128xbf16, #tpu.memory_space<vmem>>, vector<512x128xbf16>
    %cst_78 = arith.constant dense<0.000000e+00> : vector<8x128xf32>
    %152 = tpu.matmul %150, %151, %cst_78 {dimension_numbers = #tpu.dot_dimension_numbers<[1], [0], [0], [1], [0, 0, 1, 1], [], []>} : vector<8x512xbf16>, vector<512x128xbf16>, vector<8x128xf32> -> vector<8x128xf32>
    %c0_79 = arith.constant 0 : index
    %c0_80 = arith.constant 0 : index
    %153 = vector.load %arg7[%c0_79, %c0_80] : memref<1x128xf32, #tpu.memory_space<vmem>>, vector<1x128xf32>
    %154 = vector.broadcast %153 : vector<1x128xf32> to vector<8x128xf32>
    %155 = arith.addf %152, %154 : vector<8x128xf32>
    %cst_81 = arith.constant 0.000000e+00 : f32
    %156 = vector.broadcast %cst_81 : f32 to vector<8x128xf32>
    %157 = arith.maximumf %155, %156 : vector<8x128xf32>
    %158 = arith.truncf %157 : vector<8x128xf32> to vector<8x128xbf16>
    %c0_82 = arith.constant 0 : index
    %c0_83 = arith.constant 0 : index
    %159 = vector.load %arg8[%c0_82, %c0_83] : memref<128x2048xbf16, #tpu.memory_space<vmem>>, vector<128x2048xbf16>
    %cst_84 = arith.constant dense<0.000000e+00> : vector<8x2048xf32>
    %160 = tpu.matmul %158, %159, %cst_84 {dimension_numbers = #tpu.dot_dimension_numbers<[1], [0], [0], [1], [0, 0, 1, 1], [], []>} : vector<8x128xbf16>, vector<128x2048xbf16>, vector<8x2048xf32> -> vector<8x2048xf32>
    %c0_85 = arith.constant 0 : index
    %c0_86 = arith.constant 0 : index
    %161 = vector.load %arg9[%c0_85, %c0_86] : memref<1x2048xf32, #tpu.memory_space<vmem>>, vector<1x2048xf32>
    %162 = vector.broadcast %161 : vector<1x2048xf32> to vector<8x2048xf32>
    %163 = arith.addf %160, %162 : vector<8x2048xf32>
    %cst_87 = arith.constant dense<0xFF800000> : vector<8xf32>
    %164 = vector.multi_reduction <maximumf>, %163, %cst_87 [1] : vector<8x2048xf32> to vector<8xf32>
    %165 = vector.shape_cast %164 : vector<8xf32> to vector<8x1xf32>
    %166 = vector.broadcast %165 : vector<8x1xf32> to vector<8x2048xf32>
    %167 = arith.subf %163, %166 : vector<8x2048xf32>
    %168 = math.exp %167 : vector<8x2048xf32>
    %cst_88 = arith.constant dense<0.000000e+00> : vector<8xf32>
    %169 = vector.multi_reduction <add>, %168, %cst_88 [1] : vector<8x2048xf32> to vector<8xf32>
    %170 = vector.shape_cast %169 : vector<8xf32> to vector<8x1xf32>
    %171 = math.log %170 : vector<8x1xf32>
    %172 = vector.broadcast %171 : vector<8x1xf32> to vector<8x2048xf32>
    %173 = arith.subf %167, %172 : vector<8x2048xf32>
    %c0_89 = arith.constant 0 : index
    %c0_90 = arith.constant 0 : index
    %174 = vector.load %arg10[%c0_89, %c0_90] : memref<8x2048xf32, #tpu.memory_space<vmem>>, vector<8x2048xf32>
    tpu.vector_store %arg10[%c0_89, %c0_90], %173 {strides = array<i32>} : memref<8x2048xf32, #tpu.memory_space<vmem>>, vector<8x2048xf32>,
    return
  }
  func.func @transform_0(%arg0: i32) -> (i32, i32) {
    %c0_i32 = arith.constant 0 : i32
    %c0_i32_0 = arith.constant 0 : i32
    return %arg0, %c0_i32 : i32, i32
  }
  func.func @transform_1(%arg0: i32) -> (i32, i32) {
    %c0_i32 = arith.constant 0 : i32
    %c0_i32_0 = arith.constant 0 : i32
    %c0_i32_1 = arith.constant 0 : i32
    return %c0_i32, %c0_i32_0 : i32, i32
  }
  func.func @transform_2(%arg0: i32) -> (i32, i32) {
    %c0_i32 = arith.constant 0 : i32
    %c0_i32_0 = arith.constant 0 : i32
    %c0_i32_1 = arith.constant 0 : i32
    return %c0_i32, %c0_i32_0 : i32, i32
  }
  func.func @transform_3(%arg0: i32) -> (i32, i32) {
    %c0_i32 = arith.constant 0 : i32
    %c0_i32_0 = arith.constant 0 : i32
    %c0_i32_1 = arith.constant 0 : i32
    return %c0_i32, %c0_i32_0 : i32, i32
  }
  func.func @transform_4(%arg0: i32) -> (i32, i32) {
    %c0_i32 = arith.constant 0 : i32
    %c0_i32_0 = arith.constant 0 : i32
    %c0_i32_1 = arith.constant 0 : i32
    return %c0_i32, %c0_i32_0 : i32, i32
  }
  func.func @transform_5(%arg0: i32) -> (i32, i32) {
    %c0_i32 = arith.constant 0 : i32
    %c0_i32_0 = arith.constant 0 : i32
    %c0_i32_1 = arith.constant 0 : i32
    return %c0_i32, %c0_i32_0 : i32, i32
  }
  func.func @transform_6(%arg0: i32) -> (i32, i32) {
    %c0_i32 = arith.constant 0 : i32
    %c0_i32_0 = arith.constant 0 : i32
    %c0_i32_1 = arith.constant 0 : i32
    return %c0_i32, %c0_i32_0 : i32, i32
  }
  func.func @transform_7(%arg0: i32) -> (i32, i32) {
    %c0_i32 = arith.constant 0 : i32
    %c0_i32_0 = arith.constant 0 : i32
    %c0_i32_1 = arith.constant 0 : i32
    return %c0_i32, %c0_i32_0 : i32, i32
  }
  func.func @transform_8(%arg0: i32) -> (i32, i32) {
    %c0_i32 = arith.constant 0 : i32
    %c0_i32_0 = arith.constant 0 : i32
    %c0_i32_1 = arith.constant 0 : i32
    return %c0_i32, %c0_i32_0 : i32, i32
  }
  func.func @transform_9(%arg0: i32) -> (i32, i32) {
    %c0_i32 = arith.constant 0 : i32
    %c0_i32_0 = arith.constant 0 : i32
    return %arg0, %c0_i32 : i32, i32
  }
}

</mosaic_0001>

<llo_original>
// kernel: net_forward.1
$region0: #{net_forward.1}
  #allocation0 [shape = 'u32[]', space=smem, size = 0x4, offset = 0x4, fixed_abs, tag = 'smem constant byte address 0x4 - core index']
  #allocation1 [shape = 'u32[144,128]{1,0:T(1,128)}', space=vmem, size = 0x12000, scoped, tag = 'internal scratch']
  #allocation2 [shape = 'bf16[800,8]{1,0:T(16,128)(2,1)}', space=vmem, size = 0x32000, scoped, tag = 'scratch operand']
  #allocation3 [shape = 'bf16[800,32]{1,0:T(16,128)(2,1)}', space=vmem, size = 0x32000, scoped, tag = 'scratch operand']
  #allocation4 [shape = 'bf16[768,288]{1,0:T(16,128)(2,1)}', space=vmem, size = 0x90000, scoped, tag = 'scratch operand']
  %s0 = inlined_call_operand.vmem [shape: bf16[768,8], index: 0, kind: input, shape index: {}]
  %s1 = inlined_call_operand.vmem [shape: bf16[72,32], index: 1, kind: input, shape index: {}]
  %s2 = inlined_call_operand.vmem [shape: f32[1,32], index: 2, kind: input, shape index: {}]
  %s3 = inlined_call_operand.vmem [shape: bf16[288,64], index: 3, kind: input, shape index: {}]
  %s4 = inlined_call_operand.vmem [shape: f32[1,64], index: 4, kind: input, shape index: {}]
  %s5 = inlined_call_operand.hbm [shape: bf16[512,128], index: 5, kind: input, shape index: {}]
  %s6 = inlined_call_operand.vmem [shape: f32[1,128], index: 6, kind: input, shape index: {}]
  %s7 = inlined_call_operand.vmem [shape: bf16[128,2048], index: 7, kind: input, shape index: {}]
  %s8 = inlined_call_operand.vmem [shape: f32[1,2048], index: 8, kind: input, shape index: {}]
  %s9 = inlined_call_operand.vmem [shape: f32[8,2048], index: 9, kind: output, shape index: {}]
  %s10 = sld [smem:[#allocation0]]
  $region50: #{net_forward.1} parent=0
    _
  %s12 = ssub.s32 1, %s10
  %s13 = scalar_select 0, %s12, %s10
  $region1: #{net_forward.1} parent=0
    #allocation5 [shape = 'u8[131072]{0}', space=vmem, size = 0x20000, scoped, tag = 'input window, operand 5, single buffered']
    #allocation6 [shape = 's32[1]{0}', space=sflag, size = 0x4, scoped, tag = 'scoped memory for net_forward.1']
    %14 = vsyncpa [#allocation6], 0
    // Predicated region
    $region2: #{net_forward.1} parent=1 // pred_check
      _
    $region3: #{net_forward.1} parent=1 // pred_check_branch
      %16 = sbr.rel (0) target = $region5
    $region4: #{net_forward.1} parent=1 // pred_region
      _
    $region5: #{net_forward.1} parent=1 // pred_fallthru
      _
    // Predicated region
    $region6: #{net_forward.1} parent=1 // pred_check
      _
    $region7: #{net_forward.1} parent=1 // pred_check_branch
      %18 = sbr.rel (0) target = $region9
    $region8: #{net_forward.1} parent=1 // pred_region
      _
    $region9: #{net_forward.1} parent=1 // pred_fallthru
      _
    // Predicated region
    $region10: #{net_forward.1} parent=1 // pred_check
      _
    $region11: #{net_forward.1} parent=1 // pred_check_branch
      %20 = sbr.rel (0) target = $region13
    $region12: #{net_forward.1} parent=1 // pred_region
      _
    $region13: #{net_forward.1} parent=1 // pred_fallthru
      _
    // Predicated region
    $region14: #{net_forward.1} parent=1 // pred_check
      _
    $region15: #{net_forward.1} parent=1 // pred_check_branch
      %22 = sbr.rel (0) target = $region17
    $region16: #{net_forward.1} parent=1 // pred_region
      _
    $region17: #{net_forward.1} parent=1 // pred_fallthru
      _
    // Predicated region
    $region18: #{net_forward.1} parent=1 // pred_check
      _
    $region19: #{net_forward.1} parent=1 // pred_check_branch
      %24 = sbr.rel (0) target = $region21
    $region20: #{net_forward.1} parent=1 // pred_region
      _
    $region21: #{net_forward.1} parent=1 // pred_fallthru
      _
    // Predicated region
    $region22: #{net_forward.1} parent=1 // pred_check
      _
    $region23: #{net_forward.1} parent=1 // pred_check_branch
      %26 = sbr.rel (0) target = $region25
    $region24: #{net_forward.1} parent=1 // pred_region
      %s28 = ssub.s32 4096, 4096
      %29 = vsyncadd [#allocation6], %s28
      %s30 = sshll.u32 [#allocation5], 4
      %s31 = int_to_ptr.vmem [resolvable:$true] %s30
      %36 = dma.hbm_to_vmem [thread:$0]  %s5, 4096, %s31, [#allocation6], 64, 64, 4
    $region25: #{net_forward.1} parent=1 // pred_fallthru
      _
    // Predicated region
    $region26: #{net_forward.1} parent=1 // pred_check
      _
    $region27: #{net_forward.1} parent=1 // pred_check_branch
      %38 = sbr.rel (0) target = $region29
    $region28: #{net_forward.1} parent=1 // pred_region
      _
    $region29: #{net_forward.1} parent=1 // pred_fallthru
      _
    // Predicated region
    $region30: #{net_forward.1} parent=1 // pred_check
      _
    $region31: #{net_forward.1} parent=1 // pred_check_branch
      %40 = sbr.rel (0) target = $region33
    $region32: #{net_forward.1} parent=1 // pred_region
      _
    $region33: #{net_forward.1} parent=1 // pred_fallthru
      _
    // Predicated region
    $region34: #{net_forward.1} parent=1 // pred_check
      _
    $region35: #{net_forward.1} parent=1 // pred_check_branch
      %42 = sbr.rel (0) target = $region37
    $region36: #{net_forward.1} parent=1 // pred_region
      _
    $region37: #{net_forward.1} parent=1 // pred_fallthru
      _
    // Predicated region
    $region38: #{net_forward.1} parent=1 // pred_check
      _
    $region39: #{net_forward.1} parent=1 // pred_check_branch
      %44 = sbr.rel (0) target = $region41
    $region40: #{net_forward.1} parent=1 // pred_region
      %45 = dma.done [#allocation6], 4096
    $region41: #{net_forward.1} parent=1 // pred_fallthru
      _
    %v47 = vld [vmem:[%s0] sm:$0xf]
    %v48 = vld [vmem:[%s0 + $0x4] sm:$0xf]
    %v49 = vld [vmem:[%s0 + $0x8] sm:$0xf]
    %v50 = vld [vmem:[%s0 + $0xc] sm:$0xf]
    %v51 = vld [vmem:[%s0 + $0x10] sm:$0xf]
    %v52 = vld [vmem:[%s0 + $0x14] sm:$0xf]
    %v53 = vld [vmem:[%s0 + $0x18] sm:$0xf]
    %v54 = vld [vmem:[%s0 + $0x1c] sm:$0xf]
    %v55 = vld [vmem:[%s0 + $0x20] sm:$0xf]
    %v56 = vld [vmem:[%s0 + $0x24] sm:$0xf]
    %v57 = vld [vmem:[%s0 + $0x28] sm:$0xf]
    %v58 = vld [vmem:[%s0 + $0x2c] sm:$0xf]
    %v59 = vld [vmem:[%s0 + $0x30] sm:$0xf]
    %v60 = vld [vmem:[%s0 + $0x34] sm:$0xf]
    %v61 = vld [vmem:[%s0 + $0x38] sm:$0xf]
    %v62 = vld [vmem:[%s0 + $0x3c] sm:$0xf]
    %v63 = vld [vmem:[%s0 + $0x40] sm:$0xf]
    %v64 = vld [vmem:[%s0 + $0x44] sm:$0xf]
    %v65 = vld [vmem:[%s0 + $0x48] sm:$0xf]
    %v66 = vld [vmem:[%s0 + $0x4c] sm:$0xf]
    %v67 = vld [vmem:[%s0 + $0x50] sm:$0xf]
    %v68 = vld [vmem:[%s0 + $0x54] sm:$0xf]
    %v69 = vld [vmem:[%s0 + $0x58] sm:$0xf]
    %v70 = vld [vmem:[%s0 + $0x5c] sm:$0xf]
    %v71 = vld [vmem:[%s0 + $0x60] sm:$0xf]
    %v72 = vld [vmem:[%s0 + $0x64] sm:$0xf]
    %v73 = vld [vmem:[%s0 + $0x68] sm:$0xf]
    %v74 = vld [vmem:[%s0 + $0x6c] sm:$0xf]
    %v75 = vld [vmem:[%s0 + $0x70] sm:$0xf]
    %v76 = vld [vmem:[%s0 + $0x74] sm:$0xf]
    %v77 = vld [vmem:[%s0 + $0x78] sm:$0xf]
    %v78 = vld [vmem:[%s0 + $0x7c] sm:$0xf]
    %v79 = vld [vmem:[%s0 + $0x80] sm:$0xf]
    %v80 = vld [vmem:[%s0 + $0x84] sm:$0xf]
    %v81 = vld [vmem:[%s0 + $0x88] sm:$0xf]
    %v82 = vld [vmem:[%s0 + $0x8c] sm:$0xf]
    %v83 = vld [vmem:[%s0 + $0x90] sm:$0xf]
    %v84 = vld [vmem:[%s0 + $0x94] sm:$0xf]
    %v85 = vld [vmem:[%s0 + $0x98] sm:$0xf]
    %v86 = vld [vmem:[%s0 + $0x9c] sm:$0xf]
    %v87 = vld [vmem:[%s0 + $0xa0] sm:$0xf]
    %v88 = vld [vmem:[%s0 + $0xa4] sm:$0xf]
    %v89 = vld [vmem:[%s0 + $0xa8] sm:$0xf]
    %v90 = vld [vmem:[%s0 + $0xac] sm:$0xf]
    %v91 = vld [vmem:[%s0 + $0xb0] sm:$0xf]
    %v92 = vld [vmem:[%s0 + $0xb4] sm:$0xf]
    %v93 = vld [vmem:[%s0 + $0xb8] sm:$0xf]
    %v94 = vld [vmem:[%s0 + $0xbc] sm:$0xf]
    %v95 = vld [vmem:[%s0 + $0xc0] sm:$0xf]
    %v96 = vld [vmem:[%s0 + $0xc4] sm:$0xf]
    %v97 = vld [vmem:[%s0 + $0xc8] sm:$0xf]
    %v98 = vld [vmem:[%s0 + $0xcc] sm:$0xf]
    %v99 = vld [vmem:[%s0 + $0xd0] sm:$0xf]
    %v100 = vld [vmem:[%s0 + $0xd4] sm:$0xf]
    %v101 = vld [vmem:[%s0 + $0xd8] sm:$0xf]
    %v102 = vld [vmem:[%s0 + $0xdc] sm:$0xf]
    %v103 = vld [vmem:[%s0 + $0xe0] sm:$0xf]
    %v104 = vld [vmem:[%s0 + $0xe4] sm:$0xf]
    %v105 = vld [vmem:[%s0 + $0xe8] sm:$0xf]
    %v106 = vld [vmem:[%s0 + $0xec] sm:$0xf]
    %v107 = vld [vmem:[%s0 + $0xf0] sm:$0xf]
    %v108 = vld [vmem:[%s0 + $0xf4] sm:$0xf]
    %v109 = vld [vmem:[%s0 + $0xf8] sm:$0xf]
    %v110 = vld [vmem:[%s0 + $0xfc] sm:$0xf]
    %v111 = vld [vmem:[%s0 + $0x100] sm:$0xf]
    %v112 = vld [vmem:[%s0 + $0x104] sm:$0xf]
    %v113 = vld [vmem:[%s0 + $0x108] sm:$0xf]
    %v114 = vld [vmem:[%s0 + $0x10c] sm:$0xf]
    %v115 = vld [vmem:[%s0 + $0x110] sm:$0xf]
    %v116 = vld [vmem:[%s0 + $0x114] sm:$0xf]
    %v117 = vld [vmem:[%s0 + $0x118] sm:$0xf]
    %v118 = vld [vmem:[%s0 + $0x11c] sm:$0xf]
    %v119 = vld [vmem:[%s0 + $0x120] sm:$0xf]
    %v120 = vld [vmem:[%s0 + $0x124] sm:$0xf]
    %v121 = vld [vmem:[%s0 + $0x128] sm:$0xf]
    %v122 = vld [vmem:[%s0 + $0x12c] sm:$0xf]
    %v123 = vld [vmem:[%s0 + $0x130] sm:$0xf]
    %v124 = vld [vmem:[%s0 + $0x134] sm:$0xf]
    %v125 = vld [vmem:[%s0 + $0x138] sm:$0xf]
    %v126 = vld [vmem:[%s0 + $0x13c] sm:$0xf]
    %v127 = vld [vmem:[%s0 + $0x140] sm:$0xf]
    %v128 = vld [vmem:[%s0 + $0x144] sm:$0xf]
    %v129 = vld [vmem:[%s0 + $0x148] sm:$0xf]
    %v130 = vld [vmem:[%s0 + $0x14c] sm:$0xf]
    %v131 = vld [vmem:[%s0 + $0x150] sm:$0xf]
    %v132 = vld [vmem:[%s0 + $0x154] sm:$0xf]
    %v133 = vld [vmem:[%s0 + $0x158] sm:$0xf]
    %v134 = vld [vmem:[%s0 + $0x15c] sm:$0xf]
    %v135 = vld [vmem:[%s0 + $0x160] sm:$0xf]
    %v136 = vld [vmem:[%s0 + $0x164] sm:$0xf]
    %v137 = vld [vmem:[%s0 + $0x168] sm:$0xf]
    %v138 = vld [vmem:[%s0 + $0x16c] sm:$0xf]
    %v139 = vld [vmem:[%s0 + $0x170] sm:$0xf]
    %v140 = vld [vmem:[%s0 + $0x174] sm:$0xf]
    %v141 = vld [vmem:[%s0 + $0x178] sm:$0xf]
    %v142 = vld [vmem:[%s0 + $0x17c] sm:$0xf]
    %v239 = vunpack.c.l.b16 %v47
    %v240 = vunpack.c.l.b16 %v48
    %v241 = vunpack.c.l.b16 %v49
    %v242 = vunpack.c.l.b16 %v50
    %v243 = vunpack.c.l.b16 %v51
    %v244 = vunpack.c.l.b16 %v52
    %v245 = vunpack.c.l.b16 %v53
    %v246 = vunpack.c.l.b16 %v54
    %v247 = vunpack.c.l.b16 %v55
    %v248 = vunpack.c.l.b16 %v56
    %v249 = vunpack.c.l.b16 %v57
    %v250 = vunpack.c.l.b16 %v58
    %v251 = vunpack.c.l.b16 %v59
    %v252 = vunpack.c.l.b16 %v60
    %v253 = vunpack.c.l.b16 %v61
    %v254 = vunpack.c.l.b16 %v62
    %v255 = vunpack.c.l.b16 %v63
    %v256 = vunpack.c.l.b16 %v64
    %v257 = vunpack.c.l.b16 %v65
    %v258 = vunpack.c.l.b16 %v66
    %v259 = vunpack.c.l.b16 %v67
    %v260 = vunpack.c.l.b16 %v68
    %v261 = vunpack.c.l.b16 %v69
    %v262 = vunpack.c.l.b16 %v70
    %v263 = vunpack.c.l.b16 %v71
    %v264 = vunpack.c.l.b16 %v72
    %v265 = vunpack.c.l.b16 %v73
    %v266 = vunpack.c.l.b16 %v74
    %v267 = vunpack.c.l.b16 %v75
    %v268 = vunpack.c.l.b16 %v76
    %v269 = vunpack.c.l.b16 %v77
    %v270 = vunpack.c.l.b16 %v78
    %v271 = vunpack.c.l.b16 %v79
    %v272 = vunpack.c.l.b16 %v80
    %v273 = vunpack.c.l.b16 %v81
    %v274 = vunpack.c.l.b16 %v82
    %v275 = vunpack.c.l.b16 %v83
    %v276 = vunpack.c.l.b16 %v84
    %v277 = vunpack.c.l.b16 %v85
    %v278 = vunpack.c.l.b16 %v86
    %v279 = vunpack.c.l.b16 %v87
    %v280 = vunpack.c.l.b16 %v88
    %v281 = vunpack.c.l.b16 %v89
    %v282 = vunpack.c.l.b16 %v90
    %v283 = vunpack.c.l.b16 %v91
    %v284 = vunpack.c.l.b16 %v92
    %v285 = vunpack.c.l.b16 %v93
    %v286 = vunpack.c.l.b16 %v94
    %v287 = vunpack.c.l.b16 %v95
    %v288 = vunpack.c.l.b16 %v96
    %v289 = vunpack.c.l.b16 %v97
    %v290 = vunpack.c.l.b16 %v98
    %v291 = vunpack.c.l.b16 %v99
    %v292 = vunpack.c.l.b16 %v100
    %v293 = vunpack.c.l.b16 %v101
    %v294 = vunpack.c.l.b16 %v102
    %v295 = vunpack.c.l.b16 %v103
    %v296 = vunpack.c.l.b16 %v104
    %v297 = vunpack.c.l.b16 %v105
    %v298 = vunpack.c.l.b16 %v106
    %v299 = vunpack.c.l.b16 %v107
    %v300 = vunpack.c.l.b16 %v108
    %v301 = vunpack.c.l.b16 %v109
    %v302 = vunpack.c.l.b16 %v110
    %v303 = vunpack.c.l.b16 %v111
    %v304 = vunpack.c.l.b16 %v112
    %v305 = vunpack.c.l.b16 %v113
    %v306 = vunpack.c.l.b16 %v114
    %v307 = vunpack.c.l.b16 %v115
    %v308 = vunpack.c.l.b16 %v116
    %v309 = vunpack.c.l.b16 %v117
    %v310 = vunpack.c.l.b16 %v118
    %v311 = vunpack.c.l.b16 %v119
    %v312 = vunpack.c.l.b16 %v120
    %v313 = vunpack.c.l.b16 %v121
    %v314 = vunpack.c.l.b16 %v122
    %v315 = vunpack.c.l.b16 %v123
    %v316 = vunpack.c.l.b16 %v124
    %v317 = vunpack.c.l.b16 %v125
    %v318 = vunpack.c.l.b16 %v126
    %v319 = vunpack.c.l.b16 %v127
    %v320 = vunpack.c.l.b16 %v128
    %v321 = vunpack.c.l.b16 %v129
    %v322 = vunpack.c.l.b16 %v130
    %v323 = vunpack.c.l.b16 %v131
    %v324 = vunpack.c.l.b16 %v132
    %v325 = vunpack.c.l.b16 %v133
    %v326 = vunpack.c.l.b16 %v134
    %v327 = vunpack.c.l.b16 %v135
    %v328 = vunpack.c.l.b16 %v136
    %v329 = vunpack.c.l.b16 %v137
    %v330 = vunpack.c.l.b16 %v138
    %v331 = vunpack.c.l.b16 %v139
    %v332 = vunpack.c.l.b16 %v140
    %v333 = vunpack.c.l.b16 %v141
    %v334 = vunpack.c.l.b16 %v142
    %v335 = vpack.c.b16 %v240, %v239
    %v336 = vpack.c.b16 %v242, %v241
    %v337 = vpack.c.b16 %v244, %v243
    %v338 = vpack.c.b16 %v246, %v245
    %v339 = vpack.c.b16 %v248, %v247
    %v340 = vpack.c.b16 %v250, %v249
    %v341 = vpack.c.b16 %v252, %v251
    %v342 = vpack.c.b16 %v254, %v253
    %v343 = vpack.c.b16 %v256, %v255
    %v344 = vpack.c.b16 %v258, %v257
    %v345 = vpack.c.b16 %v260, %v259
    %v346 = vpack.c.b16 %v262, %v261
    %v347 = vpack.c.b16 %v264, %v263
    %v348 = vpack.c.b16 %v266, %v265
    %v349 = vpack.c.b16 %v268, %v267
    %v350 = vpack.c.b16 %v270, %v269
    %v351 = vpack.c.b16 %v272, %v271
    %v352 = vpack.c.b16 %v274, %v273
    %v353 = vpack.c.b16 %v276, %v275
    %v354 = vpack.c.b16 %v278, %v277
    %v355 = vpack.c.b16 %v280, %v279
    %v356 = vpack.c.b16 %v282, %v281
    %v357 = vpack.c.b16 %v284, %v283
    %v358 = vpack.c.b16 %v286, %v285
    %v359 = vpack.c.b16 %v288, %v287
    %v360 = vpack.c.b16 %v290, %v289
    %v361 = vpack.c.b16 %v292, %v291
    %v362 = vpack.c.b16 %v294, %v293
    %v363 = vpack.c.b16 %v296, %v295
    %v364 = vpack.c.b16 %v298, %v297
    %v365 = vpack.c.b16 %v300, %v299
    %v366 = vpack.c.b16 %v302, %v301
    %v367 = vpack.c.b16 %v304, %v303
    %v368 = vpack.c.b16 %v306, %v305
    %v369 = vpack.c.b16 %v308, %v307
    %v370 = vpack.c.b16 %v310, %v309
    %v371 = vpack.c.b16 %v312, %v311
    %v372 = vpack.c.b16 %v314, %v313
    %v373 = vpack.c.b16 %v316, %v315
    %v374 = vpack.c.b16 %v318, %v317
    %v375 = vpack.c.b16 %v320, %v319
    %v376 = vpack.c.b16 %v322, %v321
    %v377 = vpack.c.b16 %v324, %v323
    %v378 = vpack.c.b16 %v326, %v325
    %v379 = vpack.c.b16 %v328, %v327
    %v380 = vpack.c.b16 %v330, %v329
    %v381 = vpack.c.b16 %v332, %v331
    %v382 = vpack.c.b16 %v334, %v333
    %vm431 = vcmask 64512
    %432 = vst.msk [vmem:[#allocation2] sm:$0xff] %vm431, %v335
    %433 = vst.msk [vmem:[#allocation2 + $0x8] sm:$0xff] %vm431, %v336
    %434 = vst.msk [vmem:[#allocation2 + $0x10] sm:$0xff] %vm431, %v337
    %435 = vst.msk [vmem:[#allocation2 + $0x18] sm:$0xff] %vm431, %v338
    %436 = vst.msk [vmem:[#allocation2 + $0x20] sm:$0xff] %vm431, %v339
    %437 = vst.msk [vmem:[#allocation2 + $0x28] sm:$0xff] %vm431, %v340
    %438 = vst.msk [vmem:[#allocation2 + $0x30] sm:$0xff] %vm431, %v341
    %439 = vst.msk [vmem:[#allocation2 + $0x38] sm:$0xff] %vm431, %v342
    %440 = vst.msk [vmem:[#allocation2 + $0x40] sm:$0xff] %vm431, %v343
    %441 = vst.msk [vmem:[#allocation2 + $0x48] sm:$0xff] %vm431, %v344
    %442 = vst.msk [vmem:[#allocation2 + $0x50] sm:$0xff] %vm431, %v345
    %443 = vst.msk [vmem:[#allocation2 + $0x58] sm:$0xff] %vm431, %v346
    %444 = vst.msk [vmem:[#allocation2 + $0x60] sm:$0xff] %vm431, %v347
    %445 = vst.msk [vmem:[#allocation2 + $0x68] sm:$0xff] %vm431, %v348
    %446 = vst.msk [vmem:[#allocation2 + $0x70] sm:$0xff] %vm431, %v349
    %447 = vst.msk [vmem:[#allocation2 + $0x78] sm:$0xff] %vm431, %v350
    %448 = vst.msk [vmem:[#allocation2 + $0x80] sm:$0xff] %vm431, %v351
    %449 = vst.msk [vmem:[#allocation2 + $0x88] sm:$0xff] %vm431, %v352
    %450 = vst.msk [vmem:[#allocation2 + $0x90] sm:$0xff] %vm431, %v353
    %451 = vst.msk [vmem:[#allocation2 + $0x98] sm:$0xff] %vm431, %v354
    %452 = vst.msk [vmem:[#allocation2 + $0xa0] sm:$0xff] %vm431, %v355
    %453 = vst.msk [vmem:[#allocation2 + $0xa8] sm:$0xff] %vm431, %v356
    %454 = vst.msk [vmem:[#allocation2 + $0xb0] sm:$0xff] %vm431, %v357
    %455 = vst.msk [vmem:[#allocation2 + $0xb8] sm:$0xff] %vm431, %v358
    %456 = vst.msk [vmem:[#allocation2 + $0xc0] sm:$0xff] %vm431, %v359
    %457 = vst.msk [vmem:[#allocation2 + $0xc8] sm:$0xff] %vm431, %v360
    %458 = vst.msk [vmem:[#allocation2 + $0xd0] sm:$0xff] %vm431, %v361
    %459 = vst.msk [vmem:[#allocation2 + $0xd8] sm:$0xff] %vm431, %v362
    %460 = vst.msk [vmem:[#allocation2 + $0xe0] sm:$0xff] %vm431, %v363
    %461 = vst.msk [vmem:[#allocation2 + $0xe8] sm:$0xff] %vm431, %v364
    %462 = vst.msk [vmem:[#allocation2 + $0xf0] sm:$0xff] %vm431, %v365
    %463 = vst.msk [vmem:[#allocation2 + $0xf8] sm:$0xff] %vm431, %v366
    %464 = vst.msk [vmem:[#allocation2 + $0x100] sm:$0xff] %vm431, %v367
    %465 = vst.msk [vmem:[#allocation2 + $0x108] sm:$0xff] %vm431, %v368
    %466 = vst.msk [vmem:[#allocation2 + $0x110] sm:$0xff] %vm431, %v369
    %467 = vst.msk [vmem:[#allocation2 + $0x118] sm:$0xff] %vm431, %v370
    %468 = vst.msk [vmem:[#allocation2 + $0x120] sm:$0xff] %vm431, %v371
    %469 = vst.msk [vmem:[#allocation2 + $0x128] sm:$0xff] %vm431, %v372
    %470 = vst.msk [vmem:[#allocation2 + $0x130] sm:$0xff] %vm431, %v373
    %471 = vst.msk [vmem:[#allocation2 + $0x138] sm:$0xff] %vm431, %v374
    %472 = vst.msk [vmem:[#allocation2 + $0x140] sm:$0xff] %vm431, %v375
    %473 = vst.msk [vmem:[#allocation2 + $0x148] sm:$0xff] %vm431, %v376
    %474 = vst.msk [vmem:[#allocation2 + $0x150] sm:$0xff] %vm431, %v377
    %475 = vst.msk [vmem:[#allocation2 + $0x158] sm:$0xff] %vm431, %v378
    %476 = vst.msk [vmem:[#allocation2 + $0x160] sm:$0xff] %vm431, %v379
    %477 = vst.msk [vmem:[#allocation2 + $0x168] sm:$0xff] %vm431, %v380
    %478 = vst.msk [vmem:[#allocation2 + $0x170] sm:$0xff] %vm431, %v381
    %479 = vst.msk [vmem:[#allocation2 + $0x178] sm:$0xff] %vm431, %v382
    %480 = vst.msk [vmem:[#allocation2 + $0x180] sm:$0xff] %vm431, 0
    %481 = vst.msk [vmem:[#allocation2 + $0x188] sm:$0xff] %vm431, 0
    %v482 = vld [vmem:[#allocation2] sm:$0xff]
    %v483 = vld [vmem:[#allocation2 + $0x8] sm:$0xff]
    %v484 = vld [vmem:[#allocation2 + $0x10] sm:$0xff]
    %v485 = vld [vmem:[#allocation2 + $0x18] sm:$0xff]
    %v486 = vld [vmem:[#allocation2 + $0x20] sm:$0xff]
    %v487 = vld [vmem:[#allocation2 + $0x28] sm:$0xff]
    %v488 = vld [vmem:[#allocation2 + $0x30] sm:$0xff]
    %v489 = vld [vmem:[#allocation2 + $0x38] sm:$0xff]
    %v490 = vld [vmem:[#allocation2 + $0x40] sm:$0xff]
    %v491 = vld [vmem:[#allocation2 + $0x48] sm:$0xff]
    %v492 = vld [vmem:[#allocation2 + $0x50] sm:$0xff]
    %v493 = vld [vmem:[#allocation2 + $0x58] sm:$0xff]
    %v494 = vld [vmem:[#allocation2 + $0x60] sm:$0xff]
    %v495 = vld [vmem:[#allocation2 + $0x68] sm:$0xff]
    %v496 = vld [vmem:[#allocation2 + $0x70] sm:$0xff]
    %v497 = vld [vmem:[#allocation2 + $0x78] sm:$0xff]
    %v498 = vld [vmem:[#allocation2 + $0x80] sm:$0xff]
    %v499 = vld [vmem:[#allocation2 + $0x88] sm:$0xff]
    %v500 = vld [vmem:[#allocation2 + $0x90] sm:$0xff]
    %v501 = vld [vmem:[#allocation2 + $0x98] sm:$0xff]
    %v502 = vld [vmem:[#allocation2 + $0xa0] sm:$0xff]
    %v503 = vld [vmem:[#allocation2 + $0xa8] sm:$0xff]
    %v504 = vld [vmem:[#allocation2 + $0xb0] sm:$0xff]
    %v505 = vld [vmem:[#allocation2 + $0xb8] sm:$0xff]
    %v506 = vld [vmem:[#allocation2 + $0xc0] sm:$0xff]
    %v507 = vld [vmem:[#allocation2 + $0xc8] sm:$0xff]
    %v508 = vld [vmem:[#allocation2 + $0xd0] sm:$0xff]
    %v509 = vld [vmem:[#allocation2 + $0xd8] sm:$0xff]
    %v510 = vld [vmem:[#allocation2 + $0xe0] sm:$0xff]
    %v511 = vld [vmem:[#allocation2 + $0xe8] sm:$0xff]
    %v512 = vld [vmem:[#allocation2 + $0xf0] sm:$0xff]
    %v513 = vld [vmem:[#allocation2 + $0xf8] sm:$0xff]
    %v514 = vld [vmem:[#allocation2 + $0x100] sm:$0xff]
    %v515 = vld [vmem:[#allocation2 + $0x108] sm:$0xff]
    %v516 = vld [vmem:[#allocation2 + $0x110] sm:$0xff]
    %v517 = vld [vmem:[#allocation2 + $0x118] sm:$0xff]
    %v518 = vld [vmem:[#allocation2 + $0x120] sm:$0xff]
    %v519 = vld [vmem:[#allocation2 + $0x128] sm:$0xff]
    %v520 = vld [vmem:[#allocation2 + $0x130] sm:$0xff]
    %v521 = vld [vmem:[#allocation2 + $0x138] sm:$0xff]
    %v522 = vld [vmem:[#allocation2 + $0x140] sm:$0xff]
    %v523 = vld [vmem:[#allocation2 + $0x148] sm:$0xff]
    %v524 = vld [vmem:[#allocation2 + $0x150] sm:$0xff]
    %v525 = vld [vmem:[#allocation2 + $0x158] sm:$0xff]
    %v526 = vld [vmem:[#allocation2 + $0x160] sm:$0xff]
    %v527 = vld [vmem:[#allocation2 + $0x168] sm:$0xff]
    %v528 = vld [vmem:[#allocation2 + $0x170] sm:$0xff]
    %v529 = vld [vmem:[#allocation2 + $0x178] sm:$0xff]
    %530 = vst.msk [vmem:[#allocation4] sm:$0xff] %vm431, %v482
    %531 = vst.msk [vmem:[#allocation4 + $0x18] sm:$0xff] %vm431, %v483
    %532 = vst.msk [vmem:[#allocation4 + $0x30] sm:$0xff] %vm431, %v484
    %533 = vst.msk [vmem:[#allocation4 + $0x48] sm:$0xff] %vm431, %v485
    %534 = vst.msk [vmem:[#allocation4 + $0x60] sm:$0xff] %vm431, %v486
    %535 = vst.msk [vmem:[#allocation4 + $0x78] sm:$0xff] %vm431, %v487
    %536 = vst.msk [vmem:[#allocation4 + $0x90] sm:$0xff] %vm431, %v488
    %537 = vst.msk [vmem:[#allocation4 + $0xa8] sm:$0xff] %vm431, %v489
    %538 = vst.msk [vmem:[#allocation4 + $0xc0] sm:$0xff] %vm431, %v490
    %539 = vst.msk [vmem:[#allocation4 + $0xd8] sm:$0xff] %vm431, %v491
    %540 = vst.msk [vmem:[#allocation4 + $0xf0] sm:$0xff] %vm431, %v492
    %541 = vst.msk [vmem:[#allocation4 + $0x108] sm:$0xff] %vm431, %v493
    %542 = vst.msk [vmem:[#allocation4 + $0x120] sm:$0xff] %vm431, %v494
    %543 = vst.msk [vmem:[#allocation4 + $0x138] sm:$0xff] %vm431, %v495
    %544 = vst.msk [vmem:[#allocation4 + $0x150] sm:$0xff] %vm431, %v496
    %545 = vst.msk [vmem:[#allocation4 + $0x168] sm:$0xff] %vm431, %v497
    %546 = vst.msk [vmem:[#allocation4 + $0x180] sm:$0xff] %vm431, %v498
    %547 = vst.msk [vmem:[#allocation4 + $0x198] sm:$0xff] %vm431, %v499
    %548 = vst.msk [vmem:[#allocation4 + $0x1b0] sm:$0xff] %vm431, %v500
    %549 = vst.msk [vmem:[#allocation4 + $0x1c8] sm:$0xff] %vm431, %v501
    %550 = vst.msk [vmem:[#allocation4 + $0x1e0] sm:$0xff] %vm431, %v502
    %551 = vst.msk [vmem:[#allocation4 + $0x1f8] sm:$0xff] %vm431, %v503
    %552 = vst.msk [vmem:[#allocation4 + $0x210] sm:$0xff] %vm431, %v504
    %553 = vst.msk [vmem:[#allocation4 + $0x228] sm:$0xff] %vm431, %v505
    %554 = vst.msk [vmem:[#allocation4 + $0x240] sm:$0xff] %vm431, %v506
    %555 = vst.msk [vmem:[#allocation4 + $0x258] sm:$0xff] %vm431, %v507
    %556 = vst.msk [vmem:[#allocation4 + $0x270] sm:$0xff] %vm431, %v508
    %557 = vst.msk [vmem:[#allocation4 + $0x288] sm:$0xff] %vm431, %v509
    %558 = vst.msk [vmem:[#allocation4 + $0x2a0] sm:$0xff] %vm431, %v510
    %559 = vst.msk [vmem:[#allocation4 + $0x2b8] sm:$0xff] %vm431, %v511
    %560 = vst.msk [vmem:[#allocation4 + $0x2d0] sm:$0xff] %vm431, %v512
    %561 = vst.msk [vmem:[#allocation4 + $0x2e8] sm:$0xff] %vm431, %v513
    %562 = vst.msk [vmem:[#allocation4 + $0x300] sm:$0xff] %vm431, %v514
    %563 = vst.msk [vmem:[#allocation4 + $0x318] sm:$0xff] %vm431, %v515
    %564 = vst.msk [vmem:[#allocation4 + $0x330] sm:$0xff] %vm431, %v516
    %565 = vst.msk [vmem:[#allocation4 + $0x348] sm:$0xff] %vm431, %v517
    %566 = vst.msk [vmem:[#allocation4 + $0x360] sm:$0xff] %vm431, %v518
    %567 = vst.msk [vmem:[#allocation4 + $0x378] sm:$0xff] %vm431, %v519
    %568 = vst.msk [vmem:[#allocation4 + $0x390] sm:$0xff] %vm431, %v520
    %569 = vst.msk [vmem:[#allocation4 + $0x3a8] sm:$0xff] %vm431, %v521
    %570 = vst.msk [vmem:[#allocation4 + $0x3c0] sm:$0xff] %vm431, %v522
    %571 = vst.msk [vmem:[#allocation4 + $0x3d8] sm:$0xff] %vm431, %v523
    %572 = vst.msk [vmem:[#allocation4 + $0x3f0] sm:$0xff] %vm431, %v524
    %573 = vst.msk [vmem:[#allocation4 + $0x408] sm:$0xff] %vm431, %v525
    %574 = vst.msk [vmem:[#allocation4 + $0x420] sm:$0xff] %vm431, %v526
    %575 = vst.msk [vmem:[#allocation4 + $0x438] sm:$0xff] %vm431, %v527
    %576 = vst.msk [vmem:[#allocation4 + $0x450] sm:$0xff] %vm431, %v528
    %577 = vst.msk [vmem:[#allocation4 + $0x468] sm:$0xff] %vm431, %v529
    %v578 = vld [vmem:[#allocation2] sm:$0xff]
    %v579 = vld [vmem:[#allocation2 + $0x8] sm:$0xff]
    %v580 = vld [vmem:[#allocation2 + $0x10] sm:$0xff]
    %v581 = vld [vmem:[#allocation2 + $0x18] sm:$0xff]
    %v582 = vld [vmem:[#allocation2 + $0x20] sm:$0xff]
    %v583 = vld [vmem:[#allocation2 + $0x28] sm:$0xff]
    %v584 = vld [vmem:[#allocation2 + $0x30] sm:$0xff]
    %v585 = vld [vmem:[#allocation2 + $0x38] sm:$0xff]
    %v586 = vld [vmem:[#allocation2 + $0x40] sm:$0xff]
    %v587 = vld [vmem:[#allocation2 + $0x48] sm:$0xff]
    %v588 = vld [vmem:[#allocation2 + $0x50] sm:$0xff]
    %v589 = vld [vmem:[#allocation2 + $0x58] sm:$0xff]
    %v590 = vld [vmem:[#allocation2 + $0x60] sm:$0xff]
    %v591 = vld [vmem:[#allocation2 + $0x68] sm:$0xff]
    %v592 = vld [vmem:[#allocation2 + $0x70] sm:$0xff]
    %v593 = vld [vmem:[#allocation2 + $0x78] sm:$0xff]
    %v594 = vld [vmem:[#allocation2 + $0x80] sm:$0xff]
    %v595 = vld [vmem:[#allocation2 + $0x88] sm:$0xff]
    %v596 = vld [vmem:[#allocation2 + $0x90] sm:$0xff]
    %v597 = vld [vmem:[#allocation2 + $0x98] sm:$0xff]
    %v598 = vld [vmem:[#allocation2 + $0xa0] sm:$0xff]
    %v599 = vld [vmem:[#allocation2 + $0xa8] sm:$0xff]
    %v600 = vld [vmem:[#allocation2 + $0xb0] sm:$0xff]
    %v601 = vld [vmem:[#allocation2 + $0xb8] sm:$0xff]
    %v602 = vld [vmem:[#allocation2 + $0xc0] sm:$0xff]
    %v603 = vld [vmem:[#allocation2 + $0xc8] sm:$0xff]
    %v604 = vld [vmem:[#allocation2 + $0xd0] sm:$0xff]
    %v605 = vld [vmem:[#allocation2 + $0xd8] sm:$0xff]
    %v606 = vld [vmem:[#allocation2 + $0xe0] sm:$0xff]
    %v607 = vld [vmem:[#allocation2 + $0xe8] sm:$0xff]
    %v608 = vld [vmem:[#allocation2 + $0xf0] sm:$0xff]
    %v609 = vld [vmem:[#allocation2 + $0xf8] sm:$0xff]
    %v610 = vld [vmem:[#allocation2 + $0x100] sm:$0xff]
    %v611 = vld [vmem:[#allocation2 + $0x108] sm:$0xff]
    %v612 = vld [vmem:[#allocation2 + $0x110] sm:$0xff]
    %v613 = vld [vmem:[#allocation2 + $0x118] sm:$0xff]
    %v614 = vld [vmem:[#allocation2 + $0x120] sm:$0xff]
    %v615 = vld [vmem:[#allocation2 + $0x128] sm:$0xff]
    %v616 = vld [vmem:[#allocation2 + $0x130] sm:$0xff]
    %v617 = vld [vmem:[#allocation2 + $0x138] sm:$0xff]
    %v618 = vld [vmem:[#allocation2 + $0x140] sm:$0xff]
    %v619 = vld [vmem:[#allocation2 + $0x148] sm:$0xff]
    %v620 = vld [vmem:[#allocation2 + $0x150] sm:$0xff]
    %v621 = vld [vmem:[#allocation2 + $0x158] sm:$0xff]
    %v622 = vld [vmem:[#allocation2 + $0x160] sm:$0xff]
    %v623 = vld [vmem:[#allocation2 + $0x168] sm:$0xff]
    %v624 = vld [vmem:[#allocation2 + $0x170] sm:$0xff]
    %v625 = vld [vmem:[#allocation2 + $0x178] sm:$0xff]
    %v626 = vld [vmem:[#allocation2 + $0x180] sm:$0x1]
    %vm627 = vsmask.f32 7424
    %v629 = vshrl.u32 %v578, 16
    %v631 = vshll.u32 %v578, 16
    %v633 = vrot.slane %v631, 1
    %v634 = vor.u32 %v629, %v633
    %v636 = vshll.u32 %v579, 16
    %v638 = vrot.slane %v636, 1
    %v639 = vsel %vm627, %v634, %v638
    %v640 = vshrl.u32 %v579, 16
    %v642 = vor.u32 %v640, %v638
    %v644 = vshll.u32 %v580, 16
    %v646 = vrot.slane %v644, 1
    %v647 = vsel %vm627, %v642, %v646
    %v648 = vshrl.u32 %v580, 16
    %v650 = vor.u32 %v648, %v646
    %v652 = vshll.u32 %v581, 16
    %v654 = vrot.slane %v652, 1
    %v655 = vsel %vm627, %v650, %v654
    %v656 = vshrl.u32 %v581, 16
    %v658 = vor.u32 %v656, %v654
    %v660 = vshll.u32 %v582, 16
    %v662 = vrot.slane %v660, 1
    %v663 = vsel %vm627, %v658, %v662
    %v664 = vshrl.u32 %v582, 16
    %v666 = vor.u32 %v664, %v662
    %v668 = vshll.u32 %v583, 16
    %v670 = vrot.slane %v668, 1
    %v671 = vsel %vm627, %v666, %v670
    %v672 = vshrl.u32 %v583, 16
    %v674 = vor.u32 %v672, %v670
    %v676 = vshll.u32 %v584, 16
    %v678 = vrot.slane %v676, 1
    %v679 = vsel %vm627, %v674, %v678
    %v680 = vshrl.u32 %v584, 16
    %v682 = vor.u32 %v680, %v678
    %v684 = vshll.u32 %v585, 16
    %v686 = vrot.slane %v684, 1
    %v687 = vsel %vm627, %v682, %v686
    %v688 = vshrl.u32 %v585, 16
    %v690 = vor.u32 %v688, %v686
    %v692 = vshll.u32 %v586, 16
    %v694 = vrot.slane %v692, 1
    %v695 = vsel %vm627, %v690, %v694
    %v696 = vshrl.u32 %v586, 16
    %v698 = vor.u32 %v696, %v694
    %v700 = vshll.u32 %v587, 16
    %v702 = vrot.slane %v700, 1
    %v703 = vsel %vm627, %v698, %v702
    %v704 = vshrl.u32 %v587, 16
    %v706 = vor.u32 %v704, %v702
    %v708 = vshll.u32 %v588, 16
    %v710 = vrot.slane %v708, 1
    %v711 = vsel %vm627, %v706, %v710
    %v712 = vshrl.u32 %v588, 16
    %v714 = vor.u32 %v712, %v710
    %v716 = vshll.u32 %v589, 16
    %v718 = vrot.slane %v716, 1
    %v719 = vsel %vm627, %v714, %v718
    %v720 = vshrl.u32 %v589, 16
    %v722 = vor.u32 %v720, %v718
    %v724 = vshll.u32 %v590, 16
    %v726 = vrot.slane %v724, 1
    %v727 = vsel %vm627, %v722, %v726
    %v728 = vshrl.u32 %v590, 16
    %v730 = vor.u32 %v728, %v726
    %v732 = vshll.u32 %v591, 16
    %v734 = vrot.slane %v732, 1
    %v735 = vsel %vm627, %v730, %v734
    %v736 = vshrl.u32 %v591, 16
    %v738 = vor.u32 %v736, %v734
    %v740 = vshll.u32 %v592, 16
    %v742 = vrot.slane %v740, 1
    %v743 = vsel %vm627, %v738, %v742
    %v744 = vshrl.u32 %v592, 16
    %v746 = vor.u32 %v744, %v742
    %v748 = vshll.u32 %v593, 16
    %v750 = vrot.slane %v748, 1
    %v751 = vsel %vm627, %v746, %v750
    %v752 = vshrl.u32 %v593, 16
    %v754 = vor.u32 %v752, %v750
    %v756 = vshll.u32 %v594, 16
    %v758 = vrot.slane %v756, 1
    %v759 = vsel %vm627, %v754, %v758
    %v760 = vshrl.u32 %v594, 16
    %v762 = vor.u32 %v760, %v758
    %v764 = vshll.u32 %v595, 16
    %v766 = vrot.slane %v764, 1
    %v767 = vsel %vm627, %v762, %v766
    %v768 = vshrl.u32 %v595, 16
    %v770 = vor.u32 %v768, %v766
    %v772 = vshll.u32 %v596, 16
    %v774 = vrot.slane %v772, 1
    %v775 = vsel %vm627, %v770, %v774
    %v776 = vshrl.u32 %v596, 16
    %v778 = vor.u32 %v776, %v774
    %v780 = vshll.u32 %v597, 16
    %v782 = vrot.slane %v780, 1
    %v783 = vsel %vm627, %v778, %v782
    %v784 = vshrl.u32 %v597, 16
    %v786 = vor.u32 %v784, %v782
    %v788 = vshll.u32 %v598, 16
    %v790 = vrot.slane %v788, 1
    %v791 = vsel %vm627, %v786, %v790
    %v792 = vshrl.u32 %v598, 16
    %v794 = vor.u32 %v792, %v790
    %v796 = vshll.u32 %v599, 16
    %v798 = vrot.slane %v796, 1
    %v799 = vsel %vm627, %v794, %v798
    %v800 = vshrl.u32 %v599, 16
    %v802 = vor.u32 %v800, %v798
    %v804 = vshll.u32 %v600, 16
    %v806 = vrot.slane %v804, 1
    %v807 = vsel %vm627, %v802, %v806
    %v808 = vshrl.u32 %v600, 16
    %v810 = vor.u32 %v808, %v806
    %v812 = vshll.u32 %v601, 16
    %v814 = vrot.slane %v812, 1
    %v815 = vsel %vm627, %v810, %v814
    %v816 = vshrl.u32 %v601, 16
    %v818 = vor.u32 %v816, %v814
    %v820 = vshll.u32 %v602, 16
    %v822 = vrot.slane %v820, 1
    %v823 = vsel %vm627, %v818, %v822
    %v824 = vshrl.u32 %v602, 16
    %v826 = vor.u32 %v824, %v822
    %v828 = vshll.u32 %v603, 16
    %v830 = vrot.slane %v828, 1
    %v831 = vsel %vm627, %v826, %v830
    %v832 = vshrl.u32 %v603, 16
    %v834 = vor.u32 %v832, %v830
    %v836 = vshll.u32 %v604, 16
    %v838 = vrot.slane %v836, 1
    %v839 = vsel %vm627, %v834, %v838
    %v840 = vshrl.u32 %v604, 16
    %v842 = vor.u32 %v840, %v838
    %v844 = vshll.u32 %v605, 16
    %v846 = vrot.slane %v844, 1
    %v847 = vsel %vm627, %v842, %v846
    %v848 = vshrl.u32 %v605, 16
    %v850 = vor.u32 %v848, %v846
    %v852 = vshll.u32 %v606, 16
    %v854 = vrot.slane %v852, 1
    %v855 = vsel %vm627, %v850, %v854
    %v856 = vshrl.u32 %v606, 16
    %v858 = vor.u32 %v856, %v854
    %v860 = vshll.u32 %v607, 16
    %v862 = vrot.slane %v860, 1
    %v863 = vsel %vm627, %v858, %v862
    %v864 = vshrl.u32 %v607, 16
    %v866 = vor.u32 %v864, %v862
    %v868 = vshll.u32 %v608, 16
    %v870 = vrot.slane %v868, 1
    %v871 = vsel %vm627, %v866, %v870
    %v872 = vshrl.u32 %v608, 16
    %v874 = vor.u32 %v872, %v870
    %v876 = vshll.u32 %v609, 16
    %v878 = vrot.slane %v876, 1
    %v879 = vsel %vm627, %v874, %v878
    %v880 = vshrl.u32 %v609, 16
    %v882 = vor.u32 %v880, %v878
    %v884 = vshll.u32 %v610, 16
    %v886 = vrot.slane %v884, 1
    %v887 = vsel %vm627, %v882, %v886
    %v888 = vshrl.u32 %v610, 16
    %v890 = vor.u32 %v888, %v886
    %v892 = vshll.u32 %v611, 16
    %v894 = vrot.slane %v892, 1
    %v895 = vsel %vm627, %v890, %v894
    %v896 = vshrl.u32 %v611, 16
    %v898 = vor.u32 %v896, %v894
    %v900 = vshll.u32 %v612, 16
    %v902 = vrot.slane %v900, 1
    %v903 = vsel %vm627, %v898, %v902
    %v904 = vshrl.u32 %v612, 16
    %v906 = vor.u32 %v904, %v902
    %v908 = vshll.u32 %v613, 16
    %v910 = vrot.slane %v908, 1
    %v911 = vsel %vm627, %v906, %v910
    %v912 = vshrl.u32 %v613, 16
    %v914 = vor.u32 %v912, %v910
    %v916 = vshll.u32 %v614, 16
    %v918 = vrot.slane %v916, 1
    %v919 = vsel %vm627, %v914, %v918
    %v920 = vshrl.u32 %v614, 16
    %v922 = vor.u32 %v920, %v918
    %v924 = vshll.u32 %v615, 16
    %v926 = vrot.slane %v924, 1
    %v927 = vsel %vm627, %v922, %v926
    %v928 = vshrl.u32 %v615, 16
    %v930 = vor.u32 %v928, %v926
    %v932 = vshll.u32 %v616, 16
    %v934 = vrot.slane %v932, 1
    %v935 = vsel %vm627, %v930, %v934
    %v936 = vshrl.u32 %v616, 16
    %v938 = vor.u32 %v936, %v934
    %v940 = vshll.u32 %v617, 16
    %v942 = vrot.slane %v940, 1
    %v943 = vsel %vm627, %v938, %v942
    %v944 = vshrl.u32 %v617, 16
    %v946 = vor.u32 %v944, %v942
    %v948 = vshll.u32 %v618, 16
    %v950 = vrot.slane %v948, 1
    %v951 = vsel %vm627, %v946, %v950
    %v952 = vshrl.u32 %v618, 16
    %v954 = vor.u32 %v952, %v950
    %v956 = vshll.u32 %v619, 16
    %v958 = vrot.slane %v956, 1
    %v959 = vsel %vm627, %v954, %v958
    %v960 = vshrl.u32 %v619, 16
    %v962 = vor.u32 %v960, %v958
    %v964 = vshll.u32 %v620, 16
    %v966 = vrot.slane %v964, 1
    %v967 = vsel %vm627, %v962, %v966
    %v968 = vshrl.u32 %v620, 16
    %v970 = vor.u32 %v968, %v966
    %v972 = vshll.u32 %v621, 16
    %v974 = vrot.slane %v972, 1
    %v975 = vsel %vm627, %v970, %v974
    %v976 = vshrl.u32 %v621, 16
    %v978 = vor.u32 %v976, %v974
    %v980 = vshll.u32 %v622, 16
    %v982 = vrot.slane %v980, 1
    %v983 = vsel %vm627, %v978, %v982
    %v984 = vshrl.u32 %v622, 16
    %v986 = vor.u32 %v984, %v982
    %v988 = vshll.u32 %v623, 16
    %v990 = vrot.slane %v988, 1
    %v991 = vsel %vm627, %v986, %v990
    %v992 = vshrl.u32 %v623, 16
    %v994 = vor.u32 %v992, %v990
    %v996 = vshll.u32 %v624, 16
    %v998 = vrot.slane %v996, 1
    %v999 = vsel %vm627, %v994, %v998
    %v1000 = vshrl.u32 %v624, 16
    %v1002 = vor.u32 %v1000, %v998
    %v1004 = vshll.u32 %v625, 16
    %v1006 = vrot.slane %v1004, 1
    %v1007 = vsel %vm627, %v1002, %v1006
    %v1008 = vshrl.u32 %v625, 16
    %v1010 = vor.u32 %v1008, %v1006
    %v1012 = vshll.u32 %v626, 16
    %v1014 = vrot.slane %v1012, 1
    %v1015 = vsel %vm627, %v1010, %v1014
    %1016 = vrot.lane.b32.xlu0 %v639, 8
    %v1017 = vpop.permute.xlu0 %1016
    %1018 = vrot.lane.b32.xlu0 %v647, 8
    %v1019 = vpop.permute.xlu0 %1018
    %1020 = vrot.lane.b32.xlu0 %v655, 8
    %v1021 = vpop.permute.xlu0 %1020
    %1022 = vrot.lane.b32.xlu0 %v663, 8
    %v1023 = vpop.permute.xlu0 %1022
    %1024 = vrot.lane.b32.xlu0 %v671, 8
    %v1025 = vpop.permute.xlu0 %1024
    %1026 = vrot.lane.b32.xlu0 %v679, 8
    %v1027 = vpop.permute.xlu0 %1026
    %1028 = vrot.lane.b32.xlu0 %v687, 8
    %v1029 = vpop.permute.xlu0 %1028
    %1030 = vrot.lane.b32.xlu0 %v695, 8
    %v1031 = vpop.permute.xlu0 %1030
    %1032 = vrot.lane.b32.xlu0 %v703, 8
    %v1033 = vpop.permute.xlu0 %1032
    %1034 = vrot.lane.b32.xlu0 %v711, 8
    %v1035 = vpop.permute.xlu0 %1034
    %1036 = vrot.lane.b32.xlu0 %v719, 8
    %v1037 = vpop.permute.xlu0 %1036
    %1038 = vrot.lane.b32.xlu0 %v727, 8
    %v1039 = vpop.permute.xlu0 %1038
    %1040 = vrot.lane.b32.xlu0 %v735, 8
    %v1041 = vpop.permute.xlu0 %1040
    %1042 = vrot.lane.b32.xlu0 %v743, 8
    %v1043 = vpop.permute.xlu0 %1042
    %1044 = vrot.lane.b32.xlu0 %v751, 8
    %v1045 = vpop.permute.xlu0 %1044
    %1046 = vrot.lane.b32.xlu0 %v759, 8
    %v1047 = vpop.permute.xlu0 %1046
    %1048 = vrot.lane.b32.xlu0 %v767, 8
    %v1049 = vpop.permute.xlu0 %1048
    %1050 = vrot.lane.b32.xlu0 %v775, 8
    %v1051 = vpop.permute.xlu0 %1050
    %1052 = vrot.lane.b32.xlu0 %v783, 8
    %v1053 = vpop.permute.xlu0 %1052
    %1054 = vrot.lane.b32.xlu0 %v791, 8
    %v1055 = vpop.permute.xlu0 %1054
    %1056 = vrot.lane.b32.xlu0 %v799, 8
    %v1057 = vpop.permute.xlu0 %1056
    %1058 = vrot.lane.b32.xlu0 %v807, 8
    %v1059 = vpop.permute.xlu0 %1058
    %1060 = vrot.lane.b32.xlu0 %v815, 8
    %v1061 = vpop.permute.xlu0 %1060
    %1062 = vrot.lane.b32.xlu0 %v823, 8
    %v1063 = vpop.permute.xlu0 %1062
    %1064 = vrot.lane.b32.xlu0 %v831, 8
    %v1065 = vpop.permute.xlu0 %1064
    %1066 = vrot.lane.b32.xlu0 %v839, 8
    %v1067 = vpop.permute.xlu0 %1066
    %1068 = vrot.lane.b32.xlu0 %v847, 8
    %v1069 = vpop.permute.xlu0 %1068
    %1070 = vrot.lane.b32.xlu0 %v855, 8
    %v1071 = vpop.permute.xlu0 %1070
    %1072 = vrot.lane.b32.xlu0 %v863, 8
    %v1073 = vpop.permute.xlu0 %1072
    %1074 = vrot.lane.b32.xlu0 %v871, 8
    %v1075 = vpop.permute.xlu0 %1074
    %1076 = vrot.lane.b32.xlu0 %v879, 8
    %v1077 = vpop.permute.xlu0 %1076
    %1078 = vrot.lane.b32.xlu0 %v887, 8
    %v1079 = vpop.permute.xlu0 %1078
    %1080 = vrot.lane.b32.xlu0 %v895, 8
    %v1081 = vpop.permute.xlu0 %1080
    %1082 = vrot.lane.b32.xlu0 %v903, 8
    %v1083 = vpop.permute.xlu0 %1082
    %1084 = vrot.lane.b32.xlu0 %v911, 8
    %v1085 = vpop.permute.xlu0 %1084
    %1086 = vrot.lane.b32.xlu0 %v919, 8
    %v1087 = vpop.permute.xlu0 %1086
    %1088 = vrot.lane.b32.xlu0 %v927, 8
    %v1089 = vpop.permute.xlu0 %1088
    %1090 = vrot.lane.b32.xlu0 %v935, 8
    %v1091 = vpop.permute.xlu0 %1090
    %1092 = vrot.lane.b32.xlu0 %v943, 8
    %v1093 = vpop.permute.xlu0 %1092
    %1094 = vrot.lane.b32.xlu0 %v951, 8
    %v1095 = vpop.permute.xlu0 %1094
    %1096 = vrot.lane.b32.xlu0 %v959, 8
    %v1097 = vpop.permute.xlu0 %1096
    %1098 = vrot.lane.b32.xlu0 %v967, 8
    %v1099 = vpop.permute.xlu0 %1098
    %1100 = vrot.lane.b32.xlu0 %v975, 8
    %v1101 = vpop.permute.xlu0 %1100
    %1102 = vrot.lane.b32.xlu0 %v983, 8
    %v1103 = vpop.permute.xlu0 %1102
    %1104 = vrot.lane.b32.xlu0 %v991, 8
    %v1105 = vpop.permute.xlu0 %1104
    %1106 = vrot.lane.b32.xlu0 %v999, 8
    %v1107 = vpop.permute.xlu0 %1106
    %1108 = vrot.lane.b32.xlu0 %v1007, 8
    %v1109 = vpop.permute.xlu0 %1108
    %1110 = vrot.lane.b32.xlu0 %v1015, 8
    %v1111 = vpop.permute.xlu0 %1110
    %vm1160 = vcmask 130112
    %1161 = vst.msk [vmem:[#allocation4] sm:$0xff] %vm1160, %v1017
    %1162 = vst.msk [vmem:[#allocation4 + $0x18] sm:$0xff] %vm1160, %v1019
    %1163 = vst.msk [vmem:[#allocation4 + $0x30] sm:$0xff] %vm1160, %v1021
    %1164 = vst.msk [vmem:[#allocation4 + $0x48] sm:$0xff] %vm1160, %v1023
    %1165 = vst.msk [vmem:[#allocation4 + $0x60] sm:$0xff] %vm1160, %v1025
    %1166 = vst.msk [vmem:[#allocation4 + $0x78] sm:$0xff] %vm1160, %v1027
    %1167 = vst.msk [vmem:[#allocation4 + $0x90] sm:$0xff] %vm1160, %v1029
    %1168 = vst.msk [vmem:[#allocation4 + $0xa8] sm:$0xff] %vm1160, %v1031
    %1169 = vst.msk [vmem:[#allocation4 + $0xc0] sm:$0xff] %vm1160, %v1033
    %1170 = vst.msk [vmem:[#allocation4 + $0xd8] sm:$0xff] %vm1160, %v1035
    %1171 = vst.msk [vmem:[#allocation4 + $0xf0] sm:$0xff] %vm1160, %v1037
    %1172 = vst.msk [vmem:[#allocation4 + $0x108] sm:$0xff] %vm1160, %v1039
    %1173 = vst.msk [vmem:[#allocation4 + $0x120] sm:$0xff] %vm1160, %v1041
    %1174 = vst.msk [vmem:[#allocation4 + $0x138] sm:$0xff] %vm1160, %v1043
    %1175 = vst.msk [vmem:[#allocation4 + $0x150] sm:$0xff] %vm1160, %v1045
    %1176 = vst.msk [vmem:[#allocation4 + $0x168] sm:$0xff] %vm1160, %v1047
    %1177 = vst.msk [vmem:[#allocation4 + $0x180] sm:$0xff] %vm1160, %v1049
    %1178 = vst.msk [vmem:[#allocation4 + $0x198] sm:$0xff] %vm1160, %v1051
    %1179 = vst.msk [vmem:[#allocation4 + $0x1b0] sm:$0xff] %vm1160, %v1053
    %1180 = vst.msk [vmem:[#allocation4 + $0x1c8] sm:$0xff] %vm1160, %v1055
    %1181 = vst.msk [vmem:[#allocation4 + $0x1e0] sm:$0xff] %vm1160, %v1057
    %1182 = vst.msk [vmem:[#allocation4 + $0x1f8] sm:$0xff] %vm1160, %v1059
    %1183 = vst.msk [vmem:[#allocation4 + $0x210] sm:$0xff] %vm1160, %v1061
    %1184 = vst.msk [vmem:[#allocation4 + $0x228] sm:$0xff] %vm1160, %v1063
    %1185 = vst.msk [vmem:[#allocation4 + $0x240] sm:$0xff] %vm1160, %v1065
    %1186 = vst.msk [vmem:[#allocation4 + $0x258] sm:$0xff] %vm1160, %v1067
    %1187 = vst.msk [vmem:[#allocation4 + $0x270] sm:$0xff] %vm1160, %v1069
    %1188 = vst.msk [vmem:[#allocation4 + $0x288] sm:$0xff] %vm1160, %v1071
    %1189 = vst.msk [vmem:[#allocation4 + $0x2a0] sm:$0xff] %vm1160, %v1073
    %1190 = vst.msk [vmem:[#allocation4 + $0x2b8] sm:$0xff] %vm1160, %v1075
    %1191 = vst.msk [vmem:[#allocation4 + $0x2d0] sm:$0xff] %vm1160, %v1077
    %1192 = vst.msk [vmem:[#allocation4 + $0x2e8] sm:$0xff] %vm1160, %v1079
    %1193 = vst.msk [vmem:[#allocation4 + $0x300] sm:$0xff] %vm1160, %v1081
    %1194 = vst.msk [vmem:[#allocation4 + $0x318] sm:$0xff] %vm1160, %v1083
    %1195 = vst.msk [vmem:[#allocation4 + $0x330] sm:$0xff] %vm1160, %v1085
    %1196 = vst.msk [vmem:[#allocation4 + $0x348] sm:$0xff] %vm1160, %v1087
    %1197 = vst.msk [vmem:[#allocation4 + $0x360] sm:$0xff] %vm1160, %v1089
    %1198 = vst.msk [vmem:[#allocation4 + $0x378] sm:$0xff] %vm1160, %v1091
    %1199 = vst.msk [vmem:[#allocation4 + $0x390] sm:$0xff] %vm1160, %v1093
    %1200 = vst.msk [vmem:[#allocation4 + $0x3a8] sm:$0xff] %vm1160, %v1095
    %1201 = vst.msk [vmem:[#allocation4 + $0x3c0] sm:$0xff] %vm1160, %v1097
    %1202 = vst.msk [vmem:[#allocation4 + $0x3d8] sm:$0xff] %vm1160, %v1099
    %1203 = vst.msk [vmem:[#allocation4 + $0x3f0] sm:$0xff] %vm1160, %v1101
    %1204 = vst.msk [vmem:[#allocation4 + $0x408] sm:$0xff] %vm1160, %v1103
    %1205 = vst.msk [vmem:[#allocation4 + $0x420] sm:$0xff] %vm1160, %v1105
    %1206 = vst.msk [vmem:[#allocation4 + $0x438] sm:$0xff] %vm1160, %v1107
    %1207 = vst.msk [vmem:[#allocation4 + $0x450] sm:$0xff] %vm1160, %v1109
    %1208 = vst.msk [vmem:[#allocation4 + $0x468] sm:$0xff] %vm1160, %v1111
    %v1209 = vld [vmem:[#allocation2] sm:$0xfe]
    %v1210 = vld [vmem:[#allocation2 + $0x8] sm:$0xff]
    %v1211 = vld [vmem:[#allocation2 + $0x10] sm:$0xff]
    %v1212 = vld [vmem:[#allocation2 + $0x18] sm:$0xff]
    %v1213 = vld [vmem:[#allocation2 + $0x20] sm:$0xff]
    %v1214 = vld [vmem:[#allocation2 + $0x28] sm:$0xff]
    %v1215 = vld [vmem:[#allocation2 + $0x30] sm:$0xff]
    %v1216 = vld [vmem:[#allocation2 + $0x38] sm:$0xff]
    %v1217 = vld [vmem:[#allocation2 + $0x40] sm:$0xff]
    %v1218 = vld [vmem:[#allocation2 + $0x48] sm:$0xff]
    %v1219 = vld [vmem:[#allocation2 + $0x50] sm:$0xff]
    %v1220 = vld [vmem:[#allocation2 + $0x58] sm:$0xff]
    %v1221 = vld [vmem:[#allocation2 + $0x60] sm:$0xff]
    %v1222 = vld [vmem:[#allocation2 + $0x68] sm:$0xff]
    %v1223 = vld [vmem:[#allocation2 + $0x70] sm:$0xff]
    %v1224 = vld [vmem:[#allocation2 + $0x78] sm:$0xff]
    %v1225 = vld [vmem:[#allocation2 + $0x80] sm:$0xff]
    %v1226 = vld [vmem:[#allocation2 + $0x88] sm:$0xff]
    %v1227 = vld [vmem:[#allocation2 + $0x90] sm:$0xff]
    %v1228 = vld [vmem:[#allocation2 + $0x98] sm:$0xff]
    %v1229 = vld [vmem:[#allocation2 + $0xa0] sm:$0xff]
    %v1230 = vld [vmem:[#allocation2 + $0xa8] sm:$0xff]
    %v1231 = vld [vmem:[#allocation2 + $0xb0] sm:$0xff]
    %v1232 = vld [vmem:[#allocation2 + $0xb8] sm:$0xff]
    %v1233 = vld [vmem:[#allocation2 + $0xc0] sm:$0xff]
    %v1234 = vld [vmem:[#allocation2 + $0xc8] sm:$0xff]
    %v1235 = vld [vmem:[#allocation2 + $0xd0] sm:$0xff]
    %v1236 = vld [vmem:[#allocation2 + $0xd8] sm:$0xff]
    %v1237 = vld [vmem:[#allocation2 + $0xe0] sm:$0xff]
    %v1238 = vld [vmem:[#allocation2 + $0xe8] sm:$0xff]
    %v1239 = vld [vmem:[#allocation2 + $0xf0] sm:$0xff]
    %v1240 = vld [vmem:[#allocation2 + $0xf8] sm:$0xff]
    %v1241 = vld [vmem:[#allocation2 + $0x100] sm:$0xff]
    %v1242 = vld [vmem:[#allocation2 + $0x108] sm:$0xff]
    %v1243 = vld [vmem:[#allocation2 + $0x110] sm:$0xff]
    %v1244 = vld [vmem:[#allocation2 + $0x118] sm:$0xff]
    %v1245 = vld [vmem:[#allocation2 + $0x120] sm:$0xff]
    %v1246 = vld [vmem:[#allocation2 + $0x128] sm:$0xff]
    %v1247 = vld [vmem:[#allocation2 + $0x130] sm:$0xff]
    %v1248 = vld [vmem:[#allocation2 + $0x138] sm:$0xff]
    %v1249 = vld [vmem:[#allocation2 + $0x140] sm:$0xff]
    %v1250 = vld [vmem:[#allocation2 + $0x148] sm:$0xff]
    %v1251 = vld [vmem:[#allocation2 + $0x150] sm:$0xff]
    %v1252 = vld [vmem:[#allocation2 + $0x158] sm:$0xff]
    %v1253 = vld [vmem:[#allocation2 + $0x160] sm:$0xff]
    %v1254 = vld [vmem:[#allocation2 + $0x168] sm:$0xff]
    %v1255 = vld [vmem:[#allocation2 + $0x170] sm:$0xff]
    %v1256 = vld [vmem:[#allocation2 + $0x178] sm:$0xff]
    %v1257 = vld [vmem:[#allocation2 + $0x180] sm:$0x1]
    %vm1307 = vcmask 1046528
    %v1308 = vrot.slane %v1209, 1
    %v1309 = vrot.slane %v1210, 1
    %v1310 = vsel %vm1307, %v1308, %v1309
    %v1311 = vrot.slane %v1211, 1
    %v1312 = vsel %vm1307, %v1309, %v1311
    %v1313 = vrot.slane %v1212, 1
    %v1314 = vsel %vm1307, %v1311, %v1313
    %v1315 = vrot.slane %v1213, 1
    %v1316 = vsel %vm1307, %v1313, %v1315
    %v1317 = vrot.slane %v1214, 1
    %v1318 = vsel %vm1307, %v1315, %v1317
    %v1319 = vrot.slane %v1215, 1
    %v1320 = vsel %vm1307, %v1317, %v1319
    %v1321 = vrot.slane %v1216, 1
    %v1322 = vsel %vm1307, %v1319, %v1321
    %v1323 = vrot.slane %v1217, 1
    %v1324 = vsel %vm1307, %v1321, %v1323
    %v1325 = vrot.slane %v1218, 1
    %v1326 = vsel %vm1307, %v1323, %v1325
    %v1327 = vrot.slane %v1219, 1
    %v1328 = vsel %vm1307, %v1325, %v1327
    %v1329 = vrot.slane %v1220, 1
    %v1330 = vsel %vm1307, %v1327, %v1329
    %v1331 = vrot.slane %v1221, 1
    %v1332 = vsel %vm1307, %v1329, %v1331
    %v1333 = vrot.slane %v1222, 1
    %v1334 = vsel %vm1307, %v1331, %v1333
    %v1335 = vrot.slane %v1223, 1
    %v1336 = vsel %vm1307, %v1333, %v1335
    %v1337 = vrot.slane %v1224, 1
    %v1338 = vsel %vm1307, %v1335, %v1337
    %v1339 = vrot.slane %v1225, 1
    %v1340 = vsel %vm1307, %v1337, %v1339
    %v1341 = vrot.slane %v1226, 1
    %v1342 = vsel %vm1307, %v1339, %v1341
    %v1343 = vrot.slane %v1227, 1
    %v1344 = vsel %vm1307, %v1341, %v1343
    %v1345 = vrot.slane %v1228, 1
    %v1346 = vsel %vm1307, %v1343, %v1345
    %v1347 = vrot.slane %v1229, 1
    %v1348 = vsel %vm1307, %v1345, %v1347
    %v1349 = vrot.slane %v1230, 1
    %v1350 = vsel %vm1307, %v1347, %v1349
    %v1351 = vrot.slane %v1231, 1
    %v1352 = vsel %vm1307, %v1349, %v1351
    %v1353 = vrot.slane %v1232, 1
    %v1354 = vsel %vm1307, %v1351, %v1353
    %v1355 = vrot.slane %v1233, 1
    %v1356 = vsel %vm1307, %v1353, %v1355
    %v1357 = vrot.slane %v1234, 1
    %v1358 = vsel %vm1307, %v1355, %v1357
    %v1359 = vrot.slane %v1235, 1
    %v1360 = vsel %vm1307, %v1357, %v1359
    %v1361 = vrot.slane %v1236, 1
    %v1362 = vsel %vm1307, %v1359, %v1361
    %v1363 = vrot.slane %v1237, 1
    %v1364 = vsel %vm1307, %v1361, %v1363
    %v1365 = vrot.slane %v1238, 1
    %v1366 = vsel %vm1307, %v1363, %v1365
    %v1367 = vrot.slane %v1239, 1
    %v1368 = vsel %vm1307, %v1365, %v1367
    %v1369 = vrot.slane %v1240, 1
    %v1370 = vsel %vm1307, %v1367, %v1369
    %v1371 = vrot.slane %v1241, 1
    %v1372 = vsel %vm1307, %v1369, %v1371
    %v1373 = vrot.slane %v1242, 1
    %v1374 = vsel %vm1307, %v1371, %v1373
    %v1375 = vrot.slane %v1243, 1
    %v1376 = vsel %vm1307, %v1373, %v1375
    %v1377 = vrot.slane %v1244, 1
    %v1378 = vsel %vm1307, %v1375, %v1377
    %v1379 = vrot.slane %v1245, 1
    %v1380 = vsel %vm1307, %v1377, %v1379
    %v1381 = vrot.slane %v1246, 1
    %v1382 = vsel %vm1307, %v1379, %v1381
    %v1383 = vrot.slane %v1247, 1
    %v1384 = vsel %vm1307, %v1381, %v1383
    %v1385 = vrot.slane %v1248, 1
    %v1386 = vsel %vm1307, %v1383, %v1385
    %v1387 = vrot.slane %v1249, 1
    %v1388 = vsel %vm1307, %v1385, %v1387
    %v1389 = vrot.slane %v1250, 1
    %v1390 = vsel %vm1307, %v1387, %v1389
    %v1391 = vrot.slane %v1251, 1
    %v1392 = vsel %vm1307, %v1389, %v1391
    %v1393 = vrot.slane %v1252, 1
    %v1394 = vsel %vm1307, %v1391, %v1393
    %v1395 = vrot.slane %v1253, 1
    %v1396 = vsel %vm1307, %v1393, %v1395
    %v1397 = vrot.slane %v1254, 1
    %v1398 = vsel %vm1307, %v1395, %v1397
    %v1399 = vrot.slane %v1255, 1
    %v1400 = vsel %vm1307, %v1397, %v1399
    %v1401 = vrot.slane %v1256, 1
    %v1402 = vsel %vm1307, %v1399, %v1401
    %v1403 = vrot.slane %v1257, 1
    %v1404 = vsel %vm1307, %v1401, %v1403
    %1405 = vrot.lane.b32.xlu0 %v1310, 16
    %v1406 = vpop.permute.xlu0 %1405
    %1407 = vrot.lane.b32.xlu0 %v1312, 16
    %v1408 = vpop.permute.xlu0 %1407
    %1409 = vrot.lane.b32.xlu0 %v1314, 16
    %v1410 = vpop.permute.xlu0 %1409
    %1411 = vrot.lane.b32.xlu0 %v1316, 16
    %v1412 = vpop.permute.xlu0 %1411
    %1413 = vrot.lane.b32.xlu0 %v1318, 16
    %v1414 = vpop.permute.xlu0 %1413
    %1415 = vrot.lane.b32.xlu0 %v1320, 16
    %v1416 = vpop.permute.xlu0 %1415
    %1417 = vrot.lane.b32.xlu0 %v1322, 16
    %v1418 = vpop.permute.xlu0 %1417
    %1419 = vrot.lane.b32.xlu0 %v1324, 16
    %v1420 = vpop.permute.xlu0 %1419
    %1421 = vrot.lane.b32.xlu0 %v1326, 16
    %v1422 = vpop.permute.xlu0 %1421
    %1423 = vrot.lane.b32.xlu0 %v1328, 16
    %v1424 = vpop.permute.xlu0 %1423
    %1425 = vrot.lane.b32.xlu0 %v1330, 16
    %v1426 = vpop.permute.xlu0 %1425
    %1427 = vrot.lane.b32.xlu0 %v1332, 16
    %v1428 = vpop.permute.xlu0 %1427
    %1429 = vrot.lane.b32.xlu0 %v1334, 16
    %v1430 = vpop.permute.xlu0 %1429
    %1431 = vrot.lane.b32.xlu0 %v1336, 16
    %v1432 = vpop.permute.xlu0 %1431
    %1433 = vrot.lane.b32.xlu0 %v1338, 16
    %v1434 = vpop.permute.xlu0 %1433
    %1435 = vrot.lane.b32.xlu0 %v1340, 16
    %v1436 = vpop.permute.xlu0 %1435
    %1437 = vrot.lane.b32.xlu0 %v1342, 16
    %v1438 = vpop.permute.xlu0 %1437
    %1439 = vrot.lane.b32.xlu0 %v1344, 16
    %v1440 = vpop.permute.xlu0 %1439
    %1441 = vrot.lane.b32.xlu0 %v1346, 16
    %v1442 = vpop.permute.xlu0 %1441
    %1443 = vrot.lane.b32.xlu0 %v1348, 16
    %v1444 = vpop.permute.xlu0 %1443
    %1445 = vrot.lane.b32.xlu0 %v1350, 16
    %v1446 = vpop.permute.xlu0 %1445
    %1447 = vrot.lane.b32.xlu0 %v1352, 16
    %v1448 = vpop.permute.xlu0 %1447
    %1449 = vrot.lane.b32.xlu0 %v1354, 16
    %v1450 = vpop.permute.xlu0 %1449
    %1451 = vrot.lane.b32.xlu0 %v1356, 16
    %v1452 = vpop.permute.xlu0 %1451
    %1453 = vrot.lane.b32.xlu0 %v1358, 16
    %v1454 = vpop.permute.xlu0 %1453
    %1455 = vrot.lane.b32.xlu0 %v1360, 16
    %v1456 = vpop.permute.xlu0 %1455
    %1457 = vrot.lane.b32.xlu0 %v1362, 16
    %v1458 = vpop.permute.xlu0 %1457
    %1459 = vrot.lane.b32.xlu0 %v1364, 16
    %v1460 = vpop.permute.xlu0 %1459
    %1461 = vrot.lane.b32.xlu0 %v1366, 16
    %v1462 = vpop.permute.xlu0 %1461
    %1463 = vrot.lane.b32.xlu0 %v1368, 16
    %v1464 = vpop.permute.xlu0 %1463
    %1465 = vrot.lane.b32.xlu0 %v1370, 16
    %v1466 = vpop.permute.xlu0 %1465
    %1467 = vrot.lane.b32.xlu0 %v1372, 16
    %v1468 = vpop.permute.xlu0 %1467
    %1469 = vrot.lane.b32.xlu0 %v1374, 16
    %v1470 = vpop.permute.xlu0 %1469
    %1471 = vrot.lane.b32.xlu0 %v1376, 16
    %v1472 = vpop.permute.xlu0 %1471
    %1473 = vrot.lane.b32.xlu0 %v1378, 16
    %v1474 = vpop.permute.xlu0 %1473
    %1475 = vrot.lane.b32.xlu0 %v1380, 16
    %v1476 = vpop.permute.xlu0 %1475
    %1477 = vrot.lane.b32.xlu0 %v1382, 16
    %v1478 = vpop.permute.xlu0 %1477
    %1479 = vrot.lane.b32.xlu0 %v1384, 16
    %v1480 = vpop.permute.xlu0 %1479
    %1481 = vrot.lane.b32.xlu0 %v1386, 16
    %v1482 = vpop.permute.xlu0 %1481
    %1483 = vrot.lane.b32.xlu0 %v1388, 16
    %v1484 = vpop.permute.xlu0 %1483
    %1485 = vrot.lane.b32.xlu0 %v1390, 16
    %v1486 = vpop.permute.xlu0 %1485
    %1487 = vrot.lane.b32.xlu0 %v1392, 16
    %v1488 = vpop.permute.xlu0 %1487
    %1489 = vrot.lane.b32.xlu0 %v1394, 16
    %v1490 = vpop.permute.xlu0 %1489
    %1491 = vrot.lane.b32.xlu0 %v1396, 16
    %v1492 = vpop.permute.xlu0 %1491
    %1493 = vrot.lane.b32.xlu0 %v1398, 16
    %v1494 = vpop.permute.xlu0 %1493
    %1495 = vrot.lane.b32.xlu0 %v1400, 16
    %v1496 = vpop.permute.xlu0 %1495
    %1497 = vrot.lane.b32.xlu0 %v1402, 16
    %v1498 = vpop.permute.xlu0 %1497
    %1499 = vrot.lane.b32.xlu0 %v1404, 16
    %v1500 = vpop.permute.xlu0 %1499
    %vm1549 = vcmask 195712
    %1550 = vst.msk [vmem:[#allocation4] sm:$0xff] %vm1549, %v1406
    %1551 = vst.msk [vmem:[#allocation4 + $0x18] sm:$0xff] %vm1549, %v1408
    %1552 = vst.msk [vmem:[#allocation4 + $0x30] sm:$0xff] %vm1549, %v1410
    %1553 = vst.msk [vmem:[#allocation4 + $0x48] sm:$0xff] %vm1549, %v1412
    %1554 = vst.msk [vmem:[#allocation4 + $0x60] sm:$0xff] %vm1549, %v1414
    %1555 = vst.msk [vmem:[#allocation4 + $0x78] sm:$0xff] %vm1549, %v1416
    %1556 = vst.msk [vmem:[#allocation4 + $0x90] sm:$0xff] %vm1549, %v1418
    %1557 = vst.msk [vmem:[#allocation4 + $0xa8] sm:$0xff] %vm1549, %v1420
    %1558 = vst.msk [vmem:[#allocation4 + $0xc0] sm:$0xff] %vm1549, %v1422
    %1559 = vst.msk [vmem:[#allocation4 + $0xd8] sm:$0xff] %vm1549, %v1424
    %1560 = vst.msk [vmem:[#allocation4 + $0xf0] sm:$0xff] %vm1549, %v1426
    %1561 = vst.msk [vmem:[#allocation4 + $0x108] sm:$0xff] %vm1549, %v1428
    %1562 = vst.msk [vmem:[#allocation4 + $0x120] sm:$0xff] %vm1549, %v1430
    %1563 = vst.msk [vmem:[#allocation4 + $0x138] sm:$0xff] %vm1549, %v1432
    %1564 = vst.msk [vmem:[#allocation4 + $0x150] sm:$0xff] %vm1549, %v1434
    %1565 = vst.msk [vmem:[#allocation4 + $0x168] sm:$0xff] %vm1549, %v1436
    %1566 = vst.msk [vmem:[#allocation4 + $0x180] sm:$0xff] %vm1549, %v1438
    %1567 = vst.msk [vmem:[#allocation4 + $0x198] sm:$0xff] %vm1549, %v1440
    %1568 = vst.msk [vmem:[#allocation4 + $0x1b0] sm:$0xff] %vm1549, %v1442
    %1569 = vst.msk [vmem:[#allocation4 + $0x1c8] sm:$0xff] %vm1549, %v1444
    %1570 = vst.msk [vmem:[#allocation4 + $0x1e0] sm:$0xff] %vm1549, %v1446
    %1571 = vst.msk [vmem:[#allocation4 + $0x1f8] sm:$0xff] %vm1549, %v1448
    %1572 = vst.msk [vmem:[#allocation4 + $0x210] sm:$0xff] %vm1549, %v1450
    %1573 = vst.msk [vmem:[#allocation4 + $0x228] sm:$0xff] %vm1549, %v1452
    %1574 = vst.msk [vmem:[#allocation4 + $0x240] sm:$0xff] %vm1549, %v1454
    %1575 = vst.msk [vmem:[#allocation4 + $0x258] sm:$0xff] %vm1549, %v1456
    %1576 = vst.msk [vmem:[#allocation4 + $0x270] sm:$0xff] %vm1549, %v1458
    %1577 = vst.msk [vmem:[#allocation4 + $0x288] sm:$0xff] %vm1549, %v1460
    %1578 = vst.msk [vmem:[#allocation4 + $0x2a0] sm:$0xff] %vm1549, %v1462
    %1579 = vst.msk [vmem:[#allocation4 + $0x2b8] sm:$0xff] %vm1549, %v1464
    %1580 = vst.msk [vmem:[#allocation4 + $0x2d0] sm:$0xff] %vm1549, %v1466
    %1581 = vst.msk [vmem:[#allocation4 + $0x2e8] sm:$0xff] %vm1549, %v1468
    %1582 = vst.msk [vmem:[#allocation4 + $0x300] sm:$0xff] %vm1549, %v1470
    %1583 = vst.msk [vmem:[#allocation4 + $0x318] sm:$0xff] %vm1549, %v1472
    %1584 = vst.msk [vmem:[#allocation4 + $0x330] sm:$0xff] %vm1549, %v1474
    %1585 = vst.msk [vmem:[#allocation4 + $0x348] sm:$0xff] %vm1549, %v1476
    %1586 = vst.msk [vmem:[#allocation4 + $0x360] sm:$0xff] %vm1549, %v1478
    %1587 = vst.msk [vmem:[#allocation4 + $0x378] sm:$0xff] %vm1549, %v1480
    %1588 = vst.msk [vmem:[#allocation4 + $0x390] sm:$0xff] %vm1549, %v1482
    %1589 = vst.msk [vmem:[#allocation4 + $0x3a8] sm:$0xff] %vm1549, %v1484
    %1590 = vst.msk [vmem:[#allocation4 + $0x3c0] sm:$0xff] %vm1549, %v1486
    %1591 = vst.msk [vmem:[#allocation4 + $0x3d8] sm:$0xff] %vm1549, %v1488
    %1592 = vst.msk [vmem:[#allocation4 + $0x3f0] sm:$0xff] %vm1549, %v1490
    %1593 = vst.msk [vmem:[#allocation4 + $0x408] sm:$0xff] %vm1549, %v1492
    %1594 = vst.msk [vmem:[#allocation4 + $0x420] sm:$0xff] %vm1549, %v1494
    %1595 = vst.msk [vmem:[#allocation4 + $0x438] sm:$0xff] %vm1549, %v1496
    %1596 = vst.msk [vmem:[#allocation4 + $0x450] sm:$0xff] %vm1549, %v1498
    %1597 = vst.msk [vmem:[#allocation4 + $0x468] sm:$0xff] %vm1549, %v1500
    %v1598 = vld [vmem:[#allocation2] sm:$0xc0]
    %v1599 = vld [vmem:[#allocation2 + $0x8] sm:$0xff]
    %v1600 = vld [vmem:[#allocation2 + $0x10] sm:$0xff]
    %v1601 = vld [vmem:[#allocation2 + $0x18] sm:$0xff]
    %v1602 = vld [vmem:[#allocation2 + $0x20] sm:$0xff]
    %v1603 = vld [vmem:[#allocation2 + $0x28] sm:$0xff]
    %v1604 = vld [vmem:[#allocation2 + $0x30] sm:$0xff]
    %v1605 = vld [vmem:[#allocation2 + $0x38] sm:$0xff]
    %v1606 = vld [vmem:[#allocation2 + $0x40] sm:$0xff]
    %v1607 = vld [vmem:[#allocation2 + $0x48] sm:$0xff]
    %v1608 = vld [vmem:[#allocation2 + $0x50] sm:$0xff]
    %v1609 = vld [vmem:[#allocation2 + $0x58] sm:$0xff]
    %v1610 = vld [vmem:[#allocation2 + $0x60] sm:$0xff]
    %v1611 = vld [vmem:[#allocation2 + $0x68] sm:$0xff]
    %v1612 = vld [vmem:[#allocation2 + $0x70] sm:$0xff]
    %v1613 = vld [vmem:[#allocation2 + $0x78] sm:$0xff]
    %v1614 = vld [vmem:[#allocation2 + $0x80] sm:$0xff]
    %v1615 = vld [vmem:[#allocation2 + $0x88] sm:$0xff]
    %v1616 = vld [vmem:[#allocation2 + $0x90] sm:$0xff]
    %v1617 = vld [vmem:[#allocation2 + $0x98] sm:$0xff]
    %v1618 = vld [vmem:[#allocation2 + $0xa0] sm:$0xff]
    %v1619 = vld [vmem:[#allocation2 + $0xa8] sm:$0xff]
    %v1620 = vld [vmem:[#allocation2 + $0xb0] sm:$0xff]
    %v1621 = vld [vmem:[#allocation2 + $0xb8] sm:$0xff]
    %v1622 = vld [vmem:[#allocation2 + $0xc0] sm:$0xff]
    %v1623 = vld [vmem:[#allocation2 + $0xc8] sm:$0xff]
    %v1624 = vld [vmem:[#allocation2 + $0xd0] sm:$0xff]
    %v1625 = vld [vmem:[#allocation2 + $0xd8] sm:$0xff]
    %v1626 = vld [vmem:[#allocation2 + $0xe0] sm:$0xff]
    %v1627 = vld [vmem:[#allocation2 + $0xe8] sm:$0xff]
    %v1628 = vld [vmem:[#allocation2 + $0xf0] sm:$0xff]
    %v1629 = vld [vmem:[#allocation2 + $0xf8] sm:$0xff]
    %v1630 = vld [vmem:[#allocation2 + $0x100] sm:$0xff]
    %v1631 = vld [vmem:[#allocation2 + $0x108] sm:$0xff]
    %v1632 = vld [vmem:[#allocation2 + $0x110] sm:$0xff]
    %v1633 = vld [vmem:[#allocation2 + $0x118] sm:$0xff]
    %v1634 = vld [vmem:[#allocation2 + $0x120] sm:$0xff]
    %v1635 = vld [vmem:[#allocation2 + $0x128] sm:$0xff]
    %v1636 = vld [vmem:[#allocation2 + $0x130] sm:$0xff]
    %v1637 = vld [vmem:[#allocation2 + $0x138] sm:$0xff]
    %v1638 = vld [vmem:[#allocation2 + $0x140] sm:$0xff]
    %v1639 = vld [vmem:[#allocation2 + $0x148] sm:$0xff]
    %v1640 = vld [vmem:[#allocation2 + $0x150] sm:$0xff]
    %v1641 = vld [vmem:[#allocation2 + $0x158] sm:$0xff]
    %v1642 = vld [vmem:[#allocation2 + $0x160] sm:$0xff]
    %v1643 = vld [vmem:[#allocation2 + $0x168] sm:$0xff]
    %v1644 = vld [vmem:[#allocation2 + $0x170] sm:$0xff]
    %v1645 = vld [vmem:[#allocation2 + $0x178] sm:$0xff]
    %v1646 = vld [vmem:[#allocation2 + $0x180] sm:$0x3f]
    %vm1696 = vcmask 1041408
    %v1697 = vrot.slane %v1598, 6
    %v1698 = vrot.slane %v1599, 6
    %v1699 = vsel %vm1696, %v1697, %v1698
    %v1700 = vrot.slane %v1600, 6
    %v1701 = vsel %vm1696, %v1698, %v1700
    %v1702 = vrot.slane %v1601, 6
    %v1703 = vsel %vm1696, %v1700, %v1702
    %v1704 = vrot.slane %v1602, 6
    %v1705 = vsel %vm1696, %v1702, %v1704
    %v1706 = vrot.slane %v1603, 6
    %v1707 = vsel %vm1696, %v1704, %v1706
    %v1708 = vrot.slane %v1604, 6
    %v1709 = vsel %vm1696, %v1706, %v1708
    %v1710 = vrot.slane %v1605, 6
    %v1711 = vsel %vm1696, %v1708, %v1710
    %v1712 = vrot.slane %v1606, 6
    %v1713 = vsel %vm1696, %v1710, %v1712
    %v1714 = vrot.slane %v1607, 6
    %v1715 = vsel %vm1696, %v1712, %v1714
    %v1716 = vrot.slane %v1608, 6
    %v1717 = vsel %vm1696, %v1714, %v1716
    %v1718 = vrot.slane %v1609, 6
    %v1719 = vsel %vm1696, %v1716, %v1718
    %v1720 = vrot.slane %v1610, 6
    %v1721 = vsel %vm1696, %v1718, %v1720
    %v1722 = vrot.slane %v1611, 6
    %v1723 = vsel %vm1696, %v1720, %v1722
    %v1724 = vrot.slane %v1612, 6
    %v1725 = vsel %vm1696, %v1722, %v1724
    %v1726 = vrot.slane %v1613, 6
    %v1727 = vsel %vm1696, %v1724, %v1726
    %v1728 = vrot.slane %v1614, 6
    %v1729 = vsel %vm1696, %v1726, %v1728
    %v1730 = vrot.slane %v1615, 6
    %v1731 = vsel %vm1696, %v1728, %v1730
    %v1732 = vrot.slane %v1616, 6
    %v1733 = vsel %vm1696, %v1730, %v1732
    %v1734 = vrot.slane %v1617, 6
    %v1735 = vsel %vm1696, %v1732, %v1734
    %v1736 = vrot.slane %v1618, 6
    %v1737 = vsel %vm1696, %v1734, %v1736
    %v1738 = vrot.slane %v1619, 6
    %v1739 = vsel %vm1696, %v1736, %v1738
    %v1740 = vrot.slane %v1620, 6
    %v1741 = vsel %vm1696, %v1738, %v1740
    %v1742 = vrot.slane %v1621, 6
    %v1743 = vsel %vm1696, %v1740, %v1742
    %v1744 = vrot.slane %v1622, 6
    %v1745 = vsel %vm1696, %v1742, %v1744
    %v1746 = vrot.slane %v1623, 6
    %v1747 = vsel %vm1696, %v1744, %v1746
    %v1748 = vrot.slane %v1624, 6
    %v1749 = vsel %vm1696, %v1746, %v1748
    %v1750 = vrot.slane %v1625, 6
    %v1751 = vsel %vm1696, %v1748, %v1750
    %v1752 = vrot.slane %v1626, 6
    %v1753 = vsel %vm1696, %v1750, %v1752
    %v1754 = vrot.slane %v1627, 6
    %v1755 = vsel %vm1696, %v1752, %v1754
    %v1756 = vrot.slane %v1628, 6
    %v1757 = vsel %vm1696, %v1754, %v1756
    %v1758 = vrot.slane %v1629, 6
    %v1759 = vsel %vm1696, %v1756, %v1758
    %v1760 = vrot.slane %v1630, 6
    %v1761 = vsel %vm1696, %v1758, %v1760
    %v1762 = vrot.slane %v1631, 6
    %v1763 = vsel %vm1696, %v1760, %v1762
    %v1764 = vrot.slane %v1632, 6
    %v1765 = vsel %vm1696, %v1762, %v1764
    %v1766 = vrot.slane %v1633, 6
    %v1767 = vsel %vm1696, %v1764, %v1766
    %v1768 = vrot.slane %v1634, 6
    %v1769 = vsel %vm1696, %v1766, %v1768
    %v1770 = vrot.slane %v1635, 6
    %v1771 = vsel %vm1696, %v1768, %v1770
    %v1772 = vrot.slane %v1636, 6
    %v1773 = vsel %vm1696, %v1770, %v1772
    %v1774 = vrot.slane %v1637, 6
    %v1775 = vsel %vm1696, %v1772, %v1774
    %v1776 = vrot.slane %v1638, 6
    %v1777 = vsel %vm1696, %v1774, %v1776
    %v1778 = vrot.slane %v1639, 6
    %v1779 = vsel %vm1696, %v1776, %v1778
    %v1780 = vrot.slane %v1640, 6
    %v1781 = vsel %vm1696, %v1778, %v1780
    %v1782 = vrot.slane %v1641, 6
    %v1783 = vsel %vm1696, %v1780, %v1782
    %v1784 = vrot.slane %v1642, 6
    %v1785 = vsel %vm1696, %v1782, %v1784
    %v1786 = vrot.slane %v1643, 6
    %v1787 = vsel %vm1696, %v1784, %v1786
    %v1788 = vrot.slane %v1644, 6
    %v1789 = vsel %vm1696, %v1786, %v1788
    %v1790 = vrot.slane %v1645, 6
    %v1791 = vsel %vm1696, %v1788, %v1790
    %v1792 = vrot.slane %v1646, 6
    %v1793 = vsel %vm1696, %v1790, %v1792
    %1794 = vrot.lane.b32.xlu0 %v1699, 24
    %v1795 = vpop.permute.xlu0 %1794
    %1796 = vrot.lane.b32.xlu0 %v1701, 24
    %v1797 = vpop.permute.xlu0 %1796
    %1798 = vrot.lane.b32.xlu0 %v1703, 24
    %v1799 = vpop.permute.xlu0 %1798
    %1800 = vrot.lane.b32.xlu0 %v1705, 24
    %v1801 = vpop.permute.xlu0 %1800
    %1802 = vrot.lane.b32.xlu0 %v1707, 24
    %v1803 = vpop.permute.xlu0 %1802
    %1804 = vrot.lane.b32.xlu0 %v1709, 24
    %v1805 = vpop.permute.xlu0 %1804
    %1806 = vrot.lane.b32.xlu0 %v1711, 24
    %v1807 = vpop.permute.xlu0 %1806
    %1808 = vrot.lane.b32.xlu0 %v1713, 24
    %v1809 = vpop.permute.xlu0 %1808
    %1810 = vrot.lane.b32.xlu0 %v1715, 24
    %v1811 = vpop.permute.xlu0 %1810
    %1812 = vrot.lane.b32.xlu0 %v1717, 24
    %v1813 = vpop.permute.xlu0 %1812
    %1814 = vrot.lane.b32.xlu0 %v1719, 24
    %v1815 = vpop.permute.xlu0 %1814
    %1816 = vrot.lane.b32.xlu0 %v1721, 24
    %v1817 = vpop.permute.xlu0 %1816
    %1818 = vrot.lane.b32.xlu0 %v1723, 24
    %v1819 = vpop.permute.xlu0 %1818
    %1820 = vrot.lane.b32.xlu0 %v1725, 24
    %v1821 = vpop.permute.xlu0 %1820
    %1822 = vrot.lane.b32.xlu0 %v1727, 24
    %v1823 = vpop.permute.xlu0 %1822
    %1824 = vrot.lane.b32.xlu0 %v1729, 24
    %v1825 = vpop.permute.xlu0 %1824
    %1826 = vrot.lane.b32.xlu0 %v1731, 24
    %v1827 = vpop.permute.xlu0 %1826
    %1828 = vrot.lane.b32.xlu0 %v1733, 24
    %v1829 = vpop.permute.xlu0 %1828
    %1830 = vrot.lane.b32.xlu0 %v1735, 24
    %v1831 = vpop.permute.xlu0 %1830
    %1832 = vrot.lane.b32.xlu0 %v1737, 24
    %v1833 = vpop.permute.xlu0 %1832
    %1834 = vrot.lane.b32.xlu0 %v1739, 24
    %v1835 = vpop.permute.xlu0 %1834
    %1836 = vrot.lane.b32.xlu0 %v1741, 24
    %v1837 = vpop.permute.xlu0 %1836
    %1838 = vrot.lane.b32.xlu0 %v1743, 24
    %v1839 = vpop.permute.xlu0 %1838
    %1840 = vrot.lane.b32.xlu0 %v1745, 24
    %v1841 = vpop.permute.xlu0 %1840
    %1842 = vrot.lane.b32.xlu0 %v1747, 24
    %v1843 = vpop.permute.xlu0 %1842
    %1844 = vrot.lane.b32.xlu0 %v1749, 24
    %v1845 = vpop.permute.xlu0 %1844
    %1846 = vrot.lane.b32.xlu0 %v1751, 24
    %v1847 = vpop.permute.xlu0 %1846
    %1848 = vrot.lane.b32.xlu0 %v1753, 24
    %v1849 = vpop.permute.xlu0 %1848
    %1850 = vrot.lane.b32.xlu0 %v1755, 24
    %v1851 = vpop.permute.xlu0 %1850
    %1852 = vrot.lane.b32.xlu0 %v1757, 24
    %v1853 = vpop.permute.xlu0 %1852
    %1854 = vrot.lane.b32.xlu0 %v1759, 24
    %v1855 = vpop.permute.xlu0 %1854
    %1856 = vrot.lane.b32.xlu0 %v1761, 24
    %v1857 = vpop.permute.xlu0 %1856
    %1858 = vrot.lane.b32.xlu0 %v1763, 24
    %v1859 = vpop.permute.xlu0 %1858
    %1860 = vrot.lane.b32.xlu0 %v1765, 24
    %v1861 = vpop.permute.xlu0 %1860
    %1862 = vrot.lane.b32.xlu0 %v1767, 24
    %v1863 = vpop.permute.xlu0 %1862
    %1864 = vrot.lane.b32.xlu0 %v1769, 24
    %v1865 = vpop.permute.xlu0 %1864
    %1866 = vrot.lane.b32.xlu0 %v1771, 24
    %v1867 = vpop.permute.xlu0 %1866
    %1868 = vrot.lane.b32.xlu0 %v1773, 24
    %v1869 = vpop.permute.xlu0 %1868
    %1870 = vrot.lane.b32.xlu0 %v1775, 24
    %v1871 = vpop.permute.xlu0 %1870
    %1872 = vrot.lane.b32.xlu0 %v1777, 24
    %v1873 = vpop.permute.xlu0 %1872
    %1874 = vrot.lane.b32.xlu0 %v1779, 24
    %v1875 = vpop.permute.xlu0 %1874
    %1876 = vrot.lane.b32.xlu0 %v1781, 24
    %v1877 = vpop.permute.xlu0 %1876
    %1878 = vrot.lane.b32.xlu0 %v1783, 24
    %v1879 = vpop.permute.xlu0 %1878
    %1880 = vrot.lane.b32.xlu0 %v1785, 24
    %v1881 = vpop.permute.xlu0 %1880
    %1882 = vrot.lane.b32.xlu0 %v1787, 24
    %v1883 = vpop.permute.xlu0 %1882
    %1884 = vrot.lane.b32.xlu0 %v1789, 24
    %v1885 = vpop.permute.xlu0 %1884
    %1886 = vrot.lane.b32.xlu0 %v1791, 24
    %v1887 = vpop.permute.xlu0 %1886
    %1888 = vrot.lane.b32.xlu0 %v1793, 24
    %v1889 = vpop.permute.xlu0 %1888
    %vm1938 = vcmask 261312
    %1939 = vst.msk [vmem:[#allocation4] sm:$0xff] %vm1938, %v1795
    %1940 = vst.msk [vmem:[#allocation4 + $0x18] sm:$0xff] %vm1938, %v1797
    %1941 = vst.msk [vmem:[#allocation4 + $0x30] sm:$0xff] %vm1938, %v1799
    %1942 = vst.msk [vmem:[#allocation4 + $0x48] sm:$0xff] %vm1938, %v1801
    %1943 = vst.msk [vmem:[#allocation4 + $0x60] sm:$0xff] %vm1938, %v1803
    %1944 = vst.msk [vmem:[#allocation4 + $0x78] sm:$0xff] %vm1938, %v1805
    %1945 = vst.msk [vmem:[#allocation4 + $0x90] sm:$0xff] %vm1938, %v1807
    %1946 = vst.msk [vmem:[#allocation4 + $0xa8] sm:$0xff] %vm1938, %v1809
    %1947 = vst.msk [vmem:[#allocation4 + $0xc0] sm:$0xff] %vm1938, %v1811
    %1948 = vst.msk [vmem:[#allocation4 + $0xd8] sm:$0xff] %vm1938, %v1813
    %1949 = vst.msk [vmem:[#allocation4 + $0xf0] sm:$0xff] %vm1938, %v1815
    %1950 = vst.msk [vmem:[#allocation4 + $0x108] sm:$0xff] %vm1938, %v1817
    %1951 = vst.msk [vmem:[#allocation4 + $0x120] sm:$0xff] %vm1938, %v1819
    %1952 = vst.msk [vmem:[#allocation4 + $0x138] sm:$0xff] %vm1938, %v1821
    %1953 = vst.msk [vmem:[#allocation4 + $0x150] sm:$0xff] %vm1938, %v1823
    %1954 = vst.msk [vmem:[#allocation4 + $0x168] sm:$0xff] %vm1938, %v1825
    %1955 = vst.msk [vmem:[#allocation4 + $0x180] sm:$0xff] %vm1938, %v1827
    %1956 = vst.msk [vmem:[#allocation4 + $0x198] sm:$0xff] %vm1938, %v1829
    %1957 = vst.msk [vmem:[#allocation4 + $0x1b0] sm:$0xff] %vm1938, %v1831
    %1958 = vst.msk [vmem:[#allocation4 + $0x1c8] sm:$0xff] %vm1938, %v1833
    %1959 = vst.msk [vmem:[#allocation4 + $0x1e0] sm:$0xff] %vm1938, %v1835
    %1960 = vst.msk [vmem:[#allocation4 + $0x1f8] sm:$0xff] %vm1938, %v1837
    %1961 = vst.msk [vmem:[#allocation4 + $0x210] sm:$0xff] %vm1938, %v1839
    %1962 = vst.msk [vmem:[#allocation4 + $0x228] sm:$0xff] %vm1938, %v1841
    %1963 = vst.msk [vmem:[#allocation4 + $0x240] sm:$0xff] %vm1938, %v1843
    %1964 = vst.msk [vmem:[#allocation4 + $0x258] sm:$0xff] %vm1938, %v1845
    %1965 = vst.msk [vmem:[#allocation4 + $0x270] sm:$0xff] %vm1938, %v1847
    %1966 = vst.msk [vmem:[#allocation4 + $0x288] sm:$0xff] %vm1938, %v1849
    %1967 = vst.msk [vmem:[#allocation4 + $0x2a0] sm:$0xff] %vm1938, %v1851
    %1968 = vst.msk [vmem:[#allocation4 + $0x2b8] sm:$0xff] %vm1938, %v1853
    %1969 = vst.msk [vmem:[#allocation4 + $0x2d0] sm:$0xff] %vm1938, %v1855
    %1970 = vst.msk [vmem:[#allocation4 + $0x2e8] sm:$0xff] %vm1938, %v1857
    %1971 = vst.msk [vmem:[#allocation4 + $0x300] sm:$0xff] %vm1938, %v1859
    %1972 = vst.msk [vmem:[#allocation4 + $0x318] sm:$0xff] %vm1938, %v1861
    %1973 = vst.msk [vmem:[#allocation4 + $0x330] sm:$0xff] %vm1938, %v1863
    %1974 = vst.msk [vmem:[#allocation4 + $0x348] sm:$0xff] %vm1938, %v1865
    %1975 = vst.msk [vmem:[#allocation4 + $0x360] sm:$0xff] %vm1938, %v1867
    %1976 = vst.msk [vmem:[#allocation4 + $0x378] sm:$0xff] %vm1938, %v1869
    %1977 = vst.msk [vmem:[#allocation4 + $0x390] sm:$0xff] %vm1938, %v1871
    %1978 = vst.msk [vmem:[#allocation4 + $0x3a8] sm:$0xff] %vm1938, %v1873
    %1979 = vst.msk [vmem:[#allocation4 + $0x3c0] sm:$0xff] %vm1938, %v1875
    %1980 = vst.msk [vmem:[#allocation4 + $0x3d8] sm:$0xff] %vm1938, %v1877
    %1981 = vst.msk [vmem:[#allocation4 + $0x3f0] sm:$0xff] %vm1938, %v1879
    %1982 = vst.msk [vmem:[#allocation4 + $0x408] sm:$0xff] %vm1938, %v1881
    %1983 = vst.msk [vmem:[#allocation4 + $0x420] sm:$0xff] %vm1938, %v1883
    %1984 = vst.msk [vmem:[#allocation4 + $0x438] sm:$0xff] %vm1938, %v1885
    %1985 = vst.msk [vmem:[#allocation4 + $0x450] sm:$0xff] %vm1938, %v1887
    %1986 = vst.msk [vmem:[#allocation4 + $0x468] sm:$0xff] %vm1938, %v1889
    %v1987 = vld [vmem:[#allocation2] sm:$0xc0]
    %v1988 = vld [vmem:[#allocation2 + $0x8] sm:$0xff]
    %v1989 = vld [vmem:[#allocation2 + $0x10] sm:$0xff]
    %v1990 = vld [vmem:[#allocation2 + $0x18] sm:$0xff]
    %v1991 = vld [vmem:[#allocation2 + $0x20] sm:$0xff]
    %v1992 = vld [vmem:[#allocation2 + $0x28] sm:$0xff]
    %v1993 = vld [vmem:[#allocation2 + $0x30] sm:$0xff]
    %v1994 = vld [vmem:[#allocation2 + $0x38] sm:$0xff]
    %v1995 = vld [vmem:[#allocation2 + $0x40] sm:$0xff]
    %v1996 = vld [vmem:[#allocation2 + $0x48] sm:$0xff]
    %v1997 = vld [vmem:[#allocation2 + $0x50] sm:$0xff]
    %v1998 = vld [vmem:[#allocation2 + $0x58] sm:$0xff]
    %v1999 = vld [vmem:[#allocation2 + $0x60] sm:$0xff]
    %v2000 = vld [vmem:[#allocation2 + $0x68] sm:$0xff]
    %v2001 = vld [vmem:[#allocation2 + $0x70] sm:$0xff]
    %v2002 = vld [vmem:[#allocation2 + $0x78] sm:$0xff]
    %v2003 = vld [vmem:[#allocation2 + $0x80] sm:$0xff]
    %v2004 = vld [vmem:[#allocation2 + $0x88] sm:$0xff]
    %v2005 = vld [vmem:[#allocation2 + $0x90] sm:$0xff]
    %v2006 = vld [vmem:[#allocation2 + $0x98] sm:$0xff]
    %v2007 = vld [vmem:[#allocation2 + $0xa0] sm:$0xff]
    %v2008 = vld [vmem:[#allocation2 + $0xa8] sm:$0xff]
    %v2009 = vld [vmem:[#allocation2 + $0xb0] sm:$0xff]
    %v2010 = vld [vmem:[#allocation2 + $0xb8] sm:$0xff]
    %v2011 = vld [vmem:[#allocation2 + $0xc0] sm:$0xff]
    %v2012 = vld [vmem:[#allocation2 + $0xc8] sm:$0xff]
    %v2013 = vld [vmem:[#allocation2 + $0xd0] sm:$0xff]
    %v2014 = vld [vmem:[#allocation2 + $0xd8] sm:$0xff]
    %v2015 = vld [vmem:[#allocation2 + $0xe0] sm:$0xff]
    %v2016 = vld [vmem:[#allocation2 + $0xe8] sm:$0xff]
    %v2017 = vld [vmem:[#allocation2 + $0xf0] sm:$0xff]
    %v2018 = vld [vmem:[#allocation2 + $0xf8] sm:$0xff]
    %v2019 = vld [vmem:[#allocation2 + $0x100] sm:$0xff]
    %v2020 = vld [vmem:[#allocation2 + $0x108] sm:$0xff]
    %v2021 = vld [vmem:[#allocation2 + $0x110] sm:$0xff]
    %v2022 = vld [vmem:[#allocation2 + $0x118] sm:$0xff]
    %v2023 = vld [vmem:[#allocation2 + $0x120] sm:$0xff]
    %v2024 = vld [vmem:[#allocation2 + $0x128] sm:$0xff]
    %v2025 = vld [vmem:[#allocation2 + $0x130] sm:$0xff]
    %v2026 = vld [vmem:[#allocation2 + $0x138] sm:$0xff]
    %v2027 = vld [vmem:[#allocation2 + $0x140] sm:$0xff]
    %v2028 = vld [vmem:[#allocation2 + $0x148] sm:$0xff]
    %v2029 = vld [vmem:[#allocation2 + $0x150] sm:$0xff]
    %v2030 = vld [vmem:[#allocation2 + $0x158] sm:$0xff]
    %v2031 = vld [vmem:[#allocation2 + $0x160] sm:$0xff]
    %v2032 = vld [vmem:[#allocation2 + $0x168] sm:$0xff]
    %v2033 = vld [vmem:[#allocation2 + $0x170] sm:$0xff]
    %v2034 = vld [vmem:[#allocation2 + $0x178] sm:$0xff]
    %v2035 = vld [vmem:[#allocation2 + $0x180] sm:$0x7f]
    %vm2036 = vsmask.f32 1280
    %v2038 = vshrl.u32 %v1987, 16
    %v2040 = vrot.slane %v2038, 6
    %v2041 = vshll.u32 %v1987, 16
    %v2043 = vrot.slane %v2041, 7
    %v2044 = vor.u32 %v2040, %v2043
    %v2046 = vshrl.u32 %v1988, 16
    %v2048 = vrot.slane %v2046, 6
    %v2049 = vshll.u32 %v1988, 16
    %v2051 = vrot.slane %v2049, 7
    %v2052 = vor.u32 %v2048, %v2051
    %v2053 = vsel %vm2036, %v2044, %v2052
    %v2055 = vshrl.u32 %v1989, 16
    %v2057 = vrot.slane %v2055, 6
    %v2058 = vshll.u32 %v1989, 16
    %v2060 = vrot.slane %v2058, 7
    %v2061 = vor.u32 %v2057, %v2060
    %v2062 = vsel %vm2036, %v2052, %v2061
    %v2064 = vshrl.u32 %v1990, 16
    %v2066 = vrot.slane %v2064, 6
    %v2067 = vshll.u32 %v1990, 16
    %v2069 = vrot.slane %v2067, 7
    %v2070 = vor.u32 %v2066, %v2069
    %v2071 = vsel %vm2036, %v2061, %v2070
    %v2073 = vshrl.u32 %v1991, 16
    %v2075 = vrot.slane %v2073, 6
    %v2076 = vshll.u32 %v1991, 16
    %v2078 = vrot.slane %v2076, 7
    %v2079 = vor.u32 %v2075, %v2078
    %v2080 = vsel %vm2036, %v2070, %v2079
    %v2082 = vshrl.u32 %v1992, 16
    %v2084 = vrot.slane %v2082, 6
    %v2085 = vshll.u32 %v1992, 16
    %v2087 = vrot.slane %v2085, 7
    %v2088 = vor.u32 %v2084, %v2087
    %v2089 = vsel %vm2036, %v2079, %v2088
    %v2091 = vshrl.u32 %v1993, 16
    %v2093 = vrot.slane %v2091, 6
    %v2094 = vshll.u32 %v1993, 16
    %v2096 = vrot.slane %v2094, 7
    %v2097 = vor.u32 %v2093, %v2096
    %v2098 = vsel %vm2036, %v2088, %v2097
    %v2100 = vshrl.u32 %v1994, 16
    %v2102 = vrot.slane %v2100, 6
    %v2103 = vshll.u32 %v1994, 16
    %v2105 = vrot.slane %v2103, 7
    %v2106 = vor.u32 %v2102, %v2105
    %v2107 = vsel %vm2036, %v2097, %v2106
    %v2109 = vshrl.u32 %v1995, 16
    %v2111 = vrot.slane %v2109, 6
    %v2112 = vshll.u32 %v1995, 16
    %v2114 = vrot.slane %v2112, 7
    %v2115 = vor.u32 %v2111, %v2114
    %v2116 = vsel %vm2036, %v2106, %v2115
    %v2118 = vshrl.u32 %v1996, 16
    %v2120 = vrot.slane %v2118, 6
    %v2121 = vshll.u32 %v1996, 16
    %v2123 = vrot.slane %v2121, 7
    %v2124 = vor.u32 %v2120, %v2123
    %v2125 = vsel %vm2036, %v2115, %v2124
    %v2127 = vshrl.u32 %v1997, 16
    %v2129 = vrot.slane %v2127, 6
    %v2130 = vshll.u32 %v1997, 16
    %v2132 = vrot.slane %v2130, 7
    %v2133 = vor.u32 %v2129, %v2132
    %v2134 = vsel %vm2036, %v2124, %v2133
    %v2136 = vshrl.u32 %v1998, 16
    %v2138 = vrot.slane %v2136, 6
    %v2139 = vshll.u32 %v1998, 16
    %v2141 = vrot.slane %v2139, 7
    %v2142 = vor.u32 %v2138, %v2141
    %v2143 = vsel %vm2036, %v2133, %v2142
    %v2145 = vshrl.u32 %v1999, 16
    %v2147 = vrot.slane %v2145, 6
    %v2148 = vshll.u32 %v1999, 16
    %v2150 = vrot.slane %v2148, 7
    %v2151 = vor.u32 %v2147, %v2150
    %v2152 = vsel %vm2036, %v2142, %v2151
    %v2154 = vshrl.u32 %v2000, 16
    %v2156 = vrot.slane %v2154, 6
    %v2157 = vshll.u32 %v2000, 16
    %v2159 = vrot.slane %v2157, 7
    %v2160 = vor.u32 %v2156, %v2159
    %v2161 = vsel %vm2036, %v2151, %v2160
    %v2163 = vshrl.u32 %v2001, 16
    %v2165 = vrot.slane %v2163, 6
    %v2166 = vshll.u32 %v2001, 16
    %v2168 = vrot.slane %v2166, 7
    %v2169 = vor.u32 %v2165, %v2168
    %v2170 = vsel %vm2036, %v2160, %v2169
    %v2172 = vshrl.u32 %v2002, 16
    %v2174 = vrot.slane %v2172, 6
    %v2175 = vshll.u32 %v2002, 16
    %v2177 = vrot.slane %v2175, 7
    %v2178 = vor.u32 %v2174, %v2177
    %v2179 = vsel %vm2036, %v2169, %v2178
    %v2181 = vshrl.u32 %v2003, 16
    %v2183 = vrot.slane %v2181, 6
    %v2184 = vshll.u32 %v2003, 16
    %v2186 = vrot.slane %v2184, 7
    %v2187 = vor.u32 %v2183, %v2186
    %v2188 = vsel %vm2036, %v2178, %v2187
    %v2190 = vshrl.u32 %v2004, 16
    %v2192 = vrot.slane %v2190, 6
    %v2193 = vshll.u32 %v2004, 16
    %v2195 = vrot.slane %v2193, 7
    %v2196 = vor.u32 %v2192, %v2195
    %v2197 = vsel %vm2036, %v2187, %v2196
    %v2199 = vshrl.u32 %v2005, 16
    %v2201 = vrot.slane %v2199, 6
    %v2202 = vshll.u32 %v2005, 16
    %v2204 = vrot.slane %v2202, 7
    %v2205 = vor.u32 %v2201, %v2204
    %v2206 = vsel %vm2036, %v2196, %v2205
    %v2208 = vshrl.u32 %v2006, 16
    %v2210 = vrot.slane %v2208, 6
    %v2211 = vshll.u32 %v2006, 16
    %v2213 = vrot.slane %v2211, 7
    %v2214 = vor.u32 %v2210, %v2213
    %v2215 = vsel %vm2036, %v2205, %v2214
    %v2217 = vshrl.u32 %v2007, 16
    %v2219 = vrot.slane %v2217, 6
    %v2220 = vshll.u32 %v2007, 16
    %v2222 = vrot.slane %v2220, 7
    %v2223 = vor.u32 %v2219, %v2222
    %v2224 = vsel %vm2036, %v2214, %v2223
    %v2226 = vshrl.u32 %v2008, 16
    %v2228 = vrot.slane %v2226, 6
    %v2229 = vshll.u32 %v2008, 16
    %v2231 = vrot.slane %v2229, 7
    %v2232 = vor.u32 %v2228, %v2231
    %v2233 = vsel %vm2036, %v2223, %v2232
    %v2235 = vshrl.u32 %v2009, 16
    %v2237 = vrot.slane %v2235, 6
    %v2238 = vshll.u32 %v2009, 16
    %v2240 = vrot.slane %v2238, 7
    %v2241 = vor.u32 %v2237, %v2240
    %v2242 = vsel %vm2036, %v2232, %v2241
    %v2244 = vshrl.u32 %v2010, 16
    %v2246 = vrot.slane %v2244, 6
    %v2247 = vshll.u32 %v2010, 16
    %v2249 = vrot.slane %v2247, 7
    %v2250 = vor.u32 %v2246, %v2249
    %v2251 = vsel %vm2036, %v2241, %v2250
    %v2253 = vshrl.u32 %v2011, 16
    %v2255 = vrot.slane %v2253, 6
    %v2256 = vshll.u32 %v2011, 16
    %v2258 = vrot.slane %v2256, 7
    %v2259 = vor.u32 %v2255, %v2258
    %v2260 = vsel %vm2036, %v2250, %v2259
    %v2262 = vshrl.u32 %v2012, 16
    %v2264 = vrot.slane %v2262, 6
    %v2265 = vshll.u32 %v2012, 16
    %v2267 = vrot.slane %v2265, 7
    %v2268 = vor.u32 %v2264, %v2267
    %v2269 = vsel %vm2036, %v2259, %v2268
    %v2271 = vshrl.u32 %v2013, 16
    %v2273 = vrot.slane %v2271, 6
    %v2274 = vshll.u32 %v2013, 16
    %v2276 = vrot.slane %v2274, 7
    %v2277 = vor.u32 %v2273, %v2276
    %v2278 = vsel %vm2036, %v2268, %v2277
    %v2280 = vshrl.u32 %v2014, 16
    %v2282 = vrot.slane %v2280, 6
    %v2283 = vshll.u32 %v2014, 16
    %v2285 = vrot.slane %v2283, 7
    %v2286 = vor.u32 %v2282, %v2285
    %v2287 = vsel %vm2036, %v2277, %v2286
    %v2289 = vshrl.u32 %v2015, 16
    %v2291 = vrot.slane %v2289, 6
    %v2292 = vshll.u32 %v2015, 16
    %v2294 = vrot.slane %v2292, 7
    %v2295 = vor.u32 %v2291, %v2294
    %v2296 = vsel %vm2036, %v2286, %v2295
    %v2298 = vshrl.u32 %v2016, 16
    %v2300 = vrot.slane %v2298, 6
    %v2301 = vshll.u32 %v2016, 16
    %v2303 = vrot.slane %v2301, 7
    %v2304 = vor.u32 %v2300, %v2303
    %v2305 = vsel %vm2036, %v2295, %v2304
    %v2307 = vshrl.u32 %v2017, 16
    %v2309 = vrot.slane %v2307, 6
    %v2310 = vshll.u32 %v2017, 16
    %v2312 = vrot.slane %v2310, 7
    %v2313 = vor.u32 %v2309, %v2312
    %v2314 = vsel %vm2036, %v2304, %v2313
    %v2316 = vshrl.u32 %v2018, 16
    %v2318 = vrot.slane %v2316, 6
    %v2319 = vshll.u32 %v2018, 16
    %v2321 = vrot.slane %v2319, 7
    %v2322 = vor.u32 %v2318, %v2321
    %v2323 = vsel %vm2036, %v2313, %v2322
    %v2325 = vshrl.u32 %v2019, 16
    %v2327 = vrot.slane %v2325, 6
    %v2328 = vshll.u32 %v2019, 16
    %v2330 = vrot.slane %v2328, 7
    %v2331 = vor.u32 %v2327, %v2330
    %v2332 = vsel %vm2036, %v2322, %v2331
    %v2334 = vshrl.u32 %v2020, 16
    %v2336 = vrot.slane %v2334, 6
    %v2337 = vshll.u32 %v2020, 16
    %v2339 = vrot.slane %v2337, 7
    %v2340 = vor.u32 %v2336, %v2339
    %v2341 = vsel %vm2036, %v2331, %v2340
    %v2343 = vshrl.u32 %v2021, 16
    %v2345 = vrot.slane %v2343, 6
    %v2346 = vshll.u32 %v2021, 16
    %v2348 = vrot.slane %v2346, 7
    %v2349 = vor.u32 %v2345, %v2348
    %v2350 = vsel %vm2036, %v2340, %v2349
    %v2352 = vshrl.u32 %v2022, 16
    %v2354 = vrot.slane %v2352, 6
    %v2355 = vshll.u32 %v2022, 16
    %v2357 = vrot.slane %v2355, 7
    %v2358 = vor.u32 %v2354, %v2357
    %v2359 = vsel %vm2036, %v2349, %v2358
    %v2361 = vshrl.u32 %v2023, 16
    %v2363 = vrot.slane %v2361, 6
    %v2364 = vshll.u32 %v2023, 16
    %v2366 = vrot.slane %v2364, 7
    %v2367 = vor.u32 %v2363, %v2366
    %v2368 = vsel %vm2036, %v2358, %v2367
    %v2370 = vshrl.u32 %v2024, 16
    %v2372 = vrot.slane %v2370, 6
    %v2373 = vshll.u32 %v2024, 16
    %v2375 = vrot.slane %v2373, 7
    %v2376 = vor.u32 %v2372, %v2375
    %v2377 = vsel %vm2036, %v2367, %v2376
    %v2379 = vshrl.u32 %v2025, 16
    %v2381 = vrot.slane %v2379, 6
    %v2382 = vshll.u32 %v2025, 16
    %v2384 = vrot.slane %v2382, 7
    %v2385 = vor.u32 %v2381, %v2384
    %v2386 = vsel %vm2036, %v2376, %v2385
    %v2388 = vshrl.u32 %v2026, 16
    %v2390 = vrot.slane %v2388, 6
    %v2391 = vshll.u32 %v2026, 16
    %v2393 = vrot.slane %v2391, 7
    %v2394 = vor.u32 %v2390, %v2393
    %v2395 = vsel %vm2036, %v2385, %v2394
    %v2397 = vshrl.u32 %v2027, 16
    %v2399 = vrot.slane %v2397, 6
    %v2400 = vshll.u32 %v2027, 16
    %v2402 = vrot.slane %v2400, 7
    %v2403 = vor.u32 %v2399, %v2402
    %v2404 = vsel %vm2036, %v2394, %v2403
    %v2406 = vshrl.u32 %v2028, 16
    %v2408 = vrot.slane %v2406, 6
    %v2409 = vshll.u32 %v2028, 16
    %v2411 = vrot.slane %v2409, 7
    %v2412 = vor.u32 %v2408, %v2411
    %v2413 = vsel %vm2036, %v2403, %v2412
    %v2415 = vshrl.u32 %v2029, 16
    %v2417 = vrot.slane %v2415, 6
    %v2418 = vshll.u32 %v2029, 16
    %v2420 = vrot.slane %v2418, 7
    %v2421 = vor.u32 %v2417, %v2420
    %v2422 = vsel %vm2036, %v2412, %v2421
    %v2424 = vshrl.u32 %v2030, 16
    %v2426 = vrot.slane %v2424, 6
    %v2427 = vshll.u32 %v2030, 16
    %v2429 = vrot.slane %v2427, 7
    %v2430 = vor.u32 %v2426, %v2429
    %v2431 = vsel %vm2036, %v2421, %v2430
    %v2433 = vshrl.u32 %v2031, 16
    %v2435 = vrot.slane %v2433, 6
    %v2436 = vshll.u32 %v2031, 16
    %v2438 = vrot.slane %v2436, 7
    %v2439 = vor.u32 %v2435, %v2438
    %v2440 = vsel %vm2036, %v2430, %v2439
    %v2442 = vshrl.u32 %v2032, 16
    %v2444 = vrot.slane %v2442, 6
    %v2445 = vshll.u32 %v2032, 16
    %v2447 = vrot.slane %v2445, 7
    %v2448 = vor.u32 %v2444, %v2447
    %v2449 = vsel %vm2036, %v2439, %v2448
    %v2451 = vshrl.u32 %v2033, 16
    %v2453 = vrot.slane %v2451, 6
    %v2454 = vshll.u32 %v2033, 16
    %v2456 = vrot.slane %v2454, 7
    %v2457 = vor.u32 %v2453, %v2456
    %v2458 = vsel %vm2036, %v2448, %v2457
    %v2460 = vshrl.u32 %v2034, 16
    %v2462 = vrot.slane %v2460, 6
    %v2463 = vshll.u32 %v2034, 16
    %v2465 = vrot.slane %v2463, 7
    %v2466 = vor.u32 %v2462, %v2465
    %v2467 = vsel %vm2036, %v2457, %v2466
    %v2469 = vshrl.u32 %v2035, 16
    %v2471 = vrot.slane %v2469, 6
    %v2472 = vshll.u32 %v2035, 16
    %v2474 = vrot.slane %v2472, 7
    %v2475 = vor.u32 %v2471, %v2474
    %v2476 = vsel %vm2036, %v2466, %v2475
    %2477 = vrot.lane.b32.xlu0 %v2053, 32
    %v2478 = vpop.permute.xlu0 %2477
    %2479 = vrot.lane.b32.xlu0 %v2062, 32
    %v2480 = vpop.permute.xlu0 %2479
    %2481 = vrot.lane.b32.xlu0 %v2071, 32
    %v2482 = vpop.permute.xlu0 %2481
    %2483 = vrot.lane.b32.xlu0 %v2080, 32
    %v2484 = vpop.permute.xlu0 %2483
    %2485 = vrot.lane.b32.xlu0 %v2089, 32
    %v2486 = vpop.permute.xlu0 %2485
    %2487 = vrot.lane.b32.xlu0 %v2098, 32
    %v2488 = vpop.permute.xlu0 %2487
    %2489 = vrot.lane.b32.xlu0 %v2107, 32
    %v2490 = vpop.permute.xlu0 %2489
    %2491 = vrot.lane.b32.xlu0 %v2116, 32
    %v2492 = vpop.permute.xlu0 %2491
    %2493 = vrot.lane.b32.xlu0 %v2125, 32
    %v2494 = vpop.permute.xlu0 %2493
    %2495 = vrot.lane.b32.xlu0 %v2134, 32
    %v2496 = vpop.permute.xlu0 %2495
    %2497 = vrot.lane.b32.xlu0 %v2143, 32
    %v2498 = vpop.permute.xlu0 %2497
    %2499 = vrot.lane.b32.xlu0 %v2152, 32
    %v2500 = vpop.permute.xlu0 %2499
    %2501 = vrot.lane.b32.xlu0 %v2161, 32
    %v2502 = vpop.permute.xlu0 %2501
    %2503 = vrot.lane.b32.xlu0 %v2170, 32
    %v2504 = vpop.permute.xlu0 %2503
    %2505 = vrot.lane.b32.xlu0 %v2179, 32
    %v2506 = vpop.permute.xlu0 %2505
    %2507 = vrot.lane.b32.xlu0 %v2188, 32
    %v2508 = vpop.permute.xlu0 %2507
    %2509 = vrot.lane.b32.xlu0 %v2197, 32
    %v2510 = vpop.permute.xlu0 %2509
    %2511 = vrot.lane.b32.xlu0 %v2206, 32
    %v2512 = vpop.permute.xlu0 %2511
    %2513 = vrot.lane.b32.xlu0 %v2215, 32
    %v2514 = vpop.permute.xlu0 %2513
    %2515 = vrot.lane.b32.xlu0 %v2224, 32
    %v2516 = vpop.permute.xlu0 %2515
    %2517 = vrot.lane.b32.xlu0 %v2233, 32
    %v2518 = vpop.permute.xlu0 %2517
    %2519 = vrot.lane.b32.xlu0 %v2242, 32
    %v2520 = vpop.permute.xlu0 %2519
    %2521 = vrot.lane.b32.xlu0 %v2251, 32
    %v2522 = vpop.permute.xlu0 %2521
    %2523 = vrot.lane.b32.xlu0 %v2260, 32
    %v2524 = vpop.permute.xlu0 %2523
    %2525 = vrot.lane.b32.xlu0 %v2269, 32
    %v2526 = vpop.permute.xlu0 %2525
    %2527 = vrot.lane.b32.xlu0 %v2278, 32
    %v2528 = vpop.permute.xlu0 %2527
    %2529 = vrot.lane.b32.xlu0 %v2287, 32
    %v2530 = vpop.permute.xlu0 %2529
    %2531 = vrot.lane.b32.xlu0 %v2296, 32
    %v2532 = vpop.permute.xlu0 %2531
    %2533 = vrot.lane.b32.xlu0 %v2305, 32
    %v2534 = vpop.permute.xlu0 %2533
    %2535 = vrot.lane.b32.xlu0 %v2314, 32
    %v2536 = vpop.permute.xlu0 %2535
    %2537 = vrot.lane.b32.xlu0 %v2323, 32
    %v2538 = vpop.permute.xlu0 %2537
    %2539 = vrot.lane.b32.xlu0 %v2332, 32
    %v2540 = vpop.permute.xlu0 %2539
    %2541 = vrot.lane.b32.xlu0 %v2341, 32
    %v2542 = vpop.permute.xlu0 %2541
    %2543 = vrot.lane.b32.xlu0 %v2350, 32
    %v2544 = vpop.permute.xlu0 %2543
    %2545 = vrot.lane.b32.xlu0 %v2359, 32
    %v2546 = vpop.permute.xlu0 %2545
    %2547 = vrot.lane.b32.xlu0 %v2368, 32
    %v2548 = vpop.permute.xlu0 %2547
    %2549 = vrot.lane.b32.xlu0 %v2377, 32
    %v2550 = vpop.permute.xlu0 %2549
    %2551 = vrot.lane.b32.xlu0 %v2386, 32
    %v2552 = vpop.permute.xlu0 %2551
    %2553 = vrot.lane.b32.xlu0 %v2395, 32
    %v2554 = vpop.permute.xlu0 %2553
    %2555 = vrot.lane.b32.xlu0 %v2404, 32
    %v2556 = vpop.permute.xlu0 %2555
    %2557 = vrot.lane.b32.xlu0 %v2413, 32
    %v2558 = vpop.permute.xlu0 %2557
    %2559 = vrot.lane.b32.xlu0 %v2422, 32
    %v2560 = vpop.permute.xlu0 %2559
    %2561 = vrot.lane.b32.xlu0 %v2431, 32
    %v2562 = vpop.permute.xlu0 %2561
    %2563 = vrot.lane.b32.xlu0 %v2440, 32
    %v2564 = vpop.permute.xlu0 %2563
    %2565 = vrot.lane.b32.xlu0 %v2449, 32
    %v2566 = vpop.permute.xlu0 %2565
    %2567 = vrot.lane.b32.xlu0 %v2458, 32
    %v2568 = vpop.permute.xlu0 %2567
    %2569 = vrot.lane.b32.xlu0 %v2467, 32
    %v2570 = vpop.permute.xlu0 %2569
    %2571 = vrot.lane.b32.xlu0 %v2476, 32
    %v2572 = vpop.permute.xlu0 %2571
    %vm2621 = vcmask 326912
    %2622 = vst.msk [vmem:[#allocation4] sm:$0xff] %vm2621, %v2478
    %2623 = vst.msk [vmem:[#allocation4 + $0x18] sm:$0xff] %vm2621, %v2480
    %2624 = vst.msk [vmem:[#allocation4 + $0x30] sm:$0xff] %vm2621, %v2482
    %2625 = vst.msk [vmem:[#allocation4 + $0x48] sm:$0xff] %vm2621, %v2484
    %2626 = vst.msk [vmem:[#allocation4 + $0x60] sm:$0xff] %vm2621, %v2486
    %2627 = vst.msk [vmem:[#allocation4 + $0x78] sm:$0xff] %vm2621, %v2488
    %2628 = vst.msk [vmem:[#allocation4 + $0x90] sm:$0xff] %vm2621, %v2490
    %2629 = vst.msk [vmem:[#allocation4 + $0xa8] sm:$0xff] %vm2621, %v2492
    %2630 = vst.msk [vmem:[#allocation4 + $0xc0] sm:$0xff] %vm2621, %v2494
    %2631 = vst.msk [vmem:[#allocation4 + $0xd8] sm:$0xff] %vm2621, %v2496
    %2632 = vst.msk [vmem:[#allocation4 + $0xf0] sm:$0xff] %vm2621, %v2498
    %2633 = vst.msk [vmem:[#allocation4 + $0x108] sm:$0xff] %vm2621, %v2500
    %2634 = vst.msk [vmem:[#allocation4 + $0x120] sm:$0xff] %vm2621, %v2502
    %2635 = vst.msk [vmem:[#allocation4 + $0x138] sm:$0xff] %vm2621, %v2504
    %2636 = vst.msk [vmem:[#allocation4 + $0x150] sm:$0xff] %vm2621, %v2506
    %2637 = vst.msk [vmem:[#allocation4 + $0x168] sm:$0xff] %vm2621, %v2508
    %2638 = vst.msk [vmem:[#allocation4 + $0x180] sm:$0xff] %vm2621, %v2510
    %2639 = vst.msk [vmem:[#allocation4 + $0x198] sm:$0xff] %vm2621, %v2512
    %2640 = vst.msk [vmem:[#allocation4 + $0x1b0] sm:$0xff] %vm2621, %v2514
    %2641 = vst.msk [vmem:[#allocation4 + $0x1c8] sm:$0xff] %vm2621, %v2516
    %2642 = vst.msk [vmem:[#allocation4 + $0x1e0] sm:$0xff] %vm2621, %v2518
    %2643 = vst.msk [vmem:[#allocation4 + $0x1f8] sm:$0xff] %vm2621, %v2520
    %2644 = vst.msk [vmem:[#allocation4 + $0x210] sm:$0xff] %vm2621, %v2522
    %2645 = vst.msk [vmem:[#allocation4 + $0x228] sm:$0xff] %vm2621, %v2524
    %2646 = vst.msk [vmem:[#allocation4 + $0x240] sm:$0xff] %vm2621, %v2526
    %2647 = vst.msk [vmem:[#allocation4 + $0x258] sm:$0xff] %vm2621, %v2528
    %2648 = vst.msk [vmem:[#allocation4 + $0x270] sm:$0xff] %vm2621, %v2530
    %2649 = vst.msk [vmem:[#allocation4 + $0x288] sm:$0xff] %vm2621, %v2532
    %2650 = vst.msk [vmem:[#allocation4 + $0x2a0] sm:$0xff] %vm2621, %v2534
    %2651 = vst.msk [vmem:[#allocation4 + $0x2b8] sm:$0xff] %vm2621, %v2536
    %2652 = vst.msk [vmem:[#allocation4 + $0x2d0] sm:$0xff] %vm2621, %v2538
    %2653 = vst.msk [vmem:[#allocation4 + $0x2e8] sm:$0xff] %vm2621, %v2540
    %2654 = vst.msk [vmem:[#allocation4 + $0x300] sm:$0xff] %vm2621, %v2542
    %2655 = vst.msk [vmem:[#allocation4 + $0x318] sm:$0xff] %vm2621, %v2544
    %2656 = vst.msk [vmem:[#allocation4 + $0x330] sm:$0xff] %vm2621, %v2546
    %2657 = vst.msk [vmem:[#allocation4 + $0x348] sm:$0xff] %vm2621, %v2548
    %2658 = vst.msk [vmem:[#allocation4 + $0x360] sm:$0xff] %vm2621, %v2550
    %2659 = vst.msk [vmem:[#allocation4 + $0x378] sm:$0xff] %vm2621, %v2552
    %2660 = vst.msk [vmem:[#allocation4 + $0x390] sm:$0xff] %vm2621, %v2554
    %2661 = vst.msk [vmem:[#allocation4 + $0x3a8] sm:$0xff] %vm2621, %v2556
    %2662 = vst.msk [vmem:[#allocation4 + $0x3c0] sm:$0xff] %vm2621, %v2558
    %2663 = vst.msk [vmem:[#allocation4 + $0x3d8] sm:$0xff] %vm2621, %v2560
    %2664 = vst.msk [vmem:[#allocation4 + $0x3f0] sm:$0xff] %vm2621, %v2562
    %2665 = vst.msk [vmem:[#allocation4 + $0x408] sm:$0xff] %vm2621, %v2564
    %2666 = vst.msk [vmem:[#allocation4 + $0x420] sm:$0xff] %vm2621, %v2566
    %2667 = vst.msk [vmem:[#allocation4 + $0x438] sm:$0xff] %vm2621, %v2568
    %2668 = vst.msk [vmem:[#allocation4 + $0x450] sm:$0xff] %vm2621, %v2570
    %2669 = vst.msk [vmem:[#allocation4 + $0x468] sm:$0xff] %vm2621, %v2572
    %v2670 = vld [vmem:[#allocation2] sm:$0x80]
    %v2671 = vld [vmem:[#allocation2 + $0x8] sm:$0xff]
    %v2672 = vld [vmem:[#allocation2 + $0x10] sm:$0xff]
    %v2673 = vld [vmem:[#allocation2 + $0x18] sm:$0xff]
    %v2674 = vld [vmem:[#allocation2 + $0x20] sm:$0xff]
    %v2675 = vld [vmem:[#allocation2 + $0x28] sm:$0xff]
    %v2676 = vld [vmem:[#allocation2 + $0x30] sm:$0xff]
    %v2677 = vld [vmem:[#allocation2 + $0x38] sm:$0xff]
    %v2678 = vld [vmem:[#allocation2 + $0x40] sm:$0xff]
    %v2679 = vld [vmem:[#allocation2 + $0x48] sm:$0xff]
    %v2680 = vld [vmem:[#allocation2 + $0x50] sm:$0xff]
    %v2681 = vld [vmem:[#allocation2 + $0x58] sm:$0xff]
    %v2682 = vld [vmem:[#allocation2 + $0x60] sm:$0xff]
    %v2683 = vld [vmem:[#allocation2 + $0x68] sm:$0xff]
    %v2684 = vld [vmem:[#allocation2 + $0x70] sm:$0xff]
    %v2685 = vld [vmem:[#allocation2 + $0x78] sm:$0xff]
    %v2686 = vld [vmem:[#allocation2 + $0x80] sm:$0xff]
    %v2687 = vld [vmem:[#allocation2 + $0x88] sm:$0xff]
    %v2688 = vld [vmem:[#allocation2 + $0x90] sm:$0xff]
    %v2689 = vld [vmem:[#allocation2 + $0x98] sm:$0xff]
    %v2690 = vld [vmem:[#allocation2 + $0xa0] sm:$0xff]
    %v2691 = vld [vmem:[#allocation2 + $0xa8] sm:$0xff]
    %v2692 = vld [vmem:[#allocation2 + $0xb0] sm:$0xff]
    %v2693 = vld [vmem:[#allocation2 + $0xb8] sm:$0xff]
    %v2694 = vld [vmem:[#allocation2 + $0xc0] sm:$0xff]
    %v2695 = vld [vmem:[#allocation2 + $0xc8] sm:$0xff]
    %v2696 = vld [vmem:[#allocation2 + $0xd0] sm:$0xff]
    %v2697 = vld [vmem:[#allocation2 + $0xd8] sm:$0xff]
    %v2698 = vld [vmem:[#allocation2 + $0xe0] sm:$0xff]
    %v2699 = vld [vmem:[#allocation2 + $0xe8] sm:$0xff]
    %v2700 = vld [vmem:[#allocation2 + $0xf0] sm:$0xff]
    %v2701 = vld [vmem:[#allocation2 + $0xf8] sm:$0xff]
    %v2702 = vld [vmem:[#allocation2 + $0x100] sm:$0xff]
    %v2703 = vld [vmem:[#allocation2 + $0x108] sm:$0xff]
    %v2704 = vld [vmem:[#allocation2 + $0x110] sm:$0xff]
    %v2705 = vld [vmem:[#allocation2 + $0x118] sm:$0xff]
    %v2706 = vld [vmem:[#allocation2 + $0x120] sm:$0xff]
    %v2707 = vld [vmem:[#allocation2 + $0x128] sm:$0xff]
    %v2708 = vld [vmem:[#allocation2 + $0x130] sm:$0xff]
    %v2709 = vld [vmem:[#allocation2 + $0x138] sm:$0xff]
    %v2710 = vld [vmem:[#allocation2 + $0x140] sm:$0xff]
    %v2711 = vld [vmem:[#allocation2 + $0x148] sm:$0xff]
    %v2712 = vld [vmem:[#allocation2 + $0x150] sm:$0xff]
    %v2713 = vld [vmem:[#allocation2 + $0x158] sm:$0xff]
    %v2714 = vld [vmem:[#allocation2 + $0x160] sm:$0xff]
    %v2715 = vld [vmem:[#allocation2 + $0x168] sm:$0xff]
    %v2716 = vld [vmem:[#allocation2 + $0x170] sm:$0xff]
    %v2717 = vld [vmem:[#allocation2 + $0x178] sm:$0xff]
    %v2718 = vld [vmem:[#allocation2 + $0x180] sm:$0x7f]
    %vm2768 = vcmask 1040384
    %v2769 = vrot.slane %v2670, 7
    %v2770 = vrot.slane %v2671, 7
    %v2771 = vsel %vm2768, %v2769, %v2770
    %v2772 = vrot.slane %v2672, 7
    %v2773 = vsel %vm2768, %v2770, %v2772
    %v2774 = vrot.slane %v2673, 7
    %v2775 = vsel %vm2768, %v2772, %v2774
    %v2776 = vrot.slane %v2674, 7
    %v2777 = vsel %vm2768, %v2774, %v2776
    %v2778 = vrot.slane %v2675, 7
    %v2779 = vsel %vm2768, %v2776, %v2778
    %v2780 = vrot.slane %v2676, 7
    %v2781 = vsel %vm2768, %v2778, %v2780
    %v2782 = vrot.slane %v2677, 7
    %v2783 = vsel %vm2768, %v2780, %v2782
    %v2784 = vrot.slane %v2678, 7
    %v2785 = vsel %vm2768, %v2782, %v2784
    %v2786 = vrot.slane %v2679, 7
    %v2787 = vsel %vm2768, %v2784, %v2786
    %v2788 = vrot.slane %v2680, 7
    %v2789 = vsel %vm2768, %v2786, %v2788
    %v2790 = vrot.slane %v2681, 7
    %v2791 = vsel %vm2768, %v2788, %v2790
    %v2792 = vrot.slane %v2682, 7
    %v2793 = vsel %vm2768, %v2790, %v2792
    %v2794 = vrot.slane %v2683, 7
    %v2795 = vsel %vm2768, %v2792, %v2794
    %v2796 = vrot.slane %v2684, 7
    %v2797 = vsel %vm2768, %v2794, %v2796
    %v2798 = vrot.slane %v2685, 7
    %v2799 = vsel %vm2768, %v2796, %v2798
    %v2800 = vrot.slane %v2686, 7
    %v2801 = vsel %vm2768, %v2798, %v2800
    %v2802 = vrot.slane %v2687, 7
    %v2803 = vsel %vm2768, %v2800, %v2802
    %v2804 = vrot.slane %v2688, 7
    %v2805 = vsel %vm2768, %v2802, %v2804
    %v2806 = vrot.slane %v2689, 7
    %v2807 = vsel %vm2768, %v2804, %v2806
    %v2808 = vrot.slane %v2690, 7
    %v2809 = vsel %vm2768, %v2806, %v2808
    %v2810 = vrot.slane %v2691, 7
    %v2811 = vsel %vm2768, %v2808, %v2810
    %v2812 = vrot.slane %v2692, 7
    %v2813 = vsel %vm2768, %v2810, %v2812
    %v2814 = vrot.slane %v2693, 7
    %v2815 = vsel %vm2768, %v2812, %v2814
    %v2816 = vrot.slane %v2694, 7
    %v2817 = vsel %vm2768, %v2814, %v2816
    %v2818 = vrot.slane %v2695, 7
    %v2819 = vsel %vm2768, %v2816, %v2818
    %v2820 = vrot.slane %v2696, 7
    %v2821 = vsel %vm2768, %v2818, %v2820
    %v2822 = vrot.slane %v2697, 7
    %v2823 = vsel %vm2768, %v2820, %v2822
    %v2824 = vrot.slane %v2698, 7
    %v2825 = vsel %vm2768, %v2822, %v2824
    %v2826 = vrot.slane %v2699, 7
    %v2827 = vsel %vm2768, %v2824, %v2826
    %v2828 = vrot.slane %v2700, 7
    %v2829 = vsel %vm2768, %v2826, %v2828
    %v2830 = vrot.slane %v2701, 7
    %v2831 = vsel %vm2768, %v2828, %v2830
    %v2832 = vrot.slane %v2702, 7
    %v2833 = vsel %vm2768, %v2830, %v2832
    %v2834 = vrot.slane %v2703, 7
    %v2835 = vsel %vm2768, %v2832, %v2834
    %v2836 = vrot.slane %v2704, 7
    %v2837 = vsel %vm2768, %v2834, %v2836
    %v2838 = vrot.slane %v2705, 7
    %v2839 = vsel %vm2768, %v2836, %v2838
    %v2840 = vrot.slane %v2706, 7
    %v2841 = vsel %vm2768, %v2838, %v2840
    %v2842 = vrot.slane %v2707, 7
    %v2843 = vsel %vm2768, %v2840, %v2842
    %v2844 = vrot.slane %v2708, 7
    %v2845 = vsel %vm2768, %v2842, %v2844
    %v2846 = vrot.slane %v2709, 7
    %v2847 = vsel %vm2768, %v2844, %v2846
    %v2848 = vrot.slane %v2710, 7
    %v2849 = vsel %vm2768, %v2846, %v2848
    %v2850 = vrot.slane %v2711, 7
    %v2851 = vsel %vm2768, %v2848, %v2850
    %v2852 = vrot.slane %v2712, 7
    %v2853 = vsel %vm2768, %v2850, %v2852
    %v2854 = vrot.slane %v2713, 7
    %v2855 = vsel %vm2768, %v2852, %v2854
    %v2856 = vrot.slane %v2714, 7
    %v2857 = vsel %vm2768, %v2854, %v2856
    %v2858 = vrot.slane %v2715, 7
    %v2859 = vsel %vm2768, %v2856, %v2858
    %v2860 = vrot.slane %v2716, 7
    %v2861 = vsel %vm2768, %v2858, %v2860
    %v2862 = vrot.slane %v2717, 7
    %v2863 = vsel %vm2768, %v2860, %v2862
    %v2864 = vrot.slane %v2718, 7
    %v2865 = vsel %vm2768, %v2862, %v2864
    %2866 = vrot.lane.b32.xlu0 %v2771, 40
    %v2867 = vpop.permute.xlu0 %2866
    %2868 = vrot.lane.b32.xlu0 %v2773, 40
    %v2869 = vpop.permute.xlu0 %2868
    %2870 = vrot.lane.b32.xlu0 %v2775, 40
    %v2871 = vpop.permute.xlu0 %2870
    %2872 = vrot.lane.b32.xlu0 %v2777, 40
    %v2873 = vpop.permute.xlu0 %2872
    %2874 = vrot.lane.b32.xlu0 %v2779, 40
    %v2875 = vpop.permute.xlu0 %2874
    %2876 = vrot.lane.b32.xlu0 %v2781, 40
    %v2877 = vpop.permute.xlu0 %2876
    %2878 = vrot.lane.b32.xlu0 %v2783, 40
    %v2879 = vpop.permute.xlu0 %2878
    %2880 = vrot.lane.b32.xlu0 %v2785, 40
    %v2881 = vpop.permute.xlu0 %2880
    %2882 = vrot.lane.b32.xlu0 %v2787, 40
    %v2883 = vpop.permute.xlu0 %2882
    %2884 = vrot.lane.b32.xlu0 %v2789, 40
    %v2885 = vpop.permute.xlu0 %2884
    %2886 = vrot.lane.b32.xlu0 %v2791, 40
    %v2887 = vpop.permute.xlu0 %2886
    %2888 = vrot.lane.b32.xlu0 %v2793, 40
    %v2889 = vpop.permute.xlu0 %2888
    %2890 = vrot.lane.b32.xlu0 %v2795, 40
    %v2891 = vpop.permute.xlu0 %2890
    %2892 = vrot.lane.b32.xlu0 %v2797, 40
    %v2893 = vpop.permute.xlu0 %2892
    %2894 = vrot.lane.b32.xlu0 %v2799, 40
    %v2895 = vpop.permute.xlu0 %2894
    %2896 = vrot.lane.b32.xlu0 %v2801, 40
    %v2897 = vpop.permute.xlu0 %2896
    %2898 = vrot.lane.b32.xlu0 %v2803, 40
    %v2899 = vpop.permute.xlu0 %2898
    %2900 = vrot.lane.b32.xlu0 %v2805, 40
    %v2901 = vpop.permute.xlu0 %2900
    %2902 = vrot.lane.b32.xlu0 %v2807, 40
    %v2903 = vpop.permute.xlu0 %2902
    %2904 = vrot.lane.b32.xlu0 %v2809, 40
    %v2905 = vpop.permute.xlu0 %2904
    %2906 = vrot.lane.b32.xlu0 %v2811, 40
    %v2907 = vpop.permute.xlu0 %2906
    %2908 = vrot.lane.b32.xlu0 %v2813, 40
    %v2909 = vpop.permute.xlu0 %2908
    %2910 = vrot.lane.b32.xlu0 %v2815, 40
    %v2911 = vpop.permute.xlu0 %2910
    %2912 = vrot.lane.b32.xlu0 %v2817, 40
    %v2913 = vpop.permute.xlu0 %2912
    %2914 = vrot.lane.b32.xlu0 %v2819, 40
    %v2915 = vpop.permute.xlu0 %2914
    %2916 = vrot.lane.b32.xlu0 %v2821, 40
    %v2917 = vpop.permute.xlu0 %2916
    %2918 = vrot.lane.b32.xlu0 %v2823, 40
    %v2919 = vpop.permute.xlu0 %2918
    %2920 = vrot.lane.b32.xlu0 %v2825, 40
    %v2921 = vpop.permute.xlu0 %2920
    %2922 = vrot.lane.b32.xlu0 %v2827, 40
    %v2923 = vpop.permute.xlu0 %2922
    %2924 = vrot.lane.b32.xlu0 %v2829, 40
    %v2925 = vpop.permute.xlu0 %2924
    %2926 = vrot.lane.b32.xlu0 %v2831, 40
    %v2927 = vpop.permute.xlu0 %2926
    %2928 = vrot.lane.b32.xlu0 %v2833, 40
    %v2929 = vpop.permute.xlu0 %2928
    %2930 = vrot.lane.b32.xlu0 %v2835, 40
    %v2931 = vpop.permute.xlu0 %2930
    %2932 = vrot.lane.b32.xlu0 %v2837, 40
    %v2933 = vpop.permute.xlu0 %2932
    %2934 = vrot.lane.b32.xlu0 %v2839, 40
    %v2935 = vpop.permute.xlu0 %2934
    %2936 = vrot.lane.b32.xlu0 %v2841, 40
    %v2937 = vpop.permute.xlu0 %2936
    %2938 = vrot.lane.b32.xlu0 %v2843, 40
    %v2939 = vpop.permute.xlu0 %2938
    %2940 = vrot.lane.b32.xlu0 %v2845, 40
    %v2941 = vpop.permute.xlu0 %2940
    %2942 = vrot.lane.b32.xlu0 %v2847, 40
    %v2943 = vpop.permute.xlu0 %2942
    %2944 = vrot.lane.b32.xlu0 %v2849, 40
    %v2945 = vpop.permute.xlu0 %2944
    %2946 = vrot.lane.b32.xlu0 %v2851, 40
    %v2947 = vpop.permute.xlu0 %2946
    %2948 = vrot.lane.b32.xlu0 %v2853, 40
    %v2949 = vpop.permute.xlu0 %2948
    %2950 = vrot.lane.b32.xlu0 %v2855, 40
    %v2951 = vpop.permute.xlu0 %2950
    %2952 = vrot.lane.b32.xlu0 %v2857, 40
    %v2953 = vpop.permute.xlu0 %2952
    %2954 = vrot.lane.b32.xlu0 %v2859, 40
    %v2955 = vpop.permute.xlu0 %2954
    %2956 = vrot.lane.b32.xlu0 %v2861, 40
    %v2957 = vpop.permute.xlu0 %2956
    %2958 = vrot.lane.b32.xlu0 %v2863, 40
    %v2959 = vpop.permute.xlu0 %2958
    %2960 = vrot.lane.b32.xlu0 %v2865, 40
    %v2961 = vpop.permute.xlu0 %2960
    %vm3010 = vcmask 392512
    %3011 = vst.msk [vmem:[#allocation4] sm:$0xff] %vm3010, %v2867
    %3012 = vst.msk [vmem:[#allocation4 + $0x18] sm:$0xff] %vm3010, %v2869
    %3013 = vst.msk [vmem:[#allocation4 + $0x30] sm:$0xff] %vm3010, %v2871
    %3014 = vst.msk [vmem:[#allocation4 + $0x48] sm:$0xff] %vm3010, %v2873
    %3015 = vst.msk [vmem:[#allocation4 + $0x60] sm:$0xff] %vm3010, %v2875
    %3016 = vst.msk [vmem:[#allocation4 + $0x78] sm:$0xff] %vm3010, %v2877
    %3017 = vst.msk [vmem:[#allocation4 + $0x90] sm:$0xff] %vm3010, %v2879
    %3018 = vst.msk [vmem:[#allocation4 + $0xa8] sm:$0xff] %vm3010, %v2881
    %3019 = vst.msk [vmem:[#allocation4 + $0xc0] sm:$0xff] %vm3010, %v2883
    %3020 = vst.msk [vmem:[#allocation4 + $0xd8] sm:$0xff] %vm3010, %v2885
    %3021 = vst.msk [vmem:[#allocation4 + $0xf0] sm:$0xff] %vm3010, %v2887
    %3022 = vst.msk [vmem:[#allocation4 + $0x108] sm:$0xff] %vm3010, %v2889
    %3023 = vst.msk [vmem:[#allocation4 + $0x120] sm:$0xff] %vm3010, %v2891
    %3024 = vst.msk [vmem:[#allocation4 + $0x138] sm:$0xff] %vm3010, %v2893
    %3025 = vst.msk [vmem:[#allocation4 + $0x150] sm:$0xff] %vm3010, %v2895
    %3026 = vst.msk [vmem:[#allocation4 + $0x168] sm:$0xff] %vm3010, %v2897
    %3027 = vst.msk [vmem:[#allocation4 + $0x180] sm:$0xff] %vm3010, %v2899
    %3028 = vst.msk [vmem:[#allocation4 + $0x198] sm:$0xff] %vm3010, %v2901
    %3029 = vst.msk [vmem:[#allocation4 + $0x1b0] sm:$0xff] %vm3010, %v2903
    %3030 = vst.msk [vmem:[#allocation4 + $0x1c8] sm:$0xff] %vm3010, %v2905
    %3031 = vst.msk [vmem:[#allocation4 + $0x1e0] sm:$0xff] %vm3010, %v2907
    %3032 = vst.msk [vmem:[#allocation4 + $0x1f8] sm:$0xff] %vm3010, %v2909
    %3033 = vst.msk [vmem:[#allocation4 + $0x210] sm:$0xff] %vm3010, %v2911
    %3034 = vst.msk [vmem:[#allocation4 + $0x228] sm:$0xff] %vm3010, %v2913
    %3035 = vst.msk [vmem:[#allocation4 + $0x240] sm:$0xff] %vm3010, %v2915
    %3036 = vst.msk [vmem:[#allocation4 + $0x258] sm:$0xff] %vm3010, %v2917
    %3037 = vst.msk [vmem:[#allocation4 + $0x270] sm:$0xff] %vm3010, %v2919
    %3038 = vst.msk [vmem:[#allocation4 + $0x288] sm:$0xff] %vm3010, %v2921
    %3039 = vst.msk [vmem:[#allocation4 + $0x2a0] sm:$0xff] %vm3010, %v2923
    %3040 = vst.msk [vmem:[#allocation4 + $0x2b8] sm:$0xff] %vm3010, %v2925
    %3041 = vst.msk [vmem:[#allocation4 + $0x2d0] sm:$0xff] %vm3010, %v2927
    %3042 = vst.msk [vmem:[#allocation4 + $0x2e8] sm:$0xff] %vm3010, %v2929
    %3043 = vst.msk [vmem:[#allocation4 + $0x300] sm:$0xff] %vm3010, %v2931
    %3044 = vst.msk [vmem:[#allocation4 + $0x318] sm:$0xff] %vm3010, %v2933
    %3045 = vst.msk [vmem:[#allocation4 + $0x330] sm:$0xff] %vm3010, %v2935
    %3046 = vst.msk [vmem:[#allocation4 + $0x348] sm:$0xff] %vm3010, %v2937
    %3047 = vst.msk [vmem:[#allocation4 + $0x360] sm:$0xff] %vm3010, %v2939
    %3048 = vst.msk [vmem:[#allocation4 + $0x378] sm:$0xff] %vm3010, %v2941
    %3049 = vst.msk [vmem:[#allocation4 + $0x390] sm:$0xff] %vm3010, %v2943
    %3050 = vst.msk [vmem:[#allocation4 + $0x3a8] sm:$0xff] %vm3010, %v2945
    %3051 = vst.msk [vmem:[#allocation4 + $0x3c0] sm:$0xff] %vm3010, %v2947
    %3052 = vst.msk [vmem:[#allocation4 + $0x3d8] sm:$0xff] %vm3010, %v2949
    %3053 = vst.msk [vmem:[#allocation4 + $0x3f0] sm:$0xff] %vm3010, %v2951
    %3054 = vst.msk [vmem:[#allocation4 + $0x408] sm:$0xff] %vm3010, %v2953
    %3055 = vst.msk [vmem:[#allocation4 + $0x420] sm:$0xff] %vm3010, %v2955
    %3056 = vst.msk [vmem:[#allocation4 + $0x438] sm:$0xff] %vm3010, %v2957
    %3057 = vst.msk [vmem:[#allocation4 + $0x450] sm:$0xff] %vm3010, %v2959
    %3058 = vst.msk [vmem:[#allocation4 + $0x468] sm:$0xff] %vm3010, %v2961
    %v3059 = vld [vmem:[#allocation2 + $0x8] sm:$0xf0]
    %v3060 = vld [vmem:[#allocation2 + $0x10] sm:$0xff]
    %v3061 = vld [vmem:[#allocation2 + $0x18] sm:$0xff]
    %v3062 = vld [vmem:[#allocation2 + $0x20] sm:$0xff]
    %v3063 = vld [vmem:[#allocation2 + $0x28] sm:$0xff]
    %v3064 = vld [vmem:[#allocation2 + $0x30] sm:$0xff]
    %v3065 = vld [vmem:[#allocation2 + $0x38] sm:$0xff]
    %v3066 = vld [vmem:[#allocation2 + $0x40] sm:$0xff]
    %v3067 = vld [vmem:[#allocation2 + $0x48] sm:$0xff]
    %v3068 = vld [vmem:[#allocation2 + $0x50] sm:$0xff]
    %v3069 = vld [vmem:[#allocation2 + $0x58] sm:$0xff]
    %v3070 = vld [vmem:[#allocation2 + $0x60] sm:$0xff]
    %v3071 = vld [vmem:[#allocation2 + $0x68] sm:$0xff]
    %v3072 = vld [vmem:[#allocation2 + $0x70] sm:$0xff]
    %v3073 = vld [vmem:[#allocation2 + $0x78] sm:$0xff]
    %v3074 = vld [vmem:[#allocation2 + $0x80] sm:$0xff]
    %v3075 = vld [vmem:[#allocation2 + $0x88] sm:$0xff]
    %v3076 = vld [vmem:[#allocation2 + $0x90] sm:$0xff]
    %v3077 = vld [vmem:[#allocation2 + $0x98] sm:$0xff]
    %v3078 = vld [vmem:[#allocation2 + $0xa0] sm:$0xff]
    %v3079 = vld [vmem:[#allocation2 + $0xa8] sm:$0xff]
    %v3080 = vld [vmem:[#allocation2 + $0xb0] sm:$0xff]
    %v3081 = vld [vmem:[#allocation2 + $0xb8] sm:$0xff]
    %v3082 = vld [vmem:[#allocation2 + $0xc0] sm:$0xff]
    %v3083 = vld [vmem:[#allocation2 + $0xc8] sm:$0xff]
    %v3084 = vld [vmem:[#allocation2 + $0xd0] sm:$0xff]
    %v3085 = vld [vmem:[#allocation2 + $0xd8] sm:$0xff]
    %v3086 = vld [vmem:[#allocation2 + $0xe0] sm:$0xff]
    %v3087 = vld [vmem:[#allocation2 + $0xe8] sm:$0xff]
    %v3088 = vld [vmem:[#allocation2 + $0xf0] sm:$0xff]
    %v3089 = vld [vmem:[#allocation2 + $0xf8] sm:$0xff]
    %v3090 = vld [vmem:[#allocation2 + $0x100] sm:$0xff]
    %v3091 = vld [vmem:[#allocation2 + $0x108] sm:$0xff]
    %v3092 = vld [vmem:[#allocation2 + $0x110] sm:$0xff]
    %v3093 = vld [vmem:[#allocation2 + $0x118] sm:$0xff]
    %v3094 = vld [vmem:[#allocation2 + $0x120] sm:$0xff]
    %v3095 = vld [vmem:[#allocation2 + $0x128] sm:$0xff]
    %v3096 = vld [vmem:[#allocation2 + $0x130] sm:$0xff]
    %v3097 = vld [vmem:[#allocation2 + $0x138] sm:$0xff]
    %v3098 = vld [vmem:[#allocation2 + $0x140] sm:$0xff]
    %v3099 = vld [vmem:[#allocation2 + $0x148] sm:$0xff]
    %v3100 = vld [vmem:[#allocation2 + $0x150] sm:$0xff]
    %v3101 = vld [vmem:[#allocation2 + $0x158] sm:$0xff]
    %v3102 = vld [vmem:[#allocation2 + $0x160] sm:$0xff]
    %v3103 = vld [vmem:[#allocation2 + $0x168] sm:$0xff]
    %v3104 = vld [vmem:[#allocation2 + $0x170] sm:$0xff]
    %v3105 = vld [vmem:[#allocation2 + $0x178] sm:$0xff]
    %v3106 = vld [vmem:[#allocation2 + $0x180] sm:$0xff]
    %v3107 = vld [vmem:[#allocation2 + $0x188] sm:$0xf]
    %vm3157 = vcmask 1043456
    %v3158 = vrot.slane %v3059, 4
    %v3159 = vrot.slane %v3060, 4
    %v3160 = vsel %vm3157, %v3158, %v3159
    %v3161 = vrot.slane %v3061, 4
    %v3162 = vsel %vm3157, %v3159, %v3161
    %v3163 = vrot.slane %v3062, 4
    %v3164 = vsel %vm3157, %v3161, %v3163
    %v3165 = vrot.slane %v3063, 4
    %v3166 = vsel %vm3157, %v3163, %v3165
    %v3167 = vrot.slane %v3064, 4
    %v3168 = vsel %vm3157, %v3165, %v3167
    %v3169 = vrot.slane %v3065, 4
    %v3170 = vsel %vm3157, %v3167, %v3169
    %v3171 = vrot.slane %v3066, 4
    %v3172 = vsel %vm3157, %v3169, %v3171
    %v3173 = vrot.slane %v3067, 4
    %v3174 = vsel %vm3157, %v3171, %v3173
    %v3175 = vrot.slane %v3068, 4
    %v3176 = vsel %vm3157, %v3173, %v3175
    %v3177 = vrot.slane %v3069, 4
    %v3178 = vsel %vm3157, %v3175, %v3177
    %v3179 = vrot.slane %v3070, 4
    %v3180 = vsel %vm3157, %v3177, %v3179
    %v3181 = vrot.slane %v3071, 4
    %v3182 = vsel %vm3157, %v3179, %v3181
    %v3183 = vrot.slane %v3072, 4
    %v3184 = vsel %vm3157, %v3181, %v3183
    %v3185 = vrot.slane %v3073, 4
    %v3186 = vsel %vm3157, %v3183, %v3185
    %v3187 = vrot.slane %v3074, 4
    %v3188 = vsel %vm3157, %v3185, %v3187
    %v3189 = vrot.slane %v3075, 4
    %v3190 = vsel %vm3157, %v3187, %v3189
    %v3191 = vrot.slane %v3076, 4
    %v3192 = vsel %vm3157, %v3189, %v3191
    %v3193 = vrot.slane %v3077, 4
    %v3194 = vsel %vm3157, %v3191, %v3193
    %v3195 = vrot.slane %v3078, 4
    %v3196 = vsel %vm3157, %v3193, %v3195
    %v3197 = vrot.slane %v3079, 4
    %v3198 = vsel %vm3157, %v3195, %v3197
    %v3199 = vrot.slane %v3080, 4
    %v3200 = vsel %vm3157, %v3197, %v3199
    %v3201 = vrot.slane %v3081, 4
    %v3202 = vsel %vm3157, %v3199, %v3201
    %v3203 = vrot.slane %v3082, 4
    %v3204 = vsel %vm3157, %v3201, %v3203
    %v3205 = vrot.slane %v3083, 4
    %v3206 = vsel %vm3157, %v3203, %v3205
    %v3207 = vrot.slane %v3084, 4
    %v3208 = vsel %vm3157, %v3205, %v3207
    %v3209 = vrot.slane %v3085, 4
    %v3210 = vsel %vm3157, %v3207, %v3209
    %v3211 = vrot.slane %v3086, 4
    %v3212 = vsel %vm3157, %v3209, %v3211
    %v3213 = vrot.slane %v3087, 4
    %v3214 = vsel %vm3157, %v3211, %v3213
    %v3215 = vrot.slane %v3088, 4
    %v3216 = vsel %vm3157, %v3213, %v3215
    %v3217 = vrot.slane %v3089, 4
    %v3218 = vsel %vm3157, %v3215, %v3217
    %v3219 = vrot.slane %v3090, 4
    %v3220 = vsel %vm3157, %v3217, %v3219
    %v3221 = vrot.slane %v3091, 4
    %v3222 = vsel %vm3157, %v3219, %v3221
    %v3223 = vrot.slane %v3092, 4
    %v3224 = vsel %vm3157, %v3221, %v3223
    %v3225 = vrot.slane %v3093, 4
    %v3226 = vsel %vm3157, %v3223, %v3225
    %v3227 = vrot.slane %v3094, 4
    %v3228 = vsel %vm3157, %v3225, %v3227
    %v3229 = vrot.slane %v3095, 4
    %v3230 = vsel %vm3157, %v3227, %v3229
    %v3231 = vrot.slane %v3096, 4
    %v3232 = vsel %vm3157, %v3229, %v3231
    %v3233 = vrot.slane %v3097, 4
    %v3234 = vsel %vm3157, %v3231, %v3233
    %v3235 = vrot.slane %v3098, 4
    %v3236 = vsel %vm3157, %v3233, %v3235
    %v3237 = vrot.slane %v3099, 4
    %v3238 = vsel %vm3157, %v3235, %v3237
    %v3239 = vrot.slane %v3100, 4
    %v3240 = vsel %vm3157, %v3237, %v3239
    %v3241 = vrot.slane %v3101, 4
    %v3242 = vsel %vm3157, %v3239, %v3241
    %v3243 = vrot.slane %v3102, 4
    %v3244 = vsel %vm3157, %v3241, %v3243
    %v3245 = vrot.slane %v3103, 4
    %v3246 = vsel %vm3157, %v3243, %v3245
    %v3247 = vrot.slane %v3104, 4
    %v3248 = vsel %vm3157, %v3245, %v3247
    %v3249 = vrot.slane %v3105, 4
    %v3250 = vsel %vm3157, %v3247, %v3249
    %v3251 = vrot.slane %v3106, 4
    %v3252 = vsel %vm3157, %v3249, %v3251
    %v3253 = vrot.slane %v3107, 4
    %v3254 = vsel %vm3157, %v3251, %v3253
    %3255 = vrot.lane.b32.xlu0 %v3160, 48
    %v3256 = vpop.permute.xlu0 %3255
    %3257 = vrot.lane.b32.xlu0 %v3162, 48
    %v3258 = vpop.permute.xlu0 %3257
    %3259 = vrot.lane.b32.xlu0 %v3164, 48
    %v3260 = vpop.permute.xlu0 %3259
    %3261 = vrot.lane.b32.xlu0 %v3166, 48
    %v3262 = vpop.permute.xlu0 %3261
    %3263 = vrot.lane.b32.xlu0 %v3168, 48
    %v3264 = vpop.permute.xlu0 %3263
    %3265 = vrot.lane.b32.xlu0 %v3170, 48
    %v3266 = vpop.permute.xlu0 %3265
    %3267 = vrot.lane.b32.xlu0 %v3172, 48
    %v3268 = vpop.permute.xlu0 %3267
    %3269 = vrot.lane.b32.xlu0 %v3174, 48
    %v3270 = vpop.permute.xlu0 %3269
    %3271 = vrot.lane.b32.xlu0 %v3176, 48
    %v3272 = vpop.permute.xlu0 %3271
    %3273 = vrot.lane.b32.xlu0 %v3178, 48
    %v3274 = vpop.permute.xlu0 %3273
    %3275 = vrot.lane.b32.xlu0 %v3180, 48
    %v3276 = vpop.permute.xlu0 %3275
    %3277 = vrot.lane.b32.xlu0 %v3182, 48
    %v3278 = vpop.permute.xlu0 %3277
    %3279 = vrot.lane.b32.xlu0 %v3184, 48
    %v3280 = vpop.permute.xlu0 %3279
    %3281 = vrot.lane.b32.xlu0 %v3186, 48
    %v3282 = vpop.permute.xlu0 %3281
    %3283 = vrot.lane.b32.xlu0 %v3188, 48
    %v3284 = vpop.permute.xlu0 %3283
    %3285 = vrot.lane.b32.xlu0 %v3190, 48
    %v3286 = vpop.permute.xlu0 %3285
    %3287 = vrot.lane.b32.xlu0 %v3192, 48
    %v3288 = vpop.permute.xlu0 %3287
    %3289 = vrot.lane.b32.xlu0 %v3194, 48
    %v3290 = vpop.permute.xlu0 %3289
    %3291 = vrot.lane.b32.xlu0 %v3196, 48
    %v3292 = vpop.permute.xlu0 %3291
    %3293 = vrot.lane.b32.xlu0 %v3198, 48
    %v3294 = vpop.permute.xlu0 %3293
    %3295 = vrot.lane.b32.xlu0 %v3200, 48
    %v3296 = vpop.permute.xlu0 %3295
    %3297 = vrot.lane.b32.xlu0 %v3202, 48
    %v3298 = vpop.permute.xlu0 %3297
    %3299 = vrot.lane.b32.xlu0 %v3204, 48
    %v3300 = vpop.permute.xlu0 %3299
    %3301 = vrot.lane.b32.xlu0 %v3206, 48
    %v3302 = vpop.permute.xlu0 %3301
    %3303 = vrot.lane.b32.xlu0 %v3208, 48
    %v3304 = vpop.permute.xlu0 %3303
    %3305 = vrot.lane.b32.xlu0 %v3210, 48
    %v3306 = vpop.permute.xlu0 %3305
    %3307 = vrot.lane.b32.xlu0 %v3212, 48
    %v3308 = vpop.permute.xlu0 %3307
    %3309 = vrot.lane.b32.xlu0 %v3214, 48
    %v3310 = vpop.permute.xlu0 %3309
    %3311 = vrot.lane.b32.xlu0 %v3216, 48
    %v3312 = vpop.permute.xlu0 %3311
    %3313 = vrot.lane.b32.xlu0 %v3218, 48
    %v3314 = vpop.permute.xlu0 %3313
    %3315 = vrot.lane.b32.xlu0 %v3220, 48
    %v3316 = vpop.permute.xlu0 %3315
    %3317 = vrot.lane.b32.xlu0 %v3222, 48
    %v3318 = vpop.permute.xlu0 %3317
    %3319 = vrot.lane.b32.xlu0 %v3224, 48
    %v3320 = vpop.permute.xlu0 %3319
    %3321 = vrot.lane.b32.xlu0 %v3226, 48
    %v3322 = vpop.permute.xlu0 %3321
    %3323 = vrot.lane.b32.xlu0 %v3228, 48
    %v3324 = vpop.permute.xlu0 %3323
    %3325 = vrot.lane.b32.xlu0 %v3230, 48
    %v3326 = vpop.permute.xlu0 %3325
    %3327 = vrot.lane.b32.xlu0 %v3232, 48
    %v3328 = vpop.permute.xlu0 %3327
    %3329 = vrot.lane.b32.xlu0 %v3234, 48
    %v3330 = vpop.permute.xlu0 %3329
    %3331 = vrot.lane.b32.xlu0 %v3236, 48
    %v3332 = vpop.permute.xlu0 %3331
    %3333 = vrot.lane.b32.xlu0 %v3238, 48
    %v3334 = vpop.permute.xlu0 %3333
    %3335 = vrot.lane.b32.xlu0 %v3240, 48
    %v3336 = vpop.permute.xlu0 %3335
    %3337 = vrot.lane.b32.xlu0 %v3242, 48
    %v3338 = vpop.permute.xlu0 %3337
    %3339 = vrot.lane.b32.xlu0 %v3244, 48
    %v3340 = vpop.permute.xlu0 %3339
    %3341 = vrot.lane.b32.xlu0 %v3246, 48
    %v3342 = vpop.permute.xlu0 %3341
    %3343 = vrot.lane.b32.xlu0 %v3248, 48
    %v3344 = vpop.permute.xlu0 %3343
    %3345 = vrot.lane.b32.xlu0 %v3250, 48
    %v3346 = vpop.permute.xlu0 %3345
    %3347 = vrot.lane.b32.xlu0 %v3252, 48
    %v3348 = vpop.permute.xlu0 %3347
    %3349 = vrot.lane.b32.xlu0 %v3254, 48
    %v3350 = vpop.permute.xlu0 %3349
    %vm3399 = vcmask 458112
    %3400 = vst.msk [vmem:[#allocation4] sm:$0xff] %vm3399, %v3256
    %3401 = vst.msk [vmem:[#allocation4 + $0x18] sm:$0xff] %vm3399, %v3258
    %3402 = vst.msk [vmem:[#allocation4 + $0x30] sm:$0xff] %vm3399, %v3260
    %3403 = vst.msk [vmem:[#allocation4 + $0x48] sm:$0xff] %vm3399, %v3262
    %3404 = vst.msk [vmem:[#allocation4 + $0x60] sm:$0xff] %vm3399, %v3264
    %3405 = vst.msk [vmem:[#allocation4 + $0x78] sm:$0xff] %vm3399, %v3266
    %3406 = vst.msk [vmem:[#allocation4 + $0x90] sm:$0xff] %vm3399, %v3268
    %3407 = vst.msk [vmem:[#allocation4 + $0xa8] sm:$0xff] %vm3399, %v3270
    %3408 = vst.msk [vmem:[#allocation4 + $0xc0] sm:$0xff] %vm3399, %v3272
    %3409 = vst.msk [vmem:[#allocation4 + $0xd8] sm:$0xff] %vm3399, %v3274
    %3410 = vst.msk [vmem:[#allocation4 + $0xf0] sm:$0xff] %vm3399, %v3276
    %3411 = vst.msk [vmem:[#allocation4 + $0x108] sm:$0xff] %vm3399, %v3278
    %3412 = vst.msk [vmem:[#allocation4 + $0x120] sm:$0xff] %vm3399, %v3280
    %3413 = vst.msk [vmem:[#allocation4 + $0x138] sm:$0xff] %vm3399, %v3282
    %3414 = vst.msk [vmem:[#allocation4 + $0x150] sm:$0xff] %vm3399, %v3284
    %3415 = vst.msk [vmem:[#allocation4 + $0x168] sm:$0xff] %vm3399, %v3286
    %3416 = vst.msk [vmem:[#allocation4 + $0x180] sm:$0xff] %vm3399, %v3288
    %3417 = vst.msk [vmem:[#allocation4 + $0x198] sm:$0xff] %vm3399, %v3290
    %3418 = vst.msk [vmem:[#allocation4 + $0x1b0] sm:$0xff] %vm3399, %v3292
    %3419 = vst.msk [vmem:[#allocation4 + $0x1c8] sm:$0xff] %vm3399, %v3294
    %3420 = vst.msk [vmem:[#allocation4 + $0x1e0] sm:$0xff] %vm3399, %v3296
    %3421 = vst.msk [vmem:[#allocation4 + $0x1f8] sm:$0xff] %vm3399, %v3298
    %3422 = vst.msk [vmem:[#allocation4 + $0x210] sm:$0xff] %vm3399, %v3300
    %3423 = vst.msk [vmem:[#allocation4 + $0x228] sm:$0xff] %vm3399, %v3302
    %3424 = vst.msk [vmem:[#allocation4 + $0x240] sm:$0xff] %vm3399, %v3304
    %3425 = vst.msk [vmem:[#allocation4 + $0x258] sm:$0xff] %vm3399, %v3306
    %3426 = vst.msk [vmem:[#allocation4 + $0x270] sm:$0xff] %vm3399, %v3308
    %3427 = vst.msk [vmem:[#allocation4 + $0x288] sm:$0xff] %vm3399, %v3310
    %3428 = vst.msk [vmem:[#allocation4 + $0x2a0] sm:$0xff] %vm3399, %v3312
    %3429 = vst.msk [vmem:[#allocation4 + $0x2b8] sm:$0xff] %vm3399, %v3314
    %3430 = vst.msk [vmem:[#allocation4 + $0x2d0] sm:$0xff] %vm3399, %v3316
    %3431 = vst.msk [vmem:[#allocation4 + $0x2e8] sm:$0xff] %vm3399, %v3318
    %3432 = vst.msk [vmem:[#allocation4 + $0x300] sm:$0xff] %vm3399, %v3320
    %3433 = vst.msk [vmem:[#allocation4 + $0x318] sm:$0xff] %vm3399, %v3322
    %3434 = vst.msk [vmem:[#allocation4 + $0x330] sm:$0xff] %vm3399, %v3324
    %3435 = vst.msk [vmem:[#allocation4 + $0x348] sm:$0xff] %vm3399, %v3326
    %3436 = vst.msk [vmem:[#allocation4 + $0x360] sm:$0xff] %vm3399, %v3328
    %3437 = vst.msk [vmem:[#allocation4 + $0x378] sm:$0xff] %vm3399, %v3330
    %3438 = vst.msk [vmem:[#allocation4 + $0x390] sm:$0xff] %vm3399, %v3332
    %3439 = vst.msk [vmem:[#allocation4 + $0x3a8] sm:$0xff] %vm3399, %v3334
    %3440 = vst.msk [vmem:[#allocation4 + $0x3c0] sm:$0xff] %vm3399, %v3336
    %3441 = vst.msk [vmem:[#allocation4 + $0x3d8] sm:$0xff] %vm3399, %v3338
    %3442 = vst.msk [vmem:[#allocation4 + $0x3f0] sm:$0xff] %vm3399, %v3340
    %3443 = vst.msk [vmem:[#allocation4 + $0x408] sm:$0xff] %vm3399, %v3342
    %3444 = vst.msk [vmem:[#allocation4 + $0x420] sm:$0xff] %vm3399, %v3344
    %3445 = vst.msk [vmem:[#allocation4 + $0x438] sm:$0xff] %vm3399, %v3346
    %3446 = vst.msk [vmem:[#allocation4 + $0x450] sm:$0xff] %vm3399, %v3348
    %3447 = vst.msk [vmem:[#allocation4 + $0x468] sm:$0xff] %vm3399, %v3350
    %v3448 = vld [vmem:[#allocation2 + $0x8] sm:$0xf0]
    %v3449 = vld [vmem:[#allocation2 + $0x10] sm:$0xff]
    %v3450 = vld [vmem:[#allocation2 + $0x18] sm:$0xff]
    %v3451 = vld [vmem:[#allocation2 + $0x20] sm:$0xff]
    %v3452 = vld [vmem:[#allocation2 + $0x28] sm:$0xff]
    %v3453 = vld [vmem:[#allocation2 + $0x30] sm:$0xff]
    %v3454 = vld [vmem:[#allocation2 + $0x38] sm:$0xff]
    %v3455 = vld [vmem:[#allocation2 + $0x40] sm:$0xff]
    %v3456 = vld [vmem:[#allocation2 + $0x48] sm:$0xff]
    %v3457 = vld [vmem:[#allocation2 + $0x50] sm:$0xff]
    %v3458 = vld [vmem:[#allocation2 + $0x58] sm:$0xff]
    %v3459 = vld [vmem:[#allocation2 + $0x60] sm:$0xff]
    %v3460 = vld [vmem:[#allocation2 + $0x68] sm:$0xff]
    %v3461 = vld [vmem:[#allocation2 + $0x70] sm:$0xff]
    %v3462 = vld [vmem:[#allocation2 + $0x78] sm:$0xff]
    %v3463 = vld [vmem:[#allocation2 + $0x80] sm:$0xff]
    %v3464 = vld [vmem:[#allocation2 + $0x88] sm:$0xff]
    %v3465 = vld [vmem:[#allocation2 + $0x90] sm:$0xff]
    %v3466 = vld [vmem:[#allocation2 + $0x98] sm:$0xff]
    %v3467 = vld [vmem:[#allocation2 + $0xa0] sm:$0xff]
    %v3468 = vld [vmem:[#allocation2 + $0xa8] sm:$0xff]
    %v3469 = vld [vmem:[#allocation2 + $0xb0] sm:$0xff]
    %v3470 = vld [vmem:[#allocation2 + $0xb8] sm:$0xff]
    %v3471 = vld [vmem:[#allocation2 + $0xc0] sm:$0xff]
    %v3472 = vld [vmem:[#allocation2 + $0xc8] sm:$0xff]
    %v3473 = vld [vmem:[#allocation2 + $0xd0] sm:$0xff]
    %v3474 = vld [vmem:[#allocation2 + $0xd8] sm:$0xff]
    %v3475 = vld [vmem:[#allocation2 + $0xe0] sm:$0xff]
    %v3476 = vld [vmem:[#allocation2 + $0xe8] sm:$0xff]
    %v3477 = vld [vmem:[#allocation2 + $0xf0] sm:$0xff]
    %v3478 = vld [vmem:[#allocation2 + $0xf8] sm:$0xff]
    %v3479 = vld [vmem:[#allocation2 + $0x100] sm:$0xff]
    %v3480 = vld [vmem:[#allocation2 + $0x108] sm:$0xff]
    %v3481 = vld [vmem:[#allocation2 + $0x110] sm:$0xff]
    %v3482 = vld [vmem:[#allocation2 + $0x118] sm:$0xff]
    %v3483 = vld [vmem:[#allocation2 + $0x120] sm:$0xff]
    %v3484 = vld [vmem:[#allocation2 + $0x128] sm:$0xff]
    %v3485 = vld [vmem:[#allocation2 + $0x130] sm:$0xff]
    %v3486 = vld [vmem:[#allocation2 + $0x138] sm:$0xff]
    %v3487 = vld [vmem:[#allocation2 + $0x140] sm:$0xff]
    %v3488 = vld [vmem:[#allocation2 + $0x148] sm:$0xff]
    %v3489 = vld [vmem:[#allocation2 + $0x150] sm:$0xff]
    %v3490 = vld [vmem:[#allocation2 + $0x158] sm:$0xff]
    %v3491 = vld [vmem:[#allocation2 + $0x160] sm:$0xff]
    %v3492 = vld [vmem:[#allocation2 + $0x168] sm:$0xff]
    %v3493 = vld [vmem:[#allocation2 + $0x170] sm:$0xff]
    %v3494 = vld [vmem:[#allocation2 + $0x178] sm:$0xff]
    %v3495 = vld [vmem:[#allocation2 + $0x180] sm:$0xff]
    %v3496 = vld [vmem:[#allocation2 + $0x188] sm:$0x1f]
    %vm3497 = vsmask.f32 3328
    %v3499 = vshrl.u32 %v3448, 16
    %v3501 = vrot.slane %v3499, 4
    %v3502 = vshll.u32 %v3448, 16
    %v3504 = vrot.slane %v3502, 5
    %v3505 = vor.u32 %v3501, %v3504
    %v3507 = vshrl.u32 %v3449, 16
    %v3509 = vrot.slane %v3507, 4
    %v3510 = vshll.u32 %v3449, 16
    %v3512 = vrot.slane %v3510, 5
    %v3513 = vor.u32 %v3509, %v3512
    %v3514 = vsel %vm3497, %v3505, %v3513
    %v3516 = vshrl.u32 %v3450, 16
    %v3518 = vrot.slane %v3516, 4
    %v3519 = vshll.u32 %v3450, 16
    %v3521 = vrot.slane %v3519, 5
    %v3522 = vor.u32 %v3518, %v3521
    %v3523 = vsel %vm3497, %v3513, %v3522
    %v3525 = vshrl.u32 %v3451, 16
    %v3527 = vrot.slane %v3525, 4
    %v3528 = vshll.u32 %v3451, 16
    %v3530 = vrot.slane %v3528, 5
    %v3531 = vor.u32 %v3527, %v3530
    %v3532 = vsel %vm3497, %v3522, %v3531
    %v3534 = vshrl.u32 %v3452, 16
    %v3536 = vrot.slane %v3534, 4
    %v3537 = vshll.u32 %v3452, 16
    %v3539 = vrot.slane %v3537, 5
    %v3540 = vor.u32 %v3536, %v3539
    %v3541 = vsel %vm3497, %v3531, %v3540
    %v3543 = vshrl.u32 %v3453, 16
    %v3545 = vrot.slane %v3543, 4
    %v3546 = vshll.u32 %v3453, 16
    %v3548 = vrot.slane %v3546, 5
    %v3549 = vor.u32 %v3545, %v3548
    %v3550 = vsel %vm3497, %v3540, %v3549
    %v3552 = vshrl.u32 %v3454, 16
    %v3554 = vrot.slane %v3552, 4
    %v3555 = vshll.u32 %v3454, 16
    %v3557 = vrot.slane %v3555, 5
    %v3558 = vor.u32 %v3554, %v3557
    %v3559 = vsel %vm3497, %v3549, %v3558
    %v3561 = vshrl.u32 %v3455, 16
    %v3563 = vrot.slane %v3561, 4
    %v3564 = vshll.u32 %v3455, 16
    %v3566 = vrot.slane %v3564, 5
    %v3567 = vor.u32 %v3563, %v3566
    %v3568 = vsel %vm3497, %v3558, %v3567
    %v3570 = vshrl.u32 %v3456, 16
    %v3572 = vrot.slane %v3570, 4
    %v3573 = vshll.u32 %v3456, 16
    %v3575 = vrot.slane %v3573, 5
    %v3576 = vor.u32 %v3572, %v3575
    %v3577 = vsel %vm3497, %v3567, %v3576
    %v3579 = vshrl.u32 %v3457, 16
    %v3581 = vrot.slane %v3579, 4
    %v3582 = vshll.u32 %v3457, 16
    %v3584 = vrot.slane %v3582, 5
    %v3585 = vor.u32 %v3581, %v3584
    %v3586 = vsel %vm3497, %v3576, %v3585
    %v3588 = vshrl.u32 %v3458, 16
    %v3590 = vrot.slane %v3588, 4
    %v3591 = vshll.u32 %v3458, 16
    %v3593 = vrot.slane %v3591, 5
    %v3594 = vor.u32 %v3590, %v3593
    %v3595 = vsel %vm3497, %v3585, %v3594
    %v3597 = vshrl.u32 %v3459, 16
    %v3599 = vrot.slane %v3597, 4
    %v3600 = vshll.u32 %v3459, 16
    %v3602 = vrot.slane %v3600, 5
    %v3603 = vor.u32 %v3599, %v3602
    %v3604 = vsel %vm3497, %v3594, %v3603
    %v3606 = vshrl.u32 %v3460, 16
    %v3608 = vrot.slane %v3606, 4
    %v3609 = vshll.u32 %v3460, 16
    %v3611 = vrot.slane %v3609, 5
    %v3612 = vor.u32 %v3608, %v3611
    %v3613 = vsel %vm3497, %v3603, %v3612
    %v3615 = vshrl.u32 %v3461, 16
    %v3617 = vrot.slane %v3615, 4
    %v3618 = vshll.u32 %v3461, 16
    %v3620 = vrot.slane %v3618, 5
    %v3621 = vor.u32 %v3617, %v3620
    %v3622 = vsel %vm3497, %v3612, %v3621
    %v3624 = vshrl.u32 %v3462, 16
    %v3626 = vrot.slane %v3624, 4
    %v3627 = vshll.u32 %v3462, 16
    %v3629 = vrot.slane %v3627, 5
    %v3630 = vor.u32 %v3626, %v3629
    %v3631 = vsel %vm3497, %v3621, %v3630
    %v3633 = vshrl.u32 %v3463, 16
    %v3635 = vrot.slane %v3633, 4
    %v3636 = vshll.u32 %v3463, 16
    %v3638 = vrot.slane %v3636, 5
    %v3639 = vor.u32 %v3635, %v3638
    %v3640 = vsel %vm3497, %v3630, %v3639
    %v3642 = vshrl.u32 %v3464, 16
    %v3644 = vrot.slane %v3642, 4
    %v3645 = vshll.u32 %v3464, 16
    %v3647 = vrot.slane %v3645, 5
    %v3648 = vor.u32 %v3644, %v3647
    %v3649 = vsel %vm3497, %v3639, %v3648
    %v3651 = vshrl.u32 %v3465, 16
    %v3653 = vrot.slane %v3651, 4
    %v3654 = vshll.u32 %v3465, 16
    %v3656 = vrot.slane %v3654, 5
    %v3657 = vor.u32 %v3653, %v3656
    %v3658 = vsel %vm3497, %v3648, %v3657
    %v3660 = vshrl.u32 %v3466, 16
    %v3662 = vrot.slane %v3660, 4
    %v3663 = vshll.u32 %v3466, 16
    %v3665 = vrot.slane %v3663, 5
    %v3666 = vor.u32 %v3662, %v3665
    %v3667 = vsel %vm3497, %v3657, %v3666
    %v3669 = vshrl.u32 %v3467, 16
    %v3671 = vrot.slane %v3669, 4
    %v3672 = vshll.u32 %v3467, 16
    %v3674 = vrot.slane %v3672, 5
    %v3675 = vor.u32 %v3671, %v3674
    %v3676 = vsel %vm3497, %v3666, %v3675
    %v3678 = vshrl.u32 %v3468, 16
    %v3680 = vrot.slane %v3678, 4
    %v3681 = vshll.u32 %v3468, 16
    %v3683 = vrot.slane %v3681, 5
    %v3684 = vor.u32 %v3680, %v3683
    %v3685 = vsel %vm3497, %v3675, %v3684
    %v3687 = vshrl.u32 %v3469, 16
    %v3689 = vrot.slane %v3687, 4
    %v3690 = vshll.u32 %v3469, 16
    %v3692 = vrot.slane %v3690, 5
    %v3693 = vor.u32 %v3689, %v3692
    %v3694 = vsel %vm3497, %v3684, %v3693
    %v3696 = vshrl.u32 %v3470, 16
    %v3698 = vrot.slane %v3696, 4
    %v3699 = vshll.u32 %v3470, 16
    %v3701 = vrot.slane %v3699, 5
    %v3702 = vor.u32 %v3698, %v3701
    %v3703 = vsel %vm3497, %v3693, %v3702
    %v3705 = vshrl.u32 %v3471, 16
    %v3707 = vrot.slane %v3705, 4
    %v3708 = vshll.u32 %v3471, 16
    %v3710 = vrot.slane %v3708, 5
    %v3711 = vor.u32 %v3707, %v3710
    %v3712 = vsel %vm3497, %v3702, %v3711
    %v3714 = vshrl.u32 %v3472, 16
    %v3716 = vrot.slane %v3714, 4
    %v3717 = vshll.u32 %v3472, 16
    %v3719 = vrot.slane %v3717, 5
    %v3720 = vor.u32 %v3716, %v3719
    %v3721 = vsel %vm3497, %v3711, %v3720
    %v3723 = vshrl.u32 %v3473, 16
    %v3725 = vrot.slane %v3723, 4
    %v3726 = vshll.u32 %v3473, 16
    %v3728 = vrot.slane %v3726, 5
    %v3729 = vor.u32 %v3725, %v3728
    %v3730 = vsel %vm3497, %v3720, %v3729
    %v3732 = vshrl.u32 %v3474, 16
    %v3734 = vrot.slane %v3732, 4
    %v3735 = vshll.u32 %v3474, 16
    %v3737 = vrot.slane %v3735, 5
    %v3738 = vor.u32 %v3734, %v3737
    %v3739 = vsel %vm3497, %v3729, %v3738
    %v3741 = vshrl.u32 %v3475, 16
    %v3743 = vrot.slane %v3741, 4
    %v3744 = vshll.u32 %v3475, 16
    %v3746 = vrot.slane %v3744, 5
    %v3747 = vor.u32 %v3743, %v3746
    %v3748 = vsel %vm3497, %v3738, %v3747
    %v3750 = vshrl.u32 %v3476, 16
    %v3752 = vrot.slane %v3750, 4
    %v3753 = vshll.u32 %v3476, 16
    %v3755 = vrot.slane %v3753, 5
    %v3756 = vor.u32 %v3752, %v3755
    %v3757 = vsel %vm3497, %v3747, %v3756
    %v3759 = vshrl.u32 %v3477, 16
    %v3761 = vrot.slane %v3759, 4
    %v3762 = vshll.u32 %v3477, 16
    %v3764 = vrot.slane %v3762, 5
    %v3765 = vor.u32 %v3761, %v3764
    %v3766 = vsel %vm3497, %v3756, %v3765
    %v3768 = vshrl.u32 %v3478, 16
    %v3770 = vrot.slane %v3768, 4
    %v3771 = vshll.u32 %v3478, 16
    %v3773 = vrot.slane %v3771, 5
    %v3774 = vor.u32 %v3770, %v3773
    %v3775 = vsel %vm3497, %v3765, %v3774
    %v3777 = vshrl.u32 %v3479, 16
    %v3779 = vrot.slane %v3777, 4
    %v3780 = vshll.u32 %v3479, 16
    %v3782 = vrot.slane %v3780, 5
    %v3783 = vor.u32 %v3779, %v3782
    %v3784 = vsel %vm3497, %v3774, %v3783
    %v3786 = vshrl.u32 %v3480, 16
    %v3788 = vrot.slane %v3786, 4
    %v3789 = vshll.u32 %v3480, 16
    %v3791 = vrot.slane %v3789, 5
    %v3792 = vor.u32 %v3788, %v3791
    %v3793 = vsel %vm3497, %v3783, %v3792
    %v3795 = vshrl.u32 %v3481, 16
    %v3797 = vrot.slane %v3795, 4
    %v3798 = vshll.u32 %v3481, 16
    %v3800 = vrot.slane %v3798, 5
    %v3801 = vor.u32 %v3797, %v3800
    %v3802 = vsel %vm3497, %v3792, %v3801
    %v3804 = vshrl.u32 %v3482, 16
    %v3806 = vrot.slane %v3804, 4
    %v3807 = vshll.u32 %v3482, 16
    %v3809 = vrot.slane %v3807, 5
    %v3810 = vor.u32 %v3806, %v3809
    %v3811 = vsel %vm3497, %v3801, %v3810
    %v3813 = vshrl.u32 %v3483, 16
    %v3815 = vrot.slane %v3813, 4
    %v3816 = vshll.u32 %v3483, 16
    %v3818 = vrot.slane %v3816, 5
    %v3819 = vor.u32 %v3815, %v3818
    %v3820 = vsel %vm3497, %v3810, %v3819
    %v3822 = vshrl.u32 %v3484, 16
    %v3824 = vrot.slane %v3822, 4
    %v3825 = vshll.u32 %v3484, 16
    %v3827 = vrot.slane %v3825, 5
    %v3828 = vor.u32 %v3824, %v3827
    %v3829 = vsel %vm3497, %v3819, %v3828
    %v3831 = vshrl.u32 %v3485, 16
    %v3833 = vrot.slane %v3831, 4
    %v3834 = vshll.u32 %v3485, 16
    %v3836 = vrot.slane %v3834, 5
    %v3837 = vor.u32 %v3833, %v3836
    %v3838 = vsel %vm3497, %v3828, %v3837
    %v3840 = vshrl.u32 %v3486, 16
    %v3842 = vrot.slane %v3840, 4
    %v3843 = vshll.u32 %v3486, 16
    %v3845 = vrot.slane %v3843, 5
    %v3846 = vor.u32 %v3842, %v3845
    %v3847 = vsel %vm3497, %v3837, %v3846
    %v3849 = vshrl.u32 %v3487, 16
    %v3851 = vrot.slane %v3849, 4
    %v3852 = vshll.u32 %v3487, 16
    %v3854 = vrot.slane %v3852, 5
    %v3855 = vor.u32 %v3851, %v3854
    %v3856 = vsel %vm3497, %v3846, %v3855
    %v3858 = vshrl.u32 %v3488, 16
    %v3860 = vrot.slane %v3858, 4
    %v3861 = vshll.u32 %v3488, 16
    %v3863 = vrot.slane %v3861, 5
    %v3864 = vor.u32 %v3860, %v3863
    %v3865 = vsel %vm3497, %v3855, %v3864
    %v3867 = vshrl.u32 %v3489, 16
    %v3869 = vrot.slane %v3867, 4
    %v3870 = vshll.u32 %v3489, 16
    %v3872 = vrot.slane %v3870, 5
    %v3873 = vor.u32 %v3869, %v3872
    %v3874 = vsel %vm3497, %v3864, %v3873
    %v3876 = vshrl.u32 %v3490, 16
    %v3878 = vrot.slane %v3876, 4
    %v3879 = vshll.u32 %v3490, 16
    %v3881 = vrot.slane %v3879, 5
    %v3882 = vor.u32 %v3878, %v3881
    %v3883 = vsel %vm3497, %v3873, %v3882
    %v3885 = vshrl.u32 %v3491, 16
    %v3887 = vrot.slane %v3885, 4
    %v3888 = vshll.u32 %v3491, 16
    %v3890 = vrot.slane %v3888, 5
    %v3891 = vor.u32 %v3887, %v3890
    %v3892 = vsel %vm3497, %v3882, %v3891
    %v3894 = vshrl.u32 %v3492, 16
    %v3896 = vrot.slane %v3894, 4
    %v3897 = vshll.u32 %v3492, 16
    %v3899 = vrot.slane %v3897, 5
    %v3900 = vor.u32 %v3896, %v3899
    %v3901 = vsel %vm3497, %v3891, %v3900
    %v3903 = vshrl.u32 %v3493, 16
    %v3905 = vrot.slane %v3903, 4
    %v3906 = vshll.u32 %v3493, 16
    %v3908 = vrot.slane %v3906, 5
    %v3909 = vor.u32 %v3905, %v3908
    %v3910 = vsel %vm3497, %v3900, %v3909
    %v3912 = vshrl.u32 %v3494, 16
    %v3914 = vrot.slane %v3912, 4
    %v3915 = vshll.u32 %v3494, 16
    %v3917 = vrot.slane %v3915, 5
    %v3918 = vor.u32 %v3914, %v3917
    %v3919 = vsel %vm3497, %v3909, %v3918
    %v3921 = vshrl.u32 %v3495, 16
    %v3923 = vrot.slane %v3921, 4
    %v3924 = vshll.u32 %v3495, 16
    %v3926 = vrot.slane %v3924, 5
    %v3927 = vor.u32 %v3923, %v3926
    %v3928 = vsel %vm3497, %v3918, %v3927
    %v3930 = vshrl.u32 %v3496, 16
    %v3932 = vrot.slane %v3930, 4
    %v3933 = vshll.u32 %v3496, 16
    %v3935 = vrot.slane %v3933, 5
    %v3936 = vor.u32 %v3932, %v3935
    %v3937 = vsel %vm3497, %v3927, %v3936
    %3938 = vrot.lane.b32.xlu0 %v3514, 56
    %v3939 = vpop.permute.xlu0 %3938
    %3940 = vrot.lane.b32.xlu0 %v3523, 56
    %v3941 = vpop.permute.xlu0 %3940
    %3942 = vrot.lane.b32.xlu0 %v3532, 56
    %v3943 = vpop.permute.xlu0 %3942
    %3944 = vrot.lane.b32.xlu0 %v3541, 56
    %v3945 = vpop.permute.xlu0 %3944
    %3946 = vrot.lane.b32.xlu0 %v3550, 56
    %v3947 = vpop.permute.xlu0 %3946
    %3948 = vrot.lane.b32.xlu0 %v3559, 56
    %v3949 = vpop.permute.xlu0 %3948
    %3950 = vrot.lane.b32.xlu0 %v3568, 56
    %v3951 = vpop.permute.xlu0 %3950
    %3952 = vrot.lane.b32.xlu0 %v3577, 56
    %v3953 = vpop.permute.xlu0 %3952
    %3954 = vrot.lane.b32.xlu0 %v3586, 56
    %v3955 = vpop.permute.xlu0 %3954
    %3956 = vrot.lane.b32.xlu0 %v3595, 56
    %v3957 = vpop.permute.xlu0 %3956
    %3958 = vrot.lane.b32.xlu0 %v3604, 56
    %v3959 = vpop.permute.xlu0 %3958
    %3960 = vrot.lane.b32.xlu0 %v3613, 56
    %v3961 = vpop.permute.xlu0 %3960
    %3962 = vrot.lane.b32.xlu0 %v3622, 56
    %v3963 = vpop.permute.xlu0 %3962
    %3964 = vrot.lane.b32.xlu0 %v3631, 56
    %v3965 = vpop.permute.xlu0 %3964
    %3966 = vrot.lane.b32.xlu0 %v3640, 56
    %v3967 = vpop.permute.xlu0 %3966
    %3968 = vrot.lane.b32.xlu0 %v3649, 56
    %v3969 = vpop.permute.xlu0 %3968
    %3970 = vrot.lane.b32.xlu0 %v3658, 56
    %v3971 = vpop.permute.xlu0 %3970
    %3972 = vrot.lane.b32.xlu0 %v3667, 56
    %v3973 = vpop.permute.xlu0 %3972
    %3974 = vrot.lane.b32.xlu0 %v3676, 56
    %v3975 = vpop.permute.xlu0 %3974
    %3976 = vrot.lane.b32.xlu0 %v3685, 56
    %v3977 = vpop.permute.xlu0 %3976
    %3978 = vrot.lane.b32.xlu0 %v3694, 56
    %v3979 = vpop.permute.xlu0 %3978
    %3980 = vrot.lane.b32.xlu0 %v3703, 56
    %v3981 = vpop.permute.xlu0 %3980
    %3982 = vrot.lane.b32.xlu0 %v3712, 56
    %v3983 = vpop.permute.xlu0 %3982
    %3984 = vrot.lane.b32.xlu0 %v3721, 56
    %v3985 = vpop.permute.xlu0 %3984
    %3986 = vrot.lane.b32.xlu0 %v3730, 56
    %v3987 = vpop.permute.xlu0 %3986
    %3988 = vrot.lane.b32.xlu0 %v3739, 56
    %v3989 = vpop.permute.xlu0 %3988
    %3990 = vrot.lane.b32.xlu0 %v3748, 56
    %v3991 = vpop.permute.xlu0 %3990
    %3992 = vrot.lane.b32.xlu0 %v3757, 56
    %v3993 = vpop.permute.xlu0 %3992
    %3994 = vrot.lane.b32.xlu0 %v3766, 56
    %v3995 = vpop.permute.xlu0 %3994
    %3996 = vrot.lane.b32.xlu0 %v3775, 56
    %v3997 = vpop.permute.xlu0 %3996
    %3998 = vrot.lane.b32.xlu0 %v3784, 56
    %v3999 = vpop.permute.xlu0 %3998
    %4000 = vrot.lane.b32.xlu0 %v3793, 56
    %v4001 = vpop.permute.xlu0 %4000
    %4002 = vrot.lane.b32.xlu0 %v3802, 56
    %v4003 = vpop.permute.xlu0 %4002
    %4004 = vrot.lane.b32.xlu0 %v3811, 56
    %v4005 = vpop.permute.xlu0 %4004
    %4006 = vrot.lane.b32.xlu0 %v3820, 56
    %v4007 = vpop.permute.xlu0 %4006
    %4008 = vrot.lane.b32.xlu0 %v3829, 56
    %v4009 = vpop.permute.xlu0 %4008
    %4010 = vrot.lane.b32.xlu0 %v3838, 56
    %v4011 = vpop.permute.xlu0 %4010
    %4012 = vrot.lane.b32.xlu0 %v3847, 56
    %v4013 = vpop.permute.xlu0 %4012
    %4014 = vrot.lane.b32.xlu0 %v3856, 56
    %v4015 = vpop.permute.xlu0 %4014
    %4016 = vrot.lane.b32.xlu0 %v3865, 56
    %v4017 = vpop.permute.xlu0 %4016
    %4018 = vrot.lane.b32.xlu0 %v3874, 56
    %v4019 = vpop.permute.xlu0 %4018
    %4020 = vrot.lane.b32.xlu0 %v3883, 56
    %v4021 = vpop.permute.xlu0 %4020
    %4022 = vrot.lane.b32.xlu0 %v3892, 56
    %v4023 = vpop.permute.xlu0 %4022
    %4024 = vrot.lane.b32.xlu0 %v3901, 56
    %v4025 = vpop.permute.xlu0 %4024
    %4026 = vrot.lane.b32.xlu0 %v3910, 56
    %v4027 = vpop.permute.xlu0 %4026
    %4028 = vrot.lane.b32.xlu0 %v3919, 56
    %v4029 = vpop.permute.xlu0 %4028
    %4030 = vrot.lane.b32.xlu0 %v3928, 56
    %v4031 = vpop.permute.xlu0 %4030
    %4032 = vrot.lane.b32.xlu0 %v3937, 56
    %v4033 = vpop.permute.xlu0 %4032
    %vm4082 = vcmask 523712
    %4083 = vst.msk [vmem:[#allocation4] sm:$0xff] %vm4082, %v3939
    %4084 = vst.msk [vmem:[#allocation4 + $0x18] sm:$0xff] %vm4082, %v3941
    %4085 = vst.msk [vmem:[#allocation4 + $0x30] sm:$0xff] %vm4082, %v3943
    %4086 = vst.msk [vmem:[#allocation4 + $0x48] sm:$0xff] %vm4082, %v3945
    %4087 = vst.msk [vmem:[#allocation4 + $0x60] sm:$0xff] %vm4082, %v3947
    %4088 = vst.msk [vmem:[#allocation4 + $0x78] sm:$0xff] %vm4082, %v3949
    %4089 = vst.msk [vmem:[#allocation4 + $0x90] sm:$0xff] %vm4082, %v3951
    %4090 = vst.msk [vmem:[#allocation4 + $0xa8] sm:$0xff] %vm4082, %v3953
    %4091 = vst.msk [vmem:[#allocation4 + $0xc0] sm:$0xff] %vm4082, %v3955
    %4092 = vst.msk [vmem:[#allocation4 + $0xd8] sm:$0xff] %vm4082, %v3957
    %4093 = vst.msk [vmem:[#allocation4 + $0xf0] sm:$0xff] %vm4082, %v3959
    %4094 = vst.msk [vmem:[#allocation4 + $0x108] sm:$0xff] %vm4082, %v3961
    %4095 = vst.msk [vmem:[#allocation4 + $0x120] sm:$0xff] %vm4082, %v3963
    %4096 = vst.msk [vmem:[#allocation4 + $0x138] sm:$0xff] %vm4082, %v3965
    %4097 = vst.msk [vmem:[#allocation4 + $0x150] sm:$0xff] %vm4082, %v3967
    %4098 = vst.msk [vmem:[#allocation4 + $0x168] sm:$0xff] %vm4082, %v3969
    %4099 = vst.msk [vmem:[#allocation4 + $0x180] sm:$0xff] %vm4082, %v3971
    %4100 = vst.msk [vmem:[#allocation4 + $0x198] sm:$0xff] %vm4082, %v3973
    %4101 = vst.msk [vmem:[#allocation4 + $0x1b0] sm:$0xff] %vm4082, %v3975
    %4102 = vst.msk [vmem:[#allocation4 + $0x1c8] sm:$0xff] %vm4082, %v3977
    %4103 = vst.msk [vmem:[#allocation4 + $0x1e0] sm:$0xff] %vm4082, %v3979
    %4104 = vst.msk [vmem:[#allocation4 + $0x1f8] sm:$0xff] %vm4082, %v3981
    %4105 = vst.msk [vmem:[#allocation4 + $0x210] sm:$0xff] %vm4082, %v3983
    %4106 = vst.msk [vmem:[#allocation4 + $0x228] sm:$0xff] %vm4082, %v3985
    %4107 = vst.msk [vmem:[#allocation4 + $0x240] sm:$0xff] %vm4082, %v3987
    %4108 = vst.msk [vmem:[#allocation4 + $0x258] sm:$0xff] %vm4082, %v3989
    %4109 = vst.msk [vmem:[#allocation4 + $0x270] sm:$0xff] %vm4082, %v3991
    %4110 = vst.msk [vmem:[#allocation4 + $0x288] sm:$0xff] %vm4082, %v3993
    %4111 = vst.msk [vmem:[#allocation4 + $0x2a0] sm:$0xff] %vm4082, %v3995
    %4112 = vst.msk [vmem:[#allocation4 + $0x2b8] sm:$0xff] %vm4082, %v3997
    %4113 = vst.msk [vmem:[#allocation4 + $0x2d0] sm:$0xff] %vm4082, %v3999
    %4114 = vst.msk [vmem:[#allocation4 + $0x2e8] sm:$0xff] %vm4082, %v4001
    %4115 = vst.msk [vmem:[#allocation4 + $0x300] sm:$0xff] %vm4082, %v4003
    %4116 = vst.msk [vmem:[#allocation4 + $0x318] sm:$0xff] %vm4082, %v4005
    %4117 = vst.msk [vmem:[#allocation4 + $0x330] sm:$0xff] %vm4082, %v4007
    %4118 = vst.msk [vmem:[#allocation4 + $0x348] sm:$0xff] %vm4082, %v4009
    %4119 = vst.msk [vmem:[#allocation4 + $0x360] sm:$0xff] %vm4082, %v4011
    %4120 = vst.msk [vmem:[#allocation4 + $0x378] sm:$0xff] %vm4082, %v4013
    %4121 = vst.msk [vmem:[#allocation4 + $0x390] sm:$0xff] %vm4082, %v4015
    %4122 = vst.msk [vmem:[#allocation4 + $0x3a8] sm:$0xff] %vm4082, %v4017
    %4123 = vst.msk [vmem:[#allocation4 + $0x3c0] sm:$0xff] %vm4082, %v4019
    %4124 = vst.msk [vmem:[#allocation4 + $0x3d8] sm:$0xff] %vm4082, %v4021
    %4125 = vst.msk [vmem:[#allocation4 + $0x3f0] sm:$0xff] %vm4082, %v4023
    %4126 = vst.msk [vmem:[#allocation4 + $0x408] sm:$0xff] %vm4082, %v4025
    %4127 = vst.msk [vmem:[#allocation4 + $0x420] sm:$0xff] %vm4082, %v4027
    %4128 = vst.msk [vmem:[#allocation4 + $0x438] sm:$0xff] %vm4082, %v4029
    %4129 = vst.msk [vmem:[#allocation4 + $0x450] sm:$0xff] %vm4082, %v4031
    %4130 = vst.msk [vmem:[#allocation4 + $0x468] sm:$0xff] %vm4082, %v4033
    %v4131 = vld [vmem:[#allocation2 + $0x8] sm:$0xe0]
    %v4132 = vld [vmem:[#allocation2 + $0x10] sm:$0xff]
    %v4133 = vld [vmem:[#allocation2 + $0x18] sm:$0xff]
    %v4134 = vld [vmem:[#allocation2 + $0x20] sm:$0xff]
    %v4135 = vld [vmem:[#allocation2 + $0x28] sm:$0xff]
    %v4136 = vld [vmem:[#allocation2 + $0x30] sm:$0xff]
    %v4137 = vld [vmem:[#allocation2 + $0x38] sm:$0xff]
    %v4138 = vld [vmem:[#allocation2 + $0x40] sm:$0xff]
    %v4139 = vld [vmem:[#allocation2 + $0x48] sm:$0xff]
    %v4140 = vld [vmem:[#allocation2 + $0x50] sm:$0xff]
    %v4141 = vld [vmem:[#allocation2 + $0x58] sm:$0xff]
    %v4142 = vld [vmem:[#allocation2 + $0x60] sm:$0xff]
    %v4143 = vld [vmem:[#allocation2 + $0x68] sm:$0xff]
    %v4144 = vld [vmem:[#allocation2 + $0x70] sm:$0xff]
    %v4145 = vld [vmem:[#allocation2 + $0x78] sm:$0xff]
    %v4146 = vld [vmem:[#allocation2 + $0x80] sm:$0xff]
    %v4147 = vld [vmem:[#allocation2 + $0x88] sm:$0xff]
    %v4148 = vld [vmem:[#allocation2 + $0x90] sm:$0xff]
    %v4149 = vld [vmem:[#allocation2 + $0x98] sm:$0xff]
    %v4150 = vld [vmem:[#allocation2 + $0xa0] sm:$0xff]
    %v4151 = vld [vmem:[#allocation2 + $0xa8] sm:$0xff]
    %v4152 = vld [vmem:[#allocation2 + $0xb0] sm:$0xff]
    %v4153 = vld [vmem:[#allocation2 + $0xb8] sm:$0xff]
    %v4154 = vld [vmem:[#allocation2 + $0xc0] sm:$0xff]
    %v4155 = vld [vmem:[#allocation2 + $0xc8] sm:$0xff]
    %v4156 = vld [vmem:[#allocation2 + $0xd0] sm:$0xff]
    %v4157 = vld [vmem:[#allocation2 + $0xd8] sm:$0xff]
    %v4158 = vld [vmem:[#allocation2 + $0xe0] sm:$0xff]
    %v4159 = vld [vmem:[#allocation2 + $0xe8] sm:$0xff]
    %v4160 = vld [vmem:[#allocation2 + $0xf0] sm:$0xff]
    %v4161 = vld [vmem:[#allocation2 + $0xf8] sm:$0xff]
    %v4162 = vld [vmem:[#allocation2 + $0x100] sm:$0xff]
    %v4163 = vld [vmem:[#allocation2 + $0x108] sm:$0xff]
    %v4164 = vld [vmem:[#allocation2 + $0x110] sm:$0xff]
    %v4165 = vld [vmem:[#allocation2 + $0x118] sm:$0xff]
    %v4166 = vld [vmem:[#allocation2 + $0x120] sm:$0xff]
    %v4167 = vld [vmem:[#allocation2 + $0x128] sm:$0xff]
    %v4168 = vld [vmem:[#allocation2 + $0x130] sm:$0xff]
    %v4169 = vld [vmem:[#allocation2 + $0x138] sm:$0xff]
    %v4170 = vld [vmem:[#allocation2 + $0x140] sm:$0xff]
    %v4171 = vld [vmem:[#allocation2 + $0x148] sm:$0xff]
    %v4172 = vld [vmem:[#allocation2 + $0x150] sm:$0xff]
    %v4173 = vld [vmem:[#allocation2 + $0x158] sm:$0xff]
    %v4174 = vld [vmem:[#allocation2 + $0x160] sm:$0xff]
    %v4175 = vld [vmem:[#allocation2 + $0x168] sm:$0xff]
    %v4176 = vld [vmem:[#allocation2 + $0x170] sm:$0xff]
    %v4177 = vld [vmem:[#allocation2 + $0x178] sm:$0xff]
    %v4178 = vld [vmem:[#allocation2 + $0x180] sm:$0xff]
    %v4179 = vld [vmem:[#allocation2 + $0x188] sm:$0x1f]
    %vm4229 = vcmask 1042432
    %v4230 = vrot.slane %v4131, 5
    %v4231 = vrot.slane %v4132, 5
    %v4232 = vsel %vm4229, %v4230, %v4231
    %v4233 = vrot.slane %v4133, 5
    %v4234 = vsel %vm4229, %v4231, %v4233
    %v4235 = vrot.slane %v4134, 5
    %v4236 = vsel %vm4229, %v4233, %v4235
    %v4237 = vrot.slane %v4135, 5
    %v4238 = vsel %vm4229, %v4235, %v4237
    %v4239 = vrot.slane %v4136, 5
    %v4240 = vsel %vm4229, %v4237, %v4239
    %v4241 = vrot.slane %v4137, 5
    %v4242 = vsel %vm4229, %v4239, %v4241
    %v4243 = vrot.slane %v4138, 5
    %v4244 = vsel %vm4229, %v4241, %v4243
    %v4245 = vrot.slane %v4139, 5
    %v4246 = vsel %vm4229, %v4243, %v4245
    %v4247 = vrot.slane %v4140, 5
    %v4248 = vsel %vm4229, %v4245, %v4247
    %v4249 = vrot.slane %v4141, 5
    %v4250 = vsel %vm4229, %v4247, %v4249
    %v4251 = vrot.slane %v4142, 5
    %v4252 = vsel %vm4229, %v4249, %v4251
    %v4253 = vrot.slane %v4143, 5
    %v4254 = vsel %vm4229, %v4251, %v4253
    %v4255 = vrot.slane %v4144, 5
    %v4256 = vsel %vm4229, %v4253, %v4255
    %v4257 = vrot.slane %v4145, 5
    %v4258 = vsel %vm4229, %v4255, %v4257
    %v4259 = vrot.slane %v4146, 5
    %v4260 = vsel %vm4229, %v4257, %v4259
    %v4261 = vrot.slane %v4147, 5
    %v4262 = vsel %vm4229, %v4259, %v4261
    %v4263 = vrot.slane %v4148, 5
    %v4264 = vsel %vm4229, %v4261, %v4263
    %v4265 = vrot.slane %v4149, 5
    %v4266 = vsel %vm4229, %v4263, %v4265
    %v4267 = vrot.slane %v4150, 5
    %v4268 = vsel %vm4229, %v4265, %v4267
    %v4269 = vrot.slane %v4151, 5
    %v4270 = vsel %vm4229, %v4267, %v4269
    %v4271 = vrot.slane %v4152, 5
    %v4272 = vsel %vm4229, %v4269, %v4271
    %v4273 = vrot.slane %v4153, 5
    %v4274 = vsel %vm4229, %v4271, %v4273
    %v4275 = vrot.slane %v4154, 5
    %v4276 = vsel %vm4229, %v4273, %v4275
    %v4277 = vrot.slane %v4155, 5
    %v4278 = vsel %vm4229, %v4275, %v4277
    %v4279 = vrot.slane %v4156, 5
    %v4280 = vsel %vm4229, %v4277, %v4279
    %v4281 = vrot.slane %v4157, 5
    %v4282 = vsel %vm4229, %v4279, %v4281
    %v4283 = vrot.slane %v4158, 5
    %v4284 = vsel %vm4229, %v4281, %v4283
    %v4285 = vrot.slane %v4159, 5
    %v4286 = vsel %vm4229, %v4283, %v4285
    %v4287 = vrot.slane %v4160, 5
    %v4288 = vsel %vm4229, %v4285, %v4287
    %v4289 = vrot.slane %v4161, 5
    %v4290 = vsel %vm4229, %v4287, %v4289
    %v4291 = vrot.slane %v4162, 5
    %v4292 = vsel %vm4229, %v4289, %v4291
    %v4293 = vrot.slane %v4163, 5
    %v4294 = vsel %vm4229, %v4291, %v4293
    %v4295 = vrot.slane %v4164, 5
    %v4296 = vsel %vm4229, %v4293, %v4295
    %v4297 = vrot.slane %v4165, 5
    %v4298 = vsel %vm4229, %v4295, %v4297
    %v4299 = vrot.slane %v4166, 5
    %v4300 = vsel %vm4229, %v4297, %v4299
    %v4301 = vrot.slane %v4167, 5
    %v4302 = vsel %vm4229, %v4299, %v4301
    %v4303 = vrot.slane %v4168, 5
    %v4304 = vsel %vm4229, %v4301, %v4303
    %v4305 = vrot.slane %v4169, 5
    %v4306 = vsel %vm4229, %v4303, %v4305
    %v4307 = vrot.slane %v4170, 5
    %v4308 = vsel %vm4229, %v4305, %v4307
    %v4309 = vrot.slane %v4171, 5
    %v4310 = vsel %vm4229, %v4307, %v4309
    %v4311 = vrot.slane %v4172, 5
    %v4312 = vsel %vm4229, %v4309, %v4311
    %v4313 = vrot.slane %v4173, 5
    %v4314 = vsel %vm4229, %v4311, %v4313
    %v4315 = vrot.slane %v4174, 5
    %v4316 = vsel %vm4229, %v4313, %v4315
    %v4317 = vrot.slane %v4175, 5
    %v4318 = vsel %vm4229, %v4315, %v4317
    %v4319 = vrot.slane %v4176, 5
    %v4320 = vsel %vm4229, %v4317, %v4319
    %v4321 = vrot.slane %v4177, 5
    %v4322 = vsel %vm4229, %v4319, %v4321
    %v4323 = vrot.slane %v4178, 5
    %v4324 = vsel %vm4229, %v4321, %v4323
    %v4325 = vrot.slane %v4179, 5
    %v4326 = vsel %vm4229, %v4323, %v4325
    %4327 = vrot.lane.b32.xlu0 %v4232, 64
    %v4328 = vpop.permute.xlu0 %4327
    %4329 = vrot.lane.b32.xlu0 %v4234, 64
    %v4330 = vpop.permute.xlu0 %4329
    %4331 = vrot.lane.b32.xlu0 %v4236, 64
    %v4332 = vpop.permute.xlu0 %4331
    %4333 = vrot.lane.b32.xlu0 %v4238, 64
    %v4334 = vpop.permute.xlu0 %4333
    %4335 = vrot.lane.b32.xlu0 %v4240, 64
    %v4336 = vpop.permute.xlu0 %4335
    %4337 = vrot.lane.b32.xlu0 %v4242, 64
    %v4338 = vpop.permute.xlu0 %4337
    %4339 = vrot.lane.b32.xlu0 %v4244, 64
    %v4340 = vpop.permute.xlu0 %4339
    %4341 = vrot.lane.b32.xlu0 %v4246, 64
    %v4342 = vpop.permute.xlu0 %4341
    %4343 = vrot.lane.b32.xlu0 %v4248, 64
    %v4344 = vpop.permute.xlu0 %4343
    %4345 = vrot.lane.b32.xlu0 %v4250, 64
    %v4346 = vpop.permute.xlu0 %4345
    %4347 = vrot.lane.b32.xlu0 %v4252, 64
    %v4348 = vpop.permute.xlu0 %4347
    %4349 = vrot.lane.b32.xlu0 %v4254, 64
    %v4350 = vpop.permute.xlu0 %4349
    %4351 = vrot.lane.b32.xlu0 %v4256, 64
    %v4352 = vpop.permute.xlu0 %4351
    %4353 = vrot.lane.b32.xlu0 %v4258, 64
    %v4354 = vpop.permute.xlu0 %4353
    %4355 = vrot.lane.b32.xlu0 %v4260, 64
    %v4356 = vpop.permute.xlu0 %4355
    %4357 = vrot.lane.b32.xlu0 %v4262, 64
    %v4358 = vpop.permute.xlu0 %4357
    %4359 = vrot.lane.b32.xlu0 %v4264, 64
    %v4360 = vpop.permute.xlu0 %4359
    %4361 = vrot.lane.b32.xlu0 %v4266, 64
    %v4362 = vpop.permute.xlu0 %4361
    %4363 = vrot.lane.b32.xlu0 %v4268, 64
    %v4364 = vpop.permute.xlu0 %4363
    %4365 = vrot.lane.b32.xlu0 %v4270, 64
    %v4366 = vpop.permute.xlu0 %4365
    %4367 = vrot.lane.b32.xlu0 %v4272, 64
    %v4368 = vpop.permute.xlu0 %4367
    %4369 = vrot.lane.b32.xlu0 %v4274, 64
    %v4370 = vpop.permute.xlu0 %4369
    %4371 = vrot.lane.b32.xlu0 %v4276, 64
    %v4372 = vpop.permute.xlu0 %4371
    %4373 = vrot.lane.b32.xlu0 %v4278, 64
    %v4374 = vpop.permute.xlu0 %4373
    %4375 = vrot.lane.b32.xlu0 %v4280, 64
    %v4376 = vpop.permute.xlu0 %4375
    %4377 = vrot.lane.b32.xlu0 %v4282, 64
    %v4378 = vpop.permute.xlu0 %4377
    %4379 = vrot.lane.b32.xlu0 %v4284, 64
    %v4380 = vpop.permute.xlu0 %4379
    %4381 = vrot.lane.b32.xlu0 %v4286, 64
    %v4382 = vpop.permute.xlu0 %4381
    %4383 = vrot.lane.b32.xlu0 %v4288, 64
    %v4384 = vpop.permute.xlu0 %4383
    %4385 = vrot.lane.b32.xlu0 %v4290, 64
    %v4386 = vpop.permute.xlu0 %4385
    %4387 = vrot.lane.b32.xlu0 %v4292, 64
    %v4388 = vpop.permute.xlu0 %4387
    %4389 = vrot.lane.b32.xlu0 %v4294, 64
    %v4390 = vpop.permute.xlu0 %4389
    %4391 = vrot.lane.b32.xlu0 %v4296, 64
    %v4392 = vpop.permute.xlu0 %4391
    %4393 = vrot.lane.b32.xlu0 %v4298, 64
    %v4394 = vpop.permute.xlu0 %4393
    %4395 = vrot.lane.b32.xlu0 %v4300, 64
    %v4396 = vpop.permute.xlu0 %4395
    %4397 = vrot.lane.b32.xlu0 %v4302, 64
    %v4398 = vpop.permute.xlu0 %4397
    %4399 = vrot.lane.b32.xlu0 %v4304, 64
    %v4400 = vpop.permute.xlu0 %4399
    %4401 = vrot.lane.b32.xlu0 %v4306, 64
    %v4402 = vpop.permute.xlu0 %4401
    %4403 = vrot.lane.b32.xlu0 %v4308, 64
    %v4404 = vpop.permute.xlu0 %4403
    %4405 = vrot.lane.b32.xlu0 %v4310, 64
    %v4406 = vpop.permute.xlu0 %4405
    %4407 = vrot.lane.b32.xlu0 %v4312, 64
    %v4408 = vpop.permute.xlu0 %4407
    %4409 = vrot.lane.b32.xlu0 %v4314, 64
    %v4410 = vpop.permute.xlu0 %4409
    %4411 = vrot.lane.b32.xlu0 %v4316, 64
    %v4412 = vpop.permute.xlu0 %4411
    %4413 = vrot.lane.b32.xlu0 %v4318, 64
    %v4414 = vpop.permute.xlu0 %4413
    %4415 = vrot.lane.b32.xlu0 %v4320, 64
    %v4416 = vpop.permute.xlu0 %4415
    %4417 = vrot.lane.b32.xlu0 %v4322, 64
    %v4418 = vpop.permute.xlu0 %4417
    %4419 = vrot.lane.b32.xlu0 %v4324, 64
    %v4420 = vpop.permute.xlu0 %4419
    %4421 = vrot.lane.b32.xlu0 %v4326, 64
    %v4422 = vpop.permute.xlu0 %4421
    %vm4471 = vcmask 589312
    %4472 = vst.msk [vmem:[#allocation4] sm:$0xff] %vm4471, %v4328
    %4473 = vst.msk [vmem:[#allocation4 + $0x18] sm:$0xff] %vm4471, %v4330
    %4474 = vst.msk [vmem:[#allocation4 + $0x30] sm:$0xff] %vm4471, %v4332
    %4475 = vst.msk [vmem:[#allocation4 + $0x48] sm:$0xff] %vm4471, %v4334
    %4476 = vst.msk [vmem:[#allocation4 + $0x60] sm:$0xff] %vm4471, %v4336
    %4477 = vst.msk [vmem:[#allocation4 + $0x78] sm:$0xff] %vm4471, %v4338
    %4478 = vst.msk [vmem:[#allocation4 + $0x90] sm:$0xff] %vm4471, %v4340
    %4479 = vst.msk [vmem:[#allocation4 + $0xa8] sm:$0xff] %vm4471, %v4342
    %4480 = vst.msk [vmem:[#allocation4 + $0xc0] sm:$0xff] %vm4471, %v4344
    %4481 = vst.msk [vmem:[#allocation4 + $0xd8] sm:$0xff] %vm4471, %v4346
    %4482 = vst.msk [vmem:[#allocation4 + $0xf0] sm:$0xff] %vm4471, %v4348
    %4483 = vst.msk [vmem:[#allocation4 + $0x108] sm:$0xff] %vm4471, %v4350
    %4484 = vst.msk [vmem:[#allocation4 + $0x120] sm:$0xff] %vm4471, %v4352
    %4485 = vst.msk [vmem:[#allocation4 + $0x138] sm:$0xff] %vm4471, %v4354
    %4486 = vst.msk [vmem:[#allocation4 + $0x150] sm:$0xff] %vm4471, %v4356
    %4487 = vst.msk [vmem:[#allocation4 + $0x168] sm:$0xff] %vm4471, %v4358
    %4488 = vst.msk [vmem:[#allocation4 + $0x180] sm:$0xff] %vm4471, %v4360
    %4489 = vst.msk [vmem:[#allocation4 + $0x198] sm:$0xff] %vm4471, %v4362
    %4490 = vst.msk [vmem:[#allocation4 + $0x1b0] sm:$0xff] %vm4471, %v4364
    %4491 = vst.msk [vmem:[#allocation4 + $0x1c8] sm:$0xff] %vm4471, %v4366
    %4492 = vst.msk [vmem:[#allocation4 + $0x1e0] sm:$0xff] %vm4471, %v4368
    %4493 = vst.msk [vmem:[#allocation4 + $0x1f8] sm:$0xff] %vm4471, %v4370
    %4494 = vst.msk [vmem:[#allocation4 + $0x210] sm:$0xff] %vm4471, %v4372
    %4495 = vst.msk [vmem:[#allocation4 + $0x228] sm:$0xff] %vm4471, %v4374
    %4496 = vst.msk [vmem:[#allocation4 + $0x240] sm:$0xff] %vm4471, %v4376
    %4497 = vst.msk [vmem:[#allocation4 + $0x258] sm:$0xff] %vm4471, %v4378
    %4498 = vst.msk [vmem:[#allocation4 + $0x270] sm:$0xff] %vm4471, %v4380
    %4499 = vst.msk [vmem:[#allocation4 + $0x288] sm:$0xff] %vm4471, %v4382
    %4500 = vst.msk [vmem:[#allocation4 + $0x2a0] sm:$0xff] %vm4471, %v4384
    %4501 = vst.msk [vmem:[#allocation4 + $0x2b8] sm:$0xff] %vm4471, %v4386
    %4502 = vst.msk [vmem:[#allocation4 + $0x2d0] sm:$0xff] %vm4471, %v4388
    %4503 = vst.msk [vmem:[#allocation4 + $0x2e8] sm:$0xff] %vm4471, %v4390
    %4504 = vst.msk [vmem:[#allocation4 + $0x300] sm:$0xff] %vm4471, %v4392
    %4505 = vst.msk [vmem:[#allocation4 + $0x318] sm:$0xff] %vm4471, %v4394
    %4506 = vst.msk [vmem:[#allocation4 + $0x330] sm:$0xff] %vm4471, %v4396
    %4507 = vst.msk [vmem:[#allocation4 + $0x348] sm:$0xff] %vm4471, %v4398
    %4508 = vst.msk [vmem:[#allocation4 + $0x360] sm:$0xff] %vm4471, %v4400
    %4509 = vst.msk [vmem:[#allocation4 + $0x378] sm:$0xff] %vm4471, %v4402
    %4510 = vst.msk [vmem:[#allocation4 + $0x390] sm:$0xff] %vm4471, %v4404
    %4511 = vst.msk [vmem:[#allocation4 + $0x3a8] sm:$0xff] %vm4471, %v4406
    %4512 = vst.msk [vmem:[#allocation4 + $0x3c0] sm:$0xff] %vm4471, %v4408
    %4513 = vst.msk [vmem:[#allocation4 + $0x3d8] sm:$0xff] %vm4471, %v4410
    %4514 = vst.msk [vmem:[#allocation4 + $0x3f0] sm:$0xff] %vm4471, %v4412
    %4515 = vst.msk [vmem:[#allocation4 + $0x408] sm:$0xff] %vm4471, %v4414
    %4516 = vst.msk [vmem:[#allocation4 + $0x420] sm:$0xff] %vm4471, %v4416
    %4517 = vst.msk [vmem:[#allocation4 + $0x438] sm:$0xff] %vm4471, %v4418
    %4518 = vst.msk [vmem:[#allocation4 + $0x450] sm:$0xff] %vm4471, %v4420
    %4519 = vst.msk [vmem:[#allocation4 + $0x468] sm:$0xff] %vm4471, %v4422
    %v4520 = vld [vmem:[#allocation4] sm:$0xff]
    %v4521 = vld [vmem:[#allocation4 + $0x18] sm:$0xff]
    %v4522 = vld [vmem:[#allocation4 + $0x30] sm:$0xff]
    %v4523 = vld [vmem:[#allocation4 + $0x48] sm:$0xff]
    %v4524 = vld [vmem:[#allocation4 + $0x60] sm:$0xff]
    %v4525 = vld [vmem:[#allocation4 + $0x78] sm:$0xff]
    %v4526 = vld [vmem:[#allocation4 + $0x90] sm:$0xff]
    %v4527 = vld [vmem:[#allocation4 + $0xa8] sm:$0xff]
    %v4528 = vld [vmem:[#allocation4 + $0xc0] sm:$0xff]
    %v4529 = vld [vmem:[#allocation4 + $0xd8] sm:$0xff]
    %v4530 = vld [vmem:[#allocation4 + $0xf0] sm:$0xff]
    %v4531 = vld [vmem:[#allocation4 + $0x108] sm:$0xff]
    %v4532 = vld [vmem:[#allocation4 + $0x120] sm:$0xff]
    %v4533 = vld [vmem:[#allocation4 + $0x138] sm:$0xff]
    %v4534 = vld [vmem:[#allocation4 + $0x150] sm:$0xff]
    %v4535 = vld [vmem:[#allocation4 + $0x168] sm:$0xff]
    %v4536 = vld [vmem:[#allocation4 + $0x180] sm:$0xff]
    %v4537 = vld [vmem:[#allocation4 + $0x198] sm:$0xff]
    %v4538 = vld [vmem:[#allocation4 + $0x1b0] sm:$0xff]
    %v4539 = vld [vmem:[#allocation4 + $0x1c8] sm:$0xff]
    %v4540 = vld [vmem:[#allocation4 + $0x1e0] sm:$0xff]
    %v4541 = vld [vmem:[#allocation4 + $0x1f8] sm:$0xff]
    %v4542 = vld [vmem:[#allocation4 + $0x210] sm:$0xff]
    %v4543 = vld [vmem:[#allocation4 + $0x228] sm:$0xff]
    %v4544 = vld [vmem:[#allocation4 + $0x240] sm:$0xff]
    %v4545 = vld [vmem:[#allocation4 + $0x258] sm:$0xff]
    %v4546 = vld [vmem:[#allocation4 + $0x270] sm:$0xff]
    %v4547 = vld [vmem:[#allocation4 + $0x288] sm:$0xff]
    %v4548 = vld [vmem:[#allocation4 + $0x2a0] sm:$0xff]
    %v4549 = vld [vmem:[#allocation4 + $0x2b8] sm:$0xff]
    %v4550 = vld [vmem:[#allocation4 + $0x2d0] sm:$0xff]
    %v4551 = vld [vmem:[#allocation4 + $0x2e8] sm:$0xff]
    %v4552 = vld [vmem:[#allocation4 + $0x300] sm:$0xff]
    %v4553 = vld [vmem:[#allocation4 + $0x318] sm:$0xff]
    %v4554 = vld [vmem:[#allocation4 + $0x330] sm:$0xff]
    %v4555 = vld [vmem:[#allocation4 + $0x348] sm:$0xff]
    %v4556 = vld [vmem:[#allocation4 + $0x360] sm:$0xff]
    %v4557 = vld [vmem:[#allocation4 + $0x378] sm:$0xff]
    %v4558 = vld [vmem:[#allocation4 + $0x390] sm:$0xff]
    %v4559 = vld [vmem:[#allocation4 + $0x3a8] sm:$0xff]
    %v4560 = vld [vmem:[#allocation4 + $0x3c0] sm:$0xff]
    %v4561 = vld [vmem:[#allocation4 + $0x3d8] sm:$0xff]
    %v4562 = vld [vmem:[#allocation4 + $0x3f0] sm:$0xff]
    %v4563 = vld [vmem:[#allocation4 + $0x408] sm:$0xff]
    %v4564 = vld [vmem:[#allocation4 + $0x420] sm:$0xff]
    %v4565 = vld [vmem:[#allocation4 + $0x438] sm:$0xff]
    %v4566 = vld [vmem:[#allocation4 + $0x450] sm:$0xff]
    %v4567 = vld [vmem:[#allocation4 + $0x468] sm:$0xff]
    %v4568 = vld [vmem:[%s1] sm:$0xf]
    %v4569 = vld [vmem:[%s1 + $0x4] sm:$0xf]
    %v4570 = vld [vmem:[%s1 + $0x8] sm:$0xf]
    %v4571 = vld [vmem:[%s1 + $0xc] sm:$0xf]
    %v4572 = vld [vmem:[%s1 + $0x10] sm:$0xf]
    %v4573 = vld [vmem:[%s1 + $0x14] sm:$0xf]
    %v4574 = vld [vmem:[%s1 + $0x18] sm:$0xf]
    %v4575 = vld [vmem:[%s1 + $0x1c] sm:$0xf]
    %v4576 = vld [vmem:[%s1 + $0x20] sm:$0xf]
    %v4577 = vld [vmem:[%s2] sm:$0x1]
    %v4579 = vlaneseq
    %v4580 = vshrl.u32 %v4579, 7
    %v4581 = vsub.s32 0, %v4580
    %v4582 = vrot.slane %v4577, %v4581
    %v4593 = vunpack.c.l.b16 %v4568
    %v4594 = vunpack.c.l.b16 %v4569
    %v4595 = vunpack.c.l.b16 %v4570
    %v4596 = vunpack.c.l.b16 %v4571
    %v4597 = vunpack.c.l.b16 %v4572
    %v4598 = vunpack.c.l.b16 %v4573
    %v4599 = vunpack.c.l.b16 %v4574
    %v4600 = vunpack.c.l.b16 %v4575
    %v4601 = vunpack.c.l.b16 %v4576
    %v4602 = vpack.c.b16 %v4594, %v4593
    %v4603 = vpack.c.b16 %v4596, %v4595
    %v4604 = vpack.c.b16 %v4598, %v4597
    %v4605 = vpack.c.b16 %v4600, %v4599
    %v4606 = vpack.c.b16 %v4601, %v4601
    %vm4611 = vcmask 588800
    %v4613 = vsel %vm4611, %v4520, 0
    %v4616 = vsel %vm4611, %v4521, 0
    %v4619 = vsel %vm4611, %v4522, 0
    %v4622 = vsel %vm4611, %v4523, 0
    %v4625 = vsel %vm4611, %v4524, 0
    %v4628 = vsel %vm4611, %v4525, 0
    %v4631 = vsel %vm4611, %v4526, 0
    %v4634 = vsel %vm4611, %v4527, 0
    %v4637 = vsel %vm4611, %v4528, 0
    %v4640 = vsel %vm4611, %v4529, 0
    %v4643 = vsel %vm4611, %v4530, 0
    %v4646 = vsel %vm4611, %v4531, 0
    %v4649 = vsel %vm4611, %v4532, 0
    %v4652 = vsel %vm4611, %v4533, 0
    %v4655 = vsel %vm4611, %v4534, 0
    %v4658 = vsel %vm4611, %v4535, 0
    %v4661 = vsel %vm4611, %v4536, 0
    %v4664 = vsel %vm4611, %v4537, 0
    %v4667 = vsel %vm4611, %v4538, 0
    %v4670 = vsel %vm4611, %v4539, 0
    %v4673 = vsel %vm4611, %v4540, 0
    %v4676 = vsel %vm4611, %v4541, 0
    %v4679 = vsel %vm4611, %v4542, 0
    %v4682 = vsel %vm4611, %v4543, 0
    %v4685 = vsel %vm4611, %v4544, 0
    %v4688 = vsel %vm4611, %v4545, 0
    %v4691 = vsel %vm4611, %v4546, 0
    %v4694 = vsel %vm4611, %v4547, 0
    %v4697 = vsel %vm4611, %v4548, 0
    %v4700 = vsel %vm4611, %v4549, 0
    %v4703 = vsel %vm4611, %v4550, 0
    %v4706 = vsel %vm4611, %v4551, 0
    %v4709 = vsel %vm4611, %v4552, 0
    %v4712 = vsel %vm4611, %v4553, 0
    %v4715 = vsel %vm4611, %v4554, 0
    %v4718 = vsel %vm4611, %v4555, 0
    %v4721 = vsel %vm4611, %v4556, 0
    %v4724 = vsel %vm4611, %v4557, 0
    %v4727 = vsel %vm4611, %v4558, 0
    %v4730 = vsel %vm4611, %v4559, 0
    %v4733 = vsel %vm4611, %v4560, 0
    %v4736 = vsel %vm4611, %v4561, 0
    %v4739 = vsel %vm4611, %v4562, 0
    %v4742 = vsel %vm4611, %v4563, 0
    %v4745 = vsel %vm4611, %v4564, 0
    %v4748 = vsel %vm4611, %v4565, 0
    %v4751 = vsel %vm4611, %v4566, 0
    %v4754 = vsel %vm4611, %v4567, 0
    %vm4756 = vcmask 1043456
    %v4758 = vsel %vm4756, %v4606, 0
    %4760 = vmatprep.subr.bf16.mxu0 0
    %4761 = vmatpush1.bf16.msra.mxu0 %v4602
    %4762 = vmatprep.subr.bf16.mxu0 0
    %4763 = vmatpush1.bf16.msra.mxu0 %v4603
    %4764 = vmatprep.subr.bf16.mxu0 0
    %4765 = vmatpush1.bf16.msra.mxu0 %v4604
    %4766 = vmatprep.subr.bf16.mxu0 0
    %4767 = vmatpush1.bf16.msra.mxu0 %v4605
    %4768 = vmatprep.subr.bf16.mxu0 0
    %4769 = vmatpush1.bf16.msra.mxu0 %v4758
    %4770 = vmatprep.subr.bf16.mxu0 0
    %4771 = vmatpush1.bf16.msra.mxu0 0
    %4772 = vmatprep.subr.bf16.mxu0 0
    %4773 = vmatpush1.bf16.msra.mxu0 0
    %4774 = vmatprep.subr.bf16.mxu0 0
    %4775 = vmatpush1.bf16.msra.mxu0 0
    %4776 = vmatprep.subr.bf16.mxu0 0
    %4777 = vmatpush1.bf16.msra.mxu0 0
    %4778 = vmatprep.subr.bf16.mxu0 0
    %4779 = vmatpush1.bf16.msra.mxu0 0
    %4780 = vmatprep.subr.bf16.mxu0 0
    %4781 = vmatpush1.bf16.msra.mxu0 0
    %4782 = vmatprep.subr.bf16.mxu0 0
    %4783 = vmatpush1.bf16.msra.mxu0 0
    %4784 = vmatprep.subr.bf16.mxu0 0
    %4785 = vmatpush1.bf16.msra.mxu0 0
    %4786 = vmatprep.subr.bf16.mxu0 0
    %4787 = vmatpush1.bf16.msra.mxu0 0
    %4788 = vmatprep.subr.bf16.mxu0 0
    %4789 = vmatpush1.bf16.msra.mxu0 0
    %4790 = vmatprep.subr.bf16.mxu0 0
    %4791 = vmatpush1.bf16.msra.mxu0 0
    %4792 = vmatprep.mubr.bf16.mxu0 0
    %4793 = vmatmul.mubr.bf16.gmra.mrb[0].mxu0 %v4613
    %v4794 = vpop.f32.mrb[0].mxu0
    %v4795 = vadd.f32 %v4582, %v4794
    %v4796 = vpop.f32.mrb[0].mxu0
    %v4797 = vpop.f32.mrb[0].mxu0
    %v4798 = vadd.f32 %v4582, %v4797
    %v4799 = vpop.f32.mrb[0].mxu0
    %4800 = vmatprep.mubr.bf16.mxu0 0
    %4801 = vmatmul.mubr.bf16.gmra.mrb[0].mxu0 %v4616
    %v4802 = vpop.f32.mrb[0].mxu0
    %v4803 = vadd.f32 %v4582, %v4802
    %v4804 = vpop.f32.mrb[0].mxu0
    %v4805 = vpop.f32.mrb[0].mxu0
    %v4806 = vadd.f32 %v4582, %v4805
    %v4807 = vpop.f32.mrb[0].mxu0
    %4808 = vmatprep.mubr.bf16.mxu0 0
    %4809 = vmatmul.mubr.bf16.gmra.mrb[0].mxu0 %v4619
    %v4810 = vpop.f32.mrb[0].mxu0
    %v4811 = vadd.f32 %v4582, %v4810
    %v4812 = vpop.f32.mrb[0].mxu0
    %v4813 = vpop.f32.mrb[0].mxu0
    %v4814 = vadd.f32 %v4582, %v4813
    %v4815 = vpop.f32.mrb[0].mxu0
    %4816 = vmatprep.mubr.bf16.mxu0 0
    %4817 = vmatmul.mubr.bf16.gmra.mrb[0].mxu0 %v4622
    %v4818 = vpop.f32.mrb[0].mxu0
    %v4819 = vadd.f32 %v4582, %v4818
    %v4820 = vpop.f32.mrb[0].mxu0
    %v4821 = vpop.f32.mrb[0].mxu0
    %v4822 = vadd.f32 %v4582, %v4821
    %v4823 = vpop.f32.mrb[0].mxu0
    %4824 = vmatprep.mubr.bf16.mxu0 0
    %4825 = vmatmul.mubr.bf16.gmra.mrb[0].mxu0 %v4625
    %v4826 = vpop.f32.mrb[0].mxu0
    %v4827 = vadd.f32 %v4582, %v4826
    %v4828 = vpop.f32.mrb[0].mxu0
    %v4829 = vpop.f32.mrb[0].mxu0
    %v4830 = vadd.f32 %v4582, %v4829
    %v4831 = vpop.f32.mrb[0].mxu0
    %4832 = vmatprep.mubr.bf16.mxu0 0
    %4833 = vmatmul.mubr.bf16.gmra.mrb[0].mxu0 %v4628
    %v4834 = vpop.f32.mrb[0].mxu0
    %v4835 = vadd.f32 %v4582, %v4834
    %v4836 = vpop.f32.mrb[0].mxu0
    %v4837 = vpop.f32.mrb[0].mxu0
    %v4838 = vadd.f32 %v4582, %v4837
    %v4839 = vpop.f32.mrb[0].mxu0
    %4840 = vmatprep.mubr.bf16.mxu0 0
    %4841 = vmatmul.mubr.bf16.gmra.mrb[0].mxu0 %v4631
    %v4842 = vpop.f32.mrb[0].mxu0
    %v4843 = vadd.f32 %v4582, %v4842
    %v4844 = vpop.f32.mrb[0].mxu0
    %v4845 = vpop.f32.mrb[0].mxu0
    %v4846 = vadd.f32 %v4582, %v4845
    %v4847 = vpop.f32.mrb[0].mxu0
    %4848 = vmatprep.mubr.bf16.mxu0 0
    %4849 = vmatmul.mubr.bf16.gmra.mrb[0].mxu0 %v4634
    %v4850 = vpop.f32.mrb[0].mxu0
    %v4851 = vadd.f32 %v4582, %v4850
    %v4852 = vpop.f32.mrb[0].mxu0
    %v4853 = vpop.f32.mrb[0].mxu0
    %v4854 = vadd.f32 %v4582, %v4853
    %v4855 = vpop.f32.mrb[0].mxu0
    %4856 = vmatprep.mubr.bf16.mxu0 0
    %4857 = vmatmul.mubr.bf16.gmra.mrb[0].mxu0 %v4637
    %v4858 = vpop.f32.mrb[0].mxu0
    %v4859 = vadd.f32 %v4582, %v4858
    %v4860 = vpop.f32.mrb[0].mxu0
    %v4861 = vpop.f32.mrb[0].mxu0
    %v4862 = vadd.f32 %v4582, %v4861
    %v4863 = vpop.f32.mrb[0].mxu0
    %4864 = vmatprep.mubr.bf16.mxu0 0
    %4865 = vmatmul.mubr.bf16.gmra.mrb[0].mxu0 %v4640
    %v4866 = vpop.f32.mrb[0].mxu0
    %v4867 = vadd.f32 %v4582, %v4866
    %v4868 = vpop.f32.mrb[0].mxu0
    %v4869 = vpop.f32.mrb[0].mxu0
    %v4870 = vadd.f32 %v4582, %v4869
    %v4871 = vpop.f32.mrb[0].mxu0
    %4872 = vmatprep.mubr.bf16.mxu0 0
    %4873 = vmatmul.mubr.bf16.gmra.mrb[0].mxu0 %v4643
    %v4874 = vpop.f32.mrb[0].mxu0
    %v4875 = vadd.f32 %v4582, %v4874
    %v4876 = vpop.f32.mrb[0].mxu0
    %v4877 = vpop.f32.mrb[0].mxu0
    %v4878 = vadd.f32 %v4582, %v4877
    %v4879 = vpop.f32.mrb[0].mxu0
    %4880 = vmatprep.mubr.bf16.mxu0 0
    %4881 = vmatmul.mubr.bf16.gmra.mrb[0].mxu0 %v4646
    %v4882 = vpop.f32.mrb[0].mxu0
    %v4883 = vadd.f32 %v4582, %v4882
    %v4884 = vpop.f32.mrb[0].mxu0
    %v4885 = vpop.f32.mrb[0].mxu0
    %v4886 = vadd.f32 %v4582, %v4885
    %v4887 = vpop.f32.mrb[0].mxu0
    %4888 = vmatprep.mubr.bf16.mxu0 0
    %4889 = vmatmul.mubr.bf16.gmra.mrb[0].mxu0 %v4649
    %v4890 = vpop.f32.mrb[0].mxu0
    %v4891 = vadd.f32 %v4582, %v4890
    %v4892 = vpop.f32.mrb[0].mxu0
    %v4893 = vpop.f32.mrb[0].mxu0
    %v4894 = vadd.f32 %v4582, %v4893
    %v4895 = vpop.f32.mrb[0].mxu0
    %4896 = vmatprep.mubr.bf16.mxu0 0
    %4897 = vmatmul.mubr.bf16.gmra.mrb[0].mxu0 %v4652
    %v4898 = vpop.f32.mrb[0].mxu0
    %v4899 = vadd.f32 %v4582, %v4898
    %v4900 = vpop.f32.mrb[0].mxu0
    %v4901 = vpop.f32.mrb[0].mxu0
    %v4902 = vadd.f32 %v4582, %v4901
    %v4903 = vpop.f32.mrb[0].mxu0
    %4904 = vmatprep.mubr.bf16.mxu0 0
    %4905 = vmatmul.mubr.bf16.gmra.mrb[0].mxu0 %v4655
    %v4906 = vpop.f32.mrb[0].mxu0
    %v4907 = vadd.f32 %v4582, %v4906
    %v4908 = vpop.f32.mrb[0].mxu0
    %v4909 = vpop.f32.mrb[0].mxu0
    %v4910 = vadd.f32 %v4582, %v4909
    %v4911 = vpop.f32.mrb[0].mxu0
    %4912 = vmatprep.mubr.bf16.mxu0 0
    %4913 = vmatmul.mubr.bf16.gmra.mrb[0].mxu0 %v4658
    %v4914 = vpop.f32.mrb[0].mxu0
    %v4915 = vadd.f32 %v4582, %v4914
    %v4916 = vpop.f32.mrb[0].mxu0
    %v4917 = vpop.f32.mrb[0].mxu0
    %v4918 = vadd.f32 %v4582, %v4917
    %v4919 = vpop.f32.mrb[0].mxu0
    %4920 = vmatprep.mubr.bf16.mxu0 0
    %4921 = vmatmul.mubr.bf16.gmra.mrb[0].mxu0 %v4661
    %v4922 = vpop.f32.mrb[0].mxu0
    %v4923 = vadd.f32 %v4582, %v4922
    %v4924 = vpop.f32.mrb[0].mxu0
    %v4925 = vpop.f32.mrb[0].mxu0
    %v4926 = vadd.f32 %v4582, %v4925
    %v4927 = vpop.f32.mrb[0].mxu0
    %4928 = vmatprep.mubr.bf16.mxu0 0
    %4929 = vmatmul.mubr.bf16.gmra.mrb[0].mxu0 %v4664
    %v4930 = vpop.f32.mrb[0].mxu0
    %v4931 = vadd.f32 %v4582, %v4930
    %v4932 = vpop.f32.mrb[0].mxu0
    %v4933 = vpop.f32.mrb[0].mxu0
    %v4934 = vadd.f32 %v4582, %v4933
    %v4935 = vpop.f32.mrb[0].mxu0
    %4936 = vmatprep.mubr.bf16.mxu0 0
    %4937 = vmatmul.mubr.bf16.gmra.mrb[0].mxu0 %v4667
    %v4938 = vpop.f32.mrb[0].mxu0
    %v4939 = vadd.f32 %v4582, %v4938
    %v4940 = vpop.f32.mrb[0].mxu0
    %v4941 = vpop.f32.mrb[0].mxu0
    %v4942 = vadd.f32 %v4582, %v4941
    %v4943 = vpop.f32.mrb[0].mxu0
    %4944 = vmatprep.mubr.bf16.mxu0 0
    %4945 = vmatmul.mubr.bf16.gmra.mrb[0].mxu0 %v4670
    %v4946 = vpop.f32.mrb[0].mxu0
    %v4947 = vadd.f32 %v4582, %v4946
    %v4948 = vpop.f32.mrb[0].mxu0
    %v4949 = vpop.f32.mrb[0].mxu0
    %v4950 = vadd.f32 %v4582, %v4949
    %v4951 = vpop.f32.mrb[0].mxu0
    %4952 = vmatprep.mubr.bf16.mxu0 0
    %4953 = vmatmul.mubr.bf16.gmra.mrb[0].mxu0 %v4673
    %v4954 = vpop.f32.mrb[0].mxu0
    %v4955 = vadd.f32 %v4582, %v4954
    %v4956 = vpop.f32.mrb[0].mxu0
    %v4957 = vpop.f32.mrb[0].mxu0
    %v4958 = vadd.f32 %v4582, %v4957
    %v4959 = vpop.f32.mrb[0].mxu0
    %4960 = vmatprep.mubr.bf16.mxu0 0
    %4961 = vmatmul.mubr.bf16.gmra.mrb[0].mxu0 %v4676
    %v4962 = vpop.f32.mrb[0].mxu0
    %v4963 = vadd.f32 %v4582, %v4962
    %v4964 = vpop.f32.mrb[0].mxu0
    %v4965 = vpop.f32.mrb[0].mxu0
    %v4966 = vadd.f32 %v4582, %v4965
    %v4967 = vpop.f32.mrb[0].mxu0
    %4968 = vmatprep.mubr.bf16.mxu0 0
    %4969 = vmatmul.mubr.bf16.gmra.mrb[0].mxu0 %v4679
    %v4970 = vpop.f32.mrb[0].mxu0
    %v4971 = vadd.f32 %v4582, %v4970
    %v4972 = vpop.f32.mrb[0].mxu0
    %v4973 = vpop.f32.mrb[0].mxu0
    %v4974 = vadd.f32 %v4582, %v4973
    %v4975 = vpop.f32.mrb[0].mxu0
    %4976 = vmatprep.mubr.bf16.mxu0 0
    %4977 = vmatmul.mubr.bf16.gmra.mrb[0].mxu0 %v4682
    %v4978 = vpop.f32.mrb[0].mxu0
    %v4979 = vadd.f32 %v4582, %v4978
    %v4980 = vpop.f32.mrb[0].mxu0
    %v4981 = vpop.f32.mrb[0].mxu0
    %v4982 = vadd.f32 %v4582, %v4981
    %v4983 = vpop.f32.mrb[0].mxu0
    %4984 = vmatprep.mubr.bf16.mxu0 0
    %4985 = vmatmul.mubr.bf16.gmra.mrb[0].mxu0 %v4685
    %v4986 = vpop.f32.mrb[0].mxu0
    %v4987 = vadd.f32 %v4582, %v4986
    %v4988 = vpop.f32.mrb[0].mxu0
    %v4989 = vpop.f32.mrb[0].mxu0
    %v4990 = vadd.f32 %v4582, %v4989
    %v4991 = vpop.f32.mrb[0].mxu0
    %4992 = vmatprep.mubr.bf16.mxu0 0
    %4993 = vmatmul.mubr.bf16.gmra.mrb[0].mxu0 %v4688
    %v4994 = vpop.f32.mrb[0].mxu0
    %v4995 = vadd.f32 %v4582, %v4994
    %v4996 = vpop.f32.mrb[0].mxu0
    %v4997 = vpop.f32.mrb[0].mxu0
    %v4998 = vadd.f32 %v4582, %v4997
    %v4999 = vpop.f32.mrb[0].mxu0
    %5000 = vmatprep.mubr.bf16.mxu0 0
    %5001 = vmatmul.mubr.bf16.gmra.mrb[0].mxu0 %v4691
    %v5002 = vpop.f32.mrb[0].mxu0
    %v5003 = vadd.f32 %v4582, %v5002
    %v5004 = vpop.f32.mrb[0].mxu0
    %v5005 = vpop.f32.mrb[0].mxu0
    %v5006 = vadd.f32 %v4582, %v5005
    %v5007 = vpop.f32.mrb[0].mxu0
    %5008 = vmatprep.mubr.bf16.mxu0 0
    %5009 = vmatmul.mubr.bf16.gmra.mrb[0].mxu0 %v4694
    %v5010 = vpop.f32.mrb[0].mxu0
    %v5011 = vadd.f32 %v4582, %v5010
    %v5012 = vpop.f32.mrb[0].mxu0
    %v5013 = vpop.f32.mrb[0].mxu0
    %v5014 = vadd.f32 %v4582, %v5013
    %v5015 = vpop.f32.mrb[0].mxu0
    %5016 = vmatprep.mubr.bf16.mxu0 0
    %5017 = vmatmul.mubr.bf16.gmra.mrb[0].mxu0 %v4697
    %v5018 = vpop.f32.mrb[0].mxu0
    %v5019 = vadd.f32 %v4582, %v5018
    %v5020 = vpop.f32.mrb[0].mxu0
    %v5021 = vpop.f32.mrb[0].mxu0
    %v5022 = vadd.f32 %v4582, %v5021
    %v5023 = vpop.f32.mrb[0].mxu0
    %5024 = vmatprep.mubr.bf16.mxu0 0
    %5025 = vmatmul.mubr.bf16.gmra.mrb[0].mxu0 %v4700
    %v5026 = vpop.f32.mrb[0].mxu0
    %v5027 = vadd.f32 %v4582, %v5026
    %v5028 = vpop.f32.mrb[0].mxu0
    %v5029 = vpop.f32.mrb[0].mxu0
    %v5030 = vadd.f32 %v4582, %v5029
    %v5031 = vpop.f32.mrb[0].mxu0
    %5032 = vmatprep.mubr.bf16.mxu0 0
    %5033 = vmatmul.mubr.bf16.gmra.mrb[0].mxu0 %v4703
    %v5034 = vpop.f32.mrb[0].mxu0
    %v5035 = vadd.f32 %v4582, %v5034
    %v5036 = vpop.f32.mrb[0].mxu0
    %v5037 = vpop.f32.mrb[0].mxu0
    %v5038 = vadd.f32 %v4582, %v5037
    %v5039 = vpop.f32.mrb[0].mxu0
    %5040 = vmatprep.mubr.bf16.mxu0 0
    %5041 = vmatmul.mubr.bf16.gmra.mrb[0].mxu0 %v4706
    %v5042 = vpop.f32.mrb[0].mxu0
    %v5043 = vadd.f32 %v4582, %v5042
    %v5044 = vpop.f32.mrb[0].mxu0
    %v5045 = vpop.f32.mrb[0].mxu0
    %v5046 = vadd.f32 %v4582, %v5045
    %v5047 = vpop.f32.mrb[0].mxu0
    %5048 = vmatprep.mubr.bf16.mxu0 0
    %5049 = vmatmul.mubr.bf16.gmra.mrb[0].mxu0 %v4709
    %v5050 = vpop.f32.mrb[0].mxu0
    %v5051 = vadd.f32 %v4582, %v5050
    %v5052 = vpop.f32.mrb[0].mxu0
    %v5053 = vpop.f32.mrb[0].mxu0
    %v5054 = vadd.f32 %v4582, %v5053
    %v5055 = vpop.f32.mrb[0].mxu0
    %5056 = vmatprep.mubr.bf16.mxu0 0
    %5057 = vmatmul.mubr.bf16.gmra.mrb[0].mxu0 %v4712
    %v5058 = vpop.f32.mrb[0].mxu0
    %v5059 = vadd.f32 %v4582, %v5058
    %v5060 = vpop.f32.mrb[0].mxu0
    %v5061 = vpop.f32.mrb[0].mxu0
    %v5062 = vadd.f32 %v4582, %v5061
    %v5063 = vpop.f32.mrb[0].mxu0
    %5064 = vmatprep.mubr.bf16.mxu0 0
    %5065 = vmatmul.mubr.bf16.gmra.mrb[0].mxu0 %v4715
    %v5066 = vpop.f32.mrb[0].mxu0
    %v5067 = vadd.f32 %v4582, %v5066
    %v5068 = vpop.f32.mrb[0].mxu0
    %v5069 = vpop.f32.mrb[0].mxu0
    %v5070 = vadd.f32 %v4582, %v5069
    %v5071 = vpop.f32.mrb[0].mxu0
    %5072 = vmatprep.mubr.bf16.mxu0 0
    %5073 = vmatmul.mubr.bf16.gmra.mrb[0].mxu0 %v4718
    %v5074 = vpop.f32.mrb[0].mxu0
    %v5075 = vadd.f32 %v4582, %v5074
    %v5076 = vpop.f32.mrb[0].mxu0
    %v5077 = vpop.f32.mrb[0].mxu0
    %v5078 = vadd.f32 %v4582, %v5077
    %v5079 = vpop.f32.mrb[0].mxu0
    %5080 = vmatprep.mubr.bf16.mxu0 0
    %5081 = vmatmul.mubr.bf16.gmra.mrb[0].mxu0 %v4721
    %v5082 = vpop.f32.mrb[0].mxu0
    %v5083 = vadd.f32 %v4582, %v5082
    %v5084 = vpop.f32.mrb[0].mxu0
    %v5085 = vpop.f32.mrb[0].mxu0
    %v5086 = vadd.f32 %v4582, %v5085
    %v5087 = vpop.f32.mrb[0].mxu0
    %5088 = vmatprep.mubr.bf16.mxu0 0
    %5089 = vmatmul.mubr.bf16.gmra.mrb[0].mxu0 %v4724
    %v5090 = vpop.f32.mrb[0].mxu0
    %v5091 = vadd.f32 %v4582, %v5090
    %v5092 = vpop.f32.mrb[0].mxu0
    %v5093 = vpop.f32.mrb[0].mxu0
    %v5094 = vadd.f32 %v4582, %v5093
    %v5095 = vpop.f32.mrb[0].mxu0
    %5096 = vmatprep.mubr.bf16.mxu0 0
    %5097 = vmatmul.mubr.bf16.gmra.mrb[0].mxu0 %v4727
    %v5098 = vpop.f32.mrb[0].mxu0
    %v5099 = vadd.f32 %v4582, %v5098
    %v5100 = vpop.f32.mrb[0].mxu0
    %v5101 = vpop.f32.mrb[0].mxu0
    %v5102 = vadd.f32 %v4582, %v5101
    %v5103 = vpop.f32.mrb[0].mxu0
    %5104 = vmatprep.mubr.bf16.mxu0 0
    %5105 = vmatmul.mubr.bf16.gmra.mrb[0].mxu0 %v4730
    %v5106 = vpop.f32.mrb[0].mxu0
    %v5107 = vadd.f32 %v4582, %v5106
    %v5108 = vpop.f32.mrb[0].mxu0
    %v5109 = vpop.f32.mrb[0].mxu0
    %v5110 = vadd.f32 %v4582, %v5109
    %v5111 = vpop.f32.mrb[0].mxu0
    %5112 = vmatprep.mubr.bf16.mxu0 0
    %5113 = vmatmul.mubr.bf16.gmra.mrb[0].mxu0 %v4733
    %v5114 = vpop.f32.mrb[0].mxu0
    %v5115 = vadd.f32 %v4582, %v5114
    %v5116 = vpop.f32.mrb[0].mxu0
    %v5117 = vpop.f32.mrb[0].mxu0
    %v5118 = vadd.f32 %v4582, %v5117
    %v5119 = vpop.f32.mrb[0].mxu0
    %5120 = vmatprep.mubr.bf16.mxu0 0
    %5121 = vmatmul.mubr.bf16.gmra.mrb[0].mxu0 %v4736
    %v5122 = vpop.f32.mrb[0].mxu0
    %v5123 = vadd.f32 %v4582, %v5122
    %v5124 = vpop.f32.mrb[0].mxu0
    %v5125 = vpop.f32.mrb[0].mxu0
    %v5126 = vadd.f32 %v4582, %v5125
    %v5127 = vpop.f32.mrb[0].mxu0
    %5128 = vmatprep.mubr.bf16.mxu0 0
    %5129 = vmatmul.mubr.bf16.gmra.mrb[0].mxu0 %v4739
    %v5130 = vpop.f32.mrb[0].mxu0
    %v5131 = vadd.f32 %v4582, %v5130
    %v5132 = vpop.f32.mrb[0].mxu0
    %v5133 = vpop.f32.mrb[0].mxu0
    %v5134 = vadd.f32 %v4582, %v5133
    %v5135 = vpop.f32.mrb[0].mxu0
    %5136 = vmatprep.mubr.bf16.mxu0 0
    %5137 = vmatmul.mubr.bf16.gmra.mrb[0].mxu0 %v4742
    %v5138 = vpop.f32.mrb[0].mxu0
    %v5139 = vadd.f32 %v4582, %v5138
    %v5140 = vpop.f32.mrb[0].mxu0
    %v5141 = vpop.f32.mrb[0].mxu0
    %v5142 = vadd.f32 %v4582, %v5141
    %v5143 = vpop.f32.mrb[0].mxu0
    %5144 = vmatprep.mubr.bf16.mxu0 0
    %5145 = vmatmul.mubr.bf16.gmra.mrb[0].mxu0 %v4745
    %v5146 = vpop.f32.mrb[0].mxu0
    %v5147 = vadd.f32 %v4582, %v5146
    %v5148 = vpop.f32.mrb[0].mxu0
    %v5149 = vpop.f32.mrb[0].mxu0
    %v5150 = vadd.f32 %v4582, %v5149
    %v5151 = vpop.f32.mrb[0].mxu0
    %5152 = vmatprep.mubr.bf16.mxu0 0
    %5153 = vmatmul.mubr.bf16.gmra.mrb[0].mxu0 %v4748
    %v5154 = vpop.f32.mrb[0].mxu0
    %v5155 = vadd.f32 %v4582, %v5154
    %v5156 = vpop.f32.mrb[0].mxu0
    %v5157 = vpop.f32.mrb[0].mxu0
    %v5158 = vadd.f32 %v4582, %v5157
    %v5159 = vpop.f32.mrb[0].mxu0
    %5160 = vmatprep.mubr.bf16.mxu0 0
    %5161 = vmatmul.mubr.bf16.gmra.mrb[0].mxu0 %v4751
    %v5162 = vpop.f32.mrb[0].mxu0
    %v5163 = vadd.f32 %v4582, %v5162
    %v5164 = vpop.f32.mrb[0].mxu0
    %v5165 = vpop.f32.mrb[0].mxu0
    %v5166 = vadd.f32 %v4582, %v5165
    %v5167 = vpop.f32.mrb[0].mxu0
    %5168 = vmatprep.mubr.bf16.mxu0 0
    %5169 = vmatmul.mubr.bf16.gmra.mrb[0].mxu0 %v4754
    %v5170 = vpop.f32.mrb[0].mxu0
    %v5171 = vadd.f32 %v4582, %v5170
    %v5172 = vpop.f32.mrb[0].mxu0
    %v5173 = vpop.f32.mrb[0].mxu0
    %v5174 = vadd.f32 %v4582, %v5173
    %v5175 = vpop.f32.mrb[0].mxu0
    %5176 = vdwg.mxu0
    %v5177 = vmax.f32 %v4795, 0.0
    %v5178 = vmax.f32 %v4798, 0.0
    %v5179 = vmax.f32 %v4803, 0.0
    %v5180 = vmax.f32 %v4806, 0.0
    %v5181 = vmax.f32 %v4811, 0.0
    %v5182 = vmax.f32 %v4814, 0.0
    %v5183 = vmax.f32 %v4819, 0.0
    %v5184 = vmax.f32 %v4822, 0.0
    %v5185 = vmax.f32 %v4827, 0.0
    %v5186 = vmax.f32 %v4830, 0.0
    %v5187 = vmax.f32 %v4835, 0.0
    %v5188 = vmax.f32 %v4838, 0.0
    %v5189 = vmax.f32 %v4843, 0.0
    %v5190 = vmax.f32 %v4846, 0.0
    %v5191 = vmax.f32 %v4851, 0.0
    %v5192 = vmax.f32 %v4854, 0.0
    %v5193 = vmax.f32 %v4859, 0.0
    %v5194 = vmax.f32 %v4862, 0.0
    %v5195 = vmax.f32 %v4867, 0.0
    %v5196 = vmax.f32 %v4870, 0.0
    %v5197 = vmax.f32 %v4875, 0.0
    %v5198 = vmax.f32 %v4878, 0.0
    %v5199 = vmax.f32 %v4883, 0.0
    %v5200 = vmax.f32 %v4886, 0.0
    %v5201 = vmax.f32 %v4891, 0.0
    %v5202 = vmax.f32 %v4894, 0.0
    %v5203 = vmax.f32 %v4899, 0.0
    %v5204 = vmax.f32 %v4902, 0.0
    %v5205 = vmax.f32 %v4907, 0.0
    %v5206 = vmax.f32 %v4910, 0.0
    %v5207 = vmax.f32 %v4915, 0.0
    %v5208 = vmax.f32 %v4918, 0.0
    %v5209 = vmax.f32 %v4923, 0.0
    %v5210 = vmax.f32 %v4926, 0.0
    %v5211 = vmax.f32 %v4931, 0.0
    %v5212 = vmax.f32 %v4934, 0.0
    %v5213 = vmax.f32 %v4939, 0.0
    %v5214 = vmax.f32 %v4942, 0.0
    %v5215 = vmax.f32 %v4947, 0.0
    %v5216 = vmax.f32 %v4950, 0.0
    %v5217 = vmax.f32 %v4955, 0.0
    %v5218 = vmax.f32 %v4958, 0.0
    %v5219 = vmax.f32 %v4963, 0.0
    %v5220 = vmax.f32 %v4966, 0.0
    %v5221 = vmax.f32 %v4971, 0.0
    %v5222 = vmax.f32 %v4974, 0.0
    %v5223 = vmax.f32 %v4979, 0.0
    %v5224 = vmax.f32 %v4982, 0.0
    %v5225 = vmax.f32 %v4987, 0.0
    %v5226 = vmax.f32 %v4990, 0.0
    %v5227 = vmax.f32 %v4995, 0.0
    %v5228 = vmax.f32 %v4998, 0.0
    %v5229 = vmax.f32 %v5003, 0.0
    %v5230 = vmax.f32 %v5006, 0.0
    %v5231 = vmax.f32 %v5011, 0.0
    %v5232 = vmax.f32 %v5014, 0.0
    %v5233 = vmax.f32 %v5019, 0.0
    %v5234 = vmax.f32 %v5022, 0.0
    %v5235 = vmax.f32 %v5027, 0.0
    %v5236 = vmax.f32 %v5030, 0.0
    %v5237 = vmax.f32 %v5035, 0.0
    %v5238 = vmax.f32 %v5038, 0.0
    %v5239 = vmax.f32 %v5043, 0.0
    %v5240 = vmax.f32 %v5046, 0.0
    %v5241 = vmax.f32 %v5051, 0.0
    %v5242 = vmax.f32 %v5054, 0.0
    %v5243 = vmax.f32 %v5059, 0.0
    %v5244 = vmax.f32 %v5062, 0.0
    %v5245 = vmax.f32 %v5067, 0.0
    %v5246 = vmax.f32 %v5070, 0.0
    %v5247 = vmax.f32 %v5075, 0.0
    %v5248 = vmax.f32 %v5078, 0.0
    %v5249 = vmax.f32 %v5083, 0.0
    %v5250 = vmax.f32 %v5086, 0.0
    %v5251 = vmax.f32 %v5091, 0.0
    %v5252 = vmax.f32 %v5094, 0.0
    %v5253 = vmax.f32 %v5099, 0.0
    %v5254 = vmax.f32 %v5102, 0.0
    %v5255 = vmax.f32 %v5107, 0.0
    %v5256 = vmax.f32 %v5110, 0.0
    %v5257 = vmax.f32 %v5115, 0.0
    %v5258 = vmax.f32 %v5118, 0.0
    %v5259 = vmax.f32 %v5123, 0.0
    %v5260 = vmax.f32 %v5126, 0.0
    %v5261 = vmax.f32 %v5131, 0.0
    %v5262 = vmax.f32 %v5134, 0.0
    %v5263 = vmax.f32 %v5139, 0.0
    %v5264 = vmax.f32 %v5142, 0.0
    %v5265 = vmax.f32 %v5147, 0.0
    %v5266 = vmax.f32 %v5150, 0.0
    %v5267 = vmax.f32 %v5155, 0.0
    %v5268 = vmax.f32 %v5158, 0.0
    %v5269 = vmax.f32 %v5163, 0.0
    %v5270 = vmax.f32 %v5166, 0.0
    %v5271 = vmax.f32 %v5171, 0.0
    %v5272 = vmax.f32 %v5174, 0.0
    %v5273 = vpack.c.bf16 %v5178, %v5177
    %v5274 = vpack.c.bf16 %v5180, %v5179
    %v5275 = vpack.c.bf16 %v5182, %v5181
    %v5276 = vpack.c.bf16 %v5184, %v5183
    %v5277 = vpack.c.bf16 %v5186, %v5185
    %v5278 = vpack.c.bf16 %v5188, %v5187
    %v5279 = vpack.c.bf16 %v5190, %v5189
    %v5280 = vpack.c.bf16 %v5192, %v5191
    %v5281 = vpack.c.bf16 %v5194, %v5193
    %v5282 = vpack.c.bf16 %v5196, %v5195
    %v5283 = vpack.c.bf16 %v5198, %v5197
    %v5284 = vpack.c.bf16 %v5200, %v5199
    %v5285 = vpack.c.bf16 %v5202, %v5201
    %v5286 = vpack.c.bf16 %v5204, %v5203
    %v5287 = vpack.c.bf16 %v5206, %v5205
    %v5288 = vpack.c.bf16 %v5208, %v5207
    %v5289 = vpack.c.bf16 %v5210, %v5209
    %v5290 = vpack.c.bf16 %v5212, %v5211
    %v5291 = vpack.c.bf16 %v5214, %v5213
    %v5292 = vpack.c.bf16 %v5216, %v5215
    %v5293 = vpack.c.bf16 %v5218, %v5217
    %v5294 = vpack.c.bf16 %v5220, %v5219
    %v5295 = vpack.c.bf16 %v5222, %v5221
    %v5296 = vpack.c.bf16 %v5224, %v5223
    %v5297 = vpack.c.bf16 %v5226, %v5225
    %v5298 = vpack.c.bf16 %v5228, %v5227
    %v5299 = vpack.c.bf16 %v5230, %v5229
    %v5300 = vpack.c.bf16 %v5232, %v5231
    %v5301 = vpack.c.bf16 %v5234, %v5233
    %v5302 = vpack.c.bf16 %v5236, %v5235
    %v5303 = vpack.c.bf16 %v5238, %v5237
    %v5304 = vpack.c.bf16 %v5240, %v5239
    %v5305 = vpack.c.bf16 %v5242, %v5241
    %v5306 = vpack.c.bf16 %v5244, %v5243
    %v5307 = vpack.c.bf16 %v5246, %v5245
    %v5308 = vpack.c.bf16 %v5248, %v5247
    %v5309 = vpack.c.bf16 %v5250, %v5249
    %v5310 = vpack.c.bf16 %v5252, %v5251
    %v5311 = vpack.c.bf16 %v5254, %v5253
    %v5312 = vpack.c.bf16 %v5256, %v5255
    %v5313 = vpack.c.bf16 %v5258, %v5257
    %v5314 = vpack.c.bf16 %v5260, %v5259
    %v5315 = vpack.c.bf16 %v5262, %v5261
    %v5316 = vpack.c.bf16 %v5264, %v5263
    %v5317 = vpack.c.bf16 %v5266, %v5265
    %v5318 = vpack.c.bf16 %v5268, %v5267
    %v5319 = vpack.c.bf16 %v5270, %v5269
    %v5320 = vpack.c.bf16 %v5272, %v5271
    %vm5321 = vcmask 261120
    %5322 = vst.msk [vmem:[#allocation3] sm:$0xff] %vm5321, %v5273
    %5323 = vst.msk [vmem:[#allocation3 + $0x8] sm:$0xff] %vm5321, %v5274
    %5324 = vst.msk [vmem:[#allocation3 + $0x10] sm:$0xff] %vm5321, %v5275
    %5325 = vst.msk [vmem:[#allocation3 + $0x18] sm:$0xff] %vm5321, %v5276
    %5326 = vst.msk [vmem:[#allocation3 + $0x20] sm:$0xff] %vm5321, %v5277
    %5327 = vst.msk [vmem:[#allocation3 + $0x28] sm:$0xff] %vm5321, %v5278
    %5328 = vst.msk [vmem:[#allocation3 + $0x30] sm:$0xff] %vm5321, %v5279
    %5329 = vst.msk [vmem:[#allocation3 + $0x38] sm:$0xff] %vm5321, %v5280
    %5330 = vst.msk [vmem:[#allocation3 + $0x40] sm:$0xff] %vm5321, %v5281
    %5331 = vst.msk [vmem:[#allocation3 + $0x48] sm:$0xff] %vm5321, %v5282
    %5332 = vst.msk [vmem:[#allocation3 + $0x50] sm:$0xff] %vm5321, %v5283
    %5333 = vst.msk [vmem:[#allocation3 + $0x58] sm:$0xff] %vm5321, %v5284
    %5334 = vst.msk [vmem:[#allocation3 + $0x60] sm:$0xff] %vm5321, %v5285
    %5335 = vst.msk [vmem:[#allocation3 + $0x68] sm:$0xff] %vm5321, %v5286
    %5336 = vst.msk [vmem:[#allocation3 + $0x70] sm:$0xff] %vm5321, %v5287
    %5337 = vst.msk [vmem:[#allocation3 + $0x78] sm:$0xff] %vm5321, %v5288
    %5338 = vst.msk [vmem:[#allocation3 + $0x80] sm:$0xff] %vm5321, %v5289
    %5339 = vst.msk [vmem:[#allocation3 + $0x88] sm:$0xff] %vm5321, %v5290
    %5340 = vst.msk [vmem:[#allocation3 + $0x90] sm:$0xff] %vm5321, %v5291
    %5341 = vst.msk [vmem:[#allocation3 + $0x98] sm:$0xff] %vm5321, %v5292
    %5342 = vst.msk [vmem:[#allocation3 + $0xa0] sm:$0xff] %vm5321, %v5293
    %5343 = vst.msk [vmem:[#allocation3 + $0xa8] sm:$0xff] %vm5321, %v5294
    %5344 = vst.msk [vmem:[#allocation3 + $0xb0] sm:$0xff] %vm5321, %v5295
    %5345 = vst.msk [vmem:[#allocation3 + $0xb8] sm:$0xff] %vm5321, %v5296
    %5346 = vst.msk [vmem:[#allocation3 + $0xc0] sm:$0xff] %vm5321, %v5297
    %5347 = vst.msk [vmem:[#allocation3 + $0xc8] sm:$0xff] %vm5321, %v5298
    %5348 = vst.msk [vmem:[#allocation3 + $0xd0] sm:$0xff] %vm5321, %v5299
    %5349 = vst.msk [vmem:[#allocation3 + $0xd8] sm:$0xff] %vm5321, %v5300
    %5350 = vst.msk [vmem:[#allocation3 + $0xe0] sm:$0xff] %vm5321, %v5301
    %5351 = vst.msk [vmem:[#allocation3 + $0xe8] sm:$0xff] %vm5321, %v5302
    %5352 = vst.msk [vmem:[#allocation3 + $0xf0] sm:$0xff] %vm5321, %v5303
    %5353 = vst.msk [vmem:[#allocation3 + $0xf8] sm:$0xff] %vm5321, %v5304
    %5354 = vst.msk [vmem:[#allocation3 + $0x100] sm:$0xff] %vm5321, %v5305
    %5355 = vst.msk [vmem:[#allocation3 + $0x108] sm:$0xff] %vm5321, %v5306
    %5356 = vst.msk [vmem:[#allocation3 + $0x110] sm:$0xff] %vm5321, %v5307
    %5357 = vst.msk [vmem:[#allocation3 + $0x118] sm:$0xff] %vm5321, %v5308
    %5358 = vst.msk [vmem:[#allocation3 + $0x120] sm:$0xff] %vm5321, %v5309
    %5359 = vst.msk [vmem:[#allocation3 + $0x128] sm:$0xff] %vm5321, %v5310
    %5360 = vst.msk [vmem:[#allocation3 + $0x130] sm:$0xff] %vm5321, %v5311
    %5361 = vst.msk [vmem:[#allocation3 + $0x138] sm:$0xff] %vm5321, %v5312
    %5362 = vst.msk [vmem:[#allocation3 + $0x140] sm:$0xff] %vm5321, %v5313
    %5363 = vst.msk [vmem:[#allocation3 + $0x148] sm:$0xff] %vm5321, %v5314
    %5364 = vst.msk [vmem:[#allocation3 + $0x150] sm:$0xff] %vm5321, %v5315
    %5365 = vst.msk [vmem:[#allocation3 + $0x158] sm:$0xff] %vm5321, %v5316
    %5366 = vst.msk [vmem:[#allocation3 + $0x160] sm:$0xff] %vm5321, %v5317
    %5367 = vst.msk [vmem:[#allocation3 + $0x168] sm:$0xff] %vm5321, %v5318
    %5368 = vst.msk [vmem:[#allocation3 + $0x170] sm:$0xff] %vm5321, %v5319
    %5369 = vst.msk [vmem:[#allocation3 + $0x178] sm:$0xff] %vm5321, %v5320
    %5370 = vst.msk [vmem:[#allocation3 + $0x180] sm:$0xff] %vm5321, 0
    %5371 = vst.msk [vmem:[#allocation3 + $0x188] sm:$0xff] %vm5321, 0
    %v5372 = vld [vmem:[#allocation3] sm:$0xff]
    %v5373 = vld [vmem:[#allocation3 + $0x8] sm:$0xff]
    %v5374 = vld [vmem:[#allocation3 + $0x10] sm:$0xff]
    %v5375 = vld [vmem:[#allocation3 + $0x18] sm:$0xff]
    %v5376 = vld [vmem:[#allocation3 + $0x20] sm:$0xff]
    %v5377 = vld [vmem:[#allocation3 + $0x28] sm:$0xff]
    %v5378 = vld [vmem:[#allocation3 + $0x30] sm:$0xff]
    %v5379 = vld [vmem:[#allocation3 + $0x38] sm:$0xff]
    %v5380 = vld [vmem:[#allocation3 + $0x40] sm:$0xff]
    %v5381 = vld [vmem:[#allocation3 + $0x48] sm:$0xff]
    %v5382 = vld [vmem:[#allocation3 + $0x50] sm:$0xff]
    %v5383 = vld [vmem:[#allocation3 + $0x58] sm:$0xff]
    %v5384 = vld [vmem:[#allocation3 + $0x60] sm:$0xff]
    %v5385 = vld [vmem:[#allocation3 + $0x68] sm:$0xff]
    %v5386 = vld [vmem:[#allocation3 + $0x70] sm:$0xff]
    %v5387 = vld [vmem:[#allocation3 + $0x78] sm:$0xff]
    %v5388 = vld [vmem:[#allocation3 + $0x80] sm:$0xff]
    %v5389 = vld [vmem:[#allocation3 + $0x88] sm:$0xff]
    %v5390 = vld [vmem:[#allocation3 + $0x90] sm:$0xff]
    %v5391 = vld [vmem:[#allocation3 + $0x98] sm:$0xff]
    %v5392 = vld [vmem:[#allocation3 + $0xa0] sm:$0xff]
    %v5393 = vld [vmem:[#allocation3 + $0xa8] sm:$0xff]
    %v5394 = vld [vmem:[#allocation3 + $0xb0] sm:$0xff]
    %v5395 = vld [vmem:[#allocation3 + $0xb8] sm:$0xff]
    %v5396 = vld [vmem:[#allocation3 + $0xc0] sm:$0xff]
    %v5397 = vld [vmem:[#allocation3 + $0xc8] sm:$0xff]
    %v5398 = vld [vmem:[#allocation3 + $0xd0] sm:$0xff]
    %v5399 = vld [vmem:[#allocation3 + $0xd8] sm:$0xff]
    %v5400 = vld [vmem:[#allocation3 + $0xe0] sm:$0xff]
    %v5401 = vld [vmem:[#allocation3 + $0xe8] sm:$0xff]
    %v5402 = vld [vmem:[#allocation3 + $0xf0] sm:$0xff]
    %v5403 = vld [vmem:[#allocation3 + $0xf8] sm:$0xff]
    %v5404 = vld [vmem:[#allocation3 + $0x100] sm:$0xff]
    %v5405 = vld [vmem:[#allocation3 + $0x108] sm:$0xff]
    %v5406 = vld [vmem:[#allocation3 + $0x110] sm:$0xff]
    %v5407 = vld [vmem:[#allocation3 + $0x118] sm:$0xff]
    %v5408 = vld [vmem:[#allocation3 + $0x120] sm:$0xff]
    %v5409 = vld [vmem:[#allocation3 + $0x128] sm:$0xff]
    %v5410 = vld [vmem:[#allocation3 + $0x130] sm:$0xff]
    %v5411 = vld [vmem:[#allocation3 + $0x138] sm:$0xff]
    %v5412 = vld [vmem:[#allocation3 + $0x140] sm:$0xff]
    %v5413 = vld [vmem:[#allocation3 + $0x148] sm:$0xff]
    %v5414 = vld [vmem:[#allocation3 + $0x150] sm:$0xff]
    %v5415 = vld [vmem:[#allocation3 + $0x158] sm:$0xff]
    %v5416 = vld [vmem:[#allocation3 + $0x160] sm:$0xff]
    %v5417 = vld [vmem:[#allocation3 + $0x168] sm:$0xff]
    %v5418 = vld [vmem:[#allocation3 + $0x170] sm:$0xff]
    %v5419 = vld [vmem:[#allocation3 + $0x178] sm:$0xff]
    %5420 = vst.msk [vmem:[#allocation4] sm:$0xff] %vm5321, %v5372
    %5421 = vst.msk [vmem:[#allocation4 + $0x18] sm:$0xff] %vm5321, %v5373
    %5422 = vst.msk [vmem:[#allocation4 + $0x30] sm:$0xff] %vm5321, %v5374
    %5423 = vst.msk [vmem:[#allocation4 + $0x48] sm:$0xff] %vm5321, %v5375
    %5424 = vst.msk [vmem:[#allocation4 + $0x60] sm:$0xff] %vm5321, %v5376
    %5425 = vst.msk [vmem:[#allocation4 + $0x78] sm:$0xff] %vm5321, %v5377
    %5426 = vst.msk [vmem:[#allocation4 + $0x90] sm:$0xff] %vm5321, %v5378
    %5427 = vst.msk [vmem:[#allocation4 + $0xa8] sm:$0xff] %vm5321, %v5379
    %5428 = vst.msk [vmem:[#allocation4 + $0xc0] sm:$0xff] %vm5321, %v5380
    %5429 = vst.msk [vmem:[#allocation4 + $0xd8] sm:$0xff] %vm5321, %v5381
    %5430 = vst.msk [vmem:[#allocation4 + $0xf0] sm:$0xff] %vm5321, %v5382
    %5431 = vst.msk [vmem:[#allocation4 + $0x108] sm:$0xff] %vm5321, %v5383
    %5432 = vst.msk [vmem:[#allocation4 + $0x120] sm:$0xff] %vm5321, %v5384
    %5433 = vst.msk [vmem:[#allocation4 + $0x138] sm:$0xff] %vm5321, %v5385
    %5434 = vst.msk [vmem:[#allocation4 + $0x150] sm:$0xff] %vm5321, %v5386
    %5435 = vst.msk [vmem:[#allocation4 + $0x168] sm:$0xff] %vm5321, %v5387
    %5436 = vst.msk [vmem:[#allocation4 + $0x180] sm:$0xff] %vm5321, %v5388
    %5437 = vst.msk [vmem:[#allocation4 + $0x198] sm:$0xff] %vm5321, %v5389
    %5438 = vst.msk [vmem:[#allocation4 + $0x1b0] sm:$0xff] %vm5321, %v5390
    %5439 = vst.msk [vmem:[#allocation4 + $0x1c8] sm:$0xff] %vm5321, %v5391
    %5440 = vst.msk [vmem:[#allocation4 + $0x1e0] sm:$0xff] %vm5321, %v5392
    %5441 = vst.msk [vmem:[#allocation4 + $0x1f8] sm:$0xff] %vm5321, %v5393
    %5442 = vst.msk [vmem:[#allocation4 + $0x210] sm:$0xff] %vm5321, %v5394
    %5443 = vst.msk [vmem:[#allocation4 + $0x228] sm:$0xff] %vm5321, %v5395
    %5444 = vst.msk [vmem:[#allocation4 + $0x240] sm:$0xff] %vm5321, %v5396
    %5445 = vst.msk [vmem:[#allocation4 + $0x258] sm:$0xff] %vm5321, %v5397
    %5446 = vst.msk [vmem:[#allocation4 + $0x270] sm:$0xff] %vm5321, %v5398
    %5447 = vst.msk [vmem:[#allocation4 + $0x288] sm:$0xff] %vm5321, %v5399
    %5448 = vst.msk [vmem:[#allocation4 + $0x2a0] sm:$0xff] %vm5321, %v5400
    %5449 = vst.msk [vmem:[#allocation4 + $0x2b8] sm:$0xff] %vm5321, %v5401
    %5450 = vst.msk [vmem:[#allocation4 + $0x2d0] sm:$0xff] %vm5321, %v5402
    %5451 = vst.msk [vmem:[#allocation4 + $0x2e8] sm:$0xff] %vm5321, %v5403
    %5452 = vst.msk [vmem:[#allocation4 + $0x300] sm:$0xff] %vm5321, %v5404
    %5453 = vst.msk [vmem:[#allocation4 + $0x318] sm:$0xff] %vm5321, %v5405
    %5454 = vst.msk [vmem:[#allocation4 + $0x330] sm:$0xff] %vm5321, %v5406
    %5455 = vst.msk [vmem:[#allocation4 + $0x348] sm:$0xff] %vm5321, %v5407
    %5456 = vst.msk [vmem:[#allocation4 + $0x360] sm:$0xff] %vm5321, %v5408
    %5457 = vst.msk [vmem:[#allocation4 + $0x378] sm:$0xff] %vm5321, %v5409
    %5458 = vst.msk [vmem:[#allocation4 + $0x390] sm:$0xff] %vm5321, %v5410
    %5459 = vst.msk [vmem:[#allocation4 + $0x3a8] sm:$0xff] %vm5321, %v5411
    %5460 = vst.msk [vmem:[#allocation4 + $0x3c0] sm:$0xff] %vm5321, %v5412
    %5461 = vst.msk [vmem:[#allocation4 + $0x3d8] sm:$0xff] %vm5321, %v5413
    %5462 = vst.msk [vmem:[#allocation4 + $0x3f0] sm:$0xff] %vm5321, %v5414
    %5463 = vst.msk [vmem:[#allocation4 + $0x408] sm:$0xff] %vm5321, %v5415
    %5464 = vst.msk [vmem:[#allocation4 + $0x420] sm:$0xff] %vm5321, %v5416
    %5465 = vst.msk [vmem:[#allocation4 + $0x438] sm:$0xff] %vm5321, %v5417
    %5466 = vst.msk [vmem:[#allocation4 + $0x450] sm:$0xff] %vm5321, %v5418
    %5467 = vst.msk [vmem:[#allocation4 + $0x468] sm:$0xff] %vm5321, %v5419
    %v5468 = vld [vmem:[#allocation3] sm:$0xff]
    %v5469 = vld [vmem:[#allocation3 + $0x8] sm:$0xff]
    %v5470 = vld [vmem:[#allocation3 + $0x10] sm:$0xff]
    %v5471 = vld [vmem:[#allocation3 + $0x18] sm:$0xff]
    %v5472 = vld [vmem:[#allocation3 + $0x20] sm:$0xff]
    %v5473 = vld [vmem:[#allocation3 + $0x28] sm:$0xff]
    %v5474 = vld [vmem:[#allocation3 + $0x30] sm:$0xff]
    %v5475 = vld [vmem:[#allocation3 + $0x38] sm:$0xff]
    %v5476 = vld [vmem:[#allocation3 + $0x40] sm:$0xff]
    %v5477 = vld [vmem:[#allocation3 + $0x48] sm:$0xff]
    %v5478 = vld [vmem:[#allocation3 + $0x50] sm:$0xff]
    %v5479 = vld [vmem:[#allocation3 + $0x58] sm:$0xff]
    %v5480 = vld [vmem:[#allocation3 + $0x60] sm:$0xff]
    %v5481 = vld [vmem:[#allocation3 + $0x68] sm:$0xff]
    %v5482 = vld [vmem:[#allocation3 + $0x70] sm:$0xff]
    %v5483 = vld [vmem:[#allocation3 + $0x78] sm:$0xff]
    %v5484 = vld [vmem:[#allocation3 + $0x80] sm:$0xff]
    %v5485 = vld [vmem:[#allocation3 + $0x88] sm:$0xff]
    %v5486 = vld [vmem:[#allocation3 + $0x90] sm:$0xff]
    %v5487 = vld [vmem:[#allocation3 + $0x98] sm:$0xff]
    %v5488 = vld [vmem:[#allocation3 + $0xa0] sm:$0xff]
    %v5489 = vld [vmem:[#allocation3 + $0xa8] sm:$0xff]
    %v5490 = vld [vmem:[#allocation3 + $0xb0] sm:$0xff]
    %v5491 = vld [vmem:[#allocation3 + $0xb8] sm:$0xff]
    %v5492 = vld [vmem:[#allocation3 + $0xc0] sm:$0xff]
    %v5493 = vld [vmem:[#allocation3 + $0xc8] sm:$0xff]
    %v5494 = vld [vmem:[#allocation3 + $0xd0] sm:$0xff]
    %v5495 = vld [vmem:[#allocation3 + $0xd8] sm:$0xff]
    %v5496 = vld [vmem:[#allocation3 + $0xe0] sm:$0xff]
    %v5497 = vld [vmem:[#allocation3 + $0xe8] sm:$0xff]
    %v5498 = vld [vmem:[#allocation3 + $0xf0] sm:$0xff]
    %v5499 = vld [vmem:[#allocation3 + $0xf8] sm:$0xff]
    %v5500 = vld [vmem:[#allocation3 + $0x100] sm:$0xff]
    %v5501 = vld [vmem:[#allocation3 + $0x108] sm:$0xff]
    %v5502 = vld [vmem:[#allocation3 + $0x110] sm:$0xff]
    %v5503 = vld [vmem:[#allocation3 + $0x118] sm:$0xff]
    %v5504 = vld [vmem:[#allocation3 + $0x120] sm:$0xff]
    %v5505 = vld [vmem:[#allocation3 + $0x128] sm:$0xff]
    %v5506 = vld [vmem:[#allocation3 + $0x130] sm:$0xff]
    %v5507 = vld [vmem:[#allocation3 + $0x138] sm:$0xff]
    %v5508 = vld [vmem:[#allocation3 + $0x140] sm:$0xff]
    %v5509 = vld [vmem:[#allocation3 + $0x148] sm:$0xff]
    %v5510 = vld [vmem:[#allocation3 + $0x150] sm:$0xff]
    %v5511 = vld [vmem:[#allocation3 + $0x158] sm:$0xff]
    %v5512 = vld [vmem:[#allocation3 + $0x160] sm:$0xff]
    %v5513 = vld [vmem:[#allocation3 + $0x168] sm:$0xff]
    %v5514 = vld [vmem:[#allocation3 + $0x170] sm:$0xff]
    %v5515 = vld [vmem:[#allocation3 + $0x178] sm:$0xff]
    %v5516 = vld [vmem:[#allocation3 + $0x180] sm:$0x1]
    %v5518 = vshrl.u32 %v5468, 16
    %v5520 = vshll.u32 %v5468, 16
    %v5522 = vrot.slane %v5520, 1
    %v5523 = vor.u32 %v5518, %v5522
    %v5525 = vshll.u32 %v5469, 16
    %v5527 = vrot.slane %v5525, 1
    %v5528 = vsel %vm627, %v5523, %v5527
    %v5529 = vshrl.u32 %v5469, 16
    %v5531 = vor.u32 %v5529, %v5527
    %v5533 = vshll.u32 %v5470, 16
    %v5535 = vrot.slane %v5533, 1
    %v5536 = vsel %vm627, %v5531, %v5535
    %v5537 = vshrl.u32 %v5470, 16
    %v5539 = vor.u32 %v5537, %v5535
    %v5541 = vshll.u32 %v5471, 16
    %v5543 = vrot.slane %v5541, 1
    %v5544 = vsel %vm627, %v5539, %v5543
    %v5545 = vshrl.u32 %v5471, 16
    %v5547 = vor.u32 %v5545, %v5543
    %v5549 = vshll.u32 %v5472, 16
    %v5551 = vrot.slane %v5549, 1
    %v5552 = vsel %vm627, %v5547, %v5551
    %v5553 = vshrl.u32 %v5472, 16
    %v5555 = vor.u32 %v5553, %v5551
    %v5557 = vshll.u32 %v5473, 16
    %v5559 = vrot.slane %v5557, 1
    %v5560 = vsel %vm627, %v5555, %v5559
    %v5561 = vshrl.u32 %v5473, 16
    %v5563 = vor.u32 %v5561, %v5559
    %v5565 = vshll.u32 %v5474, 16
    %v5567 = vrot.slane %v5565, 1
    %v5568 = vsel %vm627, %v5563, %v5567
    %v5569 = vshrl.u32 %v5474, 16
    %v5571 = vor.u32 %v5569, %v5567
    %v5573 = vshll.u32 %v5475, 16
    %v5575 = vrot.slane %v5573, 1
    %v5576 = vsel %vm627, %v5571, %v5575
    %v5577 = vshrl.u32 %v5475, 16
    %v5579 = vor.u32 %v5577, %v5575
    %v5581 = vshll.u32 %v5476, 16
    %v5583 = vrot.slane %v5581, 1
    %v5584 = vsel %vm627, %v5579, %v5583
    %v5585 = vshrl.u32 %v5476, 16
    %v5587 = vor.u32 %v5585, %v5583
    %v5589 = vshll.u32 %v5477, 16
    %v5591 = vrot.slane %v5589, 1
    %v5592 = vsel %vm627, %v5587, %v5591
    %v5593 = vshrl.u32 %v5477, 16
    %v5595 = vor.u32 %v5593, %v5591
    %v5597 = vshll.u32 %v5478, 16
    %v5599 = vrot.slane %v5597, 1
    %v5600 = vsel %vm627, %v5595, %v5599
    %v5601 = vshrl.u32 %v5478, 16
    %v5603 = vor.u32 %v5601, %v5599
    %v5605 = vshll.u32 %v5479, 16
    %v5607 = vrot.slane %v5605, 1
    %v5608 = vsel %vm627, %v5603, %v5607
    %v5609 = vshrl.u32 %v5479, 16
    %v5611 = vor.u32 %v5609, %v5607
    %v5613 = vshll.u32 %v5480, 16
    %v5615 = vrot.slane %v5613, 1
    %v5616 = vsel %vm627, %v5611, %v5615
    %v5617 = vshrl.u32 %v5480, 16
    %v5619 = vor.u32 %v5617, %v5615
    %v5621 = vshll.u32 %v5481, 16
    %v5623 = vrot.slane %v5621, 1
    %v5624 = vsel %vm627, %v5619, %v5623
    %v5625 = vshrl.u32 %v5481, 16
    %v5627 = vor.u32 %v5625, %v5623
    %v5629 = vshll.u32 %v5482, 16
    %v5631 = vrot.slane %v5629, 1
    %v5632 = vsel %vm627, %v5627, %v5631
    %v5633 = vshrl.u32 %v5482, 16
    %v5635 = vor.u32 %v5633, %v5631
    %v5637 = vshll.u32 %v5483, 16
    %v5639 = vrot.slane %v5637, 1
    %v5640 = vsel %vm627, %v5635, %v5639
    %v5641 = vshrl.u32 %v5483, 16
    %v5643 = vor.u32 %v5641, %v5639
    %v5645 = vshll.u32 %v5484, 16
    %v5647 = vrot.slane %v5645, 1
    %v5648 = vsel %vm627, %v5643, %v5647
    %v5649 = vshrl.u32 %v5484, 16
    %v5651 = vor.u32 %v5649, %v5647
    %v5653 = vshll.u32 %v5485, 16
    %v5655 = vrot.slane %v5653, 1
    %v5656 = vsel %vm627, %v5651, %v5655
    %v5657 = vshrl.u32 %v5485, 16
    %v5659 = vor.u32 %v5657, %v5655
    %v5661 = vshll.u32 %v5486, 16
    %v5663 = vrot.slane %v5661, 1
    %v5664 = vsel %vm627, %v5659, %v5663
    %v5665 = vshrl.u32 %v5486, 16
    %v5667 = vor.u32 %v5665, %v5663
    %v5669 = vshll.u32 %v5487, 16
    %v5671 = vrot.slane %v5669, 1
    %v5672 = vsel %vm627, %v5667, %v5671
    %v5673 = vshrl.u32 %v5487, 16
    %v5675 = vor.u32 %v5673, %v5671
    %v5677 = vshll.u32 %v5488, 16
    %v5679 = vrot.slane %v5677, 1
    %v5680 = vsel %vm627, %v5675, %v5679
    %v5681 = vshrl.u32 %v5488, 16
    %v5683 = vor.u32 %v5681, %v5679
    %v5685 = vshll.u32 %v5489, 16
    %v5687 = vrot.slane %v5685, 1
    %v5688 = vsel %vm627, %v5683, %v5687
    %v5689 = vshrl.u32 %v5489, 16
    %v5691 = vor.u32 %v5689, %v5687
    %v5693 = vshll.u32 %v5490, 16
    %v5695 = vrot.slane %v5693, 1
    %v5696 = vsel %vm627, %v5691, %v5695
    %v5697 = vshrl.u32 %v5490, 16
    %v5699 = vor.u32 %v5697, %v5695
    %v5701 = vshll.u32 %v5491, 16
    %v5703 = vrot.slane %v5701, 1
    %v5704 = vsel %vm627, %v5699, %v5703
    %v5705 = vshrl.u32 %v5491, 16
    %v5707 = vor.u32 %v5705, %v5703
    %v5709 = vshll.u32 %v5492, 16
    %v5711 = vrot.slane %v5709, 1
    %v5712 = vsel %vm627, %v5707, %v5711
    %v5713 = vshrl.u32 %v5492, 16
    %v5715 = vor.u32 %v5713, %v5711
    %v5717 = vshll.u32 %v5493, 16
    %v5719 = vrot.slane %v5717, 1
    %v5720 = vsel %vm627, %v5715, %v5719
    %v5721 = vshrl.u32 %v5493, 16
    %v5723 = vor.u32 %v5721, %v5719
    %v5725 = vshll.u32 %v5494, 16
    %v5727 = vrot.slane %v5725, 1
    %v5728 = vsel %vm627, %v5723, %v5727
    %v5729 = vshrl.u32 %v5494, 16
    %v5731 = vor.u32 %v5729, %v5727
    %v5733 = vshll.u32 %v5495, 16
    %v5735 = vrot.slane %v5733, 1
    %v5736 = vsel %vm627, %v5731, %v5735
    %v5737 = vshrl.u32 %v5495, 16
    %v5739 = vor.u32 %v5737, %v5735
    %v5741 = vshll.u32 %v5496, 16
    %v5743 = vrot.slane %v5741, 1
    %v5744 = vsel %vm627, %v5739, %v5743
    %v5745 = vshrl.u32 %v5496, 16
    %v5747 = vor.u32 %v5745, %v5743
    %v5749 = vshll.u32 %v5497, 16
    %v5751 = vrot.slane %v5749, 1
    %v5752 = vsel %vm627, %v5747, %v5751
    %v5753 = vshrl.u32 %v5497, 16
    %v5755 = vor.u32 %v5753, %v5751
    %v5757 = vshll.u32 %v5498, 16
    %v5759 = vrot.slane %v5757, 1
    %v5760 = vsel %vm627, %v5755, %v5759
    %v5761 = vshrl.u32 %v5498, 16
    %v5763 = vor.u32 %v5761, %v5759
    %v5765 = vshll.u32 %v5499, 16
    %v5767 = vrot.slane %v5765, 1
    %v5768 = vsel %vm627, %v5763, %v5767
    %v5769 = vshrl.u32 %v5499, 16
    %v5771 = vor.u32 %v5769, %v5767
    %v5773 = vshll.u32 %v5500, 16
    %v5775 = vrot.slane %v5773, 1
    %v5776 = vsel %vm627, %v5771, %v5775
    %v5777 = vshrl.u32 %v5500, 16
    %v5779 = vor.u32 %v5777, %v5775
    %v5781 = vshll.u32 %v5501, 16
    %v5783 = vrot.slane %v5781, 1
    %v5784 = vsel %vm627, %v5779, %v5783
    %v5785 = vshrl.u32 %v5501, 16
    %v5787 = vor.u32 %v5785, %v5783
    %v5789 = vshll.u32 %v5502, 16
    %v5791 = vrot.slane %v5789, 1
    %v5792 = vsel %vm627, %v5787, %v5791
    %v5793 = vshrl.u32 %v5502, 16
    %v5795 = vor.u32 %v5793, %v5791
    %v5797 = vshll.u32 %v5503, 16
    %v5799 = vrot.slane %v5797, 1
    %v5800 = vsel %vm627, %v5795, %v5799
    %v5801 = vshrl.u32 %v5503, 16
    %v5803 = vor.u32 %v5801, %v5799
    %v5805 = vshll.u32 %v5504, 16
    %v5807 = vrot.slane %v5805, 1
    %v5808 = vsel %vm627, %v5803, %v5807
    %v5809 = vshrl.u32 %v5504, 16
    %v5811 = vor.u32 %v5809, %v5807
    %v5813 = vshll.u32 %v5505, 16
    %v5815 = vrot.slane %v5813, 1
    %v5816 = vsel %vm627, %v5811, %v5815
    %v5817 = vshrl.u32 %v5505, 16
    %v5819 = vor.u32 %v5817, %v5815
    %v5821 = vshll.u32 %v5506, 16
    %v5823 = vrot.slane %v5821, 1
    %v5824 = vsel %vm627, %v5819, %v5823
    %v5825 = vshrl.u32 %v5506, 16
    %v5827 = vor.u32 %v5825, %v5823
    %v5829 = vshll.u32 %v5507, 16
    %v5831 = vrot.slane %v5829, 1
    %v5832 = vsel %vm627, %v5827, %v5831
    %v5833 = vshrl.u32 %v5507, 16
    %v5835 = vor.u32 %v5833, %v5831
    %v5837 = vshll.u32 %v5508, 16
    %v5839 = vrot.slane %v5837, 1
    %v5840 = vsel %vm627, %v5835, %v5839
    %v5841 = vshrl.u32 %v5508, 16
    %v5843 = vor.u32 %v5841, %v5839
    %v5845 = vshll.u32 %v5509, 16
    %v5847 = vrot.slane %v5845, 1
    %v5848 = vsel %vm627, %v5843, %v5847
    %v5849 = vshrl.u32 %v5509, 16
    %v5851 = vor.u32 %v5849, %v5847
    %v5853 = vshll.u32 %v5510, 16
    %v5855 = vrot.slane %v5853, 1
    %v5856 = vsel %vm627, %v5851, %v5855
    %v5857 = vshrl.u32 %v5510, 16
    %v5859 = vor.u32 %v5857, %v5855
    %v5861 = vshll.u32 %v5511, 16
    %v5863 = vrot.slane %v5861, 1
    %v5864 = vsel %vm627, %v5859, %v5863
    %v5865 = vshrl.u32 %v5511, 16
    %v5867 = vor.u32 %v5865, %v5863
    %v5869 = vshll.u32 %v5512, 16
    %v5871 = vrot.slane %v5869, 1
    %v5872 = vsel %vm627, %v5867, %v5871
    %v5873 = vshrl.u32 %v5512, 16
    %v5875 = vor.u32 %v5873, %v5871
    %v5877 = vshll.u32 %v5513, 16
    %v5879 = vrot.slane %v5877, 1
    %v5880 = vsel %vm627, %v5875, %v5879
    %v5881 = vshrl.u32 %v5513, 16
    %v5883 = vor.u32 %v5881, %v5879
    %v5885 = vshll.u32 %v5514, 16
    %v5887 = vrot.slane %v5885, 1
    %v5888 = vsel %vm627, %v5883, %v5887
    %v5889 = vshrl.u32 %v5514, 16
    %v5891 = vor.u32 %v5889, %v5887
    %v5893 = vshll.u32 %v5515, 16
    %v5895 = vrot.slane %v5893, 1
    %v5896 = vsel %vm627, %v5891, %v5895
    %v5897 = vshrl.u32 %v5515, 16
    %v5899 = vor.u32 %v5897, %v5895
    %v5901 = vshll.u32 %v5516, 16
    %v5903 = vrot.slane %v5901, 1
    %v5904 = vsel %vm627, %v5899, %v5903
    %5905 = vrot.lane.b32.xlu0 %v5528, 32
    %v5906 = vpop.permute.xlu0 %5905
    %5907 = vrot.lane.b32.xlu0 %v5536, 32
    %v5908 = vpop.permute.xlu0 %5907
    %5909 = vrot.lane.b32.xlu0 %v5544, 32
    %v5910 = vpop.permute.xlu0 %5909
    %5911 = vrot.lane.b32.xlu0 %v5552, 32
    %v5912 = vpop.permute.xlu0 %5911
    %5913 = vrot.lane.b32.xlu0 %v5560, 32
    %v5914 = vpop.permute.xlu0 %5913
    %5915 = vrot.lane.b32.xlu0 %v5568, 32
    %v5916 = vpop.permute.xlu0 %5915
    %5917 = vrot.lane.b32.xlu0 %v5576, 32
    %v5918 = vpop.permute.xlu0 %5917
    %5919 = vrot.lane.b32.xlu0 %v5584, 32
    %v5920 = vpop.permute.xlu0 %5919
    %5921 = vrot.lane.b32.xlu0 %v5592, 32
    %v5922 = vpop.permute.xlu0 %5921
    %5923 = vrot.lane.b32.xlu0 %v5600, 32
    %v5924 = vpop.permute.xlu0 %5923
    %5925 = vrot.lane.b32.xlu0 %v5608, 32
    %v5926 = vpop.permute.xlu0 %5925
    %5927 = vrot.lane.b32.xlu0 %v5616, 32
    %v5928 = vpop.permute.xlu0 %5927
    %5929 = vrot.lane.b32.xlu0 %v5624, 32
    %v5930 = vpop.permute.xlu0 %5929
    %5931 = vrot.lane.b32.xlu0 %v5632, 32
    %v5932 = vpop.permute.xlu0 %5931
    %5933 = vrot.lane.b32.xlu0 %v5640, 32
    %v5934 = vpop.permute.xlu0 %5933
    %5935 = vrot.lane.b32.xlu0 %v5648, 32
    %v5936 = vpop.permute.xlu0 %5935
    %5937 = vrot.lane.b32.xlu0 %v5656, 32
    %v5938 = vpop.permute.xlu0 %5937
    %5939 = vrot.lane.b32.xlu0 %v5664, 32
    %v5940 = vpop.permute.xlu0 %5939
    %5941 = vrot.lane.b32.xlu0 %v5672, 32
    %v5942 = vpop.permute.xlu0 %5941
    %5943 = vrot.lane.b32.xlu0 %v5680, 32
    %v5944 = vpop.permute.xlu0 %5943
    %5945 = vrot.lane.b32.xlu0 %v5688, 32
    %v5946 = vpop.permute.xlu0 %5945
    %5947 = vrot.lane.b32.xlu0 %v5696, 32
    %v5948 = vpop.permute.xlu0 %5947
    %5949 = vrot.lane.b32.xlu0 %v5704, 32
    %v5950 = vpop.permute.xlu0 %5949
    %5951 = vrot.lane.b32.xlu0 %v5712, 32
    %v5952 = vpop.permute.xlu0 %5951
    %5953 = vrot.lane.b32.xlu0 %v5720, 32
    %v5954 = vpop.permute.xlu0 %5953
    %5955 = vrot.lane.b32.xlu0 %v5728, 32
    %v5956 = vpop.permute.xlu0 %5955
    %5957 = vrot.lane.b32.xlu0 %v5736, 32
    %v5958 = vpop.permute.xlu0 %5957
    %5959 = vrot.lane.b32.xlu0 %v5744, 32
    %v5960 = vpop.permute.xlu0 %5959
    %5961 = vrot.lane.b32.xlu0 %v5752, 32
    %v5962 = vpop.permute.xlu0 %5961
    %5963 = vrot.lane.b32.xlu0 %v5760, 32
    %v5964 = vpop.permute.xlu0 %5963
    %5965 = vrot.lane.b32.xlu0 %v5768, 32
    %v5966 = vpop.permute.xlu0 %5965
    %5967 = vrot.lane.b32.xlu0 %v5776, 32
    %v5968 = vpop.permute.xlu0 %5967
    %5969 = vrot.lane.b32.xlu0 %v5784, 32
    %v5970 = vpop.permute.xlu0 %5969
    %5971 = vrot.lane.b32.xlu0 %v5792, 32
    %v5972 = vpop.permute.xlu0 %5971
    %5973 = vrot.lane.b32.xlu0 %v5800, 32
    %v5974 = vpop.permute.xlu0 %5973
    %5975 = vrot.lane.b32.xlu0 %v5808, 32
    %v5976 = vpop.permute.xlu0 %5975
    %5977 = vrot.lane.b32.xlu0 %v5816, 32
    %v5978 = vpop.permute.xlu0 %5977
    %5979 = vrot.lane.b32.xlu0 %v5824, 32
    %v5980 = vpop.permute.xlu0 %5979
    %5981 = vrot.lane.b32.xlu0 %v5832, 32
    %v5982 = vpop.permute.xlu0 %5981
    %5983 = vrot.lane.b32.xlu0 %v5840, 32
    %v5984 = vpop.permute.xlu0 %5983
    %5985 = vrot.lane.b32.xlu0 %v5848, 32
    %v5986 = vpop.permute.xlu0 %5985
    %5987 = vrot.lane.b32.xlu0 %v5856, 32
    %v5988 = vpop.permute.xlu0 %5987
    %5989 = vrot.lane.b32.xlu0 %v5864, 32
    %v5990 = vpop.permute.xlu0 %5989
    %5991 = vrot.lane.b32.xlu0 %v5872, 32
    %v5992 = vpop.permute.xlu0 %5991
    %5993 = vrot.lane.b32.xlu0 %v5880, 32
    %v5994 = vpop.permute.xlu0 %5993
    %5995 = vrot.lane.b32.xlu0 %v5888, 32
    %v5996 = vpop.permute.xlu0 %5995
    %5997 = vrot.lane.b32.xlu0 %v5896, 32
    %v5998 = vpop.permute.xlu0 %5997
    %5999 = vrot.lane.b32.xlu0 %v5904, 32
    %v6000 = vpop.permute.xlu0 %5999
    %vm6049 = vcmask 523520
    %6050 = vst.msk [vmem:[#allocation4] sm:$0xff] %vm6049, %v5906
    %6051 = vst.msk [vmem:[#allocation4 + $0x18] sm:$0xff] %vm6049, %v5908
    %6052 = vst.msk [vmem:[#allocation4 + $0x30] sm:$0xff] %vm6049, %v5910
    %6053 = vst.msk [vmem:[#allocation4 + $0x48] sm:$0xff] %vm6049, %v5912
    %6054 = vst.msk [vmem:[#allocation4 + $0x60] sm:$0xff] %vm6049, %v5914
    %6055 = vst.msk [vmem:[#allocation4 + $0x78] sm:$0xff] %vm6049, %v5916
    %6056 = vst.msk [vmem:[#allocation4 + $0x90] sm:$0xff] %vm6049, %v5918
    %6057 = vst.msk [vmem:[#allocation4 + $0xa8] sm:$0xff] %vm6049, %v5920
    %6058 = vst.msk [vmem:[#allocation4 + $0xc0] sm:$0xff] %vm6049, %v5922
    %6059 = vst.msk [vmem:[#allocation4 + $0xd8] sm:$0xff] %vm6049, %v5924
    %6060 = vst.msk [vmem:[#allocation4 + $0xf0] sm:$0xff] %vm6049, %v5926
    %6061 = vst.msk [vmem:[#allocation4 + $0x108] sm:$0xff] %vm6049, %v5928
    %6062 = vst.msk [vmem:[#allocation4 + $0x120] sm:$0xff] %vm6049, %v5930
    %6063 = vst.msk [vmem:[#allocation4 + $0x138] sm:$0xff] %vm6049, %v5932
    %6064 = vst.msk [vmem:[#allocation4 + $0x150] sm:$0xff] %vm6049, %v5934
    %6065 = vst.msk [vmem:[#allocation4 + $0x168] sm:$0xff] %vm6049, %v5936
    %6066 = vst.msk [vmem:[#allocation4 + $0x180] sm:$0xff] %vm6049, %v5938
    %6067 = vst.msk [vmem:[#allocation4 + $0x198] sm:$0xff] %vm6049, %v5940
    %6068 = vst.msk [vmem:[#allocation4 + $0x1b0] sm:$0xff] %vm6049, %v5942
    %6069 = vst.msk [vmem:[#allocation4 + $0x1c8] sm:$0xff] %vm6049, %v5944
    %6070 = vst.msk [vmem:[#allocation4 + $0x1e0] sm:$0xff] %vm6049, %v5946
    %6071 = vst.msk [vmem:[#allocation4 + $0x1f8] sm:$0xff] %vm6049, %v5948
    %6072 = vst.msk [vmem:[#allocation4 + $0x210] sm:$0xff] %vm6049, %v5950
    %6073 = vst.msk [vmem:[#allocation4 + $0x228] sm:$0xff] %vm6049, %v5952
    %6074 = vst.msk [vmem:[#allocation4 + $0x240] sm:$0xff] %vm6049, %v5954
    %6075 = vst.msk [vmem:[#allocation4 + $0x258] sm:$0xff] %vm6049, %v5956
    %6076 = vst.msk [vmem:[#allocation4 + $0x270] sm:$0xff] %vm6049, %v5958
    %6077 = vst.msk [vmem:[#allocation4 + $0x288] sm:$0xff] %vm6049, %v5960
    %6078 = vst.msk [vmem:[#allocation4 + $0x2a0] sm:$0xff] %vm6049, %v5962
    %6079 = vst.msk [vmem:[#allocation4 + $0x2b8] sm:$0xff] %vm6049, %v5964
    %6080 = vst.msk [vmem:[#allocation4 + $0x2d0] sm:$0xff] %vm6049, %v5966
    %6081 = vst.msk [vmem:[#allocation4 + $0x2e8] sm:$0xff] %vm6049, %v5968
    %6082 = vst.msk [vmem:[#allocation4 + $0x300] sm:$0xff] %vm6049, %v5970
    %6083 = vst.msk [vmem:[#allocation4 + $0x318] sm:$0xff] %vm6049, %v5972
    %6084 = vst.msk [vmem:[#allocation4 + $0x330] sm:$0xff] %vm6049, %v5974
    %6085 = vst.msk [vmem:[#allocation4 + $0x348] sm:$0xff] %vm6049, %v5976
    %6086 = vst.msk [vmem:[#allocation4 + $0x360] sm:$0xff] %vm6049, %v5978
    %6087 = vst.msk [vmem:[#allocation4 + $0x378] sm:$0xff] %vm6049, %v5980
    %6088 = vst.msk [vmem:[#allocation4 + $0x390] sm:$0xff] %vm6049, %v5982
    %6089 = vst.msk [vmem:[#allocation4 + $0x3a8] sm:$0xff] %vm6049, %v5984
    %6090 = vst.msk [vmem:[#allocation4 + $0x3c0] sm:$0xff] %vm6049, %v5986
    %6091 = vst.msk [vmem:[#allocation4 + $0x3d8] sm:$0xff] %vm6049, %v5988
    %6092 = vst.msk [vmem:[#allocation4 + $0x3f0] sm:$0xff] %vm6049, %v5990
    %6093 = vst.msk [vmem:[#allocation4 + $0x408] sm:$0xff] %vm6049, %v5992
    %6094 = vst.msk [vmem:[#allocation4 + $0x420] sm:$0xff] %vm6049, %v5994
    %6095 = vst.msk [vmem:[#allocation4 + $0x438] sm:$0xff] %vm6049, %v5996
    %6096 = vst.msk [vmem:[#allocation4 + $0x450] sm:$0xff] %vm6049, %v5998
    %6097 = vst.msk [vmem:[#allocation4 + $0x468] sm:$0xff] %vm6049, %v6000
    %v6098 = vld [vmem:[#allocation3] sm:$0xfe]
    %v6099 = vld [vmem:[#allocation3 + $0x8] sm:$0xff]
    %v6100 = vld [vmem:[#allocation3 + $0x10] sm:$0xff]
    %v6101 = vld [vmem:[#allocation3 + $0x18] sm:$0xff]
    %v6102 = vld [vmem:[#allocation3 + $0x20] sm:$0xff]
    %v6103 = vld [vmem:[#allocation3 + $0x28] sm:$0xff]
    %v6104 = vld [vmem:[#allocation3 + $0x30] sm:$0xff]
    %v6105 = vld [vmem:[#allocation3 + $0x38] sm:$0xff]
    %v6106 = vld [vmem:[#allocation3 + $0x40] sm:$0xff]
    %v6107 = vld [vmem:[#allocation3 + $0x48] sm:$0xff]
    %v6108 = vld [vmem:[#allocation3 + $0x50] sm:$0xff]
    %v6109 = vld [vmem:[#allocation3 + $0x58] sm:$0xff]
    %v6110 = vld [vmem:[#allocation3 + $0x60] sm:$0xff]
    %v6111 = vld [vmem:[#allocation3 + $0x68] sm:$0xff]
    %v6112 = vld [vmem:[#allocation3 + $0x70] sm:$0xff]
    %v6113 = vld [vmem:[#allocation3 + $0x78] sm:$0xff]
    %v6114 = vld [vmem:[#allocation3 + $0x80] sm:$0xff]
    %v6115 = vld [vmem:[#allocation3 + $0x88] sm:$0xff]
    %v6116 = vld [vmem:[#allocation3 + $0x90] sm:$0xff]
    %v6117 = vld [vmem:[#allocation3 + $0x98] sm:$0xff]
    %v6118 = vld [vmem:[#allocation3 + $0xa0] sm:$0xff]
    %v6119 = vld [vmem:[#allocation3 + $0xa8] sm:$0xff]
    %v6120 = vld [vmem:[#allocation3 + $0xb0] sm:$0xff]
    %v6121 = vld [vmem:[#allocation3 + $0xb8] sm:$0xff]
    %v6122 = vld [vmem:[#allocation3 + $0xc0] sm:$0xff]
    %v6123 = vld [vmem:[#allocation3 + $0xc8] sm:$0xff]
    %v6124 = vld [vmem:[#allocation3 + $0xd0] sm:$0xff]
    %v6125 = vld [vmem:[#allocation3 + $0xd8] sm:$0xff]
    %v6126 = vld [vmem:[#allocation3 + $0xe0] sm:$0xff]
    %v6127 = vld [vmem:[#allocation3 + $0xe8] sm:$0xff]
    %v6128 = vld [vmem:[#allocation3 + $0xf0] sm:$0xff]
    %v6129 = vld [vmem:[#allocation3 + $0xf8] sm:$0xff]
    %v6130 = vld [vmem:[#allocation3 + $0x100] sm:$0xff]
    %v6131 = vld [vmem:[#allocation3 + $0x108] sm:$0xff]
    %v6132 = vld [vmem:[#allocation3 + $0x110] sm:$0xff]
    %v6133 = vld [vmem:[#allocation3 + $0x118] sm:$0xff]
    %v6134 = vld [vmem:[#allocation3 + $0x120] sm:$0xff]
    %v6135 = vld [vmem:[#allocation3 + $0x128] sm:$0xff]
    %v6136 = vld [vmem:[#allocation3 + $0x130] sm:$0xff]
    %v6137 = vld [vmem:[#allocation3 + $0x138] sm:$0xff]
    %v6138 = vld [vmem:[#allocation3 + $0x140] sm:$0xff]
    %v6139 = vld [vmem:[#allocation3 + $0x148] sm:$0xff]
    %v6140 = vld [vmem:[#allocation3 + $0x150] sm:$0xff]
    %v6141 = vld [vmem:[#allocation3 + $0x158] sm:$0xff]
    %v6142 = vld [vmem:[#allocation3 + $0x160] sm:$0xff]
    %v6143 = vld [vmem:[#allocation3 + $0x168] sm:$0xff]
    %v6144 = vld [vmem:[#allocation3 + $0x170] sm:$0xff]
    %v6145 = vld [vmem:[#allocation3 + $0x178] sm:$0xff]
    %v6146 = vld [vmem:[#allocation3 + $0x180] sm:$0x1]
    %v6196 = vrot.slane %v6098, 1
    %v6197 = vrot.slane %v6099, 1
    %v6198 = vsel %vm1307, %v6196, %v6197
    %v6199 = vrot.slane %v6100, 1
    %v6200 = vsel %vm1307, %v6197, %v6199
    %v6201 = vrot.slane %v6101, 1
    %v6202 = vsel %vm1307, %v6199, %v6201
    %v6203 = vrot.slane %v6102, 1
    %v6204 = vsel %vm1307, %v6201, %v6203
    %v6205 = vrot.slane %v6103, 1
    %v6206 = vsel %vm1307, %v6203, %v6205
    %v6207 = vrot.slane %v6104, 1
    %v6208 = vsel %vm1307, %v6205, %v6207
    %v6209 = vrot.slane %v6105, 1
    %v6210 = vsel %vm1307, %v6207, %v6209
    %v6211 = vrot.slane %v6106, 1
    %v6212 = vsel %vm1307, %v6209, %v6211
    %v6213 = vrot.slane %v6107, 1
    %v6214 = vsel %vm1307, %v6211, %v6213
    %v6215 = vrot.slane %v6108, 1
    %v6216 = vsel %vm1307, %v6213, %v6215
    %v6217 = vrot.slane %v6109, 1
    %v6218 = vsel %vm1307, %v6215, %v6217
    %v6219 = vrot.slane %v6110, 1
    %v6220 = vsel %vm1307, %v6217, %v6219
    %v6221 = vrot.slane %v6111, 1
    %v6222 = vsel %vm1307, %v6219, %v6221
    %v6223 = vrot.slane %v6112, 1
    %v6224 = vsel %vm1307, %v6221, %v6223
    %v6225 = vrot.slane %v6113, 1
    %v6226 = vsel %vm1307, %v6223, %v6225
    %v6227 = vrot.slane %v6114, 1
    %v6228 = vsel %vm1307, %v6225, %v6227
    %v6229 = vrot.slane %v6115, 1
    %v6230 = vsel %vm1307, %v6227, %v6229
    %v6231 = vrot.slane %v6116, 1
    %v6232 = vsel %vm1307, %v6229, %v6231
    %v6233 = vrot.slane %v6117, 1
    %v6234 = vsel %vm1307, %v6231, %v6233
    %v6235 = vrot.slane %v6118, 1
    %v6236 = vsel %vm1307, %v6233, %v6235
    %v6237 = vrot.slane %v6119, 1
    %v6238 = vsel %vm1307, %v6235, %v6237
    %v6239 = vrot.slane %v6120, 1
    %v6240 = vsel %vm1307, %v6237, %v6239
    %v6241 = vrot.slane %v6121, 1
    %v6242 = vsel %vm1307, %v6239, %v6241
    %v6243 = vrot.slane %v6122, 1
    %v6244 = vsel %vm1307, %v6241, %v6243
    %v6245 = vrot.slane %v6123, 1
    %v6246 = vsel %vm1307, %v6243, %v6245
    %v6247 = vrot.slane %v6124, 1
    %v6248 = vsel %vm1307, %v6245, %v6247
    %v6249 = vrot.slane %v6125, 1
    %v6250 = vsel %vm1307, %v6247, %v6249
    %v6251 = vrot.slane %v6126, 1
    %v6252 = vsel %vm1307, %v6249, %v6251
    %v6253 = vrot.slane %v6127, 1
    %v6254 = vsel %vm1307, %v6251, %v6253
    %v6255 = vrot.slane %v6128, 1
    %v6256 = vsel %vm1307, %v6253, %v6255
    %v6257 = vrot.slane %v6129, 1
    %v6258 = vsel %vm1307, %v6255, %v6257
    %v6259 = vrot.slane %v6130, 1
    %v6260 = vsel %vm1307, %v6257, %v6259
    %v6261 = vrot.slane %v6131, 1
    %v6262 = vsel %vm1307, %v6259, %v6261
    %v6263 = vrot.slane %v6132, 1
    %v6264 = vsel %vm1307, %v6261, %v6263
    %v6265 = vrot.slane %v6133, 1
    %v6266 = vsel %vm1307, %v6263, %v6265
    %v6267 = vrot.slane %v6134, 1
    %v6268 = vsel %vm1307, %v6265, %v6267
    %v6269 = vrot.slane %v6135, 1
    %v6270 = vsel %vm1307, %v6267, %v6269
    %v6271 = vrot.slane %v6136, 1
    %v6272 = vsel %vm1307, %v6269, %v6271
    %v6273 = vrot.slane %v6137, 1
    %v6274 = vsel %vm1307, %v6271, %v6273
    %v6275 = vrot.slane %v6138, 1
    %v6276 = vsel %vm1307, %v6273, %v6275
    %v6277 = vrot.slane %v6139, 1
    %v6278 = vsel %vm1307, %v6275, %v6277
    %v6279 = vrot.slane %v6140, 1
    %v6280 = vsel %vm1307, %v6277, %v6279
    %v6281 = vrot.slane %v6141, 1
    %v6282 = vsel %vm1307, %v6279, %v6281
    %v6283 = vrot.slane %v6142, 1
    %v6284 = vsel %vm1307, %v6281, %v6283
    %v6285 = vrot.slane %v6143, 1
    %v6286 = vsel %vm1307, %v6283, %v6285
    %v6287 = vrot.slane %v6144, 1
    %v6288 = vsel %vm1307, %v6285, %v6287
    %v6289 = vrot.slane %v6145, 1
    %v6290 = vsel %vm1307, %v6287, %v6289
    %v6291 = vrot.slane %v6146, 1
    %v6292 = vsel %vm1307, %v6289, %v6291
    %6293 = vrot.lane.b32.xlu0 %v6198, 64
    %v6294 = vpop.permute.xlu0 %6293
    %6295 = vrot.lane.b32.xlu0 %v6200, 64
    %v6296 = vpop.permute.xlu0 %6295
    %6297 = vrot.lane.b32.xlu0 %v6202, 64
    %v6298 = vpop.permute.xlu0 %6297
    %6299 = vrot.lane.b32.xlu0 %v6204, 64
    %v6300 = vpop.permute.xlu0 %6299
    %6301 = vrot.lane.b32.xlu0 %v6206, 64
    %v6302 = vpop.permute.xlu0 %6301
    %6303 = vrot.lane.b32.xlu0 %v6208, 64
    %v6304 = vpop.permute.xlu0 %6303
    %6305 = vrot.lane.b32.xlu0 %v6210, 64
    %v6306 = vpop.permute.xlu0 %6305
    %6307 = vrot.lane.b32.xlu0 %v6212, 64
    %v6308 = vpop.permute.xlu0 %6307
    %6309 = vrot.lane.b32.xlu0 %v6214, 64
    %v6310 = vpop.permute.xlu0 %6309
    %6311 = vrot.lane.b32.xlu0 %v6216, 64
    %v6312 = vpop.permute.xlu0 %6311
    %6313 = vrot.lane.b32.xlu0 %v6218, 64
    %v6314 = vpop.permute.xlu0 %6313
    %6315 = vrot.lane.b32.xlu0 %v6220, 64
    %v6316 = vpop.permute.xlu0 %6315
    %6317 = vrot.lane.b32.xlu0 %v6222, 64
    %v6318 = vpop.permute.xlu0 %6317
    %6319 = vrot.lane.b32.xlu0 %v6224, 64
    %v6320 = vpop.permute.xlu0 %6319
    %6321 = vrot.lane.b32.xlu0 %v6226, 64
    %v6322 = vpop.permute.xlu0 %6321
    %6323 = vrot.lane.b32.xlu0 %v6228, 64
    %v6324 = vpop.permute.xlu0 %6323
    %6325 = vrot.lane.b32.xlu0 %v6230, 64
    %v6326 = vpop.permute.xlu0 %6325
    %6327 = vrot.lane.b32.xlu0 %v6232, 64
    %v6328 = vpop.permute.xlu0 %6327
    %6329 = vrot.lane.b32.xlu0 %v6234, 64
    %v6330 = vpop.permute.xlu0 %6329
    %6331 = vrot.lane.b32.xlu0 %v6236, 64
    %v6332 = vpop.permute.xlu0 %6331
    %6333 = vrot.lane.b32.xlu0 %v6238, 64
    %v6334 = vpop.permute.xlu0 %6333
    %6335 = vrot.lane.b32.xlu0 %v6240, 64
    %v6336 = vpop.permute.xlu0 %6335
    %6337 = vrot.lane.b32.xlu0 %v6242, 64
    %v6338 = vpop.permute.xlu0 %6337
    %6339 = vrot.lane.b32.xlu0 %v6244, 64
    %v6340 = vpop.permute.xlu0 %6339
    %6341 = vrot.lane.b32.xlu0 %v6246, 64
    %v6342 = vpop.permute.xlu0 %6341
    %6343 = vrot.lane.b32.xlu0 %v6248, 64
    %v6344 = vpop.permute.xlu0 %6343
    %6345 = vrot.lane.b32.xlu0 %v6250, 64
    %v6346 = vpop.permute.xlu0 %6345
    %6347 = vrot.lane.b32.xlu0 %v6252, 64
    %v6348 = vpop.permute.xlu0 %6347
    %6349 = vrot.lane.b32.xlu0 %v6254, 64
    %v6350 = vpop.permute.xlu0 %6349
    %6351 = vrot.lane.b32.xlu0 %v6256, 64
    %v6352 = vpop.permute.xlu0 %6351
    %6353 = vrot.lane.b32.xlu0 %v6258, 64
    %v6354 = vpop.permute.xlu0 %6353
    %6355 = vrot.lane.b32.xlu0 %v6260, 64
    %v6356 = vpop.permute.xlu0 %6355
    %6357 = vrot.lane.b32.xlu0 %v6262, 64
    %v6358 = vpop.permute.xlu0 %6357
    %6359 = vrot.lane.b32.xlu0 %v6264, 64
    %v6360 = vpop.permute.xlu0 %6359
    %6361 = vrot.lane.b32.xlu0 %v6266, 64
    %v6362 = vpop.permute.xlu0 %6361
    %6363 = vrot.lane.b32.xlu0 %v6268, 64
    %v6364 = vpop.permute.xlu0 %6363
    %6365 = vrot.lane.b32.xlu0 %v6270, 64
    %v6366 = vpop.permute.xlu0 %6365
    %6367 = vrot.lane.b32.xlu0 %v6272, 64
    %v6368 = vpop.permute.xlu0 %6367
    %6369 = vrot.lane.b32.xlu0 %v6274, 64
    %v6370 = vpop.permute.xlu0 %6369
    %6371 = vrot.lane.b32.xlu0 %v6276, 64
    %v6372 = vpop.permute.xlu0 %6371
    %6373 = vrot.lane.b32.xlu0 %v6278, 64
    %v6374 = vpop.permute.xlu0 %6373
    %6375 = vrot.lane.b32.xlu0 %v6280, 64
    %v6376 = vpop.permute.xlu0 %6375
    %6377 = vrot.lane.b32.xlu0 %v6282, 64
    %v6378 = vpop.permute.xlu0 %6377
    %6379 = vrot.lane.b32.xlu0 %v6284, 64
    %v6380 = vpop.permute.xlu0 %6379
    %6381 = vrot.lane.b32.xlu0 %v6286, 64
    %v6382 = vpop.permute.xlu0 %6381
    %6383 = vrot.lane.b32.xlu0 %v6288, 64
    %v6384 = vpop.permute.xlu0 %6383
    %6385 = vrot.lane.b32.xlu0 %v6290, 64
    %v6386 = vpop.permute.xlu0 %6385
    %6387 = vrot.lane.b32.xlu0 %v6292, 64
    %v6388 = vpop.permute.xlu0 %6387
    %vm6437 = vcmask 785920
    %6438 = vst.msk [vmem:[#allocation4] sm:$0xff] %vm6437, %v6294
    %6439 = vst.msk [vmem:[#allocation4 + $0x18] sm:$0xff] %vm6437, %v6296
    %6440 = vst.msk [vmem:[#allocation4 + $0x30] sm:$0xff] %vm6437, %v6298
    %6441 = vst.msk [vmem:[#allocation4 + $0x48] sm:$0xff] %vm6437, %v6300
    %6442 = vst.msk [vmem:[#allocation4 + $0x60] sm:$0xff] %vm6437, %v6302
    %6443 = vst.msk [vmem:[#allocation4 + $0x78] sm:$0xff] %vm6437, %v6304
    %6444 = vst.msk [vmem:[#allocation4 + $0x90] sm:$0xff] %vm6437, %v6306
    %6445 = vst.msk [vmem:[#allocation4 + $0xa8] sm:$0xff] %vm6437, %v6308
    %6446 = vst.msk [vmem:[#allocation4 + $0xc0] sm:$0xff] %vm6437, %v6310
    %6447 = vst.msk [vmem:[#allocation4 + $0xd8] sm:$0xff] %vm6437, %v6312
    %6448 = vst.msk [vmem:[#allocation4 + $0xf0] sm:$0xff] %vm6437, %v6314
    %6449 = vst.msk [vmem:[#allocation4 + $0x108] sm:$0xff] %vm6437, %v6316
    %6450 = vst.msk [vmem:[#allocation4 + $0x120] sm:$0xff] %vm6437, %v6318
    %6451 = vst.msk [vmem:[#allocation4 + $0x138] sm:$0xff] %vm6437, %v6320
    %6452 = vst.msk [vmem:[#allocation4 + $0x150] sm:$0xff] %vm6437, %v6322
    %6453 = vst.msk [vmem:[#allocation4 + $0x168] sm:$0xff] %vm6437, %v6324
    %6454 = vst.msk [vmem:[#allocation4 + $0x180] sm:$0xff] %vm6437, %v6326
    %6455 = vst.msk [vmem:[#allocation4 + $0x198] sm:$0xff] %vm6437, %v6328
    %6456 = vst.msk [vmem:[#allocation4 + $0x1b0] sm:$0xff] %vm6437, %v6330
    %6457 = vst.msk [vmem:[#allocation4 + $0x1c8] sm:$0xff] %vm6437, %v6332
    %6458 = vst.msk [vmem:[#allocation4 + $0x1e0] sm:$0xff] %vm6437, %v6334
    %6459 = vst.msk [vmem:[#allocation4 + $0x1f8] sm:$0xff] %vm6437, %v6336
    %6460 = vst.msk [vmem:[#allocation4 + $0x210] sm:$0xff] %vm6437, %v6338
    %6461 = vst.msk [vmem:[#allocation4 + $0x228] sm:$0xff] %vm6437, %v6340
    %6462 = vst.msk [vmem:[#allocation4 + $0x240] sm:$0xff] %vm6437, %v6342
    %6463 = vst.msk [vmem:[#allocation4 + $0x258] sm:$0xff] %vm6437, %v6344
    %6464 = vst.msk [vmem:[#allocation4 + $0x270] sm:$0xff] %vm6437, %v6346
    %6465 = vst.msk [vmem:[#allocation4 + $0x288] sm:$0xff] %vm6437, %v6348
    %6466 = vst.msk [vmem:[#allocation4 + $0x2a0] sm:$0xff] %vm6437, %v6350
    %6467 = vst.msk [vmem:[#allocation4 + $0x2b8] sm:$0xff] %vm6437, %v6352
    %6468 = vst.msk [vmem:[#allocation4 + $0x2d0] sm:$0xff] %vm6437, %v6354
    %6469 = vst.msk [vmem:[#allocation4 + $0x2e8] sm:$0xff] %vm6437, %v6356
    %6470 = vst.msk [vmem:[#allocation4 + $0x300] sm:$0xff] %vm6437, %v6358
    %6471 = vst.msk [vmem:[#allocation4 + $0x318] sm:$0xff] %vm6437, %v6360
    %6472 = vst.msk [vmem:[#allocation4 + $0x330] sm:$0xff] %vm6437, %v6362
    %6473 = vst.msk [vmem:[#allocation4 + $0x348] sm:$0xff] %vm6437, %v6364
    %6474 = vst.msk [vmem:[#allocation4 + $0x360] sm:$0xff] %vm6437, %v6366
    %6475 = vst.msk [vmem:[#allocation4 + $0x378] sm:$0xff] %vm6437, %v6368
    %6476 = vst.msk [vmem:[#allocation4 + $0x390] sm:$0xff] %vm6437, %v6370
    %6477 = vst.msk [vmem:[#allocation4 + $0x3a8] sm:$0xff] %vm6437, %v6372
    %6478 = vst.msk [vmem:[#allocation4 + $0x3c0] sm:$0xff] %vm6437, %v6374
    %6479 = vst.msk [vmem:[#allocation4 + $0x3d8] sm:$0xff] %vm6437, %v6376
    %6480 = vst.msk [vmem:[#allocation4 + $0x3f0] sm:$0xff] %vm6437, %v6378
    %6481 = vst.msk [vmem:[#allocation4 + $0x408] sm:$0xff] %vm6437, %v6380
    %6482 = vst.msk [vmem:[#allocation4 + $0x420] sm:$0xff] %vm6437, %v6382
    %6483 = vst.msk [vmem:[#allocation4 + $0x438] sm:$0xff] %vm6437, %v6384
    %6484 = vst.msk [vmem:[#allocation4 + $0x450] sm:$0xff] %vm6437, %v6386
    %6485 = vst.msk [vmem:[#allocation4 + $0x468] sm:$0xff] %vm6437, %v6388
    %v6486 = vld [vmem:[#allocation3] sm:$0xc0]
    %v6487 = vld [vmem:[#allocation3 + $0x8] sm:$0xff]
    %v6488 = vld [vmem:[#allocation3 + $0x10] sm:$0xff]
    %v6489 = vld [vmem:[#allocation3 + $0x18] sm:$0xff]
    %v6490 = vld [vmem:[#allocation3 + $0x20] sm:$0xff]
    %v6491 = vld [vmem:[#allocation3 + $0x28] sm:$0xff]
    %v6492 = vld [vmem:[#allocation3 + $0x30] sm:$0xff]
    %v6493 = vld [vmem:[#allocation3 + $0x38] sm:$0xff]
    %v6494 = vld [vmem:[#allocation3 + $0x40] sm:$0xff]
    %v6495 = vld [vmem:[#allocation3 + $0x48] sm:$0xff]
    %v6496 = vld [vmem:[#allocation3 + $0x50] sm:$0xff]
    %v6497 = vld [vmem:[#allocation3 + $0x58] sm:$0xff]
    %v6498 = vld [vmem:[#allocation3 + $0x60] sm:$0xff]
    %v6499 = vld [vmem:[#allocation3 + $0x68] sm:$0xff]
    %v6500 = vld [vmem:[#allocation3 + $0x70] sm:$0xff]
    %v6501 = vld [vmem:[#allocation3 + $0x78] sm:$0xff]
    %v6502 = vld [vmem:[#allocation3 + $0x80] sm:$0xff]
    %v6503 = vld [vmem:[#allocation3 + $0x88] sm:$0xff]
    %v6504 = vld [vmem:[#allocation3 + $0x90] sm:$0xff]
    %v6505 = vld [vmem:[#allocation3 + $0x98] sm:$0xff]
    %v6506 = vld [vmem:[#allocation3 + $0xa0] sm:$0xff]
    %v6507 = vld [vmem:[#allocation3 + $0xa8] sm:$0xff]
    %v6508 = vld [vmem:[#allocation3 + $0xb0] sm:$0xff]
    %v6509 = vld [vmem:[#allocation3 + $0xb8] sm:$0xff]
    %v6510 = vld [vmem:[#allocation3 + $0xc0] sm:$0xff]
    %v6511 = vld [vmem:[#allocation3 + $0xc8] sm:$0xff]
    %v6512 = vld [vmem:[#allocation3 + $0xd0] sm:$0xff]
    %v6513 = vld [vmem:[#allocation3 + $0xd8] sm:$0xff]
    %v6514 = vld [vmem:[#allocation3 + $0xe0] sm:$0xff]
    %v6515 = vld [vmem:[#allocation3 + $0xe8] sm:$0xff]
    %v6516 = vld [vmem:[#allocation3 + $0xf0] sm:$0xff]
    %v6517 = vld [vmem:[#allocation3 + $0xf8] sm:$0xff]
    %v6518 = vld [vmem:[#allocation3 + $0x100] sm:$0xff]
    %v6519 = vld [vmem:[#allocation3 + $0x108] sm:$0xff]
    %v6520 = vld [vmem:[#allocation3 + $0x110] sm:$0xff]
    %v6521 = vld [vmem:[#allocation3 + $0x118] sm:$0xff]
    %v6522 = vld [vmem:[#allocation3 + $0x120] sm:$0xff]
    %v6523 = vld [vmem:[#allocation3 + $0x128] sm:$0xff]
    %v6524 = vld [vmem:[#allocation3 + $0x130] sm:$0xff]
    %v6525 = vld [vmem:[#allocation3 + $0x138] sm:$0xff]
    %v6526 = vld [vmem:[#allocation3 + $0x140] sm:$0xff]
    %v6527 = vld [vmem:[#allocation3 + $0x148] sm:$0xff]
    %v6528 = vld [vmem:[#allocation3 + $0x150] sm:$0xff]
    %v6529 = vld [vmem:[#allocation3 + $0x158] sm:$0xff]
    %v6530 = vld [vmem:[#allocation3 + $0x160] sm:$0xff]
    %v6531 = vld [vmem:[#allocation3 + $0x168] sm:$0xff]
    %v6532 = vld [vmem:[#allocation3 + $0x170] sm:$0xff]
    %v6533 = vld [vmem:[#allocation3 + $0x178] sm:$0xff]
    %v6534 = vld [vmem:[#allocation3 + $0x180] sm:$0x3f]
    %v6584 = vrot.slane %v6486, 6
    %v6585 = vrot.slane %v6487, 6
    %v6586 = vsel %vm1696, %v6584, %v6585
    %v6587 = vrot.slane %v6488, 6
    %v6588 = vsel %vm1696, %v6585, %v6587
    %v6589 = vrot.slane %v6489, 6
    %v6590 = vsel %vm1696, %v6587, %v6589
    %v6591 = vrot.slane %v6490, 6
    %v6592 = vsel %vm1696, %v6589, %v6591
    %v6593 = vrot.slane %v6491, 6
    %v6594 = vsel %vm1696, %v6591, %v6593
    %v6595 = vrot.slane %v6492, 6
    %v6596 = vsel %vm1696, %v6593, %v6595
    %v6597 = vrot.slane %v6493, 6
    %v6598 = vsel %vm1696, %v6595, %v6597
    %v6599 = vrot.slane %v6494, 6
    %v6600 = vsel %vm1696, %v6597, %v6599
    %v6601 = vrot.slane %v6495, 6
    %v6602 = vsel %vm1696, %v6599, %v6601
    %v6603 = vrot.slane %v6496, 6
    %v6604 = vsel %vm1696, %v6601, %v6603
    %v6605 = vrot.slane %v6497, 6
    %v6606 = vsel %vm1696, %v6603, %v6605
    %v6607 = vrot.slane %v6498, 6
    %v6608 = vsel %vm1696, %v6605, %v6607
    %v6609 = vrot.slane %v6499, 6
    %v6610 = vsel %vm1696, %v6607, %v6609
    %v6611 = vrot.slane %v6500, 6
    %v6612 = vsel %vm1696, %v6609, %v6611
    %v6613 = vrot.slane %v6501, 6
    %v6614 = vsel %vm1696, %v6611, %v6613
    %v6615 = vrot.slane %v6502, 6
    %v6616 = vsel %vm1696, %v6613, %v6615
    %v6617 = vrot.slane %v6503, 6
    %v6618 = vsel %vm1696, %v6615, %v6617
    %v6619 = vrot.slane %v6504, 6
    %v6620 = vsel %vm1696, %v6617, %v6619
    %v6621 = vrot.slane %v6505, 6
    %v6622 = vsel %vm1696, %v6619, %v6621
    %v6623 = vrot.slane %v6506, 6
    %v6624 = vsel %vm1696, %v6621, %v6623
    %v6625 = vrot.slane %v6507, 6
    %v6626 = vsel %vm1696, %v6623, %v6625
    %v6627 = vrot.slane %v6508, 6
    %v6628 = vsel %vm1696, %v6625, %v6627
    %v6629 = vrot.slane %v6509, 6
    %v6630 = vsel %vm1696, %v6627, %v6629
    %v6631 = vrot.slane %v6510, 6
    %v6632 = vsel %vm1696, %v6629, %v6631
    %v6633 = vrot.slane %v6511, 6
    %v6634 = vsel %vm1696, %v6631, %v6633
    %v6635 = vrot.slane %v6512, 6
    %v6636 = vsel %vm1696, %v6633, %v6635
    %v6637 = vrot.slane %v6513, 6
    %v6638 = vsel %vm1696, %v6635, %v6637
    %v6639 = vrot.slane %v6514, 6
    %v6640 = vsel %vm1696, %v6637, %v6639
    %v6641 = vrot.slane %v6515, 6
    %v6642 = vsel %vm1696, %v6639, %v6641
    %v6643 = vrot.slane %v6516, 6
    %v6644 = vsel %vm1696, %v6641, %v6643
    %v6645 = vrot.slane %v6517, 6
    %v6646 = vsel %vm1696, %v6643, %v6645
    %v6647 = vrot.slane %v6518, 6
    %v6648 = vsel %vm1696, %v6645, %v6647
    %v6649 = vrot.slane %v6519, 6
    %v6650 = vsel %vm1696, %v6647, %v6649
    %v6651 = vrot.slane %v6520, 6
    %v6652 = vsel %vm1696, %v6649, %v6651
    %v6653 = vrot.slane %v6521, 6
    %v6654 = vsel %vm1696, %v6651, %v6653
    %v6655 = vrot.slane %v6522, 6
    %v6656 = vsel %vm1696, %v6653, %v6655
    %v6657 = vrot.slane %v6523, 6
    %v6658 = vsel %vm1696, %v6655, %v6657
    %v6659 = vrot.slane %v6524, 6
    %v6660 = vsel %vm1696, %v6657, %v6659
    %v6661 = vrot.slane %v6525, 6
    %v6662 = vsel %vm1696, %v6659, %v6661
    %v6663 = vrot.slane %v6526, 6
    %v6664 = vsel %vm1696, %v6661, %v6663
    %v6665 = vrot.slane %v6527, 6
    %v6666 = vsel %vm1696, %v6663, %v6665
    %v6667 = vrot.slane %v6528, 6
    %v6668 = vsel %vm1696, %v6665, %v6667
    %v6669 = vrot.slane %v6529, 6
    %v6670 = vsel %vm1696, %v6667, %v6669
    %v6671 = vrot.slane %v6530, 6
    %v6672 = vsel %vm1696, %v6669, %v6671
    %v6673 = vrot.slane %v6531, 6
    %v6674 = vsel %vm1696, %v6671, %v6673
    %v6675 = vrot.slane %v6532, 6
    %v6676 = vsel %vm1696, %v6673, %v6675
    %v6677 = vrot.slane %v6533, 6
    %v6678 = vsel %vm1696, %v6675, %v6677
    %v6679 = vrot.slane %v6534, 6
    %v6680 = vsel %vm1696, %v6677, %v6679
    %6681 = vrot.lane.b32.xlu0 %v6586, 96
    %v6682 = vpop.permute.xlu0 %6681
    %6683 = vrot.lane.b32.xlu0 %v6588, 96
    %v6684 = vpop.permute.xlu0 %6683
    %6685 = vrot.lane.b32.xlu0 %v6590, 96
    %v6686 = vpop.permute.xlu0 %6685
    %6687 = vrot.lane.b32.xlu0 %v6592, 96
    %v6688 = vpop.permute.xlu0 %6687
    %6689 = vrot.lane.b32.xlu0 %v6594, 96
    %v6690 = vpop.permute.xlu0 %6689
    %6691 = vrot.lane.b32.xlu0 %v6596, 96
    %v6692 = vpop.permute.xlu0 %6691
    %6693 = vrot.lane.b32.xlu0 %v6598, 96
    %v6694 = vpop.permute.xlu0 %6693
    %6695 = vrot.lane.b32.xlu0 %v6600, 96
    %v6696 = vpop.permute.xlu0 %6695
    %6697 = vrot.lane.b32.xlu0 %v6602, 96
    %v6698 = vpop.permute.xlu0 %6697
    %6699 = vrot.lane.b32.xlu0 %v6604, 96
    %v6700 = vpop.permute.xlu0 %6699
    %6701 = vrot.lane.b32.xlu0 %v6606, 96
    %v6702 = vpop.permute.xlu0 %6701
    %6703 = vrot.lane.b32.xlu0 %v6608, 96
    %v6704 = vpop.permute.xlu0 %6703
    %6705 = vrot.lane.b32.xlu0 %v6610, 96
    %v6706 = vpop.permute.xlu0 %6705
    %6707 = vrot.lane.b32.xlu0 %v6612, 96
    %v6708 = vpop.permute.xlu0 %6707
    %6709 = vrot.lane.b32.xlu0 %v6614, 96
    %v6710 = vpop.permute.xlu0 %6709
    %6711 = vrot.lane.b32.xlu0 %v6616, 96
    %v6712 = vpop.permute.xlu0 %6711
    %6713 = vrot.lane.b32.xlu0 %v6618, 96
    %v6714 = vpop.permute.xlu0 %6713
    %6715 = vrot.lane.b32.xlu0 %v6620, 96
    %v6716 = vpop.permute.xlu0 %6715
    %6717 = vrot.lane.b32.xlu0 %v6622, 96
    %v6718 = vpop.permute.xlu0 %6717
    %6719 = vrot.lane.b32.xlu0 %v6624, 96
    %v6720 = vpop.permute.xlu0 %6719
    %6721 = vrot.lane.b32.xlu0 %v6626, 96
    %v6722 = vpop.permute.xlu0 %6721
    %6723 = vrot.lane.b32.xlu0 %v6628, 96
    %v6724 = vpop.permute.xlu0 %6723
    %6725 = vrot.lane.b32.xlu0 %v6630, 96
    %v6726 = vpop.permute.xlu0 %6725
    %6727 = vrot.lane.b32.xlu0 %v6632, 96
    %v6728 = vpop.permute.xlu0 %6727
    %6729 = vrot.lane.b32.xlu0 %v6634, 96
    %v6730 = vpop.permute.xlu0 %6729
    %6731 = vrot.lane.b32.xlu0 %v6636, 96
    %v6732 = vpop.permute.xlu0 %6731
    %6733 = vrot.lane.b32.xlu0 %v6638, 96
    %v6734 = vpop.permute.xlu0 %6733
    %6735 = vrot.lane.b32.xlu0 %v6640, 96
    %v6736 = vpop.permute.xlu0 %6735
    %6737 = vrot.lane.b32.xlu0 %v6642, 96
    %v6738 = vpop.permute.xlu0 %6737
    %6739 = vrot.lane.b32.xlu0 %v6644, 96
    %v6740 = vpop.permute.xlu0 %6739
    %6741 = vrot.lane.b32.xlu0 %v6646, 96
    %v6742 = vpop.permute.xlu0 %6741
    %6743 = vrot.lane.b32.xlu0 %v6648, 96
    %v6744 = vpop.permute.xlu0 %6743
    %6745 = vrot.lane.b32.xlu0 %v6650, 96
    %v6746 = vpop.permute.xlu0 %6745
    %6747 = vrot.lane.b32.xlu0 %v6652, 96
    %v6748 = vpop.permute.xlu0 %6747
    %6749 = vrot.lane.b32.xlu0 %v6654, 96
    %v6750 = vpop.permute.xlu0 %6749
    %6751 = vrot.lane.b32.xlu0 %v6656, 96
    %v6752 = vpop.permute.xlu0 %6751
    %6753 = vrot.lane.b32.xlu0 %v6658, 96
    %v6754 = vpop.permute.xlu0 %6753
    %6755 = vrot.lane.b32.xlu0 %v6660, 96
    %v6756 = vpop.permute.xlu0 %6755
    %6757 = vrot.lane.b32.xlu0 %v6662, 96
    %v6758 = vpop.permute.xlu0 %6757
    %6759 = vrot.lane.b32.xlu0 %v6664, 96
    %v6760 = vpop.permute.xlu0 %6759
    %6761 = vrot.lane.b32.xlu0 %v6666, 96
    %v6762 = vpop.permute.xlu0 %6761
    %6763 = vrot.lane.b32.xlu0 %v6668, 96
    %v6764 = vpop.permute.xlu0 %6763
    %6765 = vrot.lane.b32.xlu0 %v6670, 96
    %v6766 = vpop.permute.xlu0 %6765
    %6767 = vrot.lane.b32.xlu0 %v6672, 96
    %v6768 = vpop.permute.xlu0 %6767
    %6769 = vrot.lane.b32.xlu0 %v6674, 96
    %v6770 = vpop.permute.xlu0 %6769
    %6771 = vrot.lane.b32.xlu0 %v6676, 96
    %v6772 = vpop.permute.xlu0 %6771
    %6773 = vrot.lane.b32.xlu0 %v6678, 96
    %v6774 = vpop.permute.xlu0 %6773
    %6775 = vrot.lane.b32.xlu0 %v6680, 96
    %v6776 = vpop.permute.xlu0 %6775
    %vm6825 = vcmask 1048320
    %6826 = vst.msk [vmem:[#allocation4] sm:$0xff] %vm6825, %v6682
    %6827 = vst.msk [vmem:[#allocation4 + $0x18] sm:$0xff] %vm6825, %v6684
    %6828 = vst.msk [vmem:[#allocation4 + $0x30] sm:$0xff] %vm6825, %v6686
    %6829 = vst.msk [vmem:[#allocation4 + $0x48] sm:$0xff] %vm6825, %v6688
    %6830 = vst.msk [vmem:[#allocation4 + $0x60] sm:$0xff] %vm6825, %v6690
    %6831 = vst.msk [vmem:[#allocation4 + $0x78] sm:$0xff] %vm6825, %v6692
    %6832 = vst.msk [vmem:[#allocation4 + $0x90] sm:$0xff] %vm6825, %v6694
    %6833 = vst.msk [vmem:[#allocation4 + $0xa8] sm:$0xff] %vm6825, %v6696
    %6834 = vst.msk [vmem:[#allocation4 + $0xc0] sm:$0xff] %vm6825, %v6698
    %6835 = vst.msk [vmem:[#allocation4 + $0xd8] sm:$0xff] %vm6825, %v6700
    %6836 = vst.msk [vmem:[#allocation4 + $0xf0] sm:$0xff] %vm6825, %v6702
    %6837 = vst.msk [vmem:[#allocation4 + $0x108] sm:$0xff] %vm6825, %v6704
    %6838 = vst.msk [vmem:[#allocation4 + $0x120] sm:$0xff] %vm6825, %v6706
    %6839 = vst.msk [vmem:[#allocation4 + $0x138] sm:$0xff] %vm6825, %v6708
    %6840 = vst.msk [vmem:[#allocation4 + $0x150] sm:$0xff] %vm6825, %v6710
    %6841 = vst.msk [vmem:[#allocation4 + $0x168] sm:$0xff] %vm6825, %v6712
    %6842 = vst.msk [vmem:[#allocation4 + $0x180] sm:$0xff] %vm6825, %v6714
    %6843 = vst.msk [vmem:[#allocation4 + $0x198] sm:$0xff] %vm6825, %v6716
    %6844 = vst.msk [vmem:[#allocation4 + $0x1b0] sm:$0xff] %vm6825, %v6718
    %6845 = vst.msk [vmem:[#allocation4 + $0x1c8] sm:$0xff] %vm6825, %v6720
    %6846 = vst.msk [vmem:[#allocation4 + $0x1e0] sm:$0xff] %vm6825, %v6722
    %6847 = vst.msk [vmem:[#allocation4 + $0x1f8] sm:$0xff] %vm6825, %v6724
    %6848 = vst.msk [vmem:[#allocation4 + $0x210] sm:$0xff] %vm6825, %v6726
    %6849 = vst.msk [vmem:[#allocation4 + $0x228] sm:$0xff] %vm6825, %v6728
    %6850 = vst.msk [vmem:[#allocation4 + $0x240] sm:$0xff] %vm6825, %v6730
    %6851 = vst.msk [vmem:[#allocation4 + $0x258] sm:$0xff] %vm6825, %v6732
    %6852 = vst.msk [vmem:[#allocation4 + $0x270] sm:$0xff] %vm6825, %v6734
    %6853 = vst.msk [vmem:[#allocation4 + $0x288] sm:$0xff] %vm6825, %v6736
    %6854 = vst.msk [vmem:[#allocation4 + $0x2a0] sm:$0xff] %vm6825, %v6738
    %6855 = vst.msk [vmem:[#allocation4 + $0x2b8] sm:$0xff] %vm6825, %v6740
    %6856 = vst.msk [vmem:[#allocation4 + $0x2d0] sm:$0xff] %vm6825, %v6742
    %6857 = vst.msk [vmem:[#allocation4 + $0x2e8] sm:$0xff] %vm6825, %v6744
    %6858 = vst.msk [vmem:[#allocation4 + $0x300] sm:$0xff] %vm6825, %v6746
    %6859 = vst.msk [vmem:[#allocation4 + $0x318] sm:$0xff] %vm6825, %v6748
    %6860 = vst.msk [vmem:[#allocation4 + $0x330] sm:$0xff] %vm6825, %v6750
    %6861 = vst.msk [vmem:[#allocation4 + $0x348] sm:$0xff] %vm6825, %v6752
    %6862 = vst.msk [vmem:[#allocation4 + $0x360] sm:$0xff] %vm6825, %v6754
    %6863 = vst.msk [vmem:[#allocation4 + $0x378] sm:$0xff] %vm6825, %v6756
    %6864 = vst.msk [vmem:[#allocation4 + $0x390] sm:$0xff] %vm6825, %v6758
    %6865 = vst.msk [vmem:[#allocation4 + $0x3a8] sm:$0xff] %vm6825, %v6760
    %6866 = vst.msk [vmem:[#allocation4 + $0x3c0] sm:$0xff] %vm6825, %v6762
    %6867 = vst.msk [vmem:[#allocation4 + $0x3d8] sm:$0xff] %vm6825, %v6764
    %6868 = vst.msk [vmem:[#allocation4 + $0x3f0] sm:$0xff] %vm6825, %v6766
    %6869 = vst.msk [vmem:[#allocation4 + $0x408] sm:$0xff] %vm6825, %v6768
    %6870 = vst.msk [vmem:[#allocation4 + $0x420] sm:$0xff] %vm6825, %v6770
    %6871 = vst.msk [vmem:[#allocation4 + $0x438] sm:$0xff] %vm6825, %v6772
    %6872 = vst.msk [vmem:[#allocation4 + $0x450] sm:$0xff] %vm6825, %v6774
    %6873 = vst.msk [vmem:[#allocation4 + $0x468] sm:$0xff] %vm6825, %v6776
    %v6874 = vld [vmem:[#allocation3] sm:$0xc0]
    %v6875 = vld [vmem:[#allocation3 + $0x8] sm:$0xff]
    %v6876 = vld [vmem:[#allocation3 + $0x10] sm:$0xff]
    %v6877 = vld [vmem:[#allocation3 + $0x18] sm:$0xff]
    %v6878 = vld [vmem:[#allocation3 + $0x20] sm:$0xff]
    %v6879 = vld [vmem:[#allocation3 + $0x28] sm:$0xff]
    %v6880 = vld [vmem:[#allocation3 + $0x30] sm:$0xff]
    %v6881 = vld [vmem:[#allocation3 + $0x38] sm:$0xff]
    %v6882 = vld [vmem:[#allocation3 + $0x40] sm:$0xff]
    %v6883 = vld [vmem:[#allocation3 + $0x48] sm:$0xff]
    %v6884 = vld [vmem:[#allocation3 + $0x50] sm:$0xff]
    %v6885 = vld [vmem:[#allocation3 + $0x58] sm:$0xff]
    %v6886 = vld [vmem:[#allocation3 + $0x60] sm:$0xff]
    %v6887 = vld [vmem:[#allocation3 + $0x68] sm:$0xff]
    %v6888 = vld [vmem:[#allocation3 + $0x70] sm:$0xff]
    %v6889 = vld [vmem:[#allocation3 + $0x78] sm:$0xff]
    %v6890 = vld [vmem:[#allocation3 + $0x80] sm:$0xff]
    %v6891 = vld [vmem:[#allocation3 + $0x88] sm:$0xff]
    %v6892 = vld [vmem:[#allocation3 + $0x90] sm:$0xff]
    %v6893 = vld [vmem:[#allocation3 + $0x98] sm:$0xff]
    %v6894 = vld [vmem:[#allocation3 + $0xa0] sm:$0xff]
    %v6895 = vld [vmem:[#allocation3 + $0xa8] sm:$0xff]
    %v6896 = vld [vmem:[#allocation3 + $0xb0] sm:$0xff]
    %v6897 = vld [vmem:[#allocation3 + $0xb8] sm:$0xff]
    %v6898 = vld [vmem:[#allocation3 + $0xc0] sm:$0xff]
    %v6899 = vld [vmem:[#allocation3 + $0xc8] sm:$0xff]
    %v6900 = vld [vmem:[#allocation3 + $0xd0] sm:$0xff]
    %v6901 = vld [vmem:[#allocation3 + $0xd8] sm:$0xff]
    %v6902 = vld [vmem:[#allocation3 + $0xe0] sm:$0xff]
    %v6903 = vld [vmem:[#allocation3 + $0xe8] sm:$0xff]
    %v6904 = vld [vmem:[#allocation3 + $0xf0] sm:$0xff]
    %v6905 = vld [vmem:[#allocation3 + $0xf8] sm:$0xff]
    %v6906 = vld [vmem:[#allocation3 + $0x100] sm:$0xff]
    %v6907 = vld [vmem:[#allocation3 + $0x108] sm:$0xff]
    %v6908 = vld [vmem:[#allocation3 + $0x110] sm:$0xff]
    %v6909 = vld [vmem:[#allocation3 + $0x118] sm:$0xff]
    %v6910 = vld [vmem:[#allocation3 + $0x120] sm:$0xff]
    %v6911 = vld [vmem:[#allocation3 + $0x128] sm:$0xff]
    %v6912 = vld [vmem:[#allocation3 + $0x130] sm:$0xff]
    %v6913 = vld [vmem:[#allocation3 + $0x138] sm:$0xff]
    %v6914 = vld [vmem:[#allocation3 + $0x140] sm:$0xff]
    %v6915 = vld [vmem:[#allocation3 + $0x148] sm:$0xff]
    %v6916 = vld [vmem:[#allocation3 + $0x150] sm:$0xff]
    %v6917 = vld [vmem:[#allocation3 + $0x158] sm:$0xff]
    %v6918 = vld [vmem:[#allocation3 + $0x160] sm:$0xff]
    %v6919 = vld [vmem:[#allocation3 + $0x168] sm:$0xff]
    %v6920 = vld [vmem:[#allocation3 + $0x170] sm:$0xff]
    %v6921 = vld [vmem:[#allocation3 + $0x178] sm:$0xff]
    %v6922 = vld [vmem:[#allocation3 + $0x180] sm:$0x7f]
    %v6924 = vshrl.u32 %v6874, 16
    %v6926 = vrot.slane %v6924, 6
    %v6927 = vshll.u32 %v6874, 16
    %v6929 = vrot.slane %v6927, 7
    %v6930 = vor.u32 %v6926, %v6929
    %v6932 = vshrl.u32 %v6875, 16
    %v6934 = vrot.slane %v6932, 6
    %v6935 = vshll.u32 %v6875, 16
    %v6937 = vrot.slane %v6935, 7
    %v6938 = vor.u32 %v6934, %v6937
    %v6939 = vsel %vm2036, %v6930, %v6938
    %v6941 = vshrl.u32 %v6876, 16
    %v6943 = vrot.slane %v6941, 6
    %v6944 = vshll.u32 %v6876, 16
    %v6946 = vrot.slane %v6944, 7
    %v6947 = vor.u32 %v6943, %v6946
    %v6948 = vsel %vm2036, %v6938, %v6947
    %v6950 = vshrl.u32 %v6877, 16
    %v6952 = vrot.slane %v6950, 6
    %v6953 = vshll.u32 %v6877, 16
    %v6955 = vrot.slane %v6953, 7
    %v6956 = vor.u32 %v6952, %v6955
    %v6957 = vsel %vm2036, %v6947, %v6956
    %v6959 = vshrl.u32 %v6878, 16
    %v6961 = vrot.slane %v6959, 6
    %v6962 = vshll.u32 %v6878, 16
    %v6964 = vrot.slane %v6962, 7
    %v6965 = vor.u32 %v6961, %v6964
    %v6966 = vsel %vm2036, %v6956, %v6965
    %v6968 = vshrl.u32 %v6879, 16
    %v6970 = vrot.slane %v6968, 6
    %v6971 = vshll.u32 %v6879, 16
    %v6973 = vrot.slane %v6971, 7
    %v6974 = vor.u32 %v6970, %v6973
    %v6975 = vsel %vm2036, %v6965, %v6974
    %v6977 = vshrl.u32 %v6880, 16
    %v6979 = vrot.slane %v6977, 6
    %v6980 = vshll.u32 %v6880, 16
    %v6982 = vrot.slane %v6980, 7
    %v6983 = vor.u32 %v6979, %v6982
    %v6984 = vsel %vm2036, %v6974, %v6983
    %v6986 = vshrl.u32 %v6881, 16
    %v6988 = vrot.slane %v6986, 6
    %v6989 = vshll.u32 %v6881, 16
    %v6991 = vrot.slane %v6989, 7
    %v6992 = vor.u32 %v6988, %v6991
    %v6993 = vsel %vm2036, %v6983, %v6992
    %v6995 = vshrl.u32 %v6882, 16
    %v6997 = vrot.slane %v6995, 6
    %v6998 = vshll.u32 %v6882, 16
    %v7000 = vrot.slane %v6998, 7
    %v7001 = vor.u32 %v6997, %v7000
    %v7002 = vsel %vm2036, %v6992, %v7001
    %v7004 = vshrl.u32 %v6883, 16
    %v7006 = vrot.slane %v7004, 6
    %v7007 = vshll.u32 %v6883, 16
    %v7009 = vrot.slane %v7007, 7
    %v7010 = vor.u32 %v7006, %v7009
    %v7011 = vsel %vm2036, %v7001, %v7010
    %v7013 = vshrl.u32 %v6884, 16
    %v7015 = vrot.slane %v7013, 6
    %v7016 = vshll.u32 %v6884, 16
    %v7018 = vrot.slane %v7016, 7
    %v7019 = vor.u32 %v7015, %v7018
    %v7020 = vsel %vm2036, %v7010, %v7019
    %v7022 = vshrl.u32 %v6885, 16
    %v7024 = vrot.slane %v7022, 6
    %v7025 = vshll.u32 %v6885, 16
    %v7027 = vrot.slane %v7025, 7
    %v7028 = vor.u32 %v7024, %v7027
    %v7029 = vsel %vm2036, %v7019, %v7028
    %v7031 = vshrl.u32 %v6886, 16
    %v7033 = vrot.slane %v7031, 6
    %v7034 = vshll.u32 %v6886, 16
    %v7036 = vrot.slane %v7034, 7
    %v7037 = vor.u32 %v7033, %v7036
    %v7038 = vsel %vm2036, %v7028, %v7037
    %v7040 = vshrl.u32 %v6887, 16
    %v7042 = vrot.slane %v7040, 6
    %v7043 = vshll.u32 %v6887, 16
    %v7045 = vrot.slane %v7043, 7
    %v7046 = vor.u32 %v7042, %v7045
    %v7047 = vsel %vm2036, %v7037, %v7046
    %v7049 = vshrl.u32 %v6888, 16
    %v7051 = vrot.slane %v7049, 6
    %v7052 = vshll.u32 %v6888, 16
    %v7054 = vrot.slane %v7052, 7
    %v7055 = vor.u32 %v7051, %v7054
    %v7056 = vsel %vm2036, %v7046, %v7055
    %v7058 = vshrl.u32 %v6889, 16
    %v7060 = vrot.slane %v7058, 6
    %v7061 = vshll.u32 %v6889, 16
    %v7063 = vrot.slane %v7061, 7
    %v7064 = vor.u32 %v7060, %v7063
    %v7065 = vsel %vm2036, %v7055, %v7064
    %v7067 = vshrl.u32 %v6890, 16
    %v7069 = vrot.slane %v7067, 6
    %v7070 = vshll.u32 %v6890, 16
    %v7072 = vrot.slane %v7070, 7
    %v7073 = vor.u32 %v7069, %v7072
    %v7074 = vsel %vm2036, %v7064, %v7073
    %v7076 = vshrl.u32 %v6891, 16
    %v7078 = vrot.slane %v7076, 6
    %v7079 = vshll.u32 %v6891, 16
    %v7081 = vrot.slane %v7079, 7
    %v7082 = vor.u32 %v7078, %v7081
    %v7083 = vsel %vm2036, %v7073, %v7082
    %v7085 = vshrl.u32 %v6892, 16
    %v7087 = vrot.slane %v7085, 6
    %v7088 = vshll.u32 %v6892, 16
    %v7090 = vrot.slane %v7088, 7
    %v7091 = vor.u32 %v7087, %v7090
    %v7092 = vsel %vm2036, %v7082, %v7091
    %v7094 = vshrl.u32 %v6893, 16
    %v7096 = vrot.slane %v7094, 6
    %v7097 = vshll.u32 %v6893, 16
    %v7099 = vrot.slane %v7097, 7
    %v7100 = vor.u32 %v7096, %v7099
    %v7101 = vsel %vm2036, %v7091, %v7100
    %v7103 = vshrl.u32 %v6894, 16
    %v7105 = vrot.slane %v7103, 6
    %v7106 = vshll.u32 %v6894, 16
    %v7108 = vrot.slane %v7106, 7
    %v7109 = vor.u32 %v7105, %v7108
    %v7110 = vsel %vm2036, %v7100, %v7109
    %v7112 = vshrl.u32 %v6895, 16
    %v7114 = vrot.slane %v7112, 6
    %v7115 = vshll.u32 %v6895, 16
    %v7117 = vrot.slane %v7115, 7
    %v7118 = vor.u32 %v7114, %v7117
    %v7119 = vsel %vm2036, %v7109, %v7118
    %v7121 = vshrl.u32 %v6896, 16
    %v7123 = vrot.slane %v7121, 6
    %v7124 = vshll.u32 %v6896, 16
    %v7126 = vrot.slane %v7124, 7
    %v7127 = vor.u32 %v7123, %v7126
    %v7128 = vsel %vm2036, %v7118, %v7127
    %v7130 = vshrl.u32 %v6897, 16
    %v7132 = vrot.slane %v7130, 6
    %v7133 = vshll.u32 %v6897, 16
    %v7135 = vrot.slane %v7133, 7
    %v7136 = vor.u32 %v7132, %v7135
    %v7137 = vsel %vm2036, %v7127, %v7136
    %v7139 = vshrl.u32 %v6898, 16
    %v7141 = vrot.slane %v7139, 6
    %v7142 = vshll.u32 %v6898, 16
    %v7144 = vrot.slane %v7142, 7
    %v7145 = vor.u32 %v7141, %v7144
    %v7146 = vsel %vm2036, %v7136, %v7145
    %v7148 = vshrl.u32 %v6899, 16
    %v7150 = vrot.slane %v7148, 6
    %v7151 = vshll.u32 %v6899, 16
    %v7153 = vrot.slane %v7151, 7
    %v7154 = vor.u32 %v7150, %v7153
    %v7155 = vsel %vm2036, %v7145, %v7154
    %v7157 = vshrl.u32 %v6900, 16
    %v7159 = vrot.slane %v7157, 6
    %v7160 = vshll.u32 %v6900, 16
    %v7162 = vrot.slane %v7160, 7
    %v7163 = vor.u32 %v7159, %v7162
    %v7164 = vsel %vm2036, %v7154, %v7163
    %v7166 = vshrl.u32 %v6901, 16
    %v7168 = vrot.slane %v7166, 6
    %v7169 = vshll.u32 %v6901, 16
    %v7171 = vrot.slane %v7169, 7
    %v7172 = vor.u32 %v7168, %v7171
    %v7173 = vsel %vm2036, %v7163, %v7172
    %v7175 = vshrl.u32 %v6902, 16
    %v7177 = vrot.slane %v7175, 6
    %v7178 = vshll.u32 %v6902, 16
    %v7180 = vrot.slane %v7178, 7
    %v7181 = vor.u32 %v7177, %v7180
    %v7182 = vsel %vm2036, %v7172, %v7181
    %v7184 = vshrl.u32 %v6903, 16
    %v7186 = vrot.slane %v7184, 6
    %v7187 = vshll.u32 %v6903, 16
    %v7189 = vrot.slane %v7187, 7
    %v7190 = vor.u32 %v7186, %v7189
    %v7191 = vsel %vm2036, %v7181, %v7190
    %v7193 = vshrl.u32 %v6904, 16
    %v7195 = vrot.slane %v7193, 6
    %v7196 = vshll.u32 %v6904, 16
    %v7198 = vrot.slane %v7196, 7
    %v7199 = vor.u32 %v7195, %v7198
    %v7200 = vsel %vm2036, %v7190, %v7199
    %v7202 = vshrl.u32 %v6905, 16
    %v7204 = vrot.slane %v7202, 6
    %v7205 = vshll.u32 %v6905, 16
    %v7207 = vrot.slane %v7205, 7
    %v7208 = vor.u32 %v7204, %v7207
    %v7209 = vsel %vm2036, %v7199, %v7208
    %v7211 = vshrl.u32 %v6906, 16
    %v7213 = vrot.slane %v7211, 6
    %v7214 = vshll.u32 %v6906, 16
    %v7216 = vrot.slane %v7214, 7
    %v7217 = vor.u32 %v7213, %v7216
    %v7218 = vsel %vm2036, %v7208, %v7217
    %v7220 = vshrl.u32 %v6907, 16
    %v7222 = vrot.slane %v7220, 6
    %v7223 = vshll.u32 %v6907, 16
    %v7225 = vrot.slane %v7223, 7
    %v7226 = vor.u32 %v7222, %v7225
    %v7227 = vsel %vm2036, %v7217, %v7226
    %v7229 = vshrl.u32 %v6908, 16
    %v7231 = vrot.slane %v7229, 6
    %v7232 = vshll.u32 %v6908, 16
    %v7234 = vrot.slane %v7232, 7
    %v7235 = vor.u32 %v7231, %v7234
    %v7236 = vsel %vm2036, %v7226, %v7235
    %v7238 = vshrl.u32 %v6909, 16
    %v7240 = vrot.slane %v7238, 6
    %v7241 = vshll.u32 %v6909, 16
    %v7243 = vrot.slane %v7241, 7
    %v7244 = vor.u32 %v7240, %v7243
    %v7245 = vsel %vm2036, %v7235, %v7244
    %v7247 = vshrl.u32 %v6910, 16
    %v7249 = vrot.slane %v7247, 6
    %v7250 = vshll.u32 %v6910, 16
    %v7252 = vrot.slane %v7250, 7
    %v7253 = vor.u32 %v7249, %v7252
    %v7254 = vsel %vm2036, %v7244, %v7253
    %v7256 = vshrl.u32 %v6911, 16
    %v7258 = vrot.slane %v7256, 6
    %v7259 = vshll.u32 %v6911, 16
    %v7261 = vrot.slane %v7259, 7
    %v7262 = vor.u32 %v7258, %v7261
    %v7263 = vsel %vm2036, %v7253, %v7262
    %v7265 = vshrl.u32 %v6912, 16
    %v7267 = vrot.slane %v7265, 6
    %v7268 = vshll.u32 %v6912, 16
    %v7270 = vrot.slane %v7268, 7
    %v7271 = vor.u32 %v7267, %v7270
    %v7272 = vsel %vm2036, %v7262, %v7271
    %v7274 = vshrl.u32 %v6913, 16
    %v7276 = vrot.slane %v7274, 6
    %v7277 = vshll.u32 %v6913, 16
    %v7279 = vrot.slane %v7277, 7
    %v7280 = vor.u32 %v7276, %v7279
    %v7281 = vsel %vm2036, %v7271, %v7280
    %v7283 = vshrl.u32 %v6914, 16
    %v7285 = vrot.slane %v7283, 6
    %v7286 = vshll.u32 %v6914, 16
    %v7288 = vrot.slane %v7286, 7
    %v7289 = vor.u32 %v7285, %v7288
    %v7290 = vsel %vm2036, %v7280, %v7289
    %v7292 = vshrl.u32 %v6915, 16
    %v7294 = vrot.slane %v7292, 6
    %v7295 = vshll.u32 %v6915, 16
    %v7297 = vrot.slane %v7295, 7
    %v7298 = vor.u32 %v7294, %v7297
    %v7299 = vsel %vm2036, %v7289, %v7298
    %v7301 = vshrl.u32 %v6916, 16
    %v7303 = vrot.slane %v7301, 6
    %v7304 = vshll.u32 %v6916, 16
    %v7306 = vrot.slane %v7304, 7
    %v7307 = vor.u32 %v7303, %v7306
    %v7308 = vsel %vm2036, %v7298, %v7307
    %v7310 = vshrl.u32 %v6917, 16
    %v7312 = vrot.slane %v7310, 6
    %v7313 = vshll.u32 %v6917, 16
    %v7315 = vrot.slane %v7313, 7
    %v7316 = vor.u32 %v7312, %v7315
    %v7317 = vsel %vm2036, %v7307, %v7316
    %v7319 = vshrl.u32 %v6918, 16
    %v7321 = vrot.slane %v7319, 6
    %v7322 = vshll.u32 %v6918, 16
    %v7324 = vrot.slane %v7322, 7
    %v7325 = vor.u32 %v7321, %v7324
    %v7326 = vsel %vm2036, %v7316, %v7325
    %v7328 = vshrl.u32 %v6919, 16
    %v7330 = vrot.slane %v7328, 6
    %v7331 = vshll.u32 %v6919, 16
    %v7333 = vrot.slane %v7331, 7
    %v7334 = vor.u32 %v7330, %v7333
    %v7335 = vsel %vm2036, %v7325, %v7334
    %v7337 = vshrl.u32 %v6920, 16
    %v7339 = vrot.slane %v7337, 6
    %v7340 = vshll.u32 %v6920, 16
    %v7342 = vrot.slane %v7340, 7
    %v7343 = vor.u32 %v7339, %v7342
    %v7344 = vsel %vm2036, %v7334, %v7343
    %v7346 = vshrl.u32 %v6921, 16
    %v7348 = vrot.slane %v7346, 6
    %v7349 = vshll.u32 %v6921, 16
    %v7351 = vrot.slane %v7349, 7
    %v7352 = vor.u32 %v7348, %v7351
    %v7353 = vsel %vm2036, %v7343, %v7352
    %v7355 = vshrl.u32 %v6922, 16
    %v7357 = vrot.slane %v7355, 6
    %v7358 = vshll.u32 %v6922, 16
    %v7360 = vrot.slane %v7358, 7
    %v7361 = vor.u32 %v7357, %v7360
    %v7362 = vsel %vm2036, %v7352, %v7361
    %7411 = vst.msk [vmem:[#allocation4 + $0x8] sm:$0xff] %vm5321, %v6939
    %7412 = vst.msk [vmem:[#allocation4 + $0x20] sm:$0xff] %vm5321, %v6948
    %7413 = vst.msk [vmem:[#allocation4 + $0x38] sm:$0xff] %vm5321, %v6957
    %7414 = vst.msk [vmem:[#allocation4 + $0x50] sm:$0xff] %vm5321, %v6966
    %7415 = vst.msk [vmem:[#allocation4 + $0x68] sm:$0xff] %vm5321, %v6975
    %7416 = vst.msk [vmem:[#allocation4 + $0x80] sm:$0xff] %vm5321, %v6984
    %7417 = vst.msk [vmem:[#allocation4 + $0x98] sm:$0xff] %vm5321, %v6993
    %7418 = vst.msk [vmem:[#allocation4 + $0xb0] sm:$0xff] %vm5321, %v7002
    %7419 = vst.msk [vmem:[#allocation4 + $0xc8] sm:$0xff] %vm5321, %v7011
    %7420 = vst.msk [vmem:[#allocation4 + $0xe0] sm:$0xff] %vm5321, %v7020
    %7421 = vst.msk [vmem:[#allocation4 + $0xf8] sm:$0xff] %vm5321, %v7029
    %7422 = vst.msk [vmem:[#allocation4 + $0x110] sm:$0xff] %vm5321, %v7038
    %7423 = vst.msk [vmem:[#allocation4 + $0x128] sm:$0xff] %vm5321, %v7047
    %7424 = vst.msk [vmem:[#allocation4 + $0x140] sm:$0xff] %vm5321, %v7056
    %7425 = vst.msk [vmem:[#allocation4 + $0x158] sm:$0xff] %vm5321, %v7065
    %7426 = vst.msk [vmem:[#allocation4 + $0x170] sm:$0xff] %vm5321, %v7074
    %7427 = vst.msk [vmem:[#allocation4 + $0x188] sm:$0xff] %vm5321, %v7083
    %7428 = vst.msk [vmem:[#allocation4 + $0x1a0] sm:$0xff] %vm5321, %v7092
    %7429 = vst.msk [vmem:[#allocation4 + $0x1b8] sm:$0xff] %vm5321, %v7101
    %7430 = vst.msk [vmem:[#allocation4 + $0x1d0] sm:$0xff] %vm5321, %v7110
    %7431 = vst.msk [vmem:[#allocation4 + $0x1e8] sm:$0xff] %vm5321, %v7119
    %7432 = vst.msk [vmem:[#allocation4 + $0x200] sm:$0xff] %vm5321, %v7128
    %7433 = vst.msk [vmem:[#allocation4 + $0x218] sm:$0xff] %vm5321, %v7137
    %7434 = vst.msk [vmem:[#allocation4 + $0x230] sm:$0xff] %vm5321, %v7146
    %7435 = vst.msk [vmem:[#allocation4 + $0x248] sm:$0xff] %vm5321, %v7155
    %7436 = vst.msk [vmem:[#allocation4 + $0x260] sm:$0xff] %vm5321, %v7164
    %7437 = vst.msk [vmem:[#allocation4 + $0x278] sm:$0xff] %vm5321, %v7173
    %7438 = vst.msk [vmem:[#allocation4 + $0x290] sm:$0xff] %vm5321, %v7182
    %7439 = vst.msk [vmem:[#allocation4 + $0x2a8] sm:$0xff] %vm5321, %v7191
    %7440 = vst.msk [vmem:[#allocation4 + $0x2c0] sm:$0xff] %vm5321, %v7200
    %7441 = vst.msk [vmem:[#allocation4 + $0x2d8] sm:$0xff] %vm5321, %v7209
    %7442 = vst.msk [vmem:[#allocation4 + $0x2f0] sm:$0xff] %vm5321, %v7218
    %7443 = vst.msk [vmem:[#allocation4 + $0x308] sm:$0xff] %vm5321, %v7227
    %7444 = vst.msk [vmem:[#allocation4 + $0x320] sm:$0xff] %vm5321, %v7236
    %7445 = vst.msk [vmem:[#allocation4 + $0x338] sm:$0xff] %vm5321, %v7245
    %7446 = vst.msk [vmem:[#allocation4 + $0x350] sm:$0xff] %vm5321, %v7254
    %7447 = vst.msk [vmem:[#allocation4 + $0x368] sm:$0xff] %vm5321, %v7263
    %7448 = vst.msk [vmem:[#allocation4 + $0x380] sm:$0xff] %vm5321, %v7272
    %7449 = vst.msk [vmem:[#allocation4 + $0x398] sm:$0xff] %vm5321, %v7281
    %7450 = vst.msk [vmem:[#allocation4 + $0x3b0] sm:$0xff] %vm5321, %v7290
    %7451 = vst.msk [vmem:[#allocation4 + $0x3c8] sm:$0xff] %vm5321, %v7299
    %7452 = vst.msk [vmem:[#allocation4 + $0x3e0] sm:$0xff] %vm5321, %v7308
    %7453 = vst.msk [vmem:[#allocation4 + $0x3f8] sm:$0xff] %vm5321, %v7317
    %7454 = vst.msk [vmem:[#allocation4 + $0x410] sm:$0xff] %vm5321, %v7326
    %7455 = vst.msk [vmem:[#allocation4 + $0x428] sm:$0xff] %vm5321, %v7335
    %7456 = vst.msk [vmem:[#allocation4 + $0x440] sm:$0xff] %vm5321, %v7344
    %7457 = vst.msk [vmem:[#allocation4 + $0x458] sm:$0xff] %vm5321, %v7353
    %7458 = vst.msk [vmem:[#allocation4 + $0x470] sm:$0xff] %vm5321, %v7362
    %v7459 = vld [vmem:[#allocation3] sm:$0x80]
    %v7460 = vld [vmem:[#allocation3 + $0x8] sm:$0xff]
    %v7461 = vld [vmem:[#allocation3 + $0x10] sm:$0xff]
    %v7462 = vld [vmem:[#allocation3 + $0x18] sm:$0xff]
    %v7463 = vld [vmem:[#allocation3 + $0x20] sm:$0xff]
    %v7464 = vld [vmem:[#allocation3 + $0x28] sm:$0xff]
    %v7465 = vld [vmem:[#allocation3 + $0x30] sm:$0xff]
    %v7466 = vld [vmem:[#allocation3 + $0x38] sm:$0xff]
    %v7467 = vld [vmem:[#allocation3 + $0x40] sm:$0xff]
    %v7468 = vld [vmem:[#allocation3 + $0x48] sm:$0xff]
    %v7469 = vld [vmem:[#allocation3 + $0x50] sm:$0xff]
    %v7470 = vld [vmem:[#allocation3 + $0x58] sm:$0xff]
    %v7471 = vld [vmem:[#allocation3 + $0x60] sm:$0xff]
    %v7472 = vld [vmem:[#allocation3 + $0x68] sm:$0xff]
    %v7473 = vld [vmem:[#allocation3 + $0x70] sm:$0xff]
    %v7474 = vld [vmem:[#allocation3 + $0x78] sm:$0xff]
    %v7475 = vld [vmem:[#allocation3 + $0x80] sm:$0xff]
    %v7476 = vld [vmem:[#allocation3 + $0x88] sm:$0xff]
    %v7477 = vld [vmem:[#allocation3 + $0x90] sm:$0xff]
    %v7478 = vld [vmem:[#allocation3 + $0x98] sm:$0xff]
    %v7479 = vld [vmem:[#allocation3 + $0xa0] sm:$0xff]
    %v7480 = vld [vmem:[#allocation3 + $0xa8] sm:$0xff]
    %v7481 = vld [vmem:[#allocation3 + $0xb0] sm:$0xff]
    %v7482 = vld [vmem:[#allocation3 + $0xb8] sm:$0xff]
    %v7483 = vld [vmem:[#allocation3 + $0xc0] sm:$0xff]
    %v7484 = vld [vmem:[#allocation3 + $0xc8] sm:$0xff]
    %v7485 = vld [vmem:[#allocation3 + $0xd0] sm:$0xff]
    %v7486 = vld [vmem:[#allocation3 + $0xd8] sm:$0xff]
    %v7487 = vld [vmem:[#allocation3 + $0xe0] sm:$0xff]
    %v7488 = vld [vmem:[#allocation3 + $0xe8] sm:$0xff]
    %v7489 = vld [vmem:[#allocation3 + $0xf0] sm:$0xff]
    %v7490 = vld [vmem:[#allocation3 + $0xf8] sm:$0xff]
    %v7491 = vld [vmem:[#allocation3 + $0x100] sm:$0xff]
    %v7492 = vld [vmem:[#allocation3 + $0x108] sm:$0xff]
    %v7493 = vld [vmem:[#allocation3 + $0x110] sm:$0xff]
    %v7494 = vld [vmem:[#allocation3 + $0x118] sm:$0xff]
    %v7495 = vld [vmem:[#allocation3 + $0x120] sm:$0xff]
    %v7496 = vld [vmem:[#allocation3 + $0x128] sm:$0xff]
    %v7497 = vld [vmem:[#allocation3 + $0x130] sm:$0xff]
    %v7498 = vld [vmem:[#allocation3 + $0x138] sm:$0xff]
    %v7499 = vld [vmem:[#allocation3 + $0x140] sm:$0xff]
    %v7500 = vld [vmem:[#allocation3 + $0x148] sm:$0xff]
    %v7501 = vld [vmem:[#allocation3 + $0x150] sm:$0xff]
    %v7502 = vld [vmem:[#allocation3 + $0x158] sm:$0xff]
    %v7503 = vld [vmem:[#allocation3 + $0x160] sm:$0xff]
    %v7504 = vld [vmem:[#allocation3 + $0x168] sm:$0xff]
    %v7505 = vld [vmem:[#allocation3 + $0x170] sm:$0xff]
    %v7506 = vld [vmem:[#allocation3 + $0x178] sm:$0xff]
    %v7507 = vld [vmem:[#allocation3 + $0x180] sm:$0x7f]
    %v7557 = vrot.slane %v7459, 7
    %v7558 = vrot.slane %v7460, 7
    %v7559 = vsel %vm2768, %v7557, %v7558
    %v7560 = vrot.slane %v7461, 7
    %v7561 = vsel %vm2768, %v7558, %v7560
    %v7562 = vrot.slane %v7462, 7
    %v7563 = vsel %vm2768, %v7560, %v7562
    %v7564 = vrot.slane %v7463, 7
    %v7565 = vsel %vm2768, %v7562, %v7564
    %v7566 = vrot.slane %v7464, 7
    %v7567 = vsel %vm2768, %v7564, %v7566
    %v7568 = vrot.slane %v7465, 7
    %v7569 = vsel %vm2768, %v7566, %v7568
    %v7570 = vrot.slane %v7466, 7
    %v7571 = vsel %vm2768, %v7568, %v7570
    %v7572 = vrot.slane %v7467, 7
    %v7573 = vsel %vm2768, %v7570, %v7572
    %v7574 = vrot.slane %v7468, 7
    %v7575 = vsel %vm2768, %v7572, %v7574
    %v7576 = vrot.slane %v7469, 7
    %v7577 = vsel %vm2768, %v7574, %v7576
    %v7578 = vrot.slane %v7470, 7
    %v7579 = vsel %vm2768, %v7576, %v7578
    %v7580 = vrot.slane %v7471, 7
    %v7581 = vsel %vm2768, %v7578, %v7580
    %v7582 = vrot.slane %v7472, 7
    %v7583 = vsel %vm2768, %v7580, %v7582
    %v7584 = vrot.slane %v7473, 7
    %v7585 = vsel %vm2768, %v7582, %v7584
    %v7586 = vrot.slane %v7474, 7
    %v7587 = vsel %vm2768, %v7584, %v7586
    %v7588 = vrot.slane %v7475, 7
    %v7589 = vsel %vm2768, %v7586, %v7588
    %v7590 = vrot.slane %v7476, 7
    %v7591 = vsel %vm2768, %v7588, %v7590
    %v7592 = vrot.slane %v7477, 7
    %v7593 = vsel %vm2768, %v7590, %v7592
    %v7594 = vrot.slane %v7478, 7
    %v7595 = vsel %vm2768, %v7592, %v7594
    %v7596 = vrot.slane %v7479, 7
    %v7597 = vsel %vm2768, %v7594, %v7596
    %v7598 = vrot.slane %v7480, 7
    %v7599 = vsel %vm2768, %v7596, %v7598
    %v7600 = vrot.slane %v7481, 7
    %v7601 = vsel %vm2768, %v7598, %v7600
    %v7602 = vrot.slane %v7482, 7
    %v7603 = vsel %vm2768, %v7600, %v7602
    %v7604 = vrot.slane %v7483, 7
    %v7605 = vsel %vm2768, %v7602, %v7604
    %v7606 = vrot.slane %v7484, 7
    %v7607 = vsel %vm2768, %v7604, %v7606
    %v7608 = vrot.slane %v7485, 7
    %v7609 = vsel %vm2768, %v7606, %v7608
    %v7610 = vrot.slane %v7486, 7
    %v7611 = vsel %vm2768, %v7608, %v7610
    %v7612 = vrot.slane %v7487, 7
    %v7613 = vsel %vm2768, %v7610, %v7612
    %v7614 = vrot.slane %v7488, 7
    %v7615 = vsel %vm2768, %v7612, %v7614
    %v7616 = vrot.slane %v7489, 7
    %v7617 = vsel %vm2768, %v7614, %v7616
    %v7618 = vrot.slane %v7490, 7
    %v7619 = vsel %vm2768, %v7616, %v7618
    %v7620 = vrot.slane %v7491, 7
    %v7621 = vsel %vm2768, %v7618, %v7620
    %v7622 = vrot.slane %v7492, 7
    %v7623 = vsel %vm2768, %v7620, %v7622
    %v7624 = vrot.slane %v7493, 7
    %v7625 = vsel %vm2768, %v7622, %v7624
    %v7626 = vrot.slane %v7494, 7
    %v7627 = vsel %vm2768, %v7624, %v7626
    %v7628 = vrot.slane %v7495, 7
    %v7629 = vsel %vm2768, %v7626, %v7628
    %v7630 = vrot.slane %v7496, 7
    %v7631 = vsel %vm2768, %v7628, %v7630
    %v7632 = vrot.slane %v7497, 7
    %v7633 = vsel %vm2768, %v7630, %v7632
    %v7634 = vrot.slane %v7498, 7
    %v7635 = vsel %vm2768, %v7632, %v7634
    %v7636 = vrot.slane %v7499, 7
    %v7637 = vsel %vm2768, %v7634, %v7636
    %v7638 = vrot.slane %v7500, 7
    %v7639 = vsel %vm2768, %v7636, %v7638
    %v7640 = vrot.slane %v7501, 7
    %v7641 = vsel %vm2768, %v7638, %v7640
    %v7642 = vrot.slane %v7502, 7
    %v7643 = vsel %vm2768, %v7640, %v7642
    %v7644 = vrot.slane %v7503, 7
    %v7645 = vsel %vm2768, %v7642, %v7644
    %v7646 = vrot.slane %v7504, 7
    %v7647 = vsel %vm2768, %v7644, %v7646
    %v7648 = vrot.slane %v7505, 7
    %v7649 = vsel %vm2768, %v7646, %v7648
    %v7650 = vrot.slane %v7506, 7
    %v7651 = vsel %vm2768, %v7648, %v7650
    %v7652 = vrot.slane %v7507, 7
    %v7653 = vsel %vm2768, %v7650, %v7652
    %7654 = vrot.lane.b32.xlu0 %v7559, 32
    %v7655 = vpop.permute.xlu0 %7654
    %7656 = vrot.lane.b32.xlu0 %v7561, 32
    %v7657 = vpop.permute.xlu0 %7656
    %7658 = vrot.lane.b32.xlu0 %v7563, 32
    %v7659 = vpop.permute.xlu0 %7658
    %7660 = vrot.lane.b32.xlu0 %v7565, 32
    %v7661 = vpop.permute.xlu0 %7660
    %7662 = vrot.lane.b32.xlu0 %v7567, 32
    %v7663 = vpop.permute.xlu0 %7662
    %7664 = vrot.lane.b32.xlu0 %v7569, 32
    %v7665 = vpop.permute.xlu0 %7664
    %7666 = vrot.lane.b32.xlu0 %v7571, 32
    %v7667 = vpop.permute.xlu0 %7666
    %7668 = vrot.lane.b32.xlu0 %v7573, 32
    %v7669 = vpop.permute.xlu0 %7668
    %7670 = vrot.lane.b32.xlu0 %v7575, 32
    %v7671 = vpop.permute.xlu0 %7670
    %7672 = vrot.lane.b32.xlu0 %v7577, 32
    %v7673 = vpop.permute.xlu0 %7672
    %7674 = vrot.lane.b32.xlu0 %v7579, 32
    %v7675 = vpop.permute.xlu0 %7674
    %7676 = vrot.lane.b32.xlu0 %v7581, 32
    %v7677 = vpop.permute.xlu0 %7676
    %7678 = vrot.lane.b32.xlu0 %v7583, 32
    %v7679 = vpop.permute.xlu0 %7678
    %7680 = vrot.lane.b32.xlu0 %v7585, 32
    %v7681 = vpop.permute.xlu0 %7680
    %7682 = vrot.lane.b32.xlu0 %v7587, 32
    %v7683 = vpop.permute.xlu0 %7682
    %7684 = vrot.lane.b32.xlu0 %v7589, 32
    %v7685 = vpop.permute.xlu0 %7684
    %7686 = vrot.lane.b32.xlu0 %v7591, 32
    %v7687 = vpop.permute.xlu0 %7686
    %7688 = vrot.lane.b32.xlu0 %v7593, 32
    %v7689 = vpop.permute.xlu0 %7688
    %7690 = vrot.lane.b32.xlu0 %v7595, 32
    %v7691 = vpop.permute.xlu0 %7690
    %7692 = vrot.lane.b32.xlu0 %v7597, 32
    %v7693 = vpop.permute.xlu0 %7692
    %7694 = vrot.lane.b32.xlu0 %v7599, 32
    %v7695 = vpop.permute.xlu0 %7694
    %7696 = vrot.lane.b32.xlu0 %v7601, 32
    %v7697 = vpop.permute.xlu0 %7696
    %7698 = vrot.lane.b32.xlu0 %v7603, 32
    %v7699 = vpop.permute.xlu0 %7698
    %7700 = vrot.lane.b32.xlu0 %v7605, 32
    %v7701 = vpop.permute.xlu0 %7700
    %7702 = vrot.lane.b32.xlu0 %v7607, 32
    %v7703 = vpop.permute.xlu0 %7702
    %7704 = vrot.lane.b32.xlu0 %v7609, 32
    %v7705 = vpop.permute.xlu0 %7704
    %7706 = vrot.lane.b32.xlu0 %v7611, 32
    %v7707 = vpop.permute.xlu0 %7706
    %7708 = vrot.lane.b32.xlu0 %v7613, 32
    %v7709 = vpop.permute.xlu0 %7708
    %7710 = vrot.lane.b32.xlu0 %v7615, 32
    %v7711 = vpop.permute.xlu0 %7710
    %7712 = vrot.lane.b32.xlu0 %v7617, 32
    %v7713 = vpop.permute.xlu0 %7712
    %7714 = vrot.lane.b32.xlu0 %v7619, 32
    %v7715 = vpop.permute.xlu0 %7714
    %7716 = vrot.lane.b32.xlu0 %v7621, 32
    %v7717 = vpop.permute.xlu0 %7716
    %7718 = vrot.lane.b32.xlu0 %v7623, 32
    %v7719 = vpop.permute.xlu0 %7718
    %7720 = vrot.lane.b32.xlu0 %v7625, 32
    %v7721 = vpop.permute.xlu0 %7720
    %7722 = vrot.lane.b32.xlu0 %v7627, 32
    %v7723 = vpop.permute.xlu0 %7722
    %7724 = vrot.lane.b32.xlu0 %v7629, 32
    %v7725 = vpop.permute.xlu0 %7724
    %7726 = vrot.lane.b32.xlu0 %v7631, 32
    %v7727 = vpop.permute.xlu0 %7726
    %7728 = vrot.lane.b32.xlu0 %v7633, 32
    %v7729 = vpop.permute.xlu0 %7728
    %7730 = vrot.lane.b32.xlu0 %v7635, 32
    %v7731 = vpop.permute.xlu0 %7730
    %7732 = vrot.lane.b32.xlu0 %v7637, 32
    %v7733 = vpop.permute.xlu0 %7732
    %7734 = vrot.lane.b32.xlu0 %v7639, 32
    %v7735 = vpop.permute.xlu0 %7734
    %7736 = vrot.lane.b32.xlu0 %v7641, 32
    %v7737 = vpop.permute.xlu0 %7736
    %7738 = vrot.lane.b32.xlu0 %v7643, 32
    %v7739 = vpop.permute.xlu0 %7738
    %7740 = vrot.lane.b32.xlu0 %v7645, 32
    %v7741 = vpop.permute.xlu0 %7740
    %7742 = vrot.lane.b32.xlu0 %v7647, 32
    %v7743 = vpop.permute.xlu0 %7742
    %7744 = vrot.lane.b32.xlu0 %v7649, 32
    %v7745 = vpop.permute.xlu0 %7744
    %7746 = vrot.lane.b32.xlu0 %v7651, 32
    %v7747 = vpop.permute.xlu0 %7746
    %7748 = vrot.lane.b32.xlu0 %v7653, 32
    %v7749 = vpop.permute.xlu0 %7748
    %7798 = vst.msk [vmem:[#allocation4 + $0x8] sm:$0xff] %vm6049, %v7655
    %7799 = vst.msk [vmem:[#allocation4 + $0x20] sm:$0xff] %vm6049, %v7657
    %7800 = vst.msk [vmem:[#allocation4 + $0x38] sm:$0xff] %vm6049, %v7659
    %7801 = vst.msk [vmem:[#allocation4 + $0x50] sm:$0xff] %vm6049, %v7661
    %7802 = vst.msk [vmem:[#allocation4 + $0x68] sm:$0xff] %vm6049, %v7663
    %7803 = vst.msk [vmem:[#allocation4 + $0x80] sm:$0xff] %vm6049, %v7665
    %7804 = vst.msk [vmem:[#allocation4 + $0x98] sm:$0xff] %vm6049, %v7667
    %7805 = vst.msk [vmem:[#allocation4 + $0xb0] sm:$0xff] %vm6049, %v7669
    %7806 = vst.msk [vmem:[#allocation4 + $0xc8] sm:$0xff] %vm6049, %v7671
    %7807 = vst.msk [vmem:[#allocation4 + $0xe0] sm:$0xff] %vm6049, %v7673
    %7808 = vst.msk [vmem:[#allocation4 + $0xf8] sm:$0xff] %vm6049, %v7675
    %7809 = vst.msk [vmem:[#allocation4 + $0x110] sm:$0xff] %vm6049, %v7677
    %7810 = vst.msk [vmem:[#allocation4 + $0x128] sm:$0xff] %vm6049, %v7679
    %7811 = vst.msk [vmem:[#allocation4 + $0x140] sm:$0xff] %vm6049, %v7681
    %7812 = vst.msk [vmem:[#allocation4 + $0x158] sm:$0xff] %vm6049, %v7683
    %7813 = vst.msk [vmem:[#allocation4 + $0x170] sm:$0xff] %vm6049, %v7685
    %7814 = vst.msk [vmem:[#allocation4 + $0x188] sm:$0xff] %vm6049, %v7687
    %7815 = vst.msk [vmem:[#allocation4 + $0x1a0] sm:$0xff] %vm6049, %v7689
    %7816 = vst.msk [vmem:[#allocation4 + $0x1b8] sm:$0xff] %vm6049, %v7691
    %7817 = vst.msk [vmem:[#allocation4 + $0x1d0] sm:$0xff] %vm6049, %v7693
    %7818 = vst.msk [vmem:[#allocation4 + $0x1e8] sm:$0xff] %vm6049, %v7695
    %7819 = vst.msk [vmem:[#allocation4 + $0x200] sm:$0xff] %vm6049, %v7697
    %7820 = vst.msk [vmem:[#allocation4 + $0x218] sm:$0xff] %vm6049, %v7699
    %7821 = vst.msk [vmem:[#allocation4 + $0x230] sm:$0xff] %vm6049, %v7701
    %7822 = vst.msk [vmem:[#allocation4 + $0x248] sm:$0xff] %vm6049, %v7703
    %7823 = vst.msk [vmem:[#allocation4 + $0x260] sm:$0xff] %vm6049, %v7705
    %7824 = vst.msk [vmem:[#allocation4 + $0x278] sm:$0xff] %vm6049, %v7707
    %7825 = vst.msk [vmem:[#allocation4 + $0x290] sm:$0xff] %vm6049, %v7709
    %7826 = vst.msk [vmem:[#allocation4 + $0x2a8] sm:$0xff] %vm6049, %v7711
    %7827 = vst.msk [vmem:[#allocation4 + $0x2c0] sm:$0xff] %vm6049, %v7713
    %7828 = vst.msk [vmem:[#allocation4 + $0x2d8] sm:$0xff] %vm6049, %v7715
    %7829 = vst.msk [vmem:[#allocation4 + $0x2f0] sm:$0xff] %vm6049, %v7717
    %7830 = vst.msk [vmem:[#allocation4 + $0x308] sm:$0xff] %vm6049, %v7719
    %7831 = vst.msk [vmem:[#allocation4 + $0x320] sm:$0xff] %vm6049, %v7721
    %7832 = vst.msk [vmem:[#allocation4 + $0x338] sm:$0xff] %vm6049, %v7723
    %7833 = vst.msk [vmem:[#allocation4 + $0x350] sm:$0xff] %vm6049, %v7725
    %7834 = vst.msk [vmem:[#allocation4 + $0x368] sm:$0xff] %vm6049, %v7727
    %7835 = vst.msk [vmem:[#allocation4 + $0x380] sm:$0xff] %vm6049, %v7729
    %7836 = vst.msk [vmem:[#allocation4 + $0x398] sm:$0xff] %vm6049, %v7731
    %7837 = vst.msk [vmem:[#allocation4 + $0x3b0] sm:$0xff] %vm6049, %v7733
    %7838 = vst.msk [vmem:[#allocation4 + $0x3c8] sm:$0xff] %vm6049, %v7735
    %7839 = vst.msk [vmem:[#allocation4 + $0x3e0] sm:$0xff] %vm6049, %v7737
    %7840 = vst.msk [vmem:[#allocation4 + $0x3f8] sm:$0xff] %vm6049, %v7739
    %7841 = vst.msk [vmem:[#allocation4 + $0x410] sm:$0xff] %vm6049, %v7741
    %7842 = vst.msk [vmem:[#allocation4 + $0x428] sm:$0xff] %vm6049, %v7743
    %7843 = vst.msk [vmem:[#allocation4 + $0x440] sm:$0xff] %vm6049, %v7745
    %7844 = vst.msk [vmem:[#allocation4 + $0x458] sm:$0xff] %vm6049, %v7747
    %7845 = vst.msk [vmem:[#allocation4 + $0x470] sm:$0xff] %vm6049, %v7749
    %v7846 = vld [vmem:[#allocation3 + $0x8] sm:$0xf0]
    %v7847 = vld [vmem:[#allocation3 + $0x10] sm:$0xff]
    %v7848 = vld [vmem:[#allocation3 + $0x18] sm:$0xff]
    %v7849 = vld [vmem:[#allocation3 + $0x20] sm:$0xff]
    %v7850 = vld [vmem:[#allocation3 + $0x28] sm:$0xff]
    %v7851 = vld [vmem:[#allocation3 + $0x30] sm:$0xff]
    %v7852 = vld [vmem:[#allocation3 + $0x38] sm:$0xff]
    %v7853 = vld [vmem:[#allocation3 + $0x40] sm:$0xff]
    %v7854 = vld [vmem:[#allocation3 + $0x48] sm:$0xff]
    %v7855 = vld [vmem:[#allocation3 + $0x50] sm:$0xff]
    %v7856 = vld [vmem:[#allocation3 + $0x58] sm:$0xff]
    %v7857 = vld [vmem:[#allocation3 + $0x60] sm:$0xff]
    %v7858 = vld [vmem:[#allocation3 + $0x68] sm:$0xff]
    %v7859 = vld [vmem:[#allocation3 + $0x70] sm:$0xff]
    %v7860 = vld [vmem:[#allocation3 + $0x78] sm:$0xff]
    %v7861 = vld [vmem:[#allocation3 + $0x80] sm:$0xff]
    %v7862 = vld [vmem:[#allocation3 + $0x88] sm:$0xff]
    %v7863 = vld [vmem:[#allocation3 + $0x90] sm:$0xff]
    %v7864 = vld [vmem:[#allocation3 + $0x98] sm:$0xff]
    %v7865 = vld [vmem:[#allocation3 + $0xa0] sm:$0xff]
    %v7866 = vld [vmem:[#allocation3 + $0xa8] sm:$0xff]
    %v7867 = vld [vmem:[#allocation3 + $0xb0] sm:$0xff]
    %v7868 = vld [vmem:[#allocation3 + $0xb8] sm:$0xff]
    %v7869 = vld [vmem:[#allocation3 + $0xc0] sm:$0xff]
    %v7870 = vld [vmem:[#allocation3 + $0xc8] sm:$0xff]
    %v7871 = vld [vmem:[#allocation3 + $0xd0] sm:$0xff]
    %v7872 = vld [vmem:[#allocation3 + $0xd8] sm:$0xff]
    %v7873 = vld [vmem:[#allocation3 + $0xe0] sm:$0xff]
    %v7874 = vld [vmem:[#allocation3 + $0xe8] sm:$0xff]
    %v7875 = vld [vmem:[#allocation3 + $0xf0] sm:$0xff]
    %v7876 = vld [vmem:[#allocation3 + $0xf8] sm:$0xff]
    %v7877 = vld [vmem:[#allocation3 + $0x100] sm:$0xff]
    %v7878 = vld [vmem:[#allocation3 + $0x108] sm:$0xff]
    %v7879 = vld [vmem:[#allocation3 + $0x110] sm:$0xff]
    %v7880 = vld [vmem:[#allocation3 + $0x118] sm:$0xff]
    %v7881 = vld [vmem:[#allocation3 + $0x120] sm:$0xff]
    %v7882 = vld [vmem:[#allocation3 + $0x128] sm:$0xff]
    %v7883 = vld [vmem:[#allocation3 + $0x130] sm:$0xff]
    %v7884 = vld [vmem:[#allocation3 + $0x138] sm:$0xff]
    %v7885 = vld [vmem:[#allocation3 + $0x140] sm:$0xff]
    %v7886 = vld [vmem:[#allocation3 + $0x148] sm:$0xff]
    %v7887 = vld [vmem:[#allocation3 + $0x150] sm:$0xff]
    %v7888 = vld [vmem:[#allocation3 + $0x158] sm:$0xff]
    %v7889 = vld [vmem:[#allocation3 + $0x160] sm:$0xff]
    %v7890 = vld [vmem:[#allocation3 + $0x168] sm:$0xff]
    %v7891 = vld [vmem:[#allocation3 + $0x170] sm:$0xff]
    %v7892 = vld [vmem:[#allocation3 + $0x178] sm:$0xff]
    %v7893 = vld [vmem:[#allocation3 + $0x180] sm:$0xff]
    %v7894 = vld [vmem:[#allocation3 + $0x188] sm:$0xf]
    %v7944 = vrot.slane %v7846, 4
    %v7945 = vrot.slane %v7847, 4
    %v7946 = vsel %vm3157, %v7944, %v7945
    %v7947 = vrot.slane %v7848, 4
    %v7948 = vsel %vm3157, %v7945, %v7947
    %v7949 = vrot.slane %v7849, 4
    %v7950 = vsel %vm3157, %v7947, %v7949
    %v7951 = vrot.slane %v7850, 4
    %v7952 = vsel %vm3157, %v7949, %v7951
    %v7953 = vrot.slane %v7851, 4
    %v7954 = vsel %vm3157, %v7951, %v7953
    %v7955 = vrot.slane %v7852, 4
    %v7956 = vsel %vm3157, %v7953, %v7955
    %v7957 = vrot.slane %v7853, 4
    %v7958 = vsel %vm3157, %v7955, %v7957
    %v7959 = vrot.slane %v7854, 4
    %v7960 = vsel %vm3157, %v7957, %v7959
    %v7961 = vrot.slane %v7855, 4
    %v7962 = vsel %vm3157, %v7959, %v7961
    %v7963 = vrot.slane %v7856, 4
    %v7964 = vsel %vm3157, %v7961, %v7963
    %v7965 = vrot.slane %v7857, 4
    %v7966 = vsel %vm3157, %v7963, %v7965
    %v7967 = vrot.slane %v7858, 4
    %v7968 = vsel %vm3157, %v7965, %v7967
    %v7969 = vrot.slane %v7859, 4
    %v7970 = vsel %vm3157, %v7967, %v7969
    %v7971 = vrot.slane %v7860, 4
    %v7972 = vsel %vm3157, %v7969, %v7971
    %v7973 = vrot.slane %v7861, 4
    %v7974 = vsel %vm3157, %v7971, %v7973
    %v7975 = vrot.slane %v7862, 4
    %v7976 = vsel %vm3157, %v7973, %v7975
    %v7977 = vrot.slane %v7863, 4
    %v7978 = vsel %vm3157, %v7975, %v7977
    %v7979 = vrot.slane %v7864, 4
    %v7980 = vsel %vm3157, %v7977, %v7979
    %v7981 = vrot.slane %v7865, 4
    %v7982 = vsel %vm3157, %v7979, %v7981
    %v7983 = vrot.slane %v7866, 4
    %v7984 = vsel %vm3157, %v7981, %v7983
    %v7985 = vrot.slane %v7867, 4
    %v7986 = vsel %vm3157, %v7983, %v7985
    %v7987 = vrot.slane %v7868, 4
    %v7988 = vsel %vm3157, %v7985, %v7987
    %v7989 = vrot.slane %v7869, 4
    %v7990 = vsel %vm3157, %v7987, %v7989
    %v7991 = vrot.slane %v7870, 4
    %v7992 = vsel %vm3157, %v7989, %v7991
    %v7993 = vrot.slane %v7871, 4
    %v7994 = vsel %vm3157, %v7991, %v7993
    %v7995 = vrot.slane %v7872, 4
    %v7996 = vsel %vm3157, %v7993, %v7995
    %v7997 = vrot.slane %v7873, 4
    %v7998 = vsel %vm3157, %v7995, %v7997
    %v7999 = vrot.slane %v7874, 4
    %v8000 = vsel %vm3157, %v7997, %v7999
    %v8001 = vrot.slane %v7875, 4
    %v8002 = vsel %vm3157, %v7999, %v8001
    %v8003 = vrot.slane %v7876, 4
    %v8004 = vsel %vm3157, %v8001, %v8003
    %v8005 = vrot.slane %v7877, 4
    %v8006 = vsel %vm3157, %v8003, %v8005
    %v8007 = vrot.slane %v7878, 4
    %v8008 = vsel %vm3157, %v8005, %v8007
    %v8009 = vrot.slane %v7879, 4
    %v8010 = vsel %vm3157, %v8007, %v8009
    %v8011 = vrot.slane %v7880, 4
    %v8012 = vsel %vm3157, %v8009, %v8011
    %v8013 = vrot.slane %v7881, 4
    %v8014 = vsel %vm3157, %v8011, %v8013
    %v8015 = vrot.slane %v7882, 4
    %v8016 = vsel %vm3157, %v8013, %v8015
    %v8017 = vrot.slane %v7883, 4
    %v8018 = vsel %vm3157, %v8015, %v8017
    %v8019 = vrot.slane %v7884, 4
    %v8020 = vsel %vm3157, %v8017, %v8019
    %v8021 = vrot.slane %v7885, 4
    %v8022 = vsel %vm3157, %v8019, %v8021
    %v8023 = vrot.slane %v7886, 4
    %v8024 = vsel %vm3157, %v8021, %v8023
    %v8025 = vrot.slane %v7887, 4
    %v8026 = vsel %vm3157, %v8023, %v8025
    %v8027 = vrot.slane %v7888, 4
    %v8028 = vsel %vm3157, %v8025, %v8027
    %v8029 = vrot.slane %v7889, 4
    %v8030 = vsel %vm3157, %v8027, %v8029
    %v8031 = vrot.slane %v7890, 4
    %v8032 = vsel %vm3157, %v8029, %v8031
    %v8033 = vrot.slane %v7891, 4
    %v8034 = vsel %vm3157, %v8031, %v8033
    %v8035 = vrot.slane %v7892, 4
    %v8036 = vsel %vm3157, %v8033, %v8035
    %v8037 = vrot.slane %v7893, 4
    %v8038 = vsel %vm3157, %v8035, %v8037
    %v8039 = vrot.slane %v7894, 4
    %v8040 = vsel %vm3157, %v8037, %v8039
    %8041 = vrot.lane.b32.xlu0 %v7946, 64
    %v8042 = vpop.permute.xlu0 %8041
    %8043 = vrot.lane.b32.xlu0 %v7948, 64
    %v8044 = vpop.permute.xlu0 %8043
    %8045 = vrot.lane.b32.xlu0 %v7950, 64
    %v8046 = vpop.permute.xlu0 %8045
    %8047 = vrot.lane.b32.xlu0 %v7952, 64
    %v8048 = vpop.permute.xlu0 %8047
    %8049 = vrot.lane.b32.xlu0 %v7954, 64
    %v8050 = vpop.permute.xlu0 %8049
    %8051 = vrot.lane.b32.xlu0 %v7956, 64
    %v8052 = vpop.permute.xlu0 %8051
    %8053 = vrot.lane.b32.xlu0 %v7958, 64
    %v8054 = vpop.permute.xlu0 %8053
    %8055 = vrot.lane.b32.xlu0 %v7960, 64
    %v8056 = vpop.permute.xlu0 %8055
    %8057 = vrot.lane.b32.xlu0 %v7962, 64
    %v8058 = vpop.permute.xlu0 %8057
    %8059 = vrot.lane.b32.xlu0 %v7964, 64
    %v8060 = vpop.permute.xlu0 %8059
    %8061 = vrot.lane.b32.xlu0 %v7966, 64
    %v8062 = vpop.permute.xlu0 %8061
    %8063 = vrot.lane.b32.xlu0 %v7968, 64
    %v8064 = vpop.permute.xlu0 %8063
    %8065 = vrot.lane.b32.xlu0 %v7970, 64
    %v8066 = vpop.permute.xlu0 %8065
    %8067 = vrot.lane.b32.xlu0 %v7972, 64
    %v8068 = vpop.permute.xlu0 %8067
    %8069 = vrot.lane.b32.xlu0 %v7974, 64
    %v8070 = vpop.permute.xlu0 %8069
    %8071 = vrot.lane.b32.xlu0 %v7976, 64
    %v8072 = vpop.permute.xlu0 %8071
    %8073 = vrot.lane.b32.xlu0 %v7978, 64
    %v8074 = vpop.permute.xlu0 %8073
    %8075 = vrot.lane.b32.xlu0 %v7980, 64
    %v8076 = vpop.permute.xlu0 %8075
    %8077 = vrot.lane.b32.xlu0 %v7982, 64
    %v8078 = vpop.permute.xlu0 %8077
    %8079 = vrot.lane.b32.xlu0 %v7984, 64
    %v8080 = vpop.permute.xlu0 %8079
    %8081 = vrot.lane.b32.xlu0 %v7986, 64
    %v8082 = vpop.permute.xlu0 %8081
    %8083 = vrot.lane.b32.xlu0 %v7988, 64
    %v8084 = vpop.permute.xlu0 %8083
    %8085 = vrot.lane.b32.xlu0 %v7990, 64
    %v8086 = vpop.permute.xlu0 %8085
    %8087 = vrot.lane.b32.xlu0 %v7992, 64
    %v8088 = vpop.permute.xlu0 %8087
    %8089 = vrot.lane.b32.xlu0 %v7994, 64
    %v8090 = vpop.permute.xlu0 %8089
    %8091 = vrot.lane.b32.xlu0 %v7996, 64
    %v8092 = vpop.permute.xlu0 %8091
    %8093 = vrot.lane.b32.xlu0 %v7998, 64
    %v8094 = vpop.permute.xlu0 %8093
    %8095 = vrot.lane.b32.xlu0 %v8000, 64
    %v8096 = vpop.permute.xlu0 %8095
    %8097 = vrot.lane.b32.xlu0 %v8002, 64
    %v8098 = vpop.permute.xlu0 %8097
    %8099 = vrot.lane.b32.xlu0 %v8004, 64
    %v8100 = vpop.permute.xlu0 %8099
    %8101 = vrot.lane.b32.xlu0 %v8006, 64
    %v8102 = vpop.permute.xlu0 %8101
    %8103 = vrot.lane.b32.xlu0 %v8008, 64
    %v8104 = vpop.permute.xlu0 %8103
    %8105 = vrot.lane.b32.xlu0 %v8010, 64
    %v8106 = vpop.permute.xlu0 %8105
    %8107 = vrot.lane.b32.xlu0 %v8012, 64
    %v8108 = vpop.permute.xlu0 %8107
    %8109 = vrot.lane.b32.xlu0 %v8014, 64
    %v8110 = vpop.permute.xlu0 %8109
    %8111 = vrot.lane.b32.xlu0 %v8016, 64
    %v8112 = vpop.permute.xlu0 %8111
    %8113 = vrot.lane.b32.xlu0 %v8018, 64
    %v8114 = vpop.permute.xlu0 %8113
    %8115 = vrot.lane.b32.xlu0 %v8020, 64
    %v8116 = vpop.permute.xlu0 %8115
    %8117 = vrot.lane.b32.xlu0 %v8022, 64
    %v8118 = vpop.permute.xlu0 %8117
    %8119 = vrot.lane.b32.xlu0 %v8024, 64
    %v8120 = vpop.permute.xlu0 %8119
    %8121 = vrot.lane.b32.xlu0 %v8026, 64
    %v8122 = vpop.permute.xlu0 %8121
    %8123 = vrot.lane.b32.xlu0 %v8028, 64
    %v8124 = vpop.permute.xlu0 %8123
    %8125 = vrot.lane.b32.xlu0 %v8030, 64
    %v8126 = vpop.permute.xlu0 %8125
    %8127 = vrot.lane.b32.xlu0 %v8032, 64
    %v8128 = vpop.permute.xlu0 %8127
    %8129 = vrot.lane.b32.xlu0 %v8034, 64
    %v8130 = vpop.permute.xlu0 %8129
    %8131 = vrot.lane.b32.xlu0 %v8036, 64
    %v8132 = vpop.permute.xlu0 %8131
    %8133 = vrot.lane.b32.xlu0 %v8038, 64
    %v8134 = vpop.permute.xlu0 %8133
    %8135 = vrot.lane.b32.xlu0 %v8040, 64
    %v8136 = vpop.permute.xlu0 %8135
    %8185 = vst.msk [vmem:[#allocation4 + $0x8] sm:$0xff] %vm6437, %v8042
    %8186 = vst.msk [vmem:[#allocation4 + $0x20] sm:$0xff] %vm6437, %v8044
    %8187 = vst.msk [vmem:[#allocation4 + $0x38] sm:$0xff] %vm6437, %v8046
    %8188 = vst.msk [vmem:[#allocation4 + $0x50] sm:$0xff] %vm6437, %v8048
    %8189 = vst.msk [vmem:[#allocation4 + $0x68] sm:$0xff] %vm6437, %v8050
    %8190 = vst.msk [vmem:[#allocation4 + $0x80] sm:$0xff] %vm6437, %v8052
    %8191 = vst.msk [vmem:[#allocation4 + $0x98] sm:$0xff] %vm6437, %v8054
    %8192 = vst.msk [vmem:[#allocation4 + $0xb0] sm:$0xff] %vm6437, %v8056
    %8193 = vst.msk [vmem:[#allocation4 + $0xc8] sm:$0xff] %vm6437, %v8058
    %8194 = vst.msk [vmem:[#allocation4 + $0xe0] sm:$0xff] %vm6437, %v8060
    %8195 = vst.msk [vmem:[#allocation4 + $0xf8] sm:$0xff] %vm6437, %v8062
    %8196 = vst.msk [vmem:[#allocation4 + $0x110] sm:$0xff] %vm6437, %v8064
    %8197 = vst.msk [vmem:[#allocation4 + $0x128] sm:$0xff] %vm6437, %v8066
    %8198 = vst.msk [vmem:[#allocation4 + $0x140] sm:$0xff] %vm6437, %v8068
    %8199 = vst.msk [vmem:[#allocation4 + $0x158] sm:$0xff] %vm6437, %v8070
    %8200 = vst.msk [vmem:[#allocation4 + $0x170] sm:$0xff] %vm6437, %v8072
    %8201 = vst.msk [vmem:[#allocation4 + $0x188] sm:$0xff] %vm6437, %v8074
    %8202 = vst.msk [vmem:[#allocation4 + $0x1a0] sm:$0xff] %vm6437, %v8076
    %8203 = vst.msk [vmem:[#allocation4 + $0x1b8] sm:$0xff] %vm6437, %v8078
    %8204 = vst.msk [vmem:[#allocation4 + $0x1d0] sm:$0xff] %vm6437, %v8080
    %8205 = vst.msk [vmem:[#allocation4 + $0x1e8] sm:$0xff] %vm6437, %v8082
    %8206 = vst.msk [vmem:[#allocation4 + $0x200] sm:$0xff] %vm6437, %v8084
    %8207 = vst.msk [vmem:[#allocation4 + $0x218] sm:$0xff] %vm6437, %v8086
    %8208 = vst.msk [vmem:[#allocation4 + $0x230] sm:$0xff] %vm6437, %v8088
    %8209 = vst.msk [vmem:[#allocation4 + $0x248] sm:$0xff] %vm6437, %v8090
    %8210 = vst.msk [vmem:[#allocation4 + $0x260] sm:$0xff] %vm6437, %v8092
    %8211 = vst.msk [vmem:[#allocation4 + $0x278] sm:$0xff] %vm6437, %v8094
    %8212 = vst.msk [vmem:[#allocation4 + $0x290] sm:$0xff] %vm6437, %v8096
    %8213 = vst.msk [vmem:[#allocation4 + $0x2a8] sm:$0xff] %vm6437, %v8098
    %8214 = vst.msk [vmem:[#allocation4 + $0x2c0] sm:$0xff] %vm6437, %v8100
    %8215 = vst.msk [vmem:[#allocation4 + $0x2d8] sm:$0xff] %vm6437, %v8102
    %8216 = vst.msk [vmem:[#allocation4 + $0x2f0] sm:$0xff] %vm6437, %v8104
    %8217 = vst.msk [vmem:[#allocation4 + $0x308] sm:$0xff] %vm6437, %v8106
    %8218 = vst.msk [vmem:[#allocation4 + $0x320] sm:$0xff] %vm6437, %v8108
    %8219 = vst.msk [vmem:[#allocation4 + $0x338] sm:$0xff] %vm6437, %v8110
    %8220 = vst.msk [vmem:[#allocation4 + $0x350] sm:$0xff] %vm6437, %v8112
    %8221 = vst.msk [vmem:[#allocation4 + $0x368] sm:$0xff] %vm6437, %v8114
    %8222 = vst.msk [vmem:[#allocation4 + $0x380] sm:$0xff] %vm6437, %v8116
    %8223 = vst.msk [vmem:[#allocation4 + $0x398] sm:$0xff] %vm6437, %v8118
    %8224 = vst.msk [vmem:[#allocation4 + $0x3b0] sm:$0xff] %vm6437, %v8120
    %8225 = vst.msk [vmem:[#allocation4 + $0x3c8] sm:$0xff] %vm6437, %v8122
    %8226 = vst.msk [vmem:[#allocation4 + $0x3e0] sm:$0xff] %vm6437, %v8124
    %8227 = vst.msk [vmem:[#allocation4 + $0x3f8] sm:$0xff] %vm6437, %v8126
    %8228 = vst.msk [vmem:[#allocation4 + $0x410] sm:$0xff] %vm6437, %v8128
    %8229 = vst.msk [vmem:[#allocation4 + $0x428] sm:$0xff] %vm6437, %v8130
    %8230 = vst.msk [vmem:[#allocation4 + $0x440] sm:$0xff] %vm6437, %v8132
    %8231 = vst.msk [vmem:[#allocation4 + $0x458] sm:$0xff] %vm6437, %v8134
    %8232 = vst.msk [vmem:[#allocation4 + $0x470] sm:$0xff] %vm6437, %v8136
    %v8233 = vld [vmem:[#allocation3 + $0x8] sm:$0xf0]
    %v8234 = vld [vmem:[#allocation3 + $0x10] sm:$0xff]
    %v8235 = vld [vmem:[#allocation3 + $0x18] sm:$0xff]
    %v8236 = vld [vmem:[#allocation3 + $0x20] sm:$0xff]
    %v8237 = vld [vmem:[#allocation3 + $0x28] sm:$0xff]
    %v8238 = vld [vmem:[#allocation3 + $0x30] sm:$0xff]
    %v8239 = vld [vmem:[#allocation3 + $0x38] sm:$0xff]
    %v8240 = vld [vmem:[#allocation3 + $0x40] sm:$0xff]
    %v8241 = vld [vmem:[#allocation3 + $0x48] sm:$0xff]
    %v8242 = vld [vmem:[#allocation3 + $0x50] sm:$0xff]
    %v8243 = vld [vmem:[#allocation3 + $0x58] sm:$0xff]
    %v8244 = vld [vmem:[#allocation3 + $0x60] sm:$0xff]
    %v8245 = vld [vmem:[#allocation3 + $0x68] sm:$0xff]
    %v8246 = vld [vmem:[#allocation3 + $0x70] sm:$0xff]
    %v8247 = vld [vmem:[#allocation3 + $0x78] sm:$0xff]
    %v8248 = vld [vmem:[#allocation3 + $0x80] sm:$0xff]
    %v8249 = vld [vmem:[#allocation3 + $0x88] sm:$0xff]
    %v8250 = vld [vmem:[#allocation3 + $0x90] sm:$0xff]
    %v8251 = vld [vmem:[#allocation3 + $0x98] sm:$0xff]
    %v8252 = vld [vmem:[#allocation3 + $0xa0] sm:$0xff]
    %v8253 = vld [vmem:[#allocation3 + $0xa8] sm:$0xff]
    %v8254 = vld [vmem:[#allocation3 + $0xb0] sm:$0xff]
    %v8255 = vld [vmem:[#allocation3 + $0xb8] sm:$0xff]
    %v8256 = vld [vmem:[#allocation3 + $0xc0] sm:$0xff]
    %v8257 = vld [vmem:[#allocation3 + $0xc8] sm:$0xff]
    %v8258 = vld [vmem:[#allocation3 + $0xd0] sm:$0xff]
    %v8259 = vld [vmem:[#allocation3 + $0xd8] sm:$0xff]
    %v8260 = vld [vmem:[#allocation3 + $0xe0] sm:$0xff]
    %v8261 = vld [vmem:[#allocation3 + $0xe8] sm:$0xff]
    %v8262 = vld [vmem:[#allocation3 + $0xf0] sm:$0xff]
    %v8263 = vld [vmem:[#allocation3 + $0xf8] sm:$0xff]
    %v8264 = vld [vmem:[#allocation3 + $0x100] sm:$0xff]
    %v8265 = vld [vmem:[#allocation3 + $0x108] sm:$0xff]
    %v8266 = vld [vmem:[#allocation3 + $0x110] sm:$0xff]
    %v8267 = vld [vmem:[#allocation3 + $0x118] sm:$0xff]
    %v8268 = vld [vmem:[#allocation3 + $0x120] sm:$0xff]
    %v8269 = vld [vmem:[#allocation3 + $0x128] sm:$0xff]
    %v8270 = vld [vmem:[#allocation3 + $0x130] sm:$0xff]
    %v8271 = vld [vmem:[#allocation3 + $0x138] sm:$0xff]
    %v8272 = vld [vmem:[#allocation3 + $0x140] sm:$0xff]
    %v8273 = vld [vmem:[#allocation3 + $0x148] sm:$0xff]
    %v8274 = vld [vmem:[#allocation3 + $0x150] sm:$0xff]
    %v8275 = vld [vmem:[#allocation3 + $0x158] sm:$0xff]
    %v8276 = vld [vmem:[#allocation3 + $0x160] sm:$0xff]
    %v8277 = vld [vmem:[#allocation3 + $0x168] sm:$0xff]
    %v8278 = vld [vmem:[#allocation3 + $0x170] sm:$0xff]
    %v8279 = vld [vmem:[#allocation3 + $0x178] sm:$0xff]
    %v8280 = vld [vmem:[#allocation3 + $0x180] sm:$0xff]
    %v8281 = vld [vmem:[#allocation3 + $0x188] sm:$0x1f]
    %v8283 = vshrl.u32 %v8233, 16
    %v8285 = vrot.slane %v8283, 4
    %v8286 = vshll.u32 %v8233, 16
    %v8288 = vrot.slane %v8286, 5
    %v8289 = vor.u32 %v8285, %v8288
    %v8291 = vshrl.u32 %v8234, 16
    %v8293 = vrot.slane %v8291, 4
    %v8294 = vshll.u32 %v8234, 16
    %v8296 = vrot.slane %v8294, 5
    %v8297 = vor.u32 %v8293, %v8296
    %v8298 = vsel %vm3497, %v8289, %v8297
    %v8300 = vshrl.u32 %v8235, 16
    %v8302 = vrot.slane %v8300, 4
    %v8303 = vshll.u32 %v8235, 16
    %v8305 = vrot.slane %v8303, 5
    %v8306 = vor.u32 %v8302, %v8305
    %v8307 = vsel %vm3497, %v8297, %v8306
    %v8309 = vshrl.u32 %v8236, 16
    %v8311 = vrot.slane %v8309, 4
    %v8312 = vshll.u32 %v8236, 16
    %v8314 = vrot.slane %v8312, 5
    %v8315 = vor.u32 %v8311, %v8314
    %v8316 = vsel %vm3497, %v8306, %v8315
    %v8318 = vshrl.u32 %v8237, 16
    %v8320 = vrot.slane %v8318, 4
    %v8321 = vshll.u32 %v8237, 16
    %v8323 = vrot.slane %v8321, 5
    %v8324 = vor.u32 %v8320, %v8323
    %v8325 = vsel %vm3497, %v8315, %v8324
    %v8327 = vshrl.u32 %v8238, 16
    %v8329 = vrot.slane %v8327, 4
    %v8330 = vshll.u32 %v8238, 16
    %v8332 = vrot.slane %v8330, 5
    %v8333 = vor.u32 %v8329, %v8332
    %v8334 = vsel %vm3497, %v8324, %v8333
    %v8336 = vshrl.u32 %v8239, 16
    %v8338 = vrot.slane %v8336, 4
    %v8339 = vshll.u32 %v8239, 16
    %v8341 = vrot.slane %v8339, 5
    %v8342 = vor.u32 %v8338, %v8341
    %v8343 = vsel %vm3497, %v8333, %v8342
    %v8345 = vshrl.u32 %v8240, 16
    %v8347 = vrot.slane %v8345, 4
    %v8348 = vshll.u32 %v8240, 16
    %v8350 = vrot.slane %v8348, 5
    %v8351 = vor.u32 %v8347, %v8350
    %v8352 = vsel %vm3497, %v8342, %v8351
    %v8354 = vshrl.u32 %v8241, 16
    %v8356 = vrot.slane %v8354, 4
    %v8357 = vshll.u32 %v8241, 16
    %v8359 = vrot.slane %v8357, 5
    %v8360 = vor.u32 %v8356, %v8359
    %v8361 = vsel %vm3497, %v8351, %v8360
    %v8363 = vshrl.u32 %v8242, 16
    %v8365 = vrot.slane %v8363, 4
    %v8366 = vshll.u32 %v8242, 16
    %v8368 = vrot.slane %v8366, 5
    %v8369 = vor.u32 %v8365, %v8368
    %v8370 = vsel %vm3497, %v8360, %v8369
    %v8372 = vshrl.u32 %v8243, 16
    %v8374 = vrot.slane %v8372, 4
    %v8375 = vshll.u32 %v8243, 16
    %v8377 = vrot.slane %v8375, 5
    %v8378 = vor.u32 %v8374, %v8377
    %v8379 = vsel %vm3497, %v8369, %v8378
    %v8381 = vshrl.u32 %v8244, 16
    %v8383 = vrot.slane %v8381, 4
    %v8384 = vshll.u32 %v8244, 16
    %v8386 = vrot.slane %v8384, 5
    %v8387 = vor.u32 %v8383, %v8386
    %v8388 = vsel %vm3497, %v8378, %v8387
    %v8390 = vshrl.u32 %v8245, 16
    %v8392 = vrot.slane %v8390, 4
    %v8393 = vshll.u32 %v8245, 16
    %v8395 = vrot.slane %v8393, 5
    %v8396 = vor.u32 %v8392, %v8395
    %v8397 = vsel %vm3497, %v8387, %v8396
    %v8399 = vshrl.u32 %v8246, 16
    %v8401 = vrot.slane %v8399, 4
    %v8402 = vshll.u32 %v8246, 16
    %v8404 = vrot.slane %v8402, 5
    %v8405 = vor.u32 %v8401, %v8404
    %v8406 = vsel %vm3497, %v8396, %v8405
    %v8408 = vshrl.u32 %v8247, 16
    %v8410 = vrot.slane %v8408, 4
    %v8411 = vshll.u32 %v8247, 16
    %v8413 = vrot.slane %v8411, 5
    %v8414 = vor.u32 %v8410, %v8413
    %v8415 = vsel %vm3497, %v8405, %v8414
    %v8417 = vshrl.u32 %v8248, 16
    %v8419 = vrot.slane %v8417, 4
    %v8420 = vshll.u32 %v8248, 16
    %v8422 = vrot.slane %v8420, 5
    %v8423 = vor.u32 %v8419, %v8422
    %v8424 = vsel %vm3497, %v8414, %v8423
    %v8426 = vshrl.u32 %v8249, 16
    %v8428 = vrot.slane %v8426, 4
    %v8429 = vshll.u32 %v8249, 16
    %v8431 = vrot.slane %v8429, 5
    %v8432 = vor.u32 %v8428, %v8431
    %v8433 = vsel %vm3497, %v8423, %v8432
    %v8435 = vshrl.u32 %v8250, 16
    %v8437 = vrot.slane %v8435, 4
    %v8438 = vshll.u32 %v8250, 16
    %v8440 = vrot.slane %v8438, 5
    %v8441 = vor.u32 %v8437, %v8440
    %v8442 = vsel %vm3497, %v8432, %v8441
    %v8444 = vshrl.u32 %v8251, 16
    %v8446 = vrot.slane %v8444, 4
    %v8447 = vshll.u32 %v8251, 16
    %v8449 = vrot.slane %v8447, 5
    %v8450 = vor.u32 %v8446, %v8449
    %v8451 = vsel %vm3497, %v8441, %v8450
    %v8453 = vshrl.u32 %v8252, 16
    %v8455 = vrot.slane %v8453, 4
    %v8456 = vshll.u32 %v8252, 16
    %v8458 = vrot.slane %v8456, 5
    %v8459 = vor.u32 %v8455, %v8458
    %v8460 = vsel %vm3497, %v8450, %v8459
    %v8462 = vshrl.u32 %v8253, 16
    %v8464 = vrot.slane %v8462, 4
    %v8465 = vshll.u32 %v8253, 16
    %v8467 = vrot.slane %v8465, 5
    %v8468 = vor.u32 %v8464, %v8467
    %v8469 = vsel %vm3497, %v8459, %v8468
    %v8471 = vshrl.u32 %v8254, 16
    %v8473 = vrot.slane %v8471, 4
    %v8474 = vshll.u32 %v8254, 16
    %v8476 = vrot.slane %v8474, 5
    %v8477 = vor.u32 %v8473, %v8476
    %v8478 = vsel %vm3497, %v8468, %v8477
    %v8480 = vshrl.u32 %v8255, 16
    %v8482 = vrot.slane %v8480, 4
    %v8483 = vshll.u32 %v8255, 16
    %v8485 = vrot.slane %v8483, 5
    %v8486 = vor.u32 %v8482, %v8485
    %v8487 = vsel %vm3497, %v8477, %v8486
    %v8489 = vshrl.u32 %v8256, 16
    %v8491 = vrot.slane %v8489, 4
    %v8492 = vshll.u32 %v8256, 16
    %v8494 = vrot.slane %v8492, 5
    %v8495 = vor.u32 %v8491, %v8494
    %v8496 = vsel %vm3497, %v8486, %v8495
    %v8498 = vshrl.u32 %v8257, 16
    %v8500 = vrot.slane %v8498, 4
    %v8501 = vshll.u32 %v8257, 16
    %v8503 = vrot.slane %v8501, 5
    %v8504 = vor.u32 %v8500, %v8503
    %v8505 = vsel %vm3497, %v8495, %v8504
    %v8507 = vshrl.u32 %v8258, 16
    %v8509 = vrot.slane %v8507, 4
    %v8510 = vshll.u32 %v8258, 16
    %v8512 = vrot.slane %v8510, 5
    %v8513 = vor.u32 %v8509, %v8512
    %v8514 = vsel %vm3497, %v8504, %v8513
    %v8516 = vshrl.u32 %v8259, 16
    %v8518 = vrot.slane %v8516, 4
    %v8519 = vshll.u32 %v8259, 16
    %v8521 = vrot.slane %v8519, 5
    %v8522 = vor.u32 %v8518, %v8521
    %v8523 = vsel %vm3497, %v8513, %v8522
    %v8525 = vshrl.u32 %v8260, 16
    %v8527 = vrot.slane %v8525, 4
    %v8528 = vshll.u32 %v8260, 16
    %v8530 = vrot.slane %v8528, 5
    %v8531 = vor.u32 %v8527, %v8530
    %v8532 = vsel %vm3497, %v8522, %v8531
    %v8534 = vshrl.u32 %v8261, 16
    %v8536 = vrot.slane %v8534, 4
    %v8537 = vshll.u32 %v8261, 16
    %v8539 = vrot.slane %v8537, 5
    %v8540 = vor.u32 %v8536, %v8539
    %v8541 = vsel %vm3497, %v8531, %v8540
    %v8543 = vshrl.u32 %v8262, 16
    %v8545 = vrot.slane %v8543, 4
    %v8546 = vshll.u32 %v8262, 16
    %v8548 = vrot.slane %v8546, 5
    %v8549 = vor.u32 %v8545, %v8548
    %v8550 = vsel %vm3497, %v8540, %v8549
    %v8552 = vshrl.u32 %v8263, 16
    %v8554 = vrot.slane %v8552, 4
    %v8555 = vshll.u32 %v8263, 16
    %v8557 = vrot.slane %v8555, 5
    %v8558 = vor.u32 %v8554, %v8557
    %v8559 = vsel %vm3497, %v8549, %v8558
    %v8561 = vshrl.u32 %v8264, 16
    %v8563 = vrot.slane %v8561, 4
    %v8564 = vshll.u32 %v8264, 16
    %v8566 = vrot.slane %v8564, 5
    %v8567 = vor.u32 %v8563, %v8566
    %v8568 = vsel %vm3497, %v8558, %v8567
    %v8570 = vshrl.u32 %v8265, 16
    %v8572 = vrot.slane %v8570, 4
    %v8573 = vshll.u32 %v8265, 16
    %v8575 = vrot.slane %v8573, 5
    %v8576 = vor.u32 %v8572, %v8575
    %v8577 = vsel %vm3497, %v8567, %v8576
    %v8579 = vshrl.u32 %v8266, 16
    %v8581 = vrot.slane %v8579, 4
    %v8582 = vshll.u32 %v8266, 16
    %v8584 = vrot.slane %v8582, 5
    %v8585 = vor.u32 %v8581, %v8584
    %v8586 = vsel %vm3497, %v8576, %v8585
    %v8588 = vshrl.u32 %v8267, 16
    %v8590 = vrot.slane %v8588, 4
    %v8591 = vshll.u32 %v8267, 16
    %v8593 = vrot.slane %v8591, 5
    %v8594 = vor.u32 %v8590, %v8593
    %v8595 = vsel %vm3497, %v8585, %v8594
    %v8597 = vshrl.u32 %v8268, 16
    %v8599 = vrot.slane %v8597, 4
    %v8600 = vshll.u32 %v8268, 16
    %v8602 = vrot.slane %v8600, 5
    %v8603 = vor.u32 %v8599, %v8602
    %v8604 = vsel %vm3497, %v8594, %v8603
    %v8606 = vshrl.u32 %v8269, 16
    %v8608 = vrot.slane %v8606, 4
    %v8609 = vshll.u32 %v8269, 16
    %v8611 = vrot.slane %v8609, 5
    %v8612 = vor.u32 %v8608, %v8611
    %v8613 = vsel %vm3497, %v8603, %v8612
    %v8615 = vshrl.u32 %v8270, 16
    %v8617 = vrot.slane %v8615, 4
    %v8618 = vshll.u32 %v8270, 16
    %v8620 = vrot.slane %v8618, 5
    %v8621 = vor.u32 %v8617, %v8620
    %v8622 = vsel %vm3497, %v8612, %v8621
    %v8624 = vshrl.u32 %v8271, 16
    %v8626 = vrot.slane %v8624, 4
    %v8627 = vshll.u32 %v8271, 16
    %v8629 = vrot.slane %v8627, 5
    %v8630 = vor.u32 %v8626, %v8629
    %v8631 = vsel %vm3497, %v8621, %v8630
    %v8633 = vshrl.u32 %v8272, 16
    %v8635 = vrot.slane %v8633, 4
    %v8636 = vshll.u32 %v8272, 16
    %v8638 = vrot.slane %v8636, 5
    %v8639 = vor.u32 %v8635, %v8638
    %v8640 = vsel %vm3497, %v8630, %v8639
    %v8642 = vshrl.u32 %v8273, 16
    %v8644 = vrot.slane %v8642, 4
    %v8645 = vshll.u32 %v8273, 16
    %v8647 = vrot.slane %v8645, 5
    %v8648 = vor.u32 %v8644, %v8647
    %v8649 = vsel %vm3497, %v8639, %v8648
    %v8651 = vshrl.u32 %v8274, 16
    %v8653 = vrot.slane %v8651, 4
    %v8654 = vshll.u32 %v8274, 16
    %v8656 = vrot.slane %v8654, 5
    %v8657 = vor.u32 %v8653, %v8656
    %v8658 = vsel %vm3497, %v8648, %v8657
    %v8660 = vshrl.u32 %v8275, 16
    %v8662 = vrot.slane %v8660, 4
    %v8663 = vshll.u32 %v8275, 16
    %v8665 = vrot.slane %v8663, 5
    %v8666 = vor.u32 %v8662, %v8665
    %v8667 = vsel %vm3497, %v8657, %v8666
    %v8669 = vshrl.u32 %v8276, 16
    %v8671 = vrot.slane %v8669, 4
    %v8672 = vshll.u32 %v8276, 16
    %v8674 = vrot.slane %v8672, 5
    %v8675 = vor.u32 %v8671, %v8674
    %v8676 = vsel %vm3497, %v8666, %v8675
    %v8678 = vshrl.u32 %v8277, 16
    %v8680 = vrot.slane %v8678, 4
    %v8681 = vshll.u32 %v8277, 16
    %v8683 = vrot.slane %v8681, 5
    %v8684 = vor.u32 %v8680, %v8683
    %v8685 = vsel %vm3497, %v8675, %v8684
    %v8687 = vshrl.u32 %v8278, 16
    %v8689 = vrot.slane %v8687, 4
    %v8690 = vshll.u32 %v8278, 16
    %v8692 = vrot.slane %v8690, 5
    %v8693 = vor.u32 %v8689, %v8692
    %v8694 = vsel %vm3497, %v8684, %v8693
    %v8696 = vshrl.u32 %v8279, 16
    %v8698 = vrot.slane %v8696, 4
    %v8699 = vshll.u32 %v8279, 16
    %v8701 = vrot.slane %v8699, 5
    %v8702 = vor.u32 %v8698, %v8701
    %v8703 = vsel %vm3497, %v8693, %v8702
    %v8705 = vshrl.u32 %v8280, 16
    %v8707 = vrot.slane %v8705, 4
    %v8708 = vshll.u32 %v8280, 16
    %v8710 = vrot.slane %v8708, 5
    %v8711 = vor.u32 %v8707, %v8710
    %v8712 = vsel %vm3497, %v8702, %v8711
    %v8714 = vshrl.u32 %v8281, 16
    %v8716 = vrot.slane %v8714, 4
    %v8717 = vshll.u32 %v8281, 16
    %v8719 = vrot.slane %v8717, 5
    %v8720 = vor.u32 %v8716, %v8719
    %v8721 = vsel %vm3497, %v8711, %v8720
    %8722 = vrot.lane.b32.xlu0 %v8298, 96
    %v8723 = vpop.permute.xlu0 %8722
    %8724 = vrot.lane.b32.xlu0 %v8307, 96
    %v8725 = vpop.permute.xlu0 %8724
    %8726 = vrot.lane.b32.xlu0 %v8316, 96
    %v8727 = vpop.permute.xlu0 %8726
    %8728 = vrot.lane.b32.xlu0 %v8325, 96
    %v8729 = vpop.permute.xlu0 %8728
    %8730 = vrot.lane.b32.xlu0 %v8334, 96
    %v8731 = vpop.permute.xlu0 %8730
    %8732 = vrot.lane.b32.xlu0 %v8343, 96
    %v8733 = vpop.permute.xlu0 %8732
    %8734 = vrot.lane.b32.xlu0 %v8352, 96
    %v8735 = vpop.permute.xlu0 %8734
    %8736 = vrot.lane.b32.xlu0 %v8361, 96
    %v8737 = vpop.permute.xlu0 %8736
    %8738 = vrot.lane.b32.xlu0 %v8370, 96
    %v8739 = vpop.permute.xlu0 %8738
    %8740 = vrot.lane.b32.xlu0 %v8379, 96
    %v8741 = vpop.permute.xlu0 %8740
    %8742 = vrot.lane.b32.xlu0 %v8388, 96
    %v8743 = vpop.permute.xlu0 %8742
    %8744 = vrot.lane.b32.xlu0 %v8397, 96
    %v8745 = vpop.permute.xlu0 %8744
    %8746 = vrot.lane.b32.xlu0 %v8406, 96
    %v8747 = vpop.permute.xlu0 %8746
    %8748 = vrot.lane.b32.xlu0 %v8415, 96
    %v8749 = vpop.permute.xlu0 %8748
    %8750 = vrot.lane.b32.xlu0 %v8424, 96
    %v8751 = vpop.permute.xlu0 %8750
    %8752 = vrot.lane.b32.xlu0 %v8433, 96
    %v8753 = vpop.permute.xlu0 %8752
    %8754 = vrot.lane.b32.xlu0 %v8442, 96
    %v8755 = vpop.permute.xlu0 %8754
    %8756 = vrot.lane.b32.xlu0 %v8451, 96
    %v8757 = vpop.permute.xlu0 %8756
    %8758 = vrot.lane.b32.xlu0 %v8460, 96
    %v8759 = vpop.permute.xlu0 %8758
    %8760 = vrot.lane.b32.xlu0 %v8469, 96
    %v8761 = vpop.permute.xlu0 %8760
    %8762 = vrot.lane.b32.xlu0 %v8478, 96
    %v8763 = vpop.permute.xlu0 %8762
    %8764 = vrot.lane.b32.xlu0 %v8487, 96
    %v8765 = vpop.permute.xlu0 %8764
    %8766 = vrot.lane.b32.xlu0 %v8496, 96
    %v8767 = vpop.permute.xlu0 %8766
    %8768 = vrot.lane.b32.xlu0 %v8505, 96
    %v8769 = vpop.permute.xlu0 %8768
    %8770 = vrot.lane.b32.xlu0 %v8514, 96
    %v8771 = vpop.permute.xlu0 %8770
    %8772 = vrot.lane.b32.xlu0 %v8523, 96
    %v8773 = vpop.permute.xlu0 %8772
    %8774 = vrot.lane.b32.xlu0 %v8532, 96
    %v8775 = vpop.permute.xlu0 %8774
    %8776 = vrot.lane.b32.xlu0 %v8541, 96
    %v8777 = vpop.permute.xlu0 %8776
    %8778 = vrot.lane.b32.xlu0 %v8550, 96
    %v8779 = vpop.permute.xlu0 %8778
    %8780 = vrot.lane.b32.xlu0 %v8559, 96
    %v8781 = vpop.permute.xlu0 %8780
    %8782 = vrot.lane.b32.xlu0 %v8568, 96
    %v8783 = vpop.permute.xlu0 %8782
    %8784 = vrot.lane.b32.xlu0 %v8577, 96
    %v8785 = vpop.permute.xlu0 %8784
    %8786 = vrot.lane.b32.xlu0 %v8586, 96
    %v8787 = vpop.permute.xlu0 %8786
    %8788 = vrot.lane.b32.xlu0 %v8595, 96
    %v8789 = vpop.permute.xlu0 %8788
    %8790 = vrot.lane.b32.xlu0 %v8604, 96
    %v8791 = vpop.permute.xlu0 %8790
    %8792 = vrot.lane.b32.xlu0 %v8613, 96
    %v8793 = vpop.permute.xlu0 %8792
    %8794 = vrot.lane.b32.xlu0 %v8622, 96
    %v8795 = vpop.permute.xlu0 %8794
    %8796 = vrot.lane.b32.xlu0 %v8631, 96
    %v8797 = vpop.permute.xlu0 %8796
    %8798 = vrot.lane.b32.xlu0 %v8640, 96
    %v8799 = vpop.permute.xlu0 %8798
    %8800 = vrot.lane.b32.xlu0 %v8649, 96
    %v8801 = vpop.permute.xlu0 %8800
    %8802 = vrot.lane.b32.xlu0 %v8658, 96
    %v8803 = vpop.permute.xlu0 %8802
    %8804 = vrot.lane.b32.xlu0 %v8667, 96
    %v8805 = vpop.permute.xlu0 %8804
    %8806 = vrot.lane.b32.xlu0 %v8676, 96
    %v8807 = vpop.permute.xlu0 %8806
    %8808 = vrot.lane.b32.xlu0 %v8685, 96
    %v8809 = vpop.permute.xlu0 %8808
    %8810 = vrot.lane.b32.xlu0 %v8694, 96
    %v8811 = vpop.permute.xlu0 %8810
    %8812 = vrot.lane.b32.xlu0 %v8703, 96
    %v8813 = vpop.permute.xlu0 %8812
    %8814 = vrot.lane.b32.xlu0 %v8712, 96
    %v8815 = vpop.permute.xlu0 %8814
    %8816 = vrot.lane.b32.xlu0 %v8721, 96
    %v8817 = vpop.permute.xlu0 %8816
    %8866 = vst.msk [vmem:[#allocation4 + $0x8] sm:$0xff] %vm6825, %v8723
    %8867 = vst.msk [vmem:[#allocation4 + $0x20] sm:$0xff] %vm6825, %v8725
    %8868 = vst.msk [vmem:[#allocation4 + $0x38] sm:$0xff] %vm6825, %v8727
    %8869 = vst.msk [vmem:[#allocation4 + $0x50] sm:$0xff] %vm6825, %v8729
    %8870 = vst.msk [vmem:[#allocation4 + $0x68] sm:$0xff] %vm6825, %v8731
    %8871 = vst.msk [vmem:[#allocation4 + $0x80] sm:$0xff] %vm6825, %v8733
    %8872 = vst.msk [vmem:[#allocation4 + $0x98] sm:$0xff] %vm6825, %v8735
    %8873 = vst.msk [vmem:[#allocation4 + $0xb0] sm:$0xff] %vm6825, %v8737
    %8874 = vst.msk [vmem:[#allocation4 + $0xc8] sm:$0xff] %vm6825, %v8739
    %8875 = vst.msk [vmem:[#allocation4 + $0xe0] sm:$0xff] %vm6825, %v8741
    %8876 = vst.msk [vmem:[#allocation4 + $0xf8] sm:$0xff] %vm6825, %v8743
    %8877 = vst.msk [vmem:[#allocation4 + $0x110] sm:$0xff] %vm6825, %v8745
    %8878 = vst.msk [vmem:[#allocation4 + $0x128] sm:$0xff] %vm6825, %v8747
    %8879 = vst.msk [vmem:[#allocation4 + $0x140] sm:$0xff] %vm6825, %v8749
    %8880 = vst.msk [vmem:[#allocation4 + $0x158] sm:$0xff] %vm6825, %v8751
    %8881 = vst.msk [vmem:[#allocation4 + $0x170] sm:$0xff] %vm6825, %v8753
    %8882 = vst.msk [vmem:[#allocation4 + $0x188] sm:$0xff] %vm6825, %v8755
    %8883 = vst.msk [vmem:[#allocation4 + $0x1a0] sm:$0xff] %vm6825, %v8757
    %8884 = vst.msk [vmem:[#allocation4 + $0x1b8] sm:$0xff] %vm6825, %v8759
    %8885 = vst.msk [vmem:[#allocation4 + $0x1d0] sm:$0xff] %vm6825, %v8761
    %8886 = vst.msk [vmem:[#allocation4 + $0x1e8] sm:$0xff] %vm6825, %v8763
    %8887 = vst.msk [vmem:[#allocation4 + $0x200] sm:$0xff] %vm6825, %v8765
    %8888 = vst.msk [vmem:[#allocation4 + $0x218] sm:$0xff] %vm6825, %v8767
    %8889 = vst.msk [vmem:[#allocation4 + $0x230] sm:$0xff] %vm6825, %v8769
    %8890 = vst.msk [vmem:[#allocation4 + $0x248] sm:$0xff] %vm6825, %v8771
    %8891 = vst.msk [vmem:[#allocation4 + $0x260] sm:$0xff] %vm6825, %v8773
    %8892 = vst.msk [vmem:[#allocation4 + $0x278] sm:$0xff] %vm6825, %v8775
    %8893 = vst.msk [vmem:[#allocation4 + $0x290] sm:$0xff] %vm6825, %v8777
    %8894 = vst.msk [vmem:[#allocation4 + $0x2a8] sm:$0xff] %vm6825, %v8779
    %8895 = vst.msk [vmem:[#allocation4 + $0x2c0] sm:$0xff] %vm6825, %v8781
    %8896 = vst.msk [vmem:[#allocation4 + $0x2d8] sm:$0xff] %vm6825, %v8783
    %8897 = vst.msk [vmem:[#allocation4 + $0x2f0] sm:$0xff] %vm6825, %v8785
    %8898 = vst.msk [vmem:[#allocation4 + $0x308] sm:$0xff] %vm6825, %v8787
    %8899 = vst.msk [vmem:[#allocation4 + $0x320] sm:$0xff] %vm6825, %v8789
    %8900 = vst.msk [vmem:[#allocation4 + $0x338] sm:$0xff] %vm6825, %v8791
    %8901 = vst.msk [vmem:[#allocation4 + $0x350] sm:$0xff] %vm6825, %v8793
    %8902 = vst.msk [vmem:[#allocation4 + $0x368] sm:$0xff] %vm6825, %v8795
    %8903 = vst.msk [vmem:[#allocation4 + $0x380] sm:$0xff] %vm6825, %v8797
    %8904 = vst.msk [vmem:[#allocation4 + $0x398] sm:$0xff] %vm6825, %v8799
    %8905 = vst.msk [vmem:[#allocation4 + $0x3b0] sm:$0xff] %vm6825, %v8801
    %8906 = vst.msk [vmem:[#allocation4 + $0x3c8] sm:$0xff] %vm6825, %v8803
    %8907 = vst.msk [vmem:[#allocation4 + $0x3e0] sm:$0xff] %vm6825, %v8805
    %8908 = vst.msk [vmem:[#allocation4 + $0x3f8] sm:$0xff] %vm6825, %v8807
    %8909 = vst.msk [vmem:[#allocation4 + $0x410] sm:$0xff] %vm6825, %v8809
    %8910 = vst.msk [vmem:[#allocation4 + $0x428] sm:$0xff] %vm6825, %v8811
    %8911 = vst.msk [vmem:[#allocation4 + $0x440] sm:$0xff] %vm6825, %v8813
    %8912 = vst.msk [vmem:[#allocation4 + $0x458] sm:$0xff] %vm6825, %v8815
    %8913 = vst.msk [vmem:[#allocation4 + $0x470] sm:$0xff] %vm6825, %v8817
    %v8914 = vld [vmem:[#allocation3 + $0x8] sm:$0xe0]
    %v8915 = vld [vmem:[#allocation3 + $0x10] sm:$0xff]
    %v8916 = vld [vmem:[#allocation3 + $0x18] sm:$0xff]
    %v8917 = vld [vmem:[#allocation3 + $0x20] sm:$0xff]
    %v8918 = vld [vmem:[#allocation3 + $0x28] sm:$0xff]
    %v8919 = vld [vmem:[#allocation3 + $0x30] sm:$0xff]
    %v8920 = vld [vmem:[#allocation3 + $0x38] sm:$0xff]
    %v8921 = vld [vmem:[#allocation3 + $0x40] sm:$0xff]
    %v8922 = vld [vmem:[#allocation3 + $0x48] sm:$0xff]
    %v8923 = vld [vmem:[#allocation3 + $0x50] sm:$0xff]
    %v8924 = vld [vmem:[#allocation3 + $0x58] sm:$0xff]
    %v8925 = vld [vmem:[#allocation3 + $0x60] sm:$0xff]
    %v8926 = vld [vmem:[#allocation3 + $0x68] sm:$0xff]
    %v8927 = vld [vmem:[#allocation3 + $0x70] sm:$0xff]
    %v8928 = vld [vmem:[#allocation3 + $0x78] sm:$0xff]
    %v8929 = vld [vmem:[#allocation3 + $0x80] sm:$0xff]
    %v8930 = vld [vmem:[#allocation3 + $0x88] sm:$0xff]
    %v8931 = vld [vmem:[#allocation3 + $0x90] sm:$0xff]
    %v8932 = vld [vmem:[#allocation3 + $0x98] sm:$0xff]
    %v8933 = vld [vmem:[#allocation3 + $0xa0] sm:$0xff]
    %v8934 = vld [vmem:[#allocation3 + $0xa8] sm:$0xff]
    %v8935 = vld [vmem:[#allocation3 + $0xb0] sm:$0xff]
    %v8936 = vld [vmem:[#allocation3 + $0xb8] sm:$0xff]
    %v8937 = vld [vmem:[#allocation3 + $0xc0] sm:$0xff]
    %v8938 = vld [vmem:[#allocation3 + $0xc8] sm:$0xff]
    %v8939 = vld [vmem:[#allocation3 + $0xd0] sm:$0xff]
    %v8940 = vld [vmem:[#allocation3 + $0xd8] sm:$0xff]
    %v8941 = vld [vmem:[#allocation3 + $0xe0] sm:$0xff]
    %v8942 = vld [vmem:[#allocation3 + $0xe8] sm:$0xff]
    %v8943 = vld [vmem:[#allocation3 + $0xf0] sm:$0xff]
    %v8944 = vld [vmem:[#allocation3 + $0xf8] sm:$0xff]
    %v8945 = vld [vmem:[#allocation3 + $0x100] sm:$0xff]
    %v8946 = vld [vmem:[#allocation3 + $0x108] sm:$0xff]
    %v8947 = vld [vmem:[#allocation3 + $0x110] sm:$0xff]
    %v8948 = vld [vmem:[#allocation3 + $0x118] sm:$0xff]
    %v8949 = vld [vmem:[#allocation3 + $0x120] sm:$0xff]
    %v8950 = vld [vmem:[#allocation3 + $0x128] sm:$0xff]
    %v8951 = vld [vmem:[#allocation3 + $0x130] sm:$0xff]
    %v8952 = vld [vmem:[#allocation3 + $0x138] sm:$0xff]
    %v8953 = vld [vmem:[#allocation3 + $0x140] sm:$0xff]
    %v8954 = vld [vmem:[#allocation3 + $0x148] sm:$0xff]
    %v8955 = vld [vmem:[#allocation3 + $0x150] sm:$0xff]
    %v8956 = vld [vmem:[#allocation3 + $0x158] sm:$0xff]
    %v8957 = vld [vmem:[#allocation3 + $0x160] sm:$0xff]
    %v8958 = vld [vmem:[#allocation3 + $0x168] sm:$0xff]
    %v8959 = vld [vmem:[#allocation3 + $0x170] sm:$0xff]
    %v8960 = vld [vmem:[#allocation3 + $0x178] sm:$0xff]
    %v8961 = vld [vmem:[#allocation3 + $0x180] sm:$0xff]
    %v8962 = vld [vmem:[#allocation3 + $0x188] sm:$0x1f]
    %v9012 = vrot.slane %v8914, 5
    %v9013 = vrot.slane %v8915, 5
    %v9014 = vsel %vm4229, %v9012, %v9013
    %v9015 = vrot.slane %v8916, 5
    %v9016 = vsel %vm4229, %v9013, %v9015
    %v9017 = vrot.slane %v8917, 5
    %v9018 = vsel %vm4229, %v9015, %v9017
    %v9019 = vrot.slane %v8918, 5
    %v9020 = vsel %vm4229, %v9017, %v9019
    %v9021 = vrot.slane %v8919, 5
    %v9022 = vsel %vm4229, %v9019, %v9021
    %v9023 = vrot.slane %v8920, 5
    %v9024 = vsel %vm4229, %v9021, %v9023
    %v9025 = vrot.slane %v8921, 5
    %v9026 = vsel %vm4229, %v9023, %v9025
    %v9027 = vrot.slane %v8922, 5
    %v9028 = vsel %vm4229, %v9025, %v9027
    %v9029 = vrot.slane %v8923, 5
    %v9030 = vsel %vm4229, %v9027, %v9029
    %v9031 = vrot.slane %v8924, 5
    %v9032 = vsel %vm4229, %v9029, %v9031
    %v9033 = vrot.slane %v8925, 5
    %v9034 = vsel %vm4229, %v9031, %v9033
    %v9035 = vrot.slane %v8926, 5
    %v9036 = vsel %vm4229, %v9033, %v9035
    %v9037 = vrot.slane %v8927, 5
    %v9038 = vsel %vm4229, %v9035, %v9037
    %v9039 = vrot.slane %v8928, 5
    %v9040 = vsel %vm4229, %v9037, %v9039
    %v9041 = vrot.slane %v8929, 5
    %v9042 = vsel %vm4229, %v9039, %v9041
    %v9043 = vrot.slane %v8930, 5
    %v9044 = vsel %vm4229, %v9041, %v9043
    %v9045 = vrot.slane %v8931, 5
    %v9046 = vsel %vm4229, %v9043, %v9045
    %v9047 = vrot.slane %v8932, 5
    %v9048 = vsel %vm4229, %v9045, %v9047
    %v9049 = vrot.slane %v8933, 5
    %v9050 = vsel %vm4229, %v9047, %v9049
    %v9051 = vrot.slane %v8934, 5
    %v9052 = vsel %vm4229, %v9049, %v9051
    %v9053 = vrot.slane %v8935, 5
    %v9054 = vsel %vm4229, %v9051, %v9053
    %v9055 = vrot.slane %v8936, 5
    %v9056 = vsel %vm4229, %v9053, %v9055
    %v9057 = vrot.slane %v8937, 5
    %v9058 = vsel %vm4229, %v9055, %v9057
    %v9059 = vrot.slane %v8938, 5
    %v9060 = vsel %vm4229, %v9057, %v9059
    %v9061 = vrot.slane %v8939, 5
    %v9062 = vsel %vm4229, %v9059, %v9061
    %v9063 = vrot.slane %v8940, 5
    %v9064 = vsel %vm4229, %v9061, %v9063
    %v9065 = vrot.slane %v8941, 5
    %v9066 = vsel %vm4229, %v9063, %v9065
    %v9067 = vrot.slane %v8942, 5
    %v9068 = vsel %vm4229, %v9065, %v9067
    %v9069 = vrot.slane %v8943, 5
    %v9070 = vsel %vm4229, %v9067, %v9069
    %v9071 = vrot.slane %v8944, 5
    %v9072 = vsel %vm4229, %v9069, %v9071
    %v9073 = vrot.slane %v8945, 5
    %v9074 = vsel %vm4229, %v9071, %v9073
    %v9075 = vrot.slane %v8946, 5
    %v9076 = vsel %vm4229, %v9073, %v9075
    %v9077 = vrot.slane %v8947, 5
    %v9078 = vsel %vm4229, %v9075, %v9077
    %v9079 = vrot.slane %v8948, 5
    %v9080 = vsel %vm4229, %v9077, %v9079
    %v9081 = vrot.slane %v8949, 5
    %v9082 = vsel %vm4229, %v9079, %v9081
    %v9083 = vrot.slane %v8950, 5
    %v9084 = vsel %vm4229, %v9081, %v9083
    %v9085 = vrot.slane %v8951, 5
    %v9086 = vsel %vm4229, %v9083, %v9085
    %v9087 = vrot.slane %v8952, 5
    %v9088 = vsel %vm4229, %v9085, %v9087
    %v9089 = vrot.slane %v8953, 5
    %v9090 = vsel %vm4229, %v9087, %v9089
    %v9091 = vrot.slane %v8954, 5
    %v9092 = vsel %vm4229, %v9089, %v9091
    %v9093 = vrot.slane %v8955, 5
    %v9094 = vsel %vm4229, %v9091, %v9093
    %v9095 = vrot.slane %v8956, 5
    %v9096 = vsel %vm4229, %v9093, %v9095
    %v9097 = vrot.slane %v8957, 5
    %v9098 = vsel %vm4229, %v9095, %v9097
    %v9099 = vrot.slane %v8958, 5
    %v9100 = vsel %vm4229, %v9097, %v9099
    %v9101 = vrot.slane %v8959, 5
    %v9102 = vsel %vm4229, %v9099, %v9101
    %v9103 = vrot.slane %v8960, 5
    %v9104 = vsel %vm4229, %v9101, %v9103
    %v9105 = vrot.slane %v8961, 5
    %v9106 = vsel %vm4229, %v9103, %v9105
    %v9107 = vrot.slane %v8962, 5
    %v9108 = vsel %vm4229, %v9105, %v9107
    %9157 = vst.msk [vmem:[#allocation4 + $0x10] sm:$0xff] %vm5321, %v9014
    %9158 = vst.msk [vmem:[#allocation4 + $0x28] sm:$0xff] %vm5321, %v9016
    %9159 = vst.msk [vmem:[#allocation4 + $0x40] sm:$0xff] %vm5321, %v9018
    %9160 = vst.msk [vmem:[#allocation4 + $0x58] sm:$0xff] %vm5321, %v9020
    %9161 = vst.msk [vmem:[#allocation4 + $0x70] sm:$0xff] %vm5321, %v9022
    %9162 = vst.msk [vmem:[#allocation4 + $0x88] sm:$0xff] %vm5321, %v9024
    %9163 = vst.msk [vmem:[#allocation4 + $0xa0] sm:$0xff] %vm5321, %v9026
    %9164 = vst.msk [vmem:[#allocation4 + $0xb8] sm:$0xff] %vm5321, %v9028
    %9165 = vst.msk [vmem:[#allocation4 + $0xd0] sm:$0xff] %vm5321, %v9030
    %9166 = vst.msk [vmem:[#allocation4 + $0xe8] sm:$0xff] %vm5321, %v9032
    %9167 = vst.msk [vmem:[#allocation4 + $0x100] sm:$0xff] %vm5321, %v9034
    %9168 = vst.msk [vmem:[#allocation4 + $0x118] sm:$0xff] %vm5321, %v9036
    %9169 = vst.msk [vmem:[#allocation4 + $0x130] sm:$0xff] %vm5321, %v9038
    %9170 = vst.msk [vmem:[#allocation4 + $0x148] sm:$0xff] %vm5321, %v9040
    %9171 = vst.msk [vmem:[#allocation4 + $0x160] sm:$0xff] %vm5321, %v9042
    %9172 = vst.msk [vmem:[#allocation4 + $0x178] sm:$0xff] %vm5321, %v9044
    %9173 = vst.msk [vmem:[#allocation4 + $0x190] sm:$0xff] %vm5321, %v9046
    %9174 = vst.msk [vmem:[#allocation4 + $0x1a8] sm:$0xff] %vm5321, %v9048
    %9175 = vst.msk [vmem:[#allocation4 + $0x1c0] sm:$0xff] %vm5321, %v9050
    %9176 = vst.msk [vmem:[#allocation4 + $0x1d8] sm:$0xff] %vm5321, %v9052
    %9177 = vst.msk [vmem:[#allocation4 + $0x1f0] sm:$0xff] %vm5321, %v9054
    %9178 = vst.msk [vmem:[#allocation4 + $0x208] sm:$0xff] %vm5321, %v9056
    %9179 = vst.msk [vmem:[#allocation4 + $0x220] sm:$0xff] %vm5321, %v9058
    %9180 = vst.msk [vmem:[#allocation4 + $0x238] sm:$0xff] %vm5321, %v9060
    %9181 = vst.msk [vmem:[#allocation4 + $0x250] sm:$0xff] %vm5321, %v9062
    %9182 = vst.msk [vmem:[#allocation4 + $0x268] sm:$0xff] %vm5321, %v9064
    %9183 = vst.msk [vmem:[#allocation4 + $0x280] sm:$0xff] %vm5321, %v9066
    %9184 = vst.msk [vmem:[#allocation4 + $0x298] sm:$0xff] %vm5321, %v9068
    %9185 = vst.msk [vmem:[#allocation4 + $0x2b0] sm:$0xff] %vm5321, %v9070
    %9186 = vst.msk [vmem:[#allocation4 + $0x2c8] sm:$0xff] %vm5321, %v9072
    %9187 = vst.msk [vmem:[#allocation4 + $0x2e0] sm:$0xff] %vm5321, %v9074
    %9188 = vst.msk [vmem:[#allocation4 + $0x2f8] sm:$0xff] %vm5321, %v9076
    %9189 = vst.msk [vmem:[#allocation4 + $0x310] sm:$0xff] %vm5321, %v9078
    %9190 = vst.msk [vmem:[#allocation4 + $0x328] sm:$0xff] %vm5321, %v9080
    %9191 = vst.msk [vmem:[#allocation4 + $0x340] sm:$0xff] %vm5321, %v9082
    %9192 = vst.msk [vmem:[#allocation4 + $0x358] sm:$0xff] %vm5321, %v9084
    %9193 = vst.msk [vmem:[#allocation4 + $0x370] sm:$0xff] %vm5321, %v9086
    %9194 = vst.msk [vmem:[#allocation4 + $0x388] sm:$0xff] %vm5321, %v9088
    %9195 = vst.msk [vmem:[#allocation4 + $0x3a0] sm:$0xff] %vm5321, %v9090
    %9196 = vst.msk [vmem:[#allocation4 + $0x3b8] sm:$0xff] %vm5321, %v9092
    %9197 = vst.msk [vmem:[#allocation4 + $0x3d0] sm:$0xff] %vm5321, %v9094
    %9198 = vst.msk [vmem:[#allocation4 + $0x3e8] sm:$0xff] %vm5321, %v9096
    %9199 = vst.msk [vmem:[#allocation4 + $0x400] sm:$0xff] %vm5321, %v9098
    %9200 = vst.msk [vmem:[#allocation4 + $0x418] sm:$0xff] %vm5321, %v9100
    %9201 = vst.msk [vmem:[#allocation4 + $0x430] sm:$0xff] %vm5321, %v9102
    %9202 = vst.msk [vmem:[#allocation4 + $0x448] sm:$0xff] %vm5321, %v9104
    %9203 = vst.msk [vmem:[#allocation4 + $0x460] sm:$0xff] %vm5321, %v9106
    %9204 = vst.msk [vmem:[#allocation4 + $0x478] sm:$0xff] %vm5321, %v9108
    %v9205 = vld [vmem:[#allocation4] sm:$0xff]
    %v9206 = vld [vmem:[#allocation4 + $0x8] sm:$0xff]
    %v9207 = vld [vmem:[#allocation4 + $0x10] sm:$0xff]
    %v9208 = vld [vmem:[#allocation4 + $0x18] sm:$0xff]
    %v9209 = vld [vmem:[#allocation4 + $0x20] sm:$0xff]
    %v9210 = vld [vmem:[#allocation4 + $0x28] sm:$0xff]
    %v9211 = vld [vmem:[#allocation4 + $0x30] sm:$0xff]
    %v9212 = vld [vmem:[#allocation4 + $0x38] sm:$0xff]
    %v9213 = vld [vmem:[#allocation4 + $0x40] sm:$0xff]
    %v9214 = vld [vmem:[#allocation4 + $0x48] sm:$0xff]
    %v9215 = vld [vmem:[#allocation4 + $0x50] sm:$0xff]
    %v9216 = vld [vmem:[#allocation4 + $0x58] sm:$0xff]
    %v9217 = vld [vmem:[#allocation4 + $0x60] sm:$0xff]
    %v9218 = vld [vmem:[#allocation4 + $0x68] sm:$0xff]
    %v9219 = vld [vmem:[#allocation4 + $0x70] sm:$0xff]
    %v9220 = vld [vmem:[#allocation4 + $0x78] sm:$0xff]
    %v9221 = vld [vmem:[#allocation4 + $0x80] sm:$0xff]
    %v9222 = vld [vmem:[#allocation4 + $0x88] sm:$0xff]
    %v9223 = vld [vmem:[#allocation4 + $0x90] sm:$0xff]
    %v9224 = vld [vmem:[#allocation4 + $0x98] sm:$0xff]
    %v9225 = vld [vmem:[#allocation4 + $0xa0] sm:$0xff]
    %v9226 = vld [vmem:[#allocation4 + $0xa8] sm:$0xff]
    %v9227 = vld [vmem:[#allocation4 + $0xb0] sm:$0xff]
    %v9228 = vld [vmem:[#allocation4 + $0xb8] sm:$0xff]
    %v9229 = vld [vmem:[#allocation4 + $0xc0] sm:$0xff]
    %v9230 = vld [vmem:[#allocation4 + $0xc8] sm:$0xff]
    %v9231 = vld [vmem:[#allocation4 + $0xd0] sm:$0xff]
    %v9232 = vld [vmem:[#allocation4 + $0xd8] sm:$0xff]
    %v9233 = vld [vmem:[#allocation4 + $0xe0] sm:$0xff]
    %v9234 = vld [vmem:[#allocation4 + $0xe8] sm:$0xff]
    %v9235 = vld [vmem:[#allocation4 + $0xf0] sm:$0xff]
    %v9236 = vld [vmem:[#allocation4 + $0xf8] sm:$0xff]
    %v9237 = vld [vmem:[#allocation4 + $0x100] sm:$0xff]
    %v9238 = vld [vmem:[#allocation4 + $0x108] sm:$0xff]
    %v9239 = vld [vmem:[#allocation4 + $0x110] sm:$0xff]
    %v9240 = vld [vmem:[#allocation4 + $0x118] sm:$0xff]
    %v9241 = vld [vmem:[#allocation4 + $0x120] sm:$0xff]
    %v9242 = vld [vmem:[#allocation4 + $0x128] sm:$0xff]
    %v9243 = vld [vmem:[#allocation4 + $0x130] sm:$0xff]
    %v9244 = vld [vmem:[#allocation4 + $0x138] sm:$0xff]
    %v9245 = vld [vmem:[#allocation4 + $0x140] sm:$0xff]
    %v9246 = vld [vmem:[#allocation4 + $0x148] sm:$0xff]
    %v9247 = vld [vmem:[#allocation4 + $0x150] sm:$0xff]
    %v9248 = vld [vmem:[#allocation4 + $0x158] sm:$0xff]
    %v9249 = vld [vmem:[#allocation4 + $0x160] sm:$0xff]
    %v9250 = vld [vmem:[#allocation4 + $0x168] sm:$0xff]
    %v9251 = vld [vmem:[#allocation4 + $0x170] sm:$0xff]
    %v9252 = vld [vmem:[#allocation4 + $0x178] sm:$0xff]
    %v9253 = vld [vmem:[#allocation4 + $0x180] sm:$0xff]
    %v9254 = vld [vmem:[#allocation4 + $0x188] sm:$0xff]
    %v9255 = vld [vmem:[#allocation4 + $0x190] sm:$0xff]
    %v9256 = vld [vmem:[#allocation4 + $0x198] sm:$0xff]
    %v9257 = vld [vmem:[#allocation4 + $0x1a0] sm:$0xff]
    %v9258 = vld [vmem:[#allocation4 + $0x1a8] sm:$0xff]
    %v9259 = vld [vmem:[#allocation4 + $0x1b0] sm:$0xff]
    %v9260 = vld [vmem:[#allocation4 + $0x1b8] sm:$0xff]
    %v9261 = vld [vmem:[#allocation4 + $0x1c0] sm:$0xff]
    %v9262 = vld [vmem:[#allocation4 + $0x1c8] sm:$0xff]
    %v9263 = vld [vmem:[#allocation4 + $0x1d0] sm:$0xff]
    %v9264 = vld [vmem:[#allocation4 + $0x1d8] sm:$0xff]
    %v9265 = vld [vmem:[#allocation4 + $0x1e0] sm:$0xff]
    %v9266 = vld [vmem:[#allocation4 + $0x1e8] sm:$0xff]
    %v9267 = vld [vmem:[#allocation4 + $0x1f0] sm:$0xff]
    %v9268 = vld [vmem:[#allocation4 + $0x1f8] sm:$0xff]
    %v9269 = vld [vmem:[#allocation4 + $0x200] sm:$0xff]
    %v9270 = vld [vmem:[#allocation4 + $0x208] sm:$0xff]
    %v9271 = vld [vmem:[#allocation4 + $0x210] sm:$0xff]
    %v9272 = vld [vmem:[#allocation4 + $0x218] sm:$0xff]
    %v9273 = vld [vmem:[#allocation4 + $0x220] sm:$0xff]
    %v9274 = vld [vmem:[#allocation4 + $0x228] sm:$0xff]
    %v9275 = vld [vmem:[#allocation4 + $0x230] sm:$0xff]
    %v9276 = vld [vmem:[#allocation4 + $0x238] sm:$0xff]
    %v9277 = vld [vmem:[#allocation4 + $0x240] sm:$0xff]
    %v9278 = vld [vmem:[#allocation4 + $0x248] sm:$0xff]
    %v9279 = vld [vmem:[#allocation4 + $0x250] sm:$0xff]
    %v9280 = vld [vmem:[#allocation4 + $0x258] sm:$0xff]
    %v9281 = vld [vmem:[#allocation4 + $0x260] sm:$0xff]
    %v9282 = vld [vmem:[#allocation4 + $0x268] sm:$0xff]
    %v9283 = vld [vmem:[#allocation4 + $0x270] sm:$0xff]
    %v9284 = vld [vmem:[#allocation4 + $0x278] sm:$0xff]
    %v9285 = vld [vmem:[#allocation4 + $0x280] sm:$0xff]
    %v9286 = vld [vmem:[#allocation4 + $0x288] sm:$0xff]
    %v9287 = vld [vmem:[#allocation4 + $0x290] sm:$0xff]
    %v9288 = vld [vmem:[#allocation4 + $0x298] sm:$0xff]
    %v9289 = vld [vmem:[#allocation4 + $0x2a0] sm:$0xff]
    %v9290 = vld [vmem:[#allocation4 + $0x2a8] sm:$0xff]
    %v9291 = vld [vmem:[#allocation4 + $0x2b0] sm:$0xff]
    %v9292 = vld [vmem:[#allocation4 + $0x2b8] sm:$0xff]
    %v9293 = vld [vmem:[#allocation4 + $0x2c0] sm:$0xff]
    %v9294 = vld [vmem:[#allocation4 + $0x2c8] sm:$0xff]
    %v9295 = vld [vmem:[#allocation4 + $0x2d0] sm:$0xff]
    %v9296 = vld [vmem:[#allocation4 + $0x2d8] sm:$0xff]
    %v9297 = vld [vmem:[#allocation4 + $0x2e0] sm:$0xff]
    %v9298 = vld [vmem:[#allocation4 + $0x2e8] sm:$0xff]
    %v9299 = vld [vmem:[#allocation4 + $0x2f0] sm:$0xff]
    %v9300 = vld [vmem:[#allocation4 + $0x2f8] sm:$0xff]
    %v9301 = vld [vmem:[#allocation4 + $0x300] sm:$0xff]
    %v9302 = vld [vmem:[#allocation4 + $0x308] sm:$0xff]
    %v9303 = vld [vmem:[#allocation4 + $0x310] sm:$0xff]
    %v9304 = vld [vmem:[#allocation4 + $0x318] sm:$0xff]
    %v9305 = vld [vmem:[#allocation4 + $0x320] sm:$0xff]
    %v9306 = vld [vmem:[#allocation4 + $0x328] sm:$0xff]
    %v9307 = vld [vmem:[#allocation4 + $0x330] sm:$0xff]
    %v9308 = vld [vmem:[#allocation4 + $0x338] sm:$0xff]
    %v9309 = vld [vmem:[#allocation4 + $0x340] sm:$0xff]
    %v9310 = vld [vmem:[#allocation4 + $0x348] sm:$0xff]
    %v9311 = vld [vmem:[#allocation4 + $0x350] sm:$0xff]
    %v9312 = vld [vmem:[#allocation4 + $0x358] sm:$0xff]
    %v9313 = vld [vmem:[#allocation4 + $0x360] sm:$0xff]
    %v9314 = vld [vmem:[#allocation4 + $0x368] sm:$0xff]
    %v9315 = vld [vmem:[#allocation4 + $0x370] sm:$0xff]
    %v9316 = vld [vmem:[#allocation4 + $0x378] sm:$0xff]
    %v9317 = vld [vmem:[#allocation4 + $0x380] sm:$0xff]
    %v9318 = vld [vmem:[#allocation4 + $0x388] sm:$0xff]
    %v9319 = vld [vmem:[#allocation4 + $0x390] sm:$0xff]
    %v9320 = vld [vmem:[#allocation4 + $0x398] sm:$0xff]
    %v9321 = vld [vmem:[#allocation4 + $0x3a0] sm:$0xff]
    %v9322 = vld [vmem:[#allocation4 + $0x3a8] sm:$0xff]
    %v9323 = vld [vmem:[#allocation4 + $0x3b0] sm:$0xff]
    %v9324 = vld [vmem:[#allocation4 + $0x3b8] sm:$0xff]
    %v9325 = vld [vmem:[#allocation4 + $0x3c0] sm:$0xff]
    %v9326 = vld [vmem:[#allocation4 + $0x3c8] sm:$0xff]
    %v9327 = vld [vmem:[#allocation4 + $0x3d0] sm:$0xff]
    %v9328 = vld [vmem:[#allocation4 + $0x3d8] sm:$0xff]
    %v9329 = vld [vmem:[#allocation4 + $0x3e0] sm:$0xff]
    %v9330 = vld [vmem:[#allocation4 + $0x3e8] sm:$0xff]
    %v9331 = vld [vmem:[#allocation4 + $0x3f0] sm:$0xff]
    %v9332 = vld [vmem:[#allocation4 + $0x3f8] sm:$0xff]
    %v9333 = vld [vmem:[#allocation4 + $0x400] sm:$0xff]
    %v9334 = vld [vmem:[#allocation4 + $0x408] sm:$0xff]
    %v9335 = vld [vmem:[#allocation4 + $0x410] sm:$0xff]
    %v9336 = vld [vmem:[#allocation4 + $0x418] sm:$0xff]
    %v9337 = vld [vmem:[#allocation4 + $0x420] sm:$0xff]
    %v9338 = vld [vmem:[#allocation4 + $0x428] sm:$0xff]
    %v9339 = vld [vmem:[#allocation4 + $0x430] sm:$0xff]
    %v9340 = vld [vmem:[#allocation4 + $0x438] sm:$0xff]
    %v9341 = vld [vmem:[#allocation4 + $0x440] sm:$0xff]
    %v9342 = vld [vmem:[#allocation4 + $0x448] sm:$0xff]
    %v9343 = vld [vmem:[#allocation4 + $0x450] sm:$0xff]
    %v9344 = vld [vmem:[#allocation4 + $0x458] sm:$0xff]
    %v9345 = vld [vmem:[#allocation4 + $0x460] sm:$0xff]
    %v9346 = vld [vmem:[#allocation4 + $0x468] sm:$0xff]
    %v9347 = vld [vmem:[#allocation4 + $0x470] sm:$0xff]
    %v9348 = vld [vmem:[#allocation4 + $0x478] sm:$0xff]
    %v9349 = vld [vmem:[%s3] sm:$0xf]
    %v9350 = vld [vmem:[%s3 + $0x4] sm:$0xf]
    %v9351 = vld [vmem:[%s3 + $0x8] sm:$0xf]
    %v9352 = vld [vmem:[%s3 + $0xc] sm:$0xf]
    %v9353 = vld [vmem:[%s3 + $0x10] sm:$0xf]
    %v9354 = vld [vmem:[%s3 + $0x14] sm:$0xf]
    %v9355 = vld [vmem:[%s3 + $0x18] sm:$0xf]
    %v9356 = vld [vmem:[%s3 + $0x1c] sm:$0xf]
    %v9357 = vld [vmem:[%s3 + $0x20] sm:$0xf]
    %v9358 = vld [vmem:[%s3 + $0x24] sm:$0xf]
    %v9359 = vld [vmem:[%s3 + $0x28] sm:$0xf]
    %v9360 = vld [vmem:[%s3 + $0x2c] sm:$0xf]
    %v9361 = vld [vmem:[%s3 + $0x30] sm:$0xf]
    %v9362 = vld [vmem:[%s3 + $0x34] sm:$0xf]
    %v9363 = vld [vmem:[%s3 + $0x38] sm:$0xf]
    %v9364 = vld [vmem:[%s3 + $0x3c] sm:$0xf]
    %v9365 = vld [vmem:[%s3 + $0x40] sm:$0xf]
    %v9366 = vld [vmem:[%s3 + $0x44] sm:$0xf]
    %v9367 = vld [vmem:[%s3 + $0x48] sm:$0xf]
    %v9368 = vld [vmem:[%s3 + $0x4c] sm:$0xf]
    %v9369 = vld [vmem:[%s3 + $0x50] sm:$0xf]
    %v9370 = vld [vmem:[%s3 + $0x54] sm:$0xf]
    %v9371 = vld [vmem:[%s3 + $0x58] sm:$0xf]
    %v9372 = vld [vmem:[%s3 + $0x5c] sm:$0xf]
    %v9373 = vld [vmem:[%s3 + $0x60] sm:$0xf]
    %v9374 = vld [vmem:[%s3 + $0x64] sm:$0xf]
    %v9375 = vld [vmem:[%s3 + $0x68] sm:$0xf]
    %v9376 = vld [vmem:[%s3 + $0x6c] sm:$0xf]
    %v9377 = vld [vmem:[%s3 + $0x70] sm:$0xf]
    %v9378 = vld [vmem:[%s3 + $0x74] sm:$0xf]
    %v9379 = vld [vmem:[%s3 + $0x78] sm:$0xf]
    %v9380 = vld [vmem:[%s3 + $0x7c] sm:$0xf]
    %v9381 = vld [vmem:[%s3 + $0x80] sm:$0xf]
    %v9382 = vld [vmem:[%s3 + $0x84] sm:$0xf]
    %v9383 = vld [vmem:[%s3 + $0x88] sm:$0xf]
    %v9384 = vld [vmem:[%s3 + $0x8c] sm:$0xf]
    %v9385 = vld [vmem:[%s4] sm:$0x1]
    %v9387 = vlaneseq
    %v9388 = vshrl.u32 %v9387, 7
    %v9389 = vsub.s32 0, %v9388
    %v9390 = vrot.slane %v9385, %v9389
    %v9428 = vunpack.c.l.b16 %v9349
    %v9429 = vunpack.c.l.b16 %v9350
    %v9430 = vunpack.c.l.b16 %v9351
    %v9431 = vunpack.c.l.b16 %v9352
    %v9432 = vunpack.c.l.b16 %v9353
    %v9433 = vunpack.c.l.b16 %v9354
    %v9434 = vunpack.c.l.b16 %v9355
    %v9435 = vunpack.c.l.b16 %v9356
    %v9436 = vunpack.c.l.b16 %v9357
    %v9437 = vunpack.c.l.b16 %v9358
    %v9438 = vunpack.c.l.b16 %v9359
    %v9439 = vunpack.c.l.b16 %v9360
    %v9440 = vunpack.c.l.b16 %v9361
    %v9441 = vunpack.c.l.b16 %v9362
    %v9442 = vunpack.c.l.b16 %v9363
    %v9443 = vunpack.c.l.b16 %v9364
    %v9444 = vunpack.c.l.b16 %v9365
    %v9445 = vunpack.c.l.b16 %v9366
    %v9446 = vunpack.c.l.b16 %v9367
    %v9447 = vunpack.c.l.b16 %v9368
    %v9448 = vunpack.c.l.b16 %v9369
    %v9449 = vunpack.c.l.b16 %v9370
    %v9450 = vunpack.c.l.b16 %v9371
    %v9451 = vunpack.c.l.b16 %v9372
    %v9452 = vunpack.c.l.b16 %v9373
    %v9453 = vunpack.c.l.b16 %v9374
    %v9454 = vunpack.c.l.b16 %v9375
    %v9455 = vunpack.c.l.b16 %v9376
    %v9456 = vunpack.c.l.b16 %v9377
    %v9457 = vunpack.c.l.b16 %v9378
    %v9458 = vunpack.c.l.b16 %v9379
    %v9459 = vunpack.c.l.b16 %v9380
    %v9460 = vunpack.c.l.b16 %v9381
    %v9461 = vunpack.c.l.b16 %v9382
    %v9462 = vunpack.c.l.b16 %v9383
    %v9463 = vunpack.c.l.b16 %v9384
    %v9464 = vpack.c.b16 %v9429, %v9428
    %v9465 = vpack.c.b16 %v9431, %v9430
    %v9466 = vpack.c.b16 %v9433, %v9432
    %v9467 = vpack.c.b16 %v9435, %v9434
    %v9468 = vpack.c.b16 %v9437, %v9436
    %v9469 = vpack.c.b16 %v9439, %v9438
    %v9470 = vpack.c.b16 %v9441, %v9440
    %v9471 = vpack.c.b16 %v9443, %v9442
    %v9472 = vpack.c.b16 %v9445, %v9444
    %v9473 = vpack.c.b16 %v9447, %v9446
    %v9474 = vpack.c.b16 %v9449, %v9448
    %v9475 = vpack.c.b16 %v9451, %v9450
    %v9476 = vpack.c.b16 %v9453, %v9452
    %v9477 = vpack.c.b16 %v9455, %v9454
    %v9478 = vpack.c.b16 %v9457, %v9456
    %v9479 = vpack.c.b16 %v9459, %v9458
    %v9480 = vpack.c.b16 %v9461, %v9460
    %v9481 = vpack.c.b16 %v9463, %v9462
    %v9501 = vsel %vm5321, %v9207, 0
    %v9504 = vsel %vm5321, %v9210, 0
    %v9507 = vsel %vm5321, %v9213, 0
    %v9510 = vsel %vm5321, %v9216, 0
    %v9513 = vsel %vm5321, %v9219, 0
    %v9516 = vsel %vm5321, %v9222, 0
    %v9519 = vsel %vm5321, %v9225, 0
    %v9522 = vsel %vm5321, %v9228, 0
    %v9525 = vsel %vm5321, %v9231, 0
    %v9528 = vsel %vm5321, %v9234, 0
    %v9531 = vsel %vm5321, %v9237, 0
    %v9534 = vsel %vm5321, %v9240, 0
    %v9537 = vsel %vm5321, %v9243, 0
    %v9540 = vsel %vm5321, %v9246, 0
    %v9543 = vsel %vm5321, %v9249, 0
    %v9546 = vsel %vm5321, %v9252, 0
    %v9549 = vsel %vm5321, %v9255, 0
    %v9552 = vsel %vm5321, %v9258, 0
    %v9555 = vsel %vm5321, %v9261, 0
    %v9558 = vsel %vm5321, %v9264, 0
    %v9561 = vsel %vm5321, %v9267, 0
    %v9564 = vsel %vm5321, %v9270, 0
    %v9567 = vsel %vm5321, %v9273, 0
    %v9570 = vsel %vm5321, %v9276, 0
    %v9573 = vsel %vm5321, %v9279, 0
    %v9576 = vsel %vm5321, %v9282, 0
    %v9579 = vsel %vm5321, %v9285, 0
    %v9582 = vsel %vm5321, %v9288, 0
    %v9585 = vsel %vm5321, %v9291, 0
    %v9588 = vsel %vm5321, %v9294, 0
    %v9591 = vsel %vm5321, %v9297, 0
    %v9594 = vsel %vm5321, %v9300, 0
    %v9597 = vsel %vm5321, %v9303, 0
    %v9600 = vsel %vm5321, %v9306, 0
    %v9603 = vsel %vm5321, %v9309, 0
    %v9606 = vsel %vm5321, %v9312, 0
    %v9609 = vsel %vm5321, %v9315, 0
    %v9612 = vsel %vm5321, %v9318, 0
    %v9615 = vsel %vm5321, %v9321, 0
    %v9618 = vsel %vm5321, %v9324, 0
    %v9621 = vsel %vm5321, %v9327, 0
    %v9624 = vsel %vm5321, %v9330, 0
    %v9627 = vsel %vm5321, %v9333, 0
    %v9630 = vsel %vm5321, %v9336, 0
    %v9633 = vsel %vm5321, %v9339, 0
    %v9636 = vsel %vm5321, %v9342, 0
    %v9639 = vsel %vm5321, %v9345, 0
    %v9642 = vsel %vm5321, %v9348, 0
    %9644 = vmatprep.subr.bf16.mxu0 0
    %9645 = vmatpush1.bf16.msra.mxu0 %v9464
    %9646 = vmatprep.subr.bf16.mxu0 0
    %9647 = vmatpush1.bf16.msra.mxu0 %v9465
    %9648 = vmatprep.subr.bf16.mxu0 0
    %9649 = vmatpush1.bf16.msra.mxu0 %v9466
    %9650 = vmatprep.subr.bf16.mxu0 0
    %9651 = vmatpush1.bf16.msra.mxu0 %v9467
    %9652 = vmatprep.subr.bf16.mxu0 0
    %9653 = vmatpush1.bf16.msra.mxu0 %v9468
    %9654 = vmatprep.subr.bf16.mxu0 0
    %9655 = vmatpush1.bf16.msra.mxu0 %v9469
    %9656 = vmatprep.subr.bf16.mxu0 0
    %9657 = vmatpush1.bf16.msra.mxu0 %v9470
    %9658 = vmatprep.subr.bf16.mxu0 0
    %9659 = vmatpush1.bf16.msra.mxu0 %v9471
    %9660 = vmatprep.subr.bf16.mxu0 0
    %9661 = vmatpush1.bf16.msra.mxu0 %v9472
    %9662 = vmatprep.subr.bf16.mxu0 0
    %9663 = vmatpush1.bf16.msra.mxu0 %v9473
    %9664 = vmatprep.subr.bf16.mxu0 0
    %9665 = vmatpush1.bf16.msra.mxu0 %v9474
    %9666 = vmatprep.subr.bf16.mxu0 0
    %9667 = vmatpush1.bf16.msra.mxu0 %v9475
    %9668 = vmatprep.subr.bf16.mxu0 0
    %9669 = vmatpush1.bf16.msra.mxu0 %v9476
    %9670 = vmatprep.subr.bf16.mxu0 0
    %9671 = vmatpush1.bf16.msra.mxu0 %v9477
    %9672 = vmatprep.subr.bf16.mxu0 0
    %9673 = vmatpush1.bf16.msra.mxu0 %v9478
    %9674 = vmatprep.subr.bf16.mxu0 0
    %9675 = vmatpush1.bf16.msra.mxu0 %v9479
    %9676 = vmatprep.mubr.bf16.mxu0 %v9206
    %9677 = vmatmul.mubr.bf16.gmra.mrb[0].mxu0 %v9205
    %v9678 = vpop.f32.mrb[0].mxu0
    %v9679 = vadd.f32 %v9390, %v9678
    %v9680 = vpop.f32.mrb[0].mxu0
    %v9681 = vpop.f32.mrb[0].mxu0
    %v9682 = vadd.f32 %v9390, %v9681
    %v9683 = vpop.f32.mrb[0].mxu0
    %9684 = vmatprep.mubr.bf16.mxu0 %v9209
    %9685 = vmatmul.mubr.bf16.gmra.mrb[0].mxu0 %v9208
    %v9686 = vpop.f32.mrb[0].mxu0
    %v9687 = vadd.f32 %v9390, %v9686
    %v9688 = vpop.f32.mrb[0].mxu0
    %v9689 = vpop.f32.mrb[0].mxu0
    %v9690 = vadd.f32 %v9390, %v9689
    %v9691 = vpop.f32.mrb[0].mxu0
    %9692 = vmatprep.mubr.bf16.mxu0 %v9212
    %9693 = vmatmul.mubr.bf16.gmra.mrb[0].mxu0 %v9211
    %v9694 = vpop.f32.mrb[0].mxu0
    %v9695 = vadd.f32 %v9390, %v9694
    %v9696 = vpop.f32.mrb[0].mxu0
    %v9697 = vpop.f32.mrb[0].mxu0
    %v9698 = vadd.f32 %v9390, %v9697
    %v9699 = vpop.f32.mrb[0].mxu0
    %9700 = vmatprep.mubr.bf16.mxu0 %v9215
    %9701 = vmatmul.mubr.bf16.gmra.mrb[0].mxu0 %v9214
    %v9702 = vpop.f32.mrb[0].mxu0
    %v9703 = vpop.f32.mrb[0].mxu0
    %v9704 = vpop.f32.mrb[0].mxu0
    %v9705 = vpop.f32.mrb[0].mxu0
    %9706 = vmatprep.mubr.bf16.mxu0 %v9218
    %9707 = vmatmul.mubr.bf16.gmra.mrb[0].mxu0 %v9217
    %v9708 = vpop.f32.mrb[0].mxu0
    %v9709 = vpop.f32.mrb[0].mxu0
    %v9710 = vpop.f32.mrb[0].mxu0
    %v9711 = vpop.f32.mrb[0].mxu0
    %9712 = vmatprep.mubr.bf16.mxu0 %v9221
    %9713 = vmatmul.mubr.bf16.gmra.mrb[0].mxu0 %v9220
    %v9714 = vpop.f32.mrb[0].mxu0
    %v9715 = vpop.f32.mrb[0].mxu0
    %v9716 = vpop.f32.mrb[0].mxu0
    %v9717 = vpop.f32.mrb[0].mxu0
    %9718 = vmatprep.mubr.bf16.mxu0 %v9224
    %9719 = vmatmul.mubr.bf16.gmra.mrb[0].mxu0 %v9223
    %v9720 = vpop.f32.mrb[0].mxu0
    %v9721 = vadd.f32 %v9390, %v9720
    %v9722 = vpop.f32.mrb[0].mxu0
    %v9723 = vpop.f32.mrb[0].mxu0
    %v9724 = vadd.f32 %v9390, %v9723
    %v9725 = vpop.f32.mrb[0].mxu0
    %9726 = vmatprep.mubr.bf16.mxu0 %v9227
    %9727 = vmatmul.mubr.bf16.gmra.mrb[0].mxu0 %v9226
    %v9728 = vpop.f32.mrb[0].mxu0
    %v9729 = vadd.f32 %v9390, %v9728
    %v9730 = vpop.f32.mrb[0].mxu0
    %v9731 = vpop.f32.mrb[0].mxu0
    %v9732 = vadd.f32 %v9390, %v9731
    %v9733 = vpop.f32.mrb[0].mxu0
    %9734 = vmatprep.mubr.bf16.mxu0 %v9230
    %9735 = vmatmul.mubr.bf16.gmra.mrb[0].mxu0 %v9229
    %v9736 = vpop.f32.mrb[0].mxu0
    %v9737 = vadd.f32 %v9390, %v9736
    %v9738 = vpop.f32.mrb[0].mxu0
    %v9739 = vpop.f32.mrb[0].mxu0
    %v9740 = vadd.f32 %v9390, %v9739
    %v9741 = vpop.f32.mrb[0].mxu0
    %9742 = vmatprep.mubr.bf16.mxu0 %v9233
    %9743 = vmatmul.mubr.bf16.gmra.mrb[0].mxu0 %v9232
    %v9744 = vpop.f32.mrb[0].mxu0
    %v9745 = vpop.f32.mrb[0].mxu0
    %v9746 = vpop.f32.mrb[0].mxu0
    %v9747 = vpop.f32.mrb[0].mxu0
    %9748 = vmatprep.mubr.bf16.mxu0 %v9236
    %9749 = vmatmul.mubr.bf16.gmra.mrb[0].mxu0 %v9235
    %v9750 = vpop.f32.mrb[0].mxu0
    %v9751 = vpop.f32.mrb[0].mxu0
    %v9752 = vpop.f32.mrb[0].mxu0
    %v9753 = vpop.f32.mrb[0].mxu0
    %9754 = vmatprep.mubr.bf16.mxu0 %v9239
    %9755 = vmatmul.mubr.bf16.gmra.mrb[0].mxu0 %v9238
    %v9756 = vpop.f32.mrb[0].mxu0
    %v9757 = vpop.f32.mrb[0].mxu0
    %v9758 = vpop.f32.mrb[0].mxu0
    %v9759 = vpop.f32.mrb[0].mxu0
    %9760 = vmatprep.mubr.bf16.mxu0 %v9242
    %9761 = vmatmul.mubr.bf16.gmra.mrb[0].mxu0 %v9241
    %v9762 = vpop.f32.mrb[0].mxu0
    %v9763 = vadd.f32 %v9390, %v9762
    %v9764 = vpop.f32.mrb[0].mxu0
    %v9765 = vpop.f32.mrb[0].mxu0
    %v9766 = vadd.f32 %v9390, %v9765
    %v9767 = vpop.f32.mrb[0].mxu0
    %9768 = vmatprep.mubr.bf16.mxu0 %v9245
    %9769 = vmatmul.mubr.bf16.gmra.mrb[0].mxu0 %v9244
    %v9770 = vpop.f32.mrb[0].mxu0
    %v9771 = vadd.f32 %v9390, %v9770
    %v9772 = vpop.f32.mrb[0].mxu0
    %v9773 = vpop.f32.mrb[0].mxu0
    %v9774 = vadd.f32 %v9390, %v9773
    %v9775 = vpop.f32.mrb[0].mxu0
    %9776 = vmatprep.mubr.bf16.mxu0 %v9248
    %9777 = vmatmul.mubr.bf16.gmra.mrb[0].mxu0 %v9247
    %v9778 = vpop.f32.mrb[0].mxu0
    %v9779 = vadd.f32 %v9390, %v9778
    %v9780 = vpop.f32.mrb[0].mxu0
    %v9781 = vpop.f32.mrb[0].mxu0
    %v9782 = vadd.f32 %v9390, %v9781
    %v9783 = vpop.f32.mrb[0].mxu0
    %9784 = vmatprep.mubr.bf16.mxu0 %v9251
    %9785 = vmatmul.mubr.bf16.gmra.mrb[0].mxu0 %v9250
    %v9786 = vpop.f32.mrb[0].mxu0
    %v9787 = vpop.f32.mrb[0].mxu0
    %v9788 = vpop.f32.mrb[0].mxu0
    %v9789 = vpop.f32.mrb[0].mxu0
    %9790 = vmatprep.mubr.bf16.mxu0 %v9254
    %9791 = vmatmul.mubr.bf16.gmra.mrb[0].mxu0 %v9253
    %v9792 = vpop.f32.mrb[0].mxu0
    %v9793 = vpop.f32.mrb[0].mxu0
    %v9794 = vpop.f32.mrb[0].mxu0
    %v9795 = vpop.f32.mrb[0].mxu0
    %9796 = vmatprep.mubr.bf16.mxu0 %v9257
    %9797 = vmatmul.mubr.bf16.gmra.mrb[0].mxu0 %v9256
    %v9798 = vpop.f32.mrb[0].mxu0
    %v9799 = vpop.f32.mrb[0].mxu0
    %v9800 = vpop.f32.mrb[0].mxu0
    %v9801 = vpop.f32.mrb[0].mxu0
    %9802 = vmatprep.mubr.bf16.mxu0 %v9260
    %9803 = vmatmul.mubr.bf16.gmra.mrb[0].mxu0 %v9259
    %v9804 = vpop.f32.mrb[0].mxu0
    %v9805 = vadd.f32 %v9390, %v9804
    %v9806 = vpop.f32.mrb[0].mxu0
    %v9807 = vpop.f32.mrb[0].mxu0
    %v9808 = vadd.f32 %v9390, %v9807
    %v9809 = vpop.f32.mrb[0].mxu0
    %9810 = vmatprep.mubr.bf16.mxu0 %v9263
    %9811 = vmatmul.mubr.bf16.gmra.mrb[0].mxu0 %v9262
    %v9812 = vpop.f32.mrb[0].mxu0
    %v9813 = vadd.f32 %v9390, %v9812
    %v9814 = vpop.f32.mrb[0].mxu0
    %v9815 = vpop.f32.mrb[0].mxu0
    %v9816 = vadd.f32 %v9390, %v9815
    %v9817 = vpop.f32.mrb[0].mxu0
    %9818 = vmatprep.mubr.bf16.mxu0 %v9266
    %9819 = vmatmul.mubr.bf16.gmra.mrb[0].mxu0 %v9265
    %v9820 = vpop.f32.mrb[0].mxu0
    %v9821 = vadd.f32 %v9390, %v9820
    %v9822 = vpop.f32.mrb[0].mxu0
    %v9823 = vpop.f32.mrb[0].mxu0
    %v9824 = vadd.f32 %v9390, %v9823
    %v9825 = vpop.f32.mrb[0].mxu0
    %9826 = vmatprep.mubr.bf16.mxu0 %v9269
    %9827 = vmatmul.mubr.bf16.gmra.mrb[0].mxu0 %v9268
    %v9828 = vpop.f32.mrb[0].mxu0
    %v9829 = vpop.f32.mrb[0].mxu0
    %v9830 = vpop.f32.mrb[0].mxu0
    %v9831 = vpop.f32.mrb[0].mxu0
    %9832 = vmatprep.mubr.bf16.mxu0 %v9272
    %9833 = vmatmul.mubr.bf16.gmra.mrb[0].mxu0 %v9271
    %v9834 = vpop.f32.mrb[0].mxu0
    %v9835 = vpop.f32.mrb[0].mxu0
    %v9836 = vpop.f32.mrb[0].mxu0
    %v9837 = vpop.f32.mrb[0].mxu0
    %9838 = vmatprep.mubr.bf16.mxu0 %v9275
    %9839 = vmatmul.mubr.bf16.gmra.mrb[0].mxu0 %v9274
    %v9840 = vpop.f32.mrb[0].mxu0
    %v9841 = vpop.f32.mrb[0].mxu0
    %v9842 = vpop.f32.mrb[0].mxu0
    %v9843 = vpop.f32.mrb[0].mxu0
    %9844 = vmatprep.mubr.bf16.mxu0 %v9278
    %9845 = vmatmul.mubr.bf16.gmra.mrb[0].mxu0 %v9277
    %v9846 = vpop.f32.mrb[0].mxu0
    %v9847 = vadd.f32 %v9390, %v9846
    %v9848 = vpop.f32.mrb[0].mxu0
    %v9849 = vpop.f32.mrb[0].mxu0
    %v9850 = vadd.f32 %v9390, %v9849
    %v9851 = vpop.f32.mrb[0].mxu0
    %9852 = vmatprep.mubr.bf16.mxu0 %v9281
    %9853 = vmatmul.mubr.bf16.gmra.mrb[0].mxu0 %v9280
    %v9854 = vpop.f32.mrb[0].mxu0
    %v9855 = vadd.f32 %v9390, %v9854
    %v9856 = vpop.f32.mrb[0].mxu0
    %v9857 = vpop.f32.mrb[0].mxu0
    %v9858 = vadd.f32 %v9390, %v9857
    %v9859 = vpop.f32.mrb[0].mxu0
    %9860 = vmatprep.mubr.bf16.mxu0 %v9284
    %9861 = vmatmul.mubr.bf16.gmra.mrb[0].mxu0 %v9283
    %v9862 = vpop.f32.mrb[0].mxu0
    %v9863 = vadd.f32 %v9390, %v9862
    %v9864 = vpop.f32.mrb[0].mxu0
    %v9865 = vpop.f32.mrb[0].mxu0
    %v9866 = vadd.f32 %v9390, %v9865
    %v9867 = vpop.f32.mrb[0].mxu0
    %9868 = vmatprep.mubr.bf16.mxu0 %v9287
    %9869 = vmatmul.mubr.bf16.gmra.mrb[0].mxu0 %v9286
    %v9870 = vpop.f32.mrb[0].mxu0
    %v9871 = vpop.f32.mrb[0].mxu0
    %v9872 = vpop.f32.mrb[0].mxu0
    %v9873 = vpop.f32.mrb[0].mxu0
    %9874 = vmatprep.mubr.bf16.mxu0 %v9290
    %9875 = vmatmul.mubr.bf16.gmra.mrb[0].mxu0 %v9289
    %v9876 = vpop.f32.mrb[0].mxu0
    %v9877 = vpop.f32.mrb[0].mxu0
    %v9878 = vpop.f32.mrb[0].mxu0
    %v9879 = vpop.f32.mrb[0].mxu0
    %9880 = vmatprep.mubr.bf16.mxu0 %v9293
    %9881 = vmatmul.mubr.bf16.gmra.mrb[0].mxu0 %v9292
    %v9882 = vpop.f32.mrb[0].mxu0
    %v9883 = vpop.f32.mrb[0].mxu0
    %v9884 = vpop.f32.mrb[0].mxu0
    %v9885 = vpop.f32.mrb[0].mxu0
    %9886 = vmatprep.mubr.bf16.mxu0 %v9296
    %9887 = vmatmul.mubr.bf16.gmra.mrb[0].mxu0 %v9295
    %v9888 = vpop.f32.mrb[0].mxu0
    %v9889 = vadd.f32 %v9390, %v9888
    %v9890 = vpop.f32.mrb[0].mxu0
    %v9891 = vpop.f32.mrb[0].mxu0
    %v9892 = vadd.f32 %v9390, %v9891
    %v9893 = vpop.f32.mrb[0].mxu0
    %9894 = vmatprep.mubr.bf16.mxu0 %v9299
    %9895 = vmatmul.mubr.bf16.gmra.mrb[0].mxu0 %v9298
    %v9896 = vpop.f32.mrb[0].mxu0
    %v9897 = vadd.f32 %v9390, %v9896
    %v9898 = vpop.f32.mrb[0].mxu0
    %v9899 = vpop.f32.mrb[0].mxu0
    %v9900 = vadd.f32 %v9390, %v9899
    %v9901 = vpop.f32.mrb[0].mxu0
    %9902 = vmatprep.mubr.bf16.mxu0 %v9302
    %9903 = vmatmul.mubr.bf16.gmra.mrb[0].mxu0 %v9301
    %v9904 = vpop.f32.mrb[0].mxu0
    %v9905 = vadd.f32 %v9390, %v9904
    %v9906 = vpop.f32.mrb[0].mxu0
    %v9907 = vpop.f32.mrb[0].mxu0
    %v9908 = vadd.f32 %v9390, %v9907
    %v9909 = vpop.f32.mrb[0].mxu0
    %9910 = vmatprep.mubr.bf16.mxu0 %v9305
    %9911 = vmatmul.mubr.bf16.gmra.mrb[0].mxu0 %v9304
    %v9912 = vpop.f32.mrb[0].mxu0
    %v9913 = vpop.f32.mrb[0].mxu0
    %v9914 = vpop.f32.mrb[0].mxu0
    %v9915 = vpop.f32.mrb[0].mxu0
    %9916 = vmatprep.mubr.bf16.mxu0 %v9308
    %9917 = vmatmul.mubr.bf16.gmra.mrb[0].mxu0 %v9307
    %v9918 = vpop.f32.mrb[0].mxu0
    %v9919 = vpop.f32.mrb[0].mxu0
    %v9920 = vpop.f32.mrb[0].mxu0
    %v9921 = vpop.f32.mrb[0].mxu0
    %9922 = vmatprep.mubr.bf16.mxu0 %v9311
    %9923 = vmatmul.mubr.bf16.gmra.mrb[0].mxu0 %v9310
    %v9924 = vpop.f32.mrb[0].mxu0
    %v9925 = vpop.f32.mrb[0].mxu0
    %v9926 = vpop.f32.mrb[0].mxu0
    %v9927 = vpop.f32.mrb[0].mxu0
    %9928 = vmatprep.mubr.bf16.mxu0 %v9314
    %9929 = vmatmul.mubr.bf16.gmra.mrb[0].mxu0 %v9313
    %v9930 = vpop.f32.mrb[0].mxu0
    %v9931 = vadd.f32 %v9390, %v9930
    %v9932 = vpop.f32.mrb[0].mxu0
    %v9933 = vpop.f32.mrb[0].mxu0
    %v9934 = vadd.f32 %v9390, %v9933
    %v9935 = vpop.f32.mrb[0].mxu0
    %9936 = vmatprep.mubr.bf16.mxu0 %v9317
    %9937 = vmatmul.mubr.bf16.gmra.mrb[0].mxu0 %v9316
    %v9938 = vpop.f32.mrb[0].mxu0
    %v9939 = vadd.f32 %v9390, %v9938
    %v9940 = vpop.f32.mrb[0].mxu0
    %v9941 = vpop.f32.mrb[0].mxu0
    %v9942 = vadd.f32 %v9390, %v9941
    %v9943 = vpop.f32.mrb[0].mxu0
    %9944 = vmatprep.mubr.bf16.mxu0 %v9320
    %9945 = vmatmul.mubr.bf16.gmra.mrb[0].mxu0 %v9319
    %v9946 = vpop.f32.mrb[0].mxu0
    %v9947 = vadd.f32 %v9390, %v9946
    %v9948 = vpop.f32.mrb[0].mxu0
    %v9949 = vpop.f32.mrb[0].mxu0
    %v9950 = vadd.f32 %v9390, %v9949
    %v9951 = vpop.f32.mrb[0].mxu0
    %9952 = vmatprep.mubr.bf16.mxu0 %v9323
    %9953 = vmatmul.mubr.bf16.gmra.mrb[0].mxu0 %v9322
    %v9954 = vpop.f32.mrb[0].mxu0
    %v9955 = vpop.f32.mrb[0].mxu0
    %v9956 = vpop.f32.mrb[0].mxu0
    %v9957 = vpop.f32.mrb[0].mxu0
    %9958 = vmatprep.mubr.bf16.mxu0 %v9326
    %9959 = vmatmul.mubr.bf16.gmra.mrb[0].mxu0 %v9325
    %v9960 = vpop.f32.mrb[0].mxu0
    %v9961 = vpop.f32.mrb[0].mxu0
    %v9962 = vpop.f32.mrb[0].mxu0
    %v9963 = vpop.f32.mrb[0].mxu0
    %9964 = vmatprep.mubr.bf16.mxu0 %v9329
    %9965 = vmatmul.mubr.bf16.gmra.mrb[0].mxu0 %v9328
    %v9966 = vpop.f32.mrb[0].mxu0
    %v9967 = vpop.f32.mrb[0].mxu0
    %v9968 = vpop.f32.mrb[0].mxu0
    %v9969 = vpop.f32.mrb[0].mxu0
    %9970 = vmatprep.mubr.bf16.mxu0 %v9332
    %9971 = vmatmul.mubr.bf16.gmra.mrb[0].mxu0 %v9331
    %v9972 = vpop.f32.mrb[0].mxu0
    %v9973 = vadd.f32 %v9390, %v9972
    %v9974 = vpop.f32.mrb[0].mxu0
    %v9975 = vpop.f32.mrb[0].mxu0
    %v9976 = vadd.f32 %v9390, %v9975
    %v9977 = vpop.f32.mrb[0].mxu0
    %9978 = vmatprep.mubr.bf16.mxu0 %v9335
    %9979 = vmatmul.mubr.bf16.gmra.mrb[0].mxu0 %v9334
    %v9980 = vpop.f32.mrb[0].mxu0
    %v9981 = vadd.f32 %v9390, %v9980
    %v9982 = vpop.f32.mrb[0].mxu0
    %v9983 = vpop.f32.mrb[0].mxu0
    %v9984 = vadd.f32 %v9390, %v9983
    %v9985 = vpop.f32.mrb[0].mxu0
    %9986 = vmatprep.mubr.bf16.mxu0 %v9338
    %9987 = vmatmul.mubr.bf16.gmra.mrb[0].mxu0 %v9337
    %v9988 = vpop.f32.mrb[0].mxu0
    %v9989 = vadd.f32 %v9390, %v9988
    %v9990 = vpop.f32.mrb[0].mxu0
    %v9991 = vpop.f32.mrb[0].mxu0
    %v9992 = vadd.f32 %v9390, %v9991
    %v9993 = vpop.f32.mrb[0].mxu0
    %9994 = vmatprep.mubr.bf16.mxu0 %v9341
    %9995 = vmatmul.mubr.bf16.gmra.mrb[0].mxu0 %v9340
    %v9996 = vpop.f32.mrb[0].mxu0
    %v9997 = vpop.f32.mrb[0].mxu0
    %v9998 = vpop.f32.mrb[0].mxu0
    %v9999 = vpop.f32.mrb[0].mxu0
    %10000 = vmatprep.mubr.bf16.mxu0 %v9344
    %10001 = vmatmul.mubr.bf16.gmra.mrb[0].mxu0 %v9343
    %v10002 = vpop.f32.mrb[0].mxu0
    %v10003 = vpop.f32.mrb[0].mxu0
    %v10004 = vpop.f32.mrb[0].mxu0
    %v10005 = vpop.f32.mrb[0].mxu0
    %10006 = vmatprep.mubr.bf16.mxu0 %v9347
    %10007 = vmatmul.mubr.bf16.gmra.mrb[0].mxu0 %v9346
    %v10008 = vpop.f32.mrb[0].mxu0
    %v10009 = vpop.f32.mrb[0].mxu0
    %v10010 = vpop.f32.mrb[0].mxu0
    %v10011 = vpop.f32.mrb[0].mxu0
    %10012 = vdwg.mxu0
    %10013 = vmatprep.subr.bf16.mxu0 0
    %10014 = vmatpush1.bf16.msra.mxu0 %v9480
    %10015 = vmatprep.subr.bf16.mxu0 0
    %10016 = vmatpush1.bf16.msra.mxu0 %v9481
    %10017 = vmatprep.subr.bf16.mxu0 0
    %10018 = vmatpush1.bf16.msra.mxu0 0
    %10019 = vmatprep.subr.bf16.mxu0 0
    %10020 = vmatpush1.bf16.msra.mxu0 0
    %10021 = vmatprep.subr.bf16.mxu0 0
    %10022 = vmatpush1.bf16.msra.mxu0 0
    %10023 = vmatprep.subr.bf16.mxu0 0
    %10024 = vmatpush1.bf16.msra.mxu0 0
    %10025 = vmatprep.subr.bf16.mxu0 0
    %10026 = vmatpush1.bf16.msra.mxu0 0
    %10027 = vmatprep.subr.bf16.mxu0 0
    %10028 = vmatpush1.bf16.msra.mxu0 0
    %10029 = vmatprep.subr.bf16.mxu0 0
    %10030 = vmatpush1.bf16.msra.mxu0 0
    %10031 = vmatprep.subr.bf16.mxu0 0
    %10032 = vmatpush1.bf16.msra.mxu0 0
    %10033 = vmatprep.subr.bf16.mxu0 0
    %10034 = vmatpush1.bf16.msra.mxu0 0
    %10035 = vmatprep.subr.bf16.mxu0 0
    %10036 = vmatpush1.bf16.msra.mxu0 0
    %10037 = vmatprep.subr.bf16.mxu0 0
    %10038 = vmatpush1.bf16.msra.mxu0 0
    %10039 = vmatprep.subr.bf16.mxu0 0
    %10040 = vmatpush1.bf16.msra.mxu0 0
    %10041 = vmatprep.subr.bf16.mxu0 0
    %10042 = vmatpush1.bf16.msra.mxu0 0
    %10043 = vmatprep.subr.bf16.mxu0 0
    %10044 = vmatpush1.bf16.msra.mxu0 0
    %10045 = vmatprep.mubr.bf16.mxu0 0
    %10046 = vmatmul.mubr.bf16.gmra.mrb[0].mxu0 %v9501
    %v10047 = vpop.f32.mrb[0].mxu0
    %v10048 = vadd.f32 %v9679, %v10047
    %v10049 = vpop.f32.mrb[0].mxu0
    %v10050 = vpop.f32.mrb[0].mxu0
    %v10051 = vadd.f32 %v9682, %v10050
    %v10052 = vpop.f32.mrb[0].mxu0
    %10053 = vmatprep.mubr.bf16.mxu0 0
    %10054 = vmatmul.mubr.bf16.gmra.mrb[0].mxu0 %v9504
    %v10055 = vpop.f32.mrb[0].mxu0
    %v10056 = vadd.f32 %v9687, %v10055
    %v10057 = vpop.f32.mrb[0].mxu0
    %v10058 = vpop.f32.mrb[0].mxu0
    %v10059 = vadd.f32 %v9690, %v10058
    %v10060 = vpop.f32.mrb[0].mxu0
    %10061 = vmatprep.mubr.bf16.mxu0 0
    %10062 = vmatmul.mubr.bf16.gmra.mrb[0].mxu0 %v9507
    %v10063 = vpop.f32.mrb[0].mxu0
    %v10064 = vadd.f32 %v9695, %v10063
    %v10065 = vpop.f32.mrb[0].mxu0
    %v10066 = vpop.f32.mrb[0].mxu0
    %v10067 = vadd.f32 %v9698, %v10066
    %v10068 = vpop.f32.mrb[0].mxu0
    %10069 = vmatprep.mubr.bf16.mxu0 0
    %10070 = vmatmul.mubr.bf16.gmra.mrb[0].mxu0 %v9510
    %v10071 = vpop.f32.mrb[0].mxu0
    %v10072 = vpop.f32.mrb[0].mxu0
    %v10073 = vpop.f32.mrb[0].mxu0
    %v10074 = vpop.f32.mrb[0].mxu0
    %10075 = vmatprep.mubr.bf16.mxu0 0
    %10076 = vmatmul.mubr.bf16.gmra.mrb[0].mxu0 %v9513
    %v10077 = vpop.f32.mrb[0].mxu0
    %v10078 = vpop.f32.mrb[0].mxu0
    %v10079 = vpop.f32.mrb[0].mxu0
    %v10080 = vpop.f32.mrb[0].mxu0
    %10081 = vmatprep.mubr.bf16.mxu0 0
    %10082 = vmatmul.mubr.bf16.gmra.mrb[0].mxu0 %v9516
    %v10083 = vpop.f32.mrb[0].mxu0
    %v10084 = vpop.f32.mrb[0].mxu0
    %v10085 = vpop.f32.mrb[0].mxu0
    %v10086 = vpop.f32.mrb[0].mxu0
    %10087 = vmatprep.mubr.bf16.mxu0 0
    %10088 = vmatmul.mubr.bf16.gmra.mrb[0].mxu0 %v9519
    %v10089 = vpop.f32.mrb[0].mxu0
    %v10090 = vadd.f32 %v9721, %v10089
    %v10091 = vpop.f32.mrb[0].mxu0
    %v10092 = vpop.f32.mrb[0].mxu0
    %v10093 = vadd.f32 %v9724, %v10092
    %v10094 = vpop.f32.mrb[0].mxu0
    %10095 = vmatprep.mubr.bf16.mxu0 0
    %10096 = vmatmul.mubr.bf16.gmra.mrb[0].mxu0 %v9522
    %v10097 = vpop.f32.mrb[0].mxu0
    %v10098 = vadd.f32 %v9729, %v10097
    %v10099 = vpop.f32.mrb[0].mxu0
    %v10100 = vpop.f32.mrb[0].mxu0
    %v10101 = vadd.f32 %v9732, %v10100
    %v10102 = vpop.f32.mrb[0].mxu0
    %10103 = vmatprep.mubr.bf16.mxu0 0
    %10104 = vmatmul.mubr.bf16.gmra.mrb[0].mxu0 %v9525
    %v10105 = vpop.f32.mrb[0].mxu0
    %v10106 = vadd.f32 %v9737, %v10105
    %v10107 = vpop.f32.mrb[0].mxu0
    %v10108 = vpop.f32.mrb[0].mxu0
    %v10109 = vadd.f32 %v9740, %v10108
    %v10110 = vpop.f32.mrb[0].mxu0
    %10111 = vmatprep.mubr.bf16.mxu0 0
    %10112 = vmatmul.mubr.bf16.gmra.mrb[0].mxu0 %v9528
    %v10113 = vpop.f32.mrb[0].mxu0
    %v10114 = vpop.f32.mrb[0].mxu0
    %v10115 = vpop.f32.mrb[0].mxu0
    %v10116 = vpop.f32.mrb[0].mxu0
    %10117 = vmatprep.mubr.bf16.mxu0 0
    %10118 = vmatmul.mubr.bf16.gmra.mrb[0].mxu0 %v9531
    %v10119 = vpop.f32.mrb[0].mxu0
    %v10120 = vpop.f32.mrb[0].mxu0
    %v10121 = vpop.f32.mrb[0].mxu0
    %v10122 = vpop.f32.mrb[0].mxu0
    %10123 = vmatprep.mubr.bf16.mxu0 0
    %10124 = vmatmul.mubr.bf16.gmra.mrb[0].mxu0 %v9534
    %v10125 = vpop.f32.mrb[0].mxu0
    %v10126 = vpop.f32.mrb[0].mxu0
    %v10127 = vpop.f32.mrb[0].mxu0
    %v10128 = vpop.f32.mrb[0].mxu0
    %10129 = vmatprep.mubr.bf16.mxu0 0
    %10130 = vmatmul.mubr.bf16.gmra.mrb[0].mxu0 %v9537
    %v10131 = vpop.f32.mrb[0].mxu0
    %v10132 = vadd.f32 %v9763, %v10131
    %v10133 = vpop.f32.mrb[0].mxu0
    %v10134 = vpop.f32.mrb[0].mxu0
    %v10135 = vadd.f32 %v9766, %v10134
    %v10136 = vpop.f32.mrb[0].mxu0
    %10137 = vmatprep.mubr.bf16.mxu0 0
    %10138 = vmatmul.mubr.bf16.gmra.mrb[0].mxu0 %v9540
    %v10139 = vpop.f32.mrb[0].mxu0
    %v10140 = vadd.f32 %v9771, %v10139
    %v10141 = vpop.f32.mrb[0].mxu0
    %v10142 = vpop.f32.mrb[0].mxu0
    %v10143 = vadd.f32 %v9774, %v10142
    %v10144 = vpop.f32.mrb[0].mxu0
    %10145 = vmatprep.mubr.bf16.mxu0 0
    %10146 = vmatmul.mubr.bf16.gmra.mrb[0].mxu0 %v9543
    %v10147 = vpop.f32.mrb[0].mxu0
    %v10148 = vadd.f32 %v9779, %v10147
    %v10149 = vpop.f32.mrb[0].mxu0
    %v10150 = vpop.f32.mrb[0].mxu0
    %v10151 = vadd.f32 %v9782, %v10150
    %v10152 = vpop.f32.mrb[0].mxu0
    %10153 = vmatprep.mubr.bf16.mxu0 0
    %10154 = vmatmul.mubr.bf16.gmra.mrb[0].mxu0 %v9546
    %v10155 = vpop.f32.mrb[0].mxu0
    %v10156 = vpop.f32.mrb[0].mxu0
    %v10157 = vpop.f32.mrb[0].mxu0
    %v10158 = vpop.f32.mrb[0].mxu0
    %10159 = vmatprep.mubr.bf16.mxu0 0
    %10160 = vmatmul.mubr.bf16.gmra.mrb[0].mxu0 %v9549
    %v10161 = vpop.f32.mrb[0].mxu0
    %v10162 = vpop.f32.mrb[0].mxu0
    %v10163 = vpop.f32.mrb[0].mxu0
    %v10164 = vpop.f32.mrb[0].mxu0
    %10165 = vmatprep.mubr.bf16.mxu0 0
    %10166 = vmatmul.mubr.bf16.gmra.mrb[0].mxu0 %v9552
    %v10167 = vpop.f32.mrb[0].mxu0
    %v10168 = vpop.f32.mrb[0].mxu0
    %v10169 = vpop.f32.mrb[0].mxu0
    %v10170 = vpop.f32.mrb[0].mxu0
    %10171 = vmatprep.mubr.bf16.mxu0 0
    %10172 = vmatmul.mubr.bf16.gmra.mrb[0].mxu0 %v9555
    %v10173 = vpop.f32.mrb[0].mxu0
    %v10174 = vadd.f32 %v9805, %v10173
    %v10175 = vpop.f32.mrb[0].mxu0
    %v10176 = vpop.f32.mrb[0].mxu0
    %v10177 = vadd.f32 %v9808, %v10176
    %v10178 = vpop.f32.mrb[0].mxu0
    %10179 = vmatprep.mubr.bf16.mxu0 0
    %10180 = vmatmul.mubr.bf16.gmra.mrb[0].mxu0 %v9558
    %v10181 = vpop.f32.mrb[0].mxu0
    %v10182 = vadd.f32 %v9813, %v10181
    %v10183 = vpop.f32.mrb[0].mxu0
    %v10184 = vpop.f32.mrb[0].mxu0
    %v10185 = vadd.f32 %v9816, %v10184
    %v10186 = vpop.f32.mrb[0].mxu0
    %10187 = vmatprep.mubr.bf16.mxu0 0
    %10188 = vmatmul.mubr.bf16.gmra.mrb[0].mxu0 %v9561
    %v10189 = vpop.f32.mrb[0].mxu0
    %v10190 = vadd.f32 %v9821, %v10189
    %v10191 = vpop.f32.mrb[0].mxu0
    %v10192 = vpop.f32.mrb[0].mxu0
    %v10193 = vadd.f32 %v9824, %v10192
    %v10194 = vpop.f32.mrb[0].mxu0
    %10195 = vmatprep.mubr.bf16.mxu0 0
    %10196 = vmatmul.mubr.bf16.gmra.mrb[0].mxu0 %v9564
    %v10197 = vpop.f32.mrb[0].mxu0
    %v10198 = vpop.f32.mrb[0].mxu0
    %v10199 = vpop.f32.mrb[0].mxu0
    %v10200 = vpop.f32.mrb[0].mxu0
    %10201 = vmatprep.mubr.bf16.mxu0 0
    %10202 = vmatmul.mubr.bf16.gmra.mrb[0].mxu0 %v9567
    %v10203 = vpop.f32.mrb[0].mxu0
    %v10204 = vpop.f32.mrb[0].mxu0
    %v10205 = vpop.f32.mrb[0].mxu0
    %v10206 = vpop.f32.mrb[0].mxu0
    %10207 = vmatprep.mubr.bf16.mxu0 0
    %10208 = vmatmul.mubr.bf16.gmra.mrb[0].mxu0 %v9570
    %v10209 = vpop.f32.mrb[0].mxu0
    %v10210 = vpop.f32.mrb[0].mxu0
    %v10211 = vpop.f32.mrb[0].mxu0
    %v10212 = vpop.f32.mrb[0].mxu0
    %10213 = vmatprep.mubr.bf16.mxu0 0
    %10214 = vmatmul.mubr.bf16.gmra.mrb[0].mxu0 %v9573
    %v10215 = vpop.f32.mrb[0].mxu0
    %v10216 = vadd.f32 %v9847, %v10215
    %v10217 = vpop.f32.mrb[0].mxu0
    %v10218 = vpop.f32.mrb[0].mxu0
    %v10219 = vadd.f32 %v9850, %v10218
    %v10220 = vpop.f32.mrb[0].mxu0
    %10221 = vmatprep.mubr.bf16.mxu0 0
    %10222 = vmatmul.mubr.bf16.gmra.mrb[0].mxu0 %v9576
    %v10223 = vpop.f32.mrb[0].mxu0
    %v10224 = vadd.f32 %v9855, %v10223
    %v10225 = vpop.f32.mrb[0].mxu0
    %v10226 = vpop.f32.mrb[0].mxu0
    %v10227 = vadd.f32 %v9858, %v10226
    %v10228 = vpop.f32.mrb[0].mxu0
    %10229 = vmatprep.mubr.bf16.mxu0 0
    %10230 = vmatmul.mubr.bf16.gmra.mrb[0].mxu0 %v9579
    %v10231 = vpop.f32.mrb[0].mxu0
    %v10232 = vadd.f32 %v9863, %v10231
    %v10233 = vpop.f32.mrb[0].mxu0
    %v10234 = vpop.f32.mrb[0].mxu0
    %v10235 = vadd.f32 %v9866, %v10234
    %v10236 = vpop.f32.mrb[0].mxu0
    %10237 = vmatprep.mubr.bf16.mxu0 0
    %10238 = vmatmul.mubr.bf16.gmra.mrb[0].mxu0 %v9582
    %v10239 = vpop.f32.mrb[0].mxu0
    %v10240 = vpop.f32.mrb[0].mxu0
    %v10241 = vpop.f32.mrb[0].mxu0
    %v10242 = vpop.f32.mrb[0].mxu0
    %10243 = vmatprep.mubr.bf16.mxu0 0
    %10244 = vmatmul.mubr.bf16.gmra.mrb[0].mxu0 %v9585
    %v10245 = vpop.f32.mrb[0].mxu0
    %v10246 = vpop.f32.mrb[0].mxu0
    %v10247 = vpop.f32.mrb[0].mxu0
    %v10248 = vpop.f32.mrb[0].mxu0
    %10249 = vmatprep.mubr.bf16.mxu0 0
    %10250 = vmatmul.mubr.bf16.gmra.mrb[0].mxu0 %v9588
    %v10251 = vpop.f32.mrb[0].mxu0
    %v10252 = vpop.f32.mrb[0].mxu0
    %v10253 = vpop.f32.mrb[0].mxu0
    %v10254 = vpop.f32.mrb[0].mxu0
    %10255 = vmatprep.mubr.bf16.mxu0 0
    %10256 = vmatmul.mubr.bf16.gmra.mrb[0].mxu0 %v9591
    %v10257 = vpop.f32.mrb[0].mxu0
    %v10258 = vadd.f32 %v9889, %v10257
    %v10259 = vpop.f32.mrb[0].mxu0
    %v10260 = vpop.f32.mrb[0].mxu0
    %v10261 = vadd.f32 %v9892, %v10260
    %v10262 = vpop.f32.mrb[0].mxu0
    %10263 = vmatprep.mubr.bf16.mxu0 0
    %10264 = vmatmul.mubr.bf16.gmra.mrb[0].mxu0 %v9594
    %v10265 = vpop.f32.mrb[0].mxu0
    %v10266 = vadd.f32 %v9897, %v10265
    %v10267 = vpop.f32.mrb[0].mxu0
    %v10268 = vpop.f32.mrb[0].mxu0
    %v10269 = vadd.f32 %v9900, %v10268
    %v10270 = vpop.f32.mrb[0].mxu0
    %10271 = vmatprep.mubr.bf16.mxu0 0
    %10272 = vmatmul.mubr.bf16.gmra.mrb[0].mxu0 %v9597
    %v10273 = vpop.f32.mrb[0].mxu0
    %v10274 = vadd.f32 %v9905, %v10273
    %v10275 = vpop.f32.mrb[0].mxu0
    %v10276 = vpop.f32.mrb[0].mxu0
    %v10277 = vadd.f32 %v9908, %v10276
    %v10278 = vpop.f32.mrb[0].mxu0
    %10279 = vmatprep.mubr.bf16.mxu0 0
    %10280 = vmatmul.mubr.bf16.gmra.mrb[0].mxu0 %v9600
    %v10281 = vpop.f32.mrb[0].mxu0
    %v10282 = vpop.f32.mrb[0].mxu0
    %v10283 = vpop.f32.mrb[0].mxu0
    %v10284 = vpop.f32.mrb[0].mxu0
    %10285 = vmatprep.mubr.bf16.mxu0 0
    %10286 = vmatmul.mubr.bf16.gmra.mrb[0].mxu0 %v9603
    %v10287 = vpop.f32.mrb[0].mxu0
    %v10288 = vpop.f32.mrb[0].mxu0
    %v10289 = vpop.f32.mrb[0].mxu0
    %v10290 = vpop.f32.mrb[0].mxu0
    %10291 = vmatprep.mubr.bf16.mxu0 0
    %10292 = vmatmul.mubr.bf16.gmra.mrb[0].mxu0 %v9606
    %v10293 = vpop.f32.mrb[0].mxu0
    %v10294 = vpop.f32.mrb[0].mxu0
    %v10295 = vpop.f32.mrb[0].mxu0
    %v10296 = vpop.f32.mrb[0].mxu0
    %10297 = vmatprep.mubr.bf16.mxu0 0
    %10298 = vmatmul.mubr.bf16.gmra.mrb[0].mxu0 %v9609
    %v10299 = vpop.f32.mrb[0].mxu0
    %v10300 = vadd.f32 %v9931, %v10299
    %v10301 = vpop.f32.mrb[0].mxu0
    %v10302 = vpop.f32.mrb[0].mxu0
    %v10303 = vadd.f32 %v9934, %v10302
    %v10304 = vpop.f32.mrb[0].mxu0
    %10305 = vmatprep.mubr.bf16.mxu0 0
    %10306 = vmatmul.mubr.bf16.gmra.mrb[0].mxu0 %v9612
    %v10307 = vpop.f32.mrb[0].mxu0
    %v10308 = vadd.f32 %v9939, %v10307
    %v10309 = vpop.f32.mrb[0].mxu0
    %v10310 = vpop.f32.mrb[0].mxu0
    %v10311 = vadd.f32 %v9942, %v10310
    %v10312 = vpop.f32.mrb[0].mxu0
    %10313 = vmatprep.mubr.bf16.mxu0 0
    %10314 = vmatmul.mubr.bf16.gmra.mrb[0].mxu0 %v9615
    %v10315 = vpop.f32.mrb[0].mxu0
    %v10316 = vadd.f32 %v9947, %v10315
    %v10317 = vpop.f32.mrb[0].mxu0
    %v10318 = vpop.f32.mrb[0].mxu0
    %v10319 = vadd.f32 %v9950, %v10318
    %v10320 = vpop.f32.mrb[0].mxu0
    %10321 = vmatprep.mubr.bf16.mxu0 0
    %10322 = vmatmul.mubr.bf16.gmra.mrb[0].mxu0 %v9618
    %v10323 = vpop.f32.mrb[0].mxu0
    %v10324 = vpop.f32.mrb[0].mxu0
    %v10325 = vpop.f32.mrb[0].mxu0
    %v10326 = vpop.f32.mrb[0].mxu0
    %10327 = vmatprep.mubr.bf16.mxu0 0
    %10328 = vmatmul.mubr.bf16.gmra.mrb[0].mxu0 %v9621
    %v10329 = vpop.f32.mrb[0].mxu0
    %v10330 = vpop.f32.mrb[0].mxu0
    %v10331 = vpop.f32.mrb[0].mxu0
    %v10332 = vpop.f32.mrb[0].mxu0
    %10333 = vmatprep.mubr.bf16.mxu0 0
    %10334 = vmatmul.mubr.bf16.gmra.mrb[0].mxu0 %v9624
    %v10335 = vpop.f32.mrb[0].mxu0
    %v10336 = vpop.f32.mrb[0].mxu0
    %v10337 = vpop.f32.mrb[0].mxu0
    %v10338 = vpop.f32.mrb[0].mxu0
    %10339 = vmatprep.mubr.bf16.mxu0 0
    %10340 = vmatmul.mubr.bf16.gmra.mrb[0].mxu0 %v9627
    %v10341 = vpop.f32.mrb[0].mxu0
    %v10342 = vadd.f32 %v9973, %v10341
    %v10343 = vpop.f32.mrb[0].mxu0
    %v10344 = vpop.f32.mrb[0].mxu0
    %v10345 = vadd.f32 %v9976, %v10344
    %v10346 = vpop.f32.mrb[0].mxu0
    %10347 = vmatprep.mubr.bf16.mxu0 0
    %10348 = vmatmul.mubr.bf16.gmra.mrb[0].mxu0 %v9630
    %v10349 = vpop.f32.mrb[0].mxu0
    %v10350 = vadd.f32 %v9981, %v10349
    %v10351 = vpop.f32.mrb[0].mxu0
    %v10352 = vpop.f32.mrb[0].mxu0
    %v10353 = vadd.f32 %v9984, %v10352
    %v10354 = vpop.f32.mrb[0].mxu0
    %10355 = vmatprep.mubr.bf16.mxu0 0
    %10356 = vmatmul.mubr.bf16.gmra.mrb[0].mxu0 %v9633
    %v10357 = vpop.f32.mrb[0].mxu0
    %v10358 = vadd.f32 %v9989, %v10357
    %v10359 = vpop.f32.mrb[0].mxu0
    %v10360 = vpop.f32.mrb[0].mxu0
    %v10361 = vadd.f32 %v9992, %v10360
    %v10362 = vpop.f32.mrb[0].mxu0
    %10363 = vmatprep.mubr.bf16.mxu0 0
    %10364 = vmatmul.mubr.bf16.gmra.mrb[0].mxu0 %v9636
    %v10365 = vpop.f32.mrb[0].mxu0
    %v10366 = vpop.f32.mrb[0].mxu0
    %v10367 = vpop.f32.mrb[0].mxu0
    %v10368 = vpop.f32.mrb[0].mxu0
    %10369 = vmatprep.mubr.bf16.mxu0 0
    %10370 = vmatmul.mubr.bf16.gmra.mrb[0].mxu0 %v9639
    %v10371 = vpop.f32.mrb[0].mxu0
    %v10372 = vpop.f32.mrb[0].mxu0
    %v10373 = vpop.f32.mrb[0].mxu0
    %v10374 = vpop.f32.mrb[0].mxu0
    %10375 = vmatprep.mubr.bf16.mxu0 0
    %10376 = vmatmul.mubr.bf16.gmra.mrb[0].mxu0 %v9642
    %v10377 = vpop.f32.mrb[0].mxu0
    %v10378 = vpop.f32.mrb[0].mxu0
    %v10379 = vpop.f32.mrb[0].mxu0
    %v10380 = vpop.f32.mrb[0].mxu0
    %10381 = vdwg.mxu0
    %v10382 = vmax.f32 %v10048, 0.0
    %v10383 = vmax.f32 %v10051, 0.0
    %v10384 = vmax.f32 %v10056, 0.0
    %v10385 = vmax.f32 %v10059, 0.0
    %v10386 = vmax.f32 %v10064, 0.0
    %v10387 = vmax.f32 %v10067, 0.0
    %v10388 = vmax.f32 %v10090, 0.0
    %v10389 = vmax.f32 %v10093, 0.0
    %v10390 = vmax.f32 %v10098, 0.0
    %v10391 = vmax.f32 %v10101, 0.0
    %v10392 = vmax.f32 %v10106, 0.0
    %v10393 = vmax.f32 %v10109, 0.0
    %v10394 = vmax.f32 %v10132, 0.0
    %v10395 = vmax.f32 %v10135, 0.0
    %v10396 = vmax.f32 %v10140, 0.0
    %v10397 = vmax.f32 %v10143, 0.0
    %v10398 = vmax.f32 %v10148, 0.0
    %v10399 = vmax.f32 %v10151, 0.0
    %v10400 = vmax.f32 %v10174, 0.0
    %v10401 = vmax.f32 %v10177, 0.0
    %v10402 = vmax.f32 %v10182, 0.0
    %v10403 = vmax.f32 %v10185, 0.0
    %v10404 = vmax.f32 %v10190, 0.0
    %v10405 = vmax.f32 %v10193, 0.0
    %v10406 = vmax.f32 %v10216, 0.0
    %v10407 = vmax.f32 %v10219, 0.0
    %v10408 = vmax.f32 %v10224, 0.0
    %v10409 = vmax.f32 %v10227, 0.0
    %v10410 = vmax.f32 %v10232, 0.0
    %v10411 = vmax.f32 %v10235, 0.0
    %v10412 = vmax.f32 %v10258, 0.0
    %v10413 = vmax.f32 %v10261, 0.0
    %v10414 = vmax.f32 %v10266, 0.0
    %v10415 = vmax.f32 %v10269, 0.0
    %v10416 = vmax.f32 %v10274, 0.0
    %v10417 = vmax.f32 %v10277, 0.0
    %v10418 = vmax.f32 %v10300, 0.0
    %v10419 = vmax.f32 %v10303, 0.0
    %v10420 = vmax.f32 %v10308, 0.0
    %v10421 = vmax.f32 %v10311, 0.0
    %v10422 = vmax.f32 %v10316, 0.0
    %v10423 = vmax.f32 %v10319, 0.0
    %v10424 = vmax.f32 %v10342, 0.0
    %v10425 = vmax.f32 %v10345, 0.0
    %v10426 = vmax.f32 %v10350, 0.0
    %v10427 = vmax.f32 %v10353, 0.0
    %v10428 = vmax.f32 %v10358, 0.0
    %v10429 = vmax.f32 %v10361, 0.0
    %v10438 = vrot.slane %v10382, 1
    %v10439 = vrot.slane %v10388, 1
    %v10440 = vrot.slane %v10394, 1
    %v10441 = vrot.slane %v10400, 1
    %v10442 = vrot.slane %v10406, 1
    %v10443 = vrot.slane %v10412, 1
    %v10444 = vrot.slane %v10418, 1
    %v10445 = vrot.slane %v10424, 1
    %v10454 = vmax.f32 %v10382, %v10438
    %v10455 = vmax.f32 %v10388, %v10439
    %v10456 = vmax.f32 %v10394, %v10440
    %v10457 = vmax.f32 %v10400, %v10441
    %v10458 = vmax.f32 %v10406, %v10442
    %v10459 = vmax.f32 %v10412, %v10443
    %v10460 = vmax.f32 %v10418, %v10444
    %v10461 = vmax.f32 %v10424, %v10445
    %v10470 = vrot.slane %v10383, 1
    %v10471 = vrot.slane %v10389, 1
    %v10472 = vrot.slane %v10395, 1
    %v10473 = vrot.slane %v10401, 1
    %v10474 = vrot.slane %v10407, 1
    %v10475 = vrot.slane %v10413, 1
    %v10476 = vrot.slane %v10419, 1
    %v10477 = vrot.slane %v10425, 1
    %v10486 = vmax.f32 %v10383, %v10470
    %v10487 = vmax.f32 %v10389, %v10471
    %v10488 = vmax.f32 %v10395, %v10472
    %v10489 = vmax.f32 %v10401, %v10473
    %v10490 = vmax.f32 %v10407, %v10474
    %v10491 = vmax.f32 %v10413, %v10475
    %v10492 = vmax.f32 %v10419, %v10476
    %v10493 = vmax.f32 %v10425, %v10477
    %v10502 = vrot.slane %v10486, 4
    %v10503 = vrot.slane %v10487, 4
    %v10504 = vrot.slane %v10488, 4
    %v10505 = vrot.slane %v10489, 4
    %v10506 = vrot.slane %v10490, 4
    %v10507 = vrot.slane %v10491, 4
    %v10508 = vrot.slane %v10492, 4
    %v10509 = vrot.slane %v10493, 4
    %v10518 = vmax.f32 %v10454, %v10502
    %v10519 = vmax.f32 %v10455, %v10503
    %v10520 = vmax.f32 %v10456, %v10504
    %v10521 = vmax.f32 %v10457, %v10505
    %v10522 = vmax.f32 %v10458, %v10506
    %v10523 = vmax.f32 %v10459, %v10507
    %v10524 = vmax.f32 %v10460, %v10508
    %v10525 = vmax.f32 %v10461, %v10509
    %v10534 = vrot.slane %v10384, 1
    %v10535 = vrot.slane %v10390, 1
    %v10536 = vrot.slane %v10396, 1
    %v10537 = vrot.slane %v10402, 1
    %v10538 = vrot.slane %v10408, 1
    %v10539 = vrot.slane %v10414, 1
    %v10540 = vrot.slane %v10420, 1
    %v10541 = vrot.slane %v10426, 1
    %v10550 = vmax.f32 %v10384, %v10534
    %v10551 = vmax.f32 %v10390, %v10535
    %v10552 = vmax.f32 %v10396, %v10536
    %v10553 = vmax.f32 %v10402, %v10537
    %v10554 = vmax.f32 %v10408, %v10538
    %v10555 = vmax.f32 %v10414, %v10539
    %v10556 = vmax.f32 %v10420, %v10540
    %v10557 = vmax.f32 %v10426, %v10541
    %v10566 = vrot.slane %v10550, 4
    %v10567 = vrot.slane %v10551, 4
    %v10568 = vrot.slane %v10552, 4
    %v10569 = vrot.slane %v10553, 4
    %v10570 = vrot.slane %v10554, 4
    %v10571 = vrot.slane %v10555, 4
    %v10572 = vrot.slane %v10556, 4
    %v10573 = vrot.slane %v10557, 4
    %v10582 = vmax.f32 %v10454, %v10566
    %v10583 = vmax.f32 %v10455, %v10567
    %v10584 = vmax.f32 %v10456, %v10568
    %v10585 = vmax.f32 %v10457, %v10569
    %v10586 = vmax.f32 %v10458, %v10570
    %v10587 = vmax.f32 %v10459, %v10571
    %v10588 = vmax.f32 %v10460, %v10572
    %v10589 = vmax.f32 %v10461, %v10573
    %v10598 = vrot.slane %v10385, 1
    %v10599 = vrot.slane %v10391, 1
    %v10600 = vrot.slane %v10397, 1
    %v10601 = vrot.slane %v10403, 1
    %v10602 = vrot.slane %v10409, 1
    %v10603 = vrot.slane %v10415, 1
    %v10604 = vrot.slane %v10421, 1
    %v10605 = vrot.slane %v10427, 1
    %v10614 = vmax.f32 %v10385, %v10598
    %v10615 = vmax.f32 %v10391, %v10599
    %v10616 = vmax.f32 %v10397, %v10600
    %v10617 = vmax.f32 %v10403, %v10601
    %v10618 = vmax.f32 %v10409, %v10602
    %v10619 = vmax.f32 %v10415, %v10603
    %v10620 = vmax.f32 %v10421, %v10604
    %v10621 = vmax.f32 %v10427, %v10605
    %v10630 = vrot.slane %v10386, 1
    %v10631 = vrot.slane %v10392, 1
    %v10632 = vrot.slane %v10398, 1
    %v10633 = vrot.slane %v10404, 1
    %v10634 = vrot.slane %v10410, 1
    %v10635 = vrot.slane %v10416, 1
    %v10636 = vrot.slane %v10422, 1
    %v10637 = vrot.slane %v10428, 1
    %v10646 = vmax.f32 %v10386, %v10630
    %v10647 = vmax.f32 %v10392, %v10631
    %v10648 = vmax.f32 %v10398, %v10632
    %v10649 = vmax.f32 %v10404, %v10633
    %v10650 = vmax.f32 %v10410, %v10634
    %v10651 = vmax.f32 %v10416, %v10635
    %v10652 = vmax.f32 %v10422, %v10636
    %v10653 = vmax.f32 %v10428, %v10637
    %v10662 = vrot.slane %v10646, 4
    %v10663 = vrot.slane %v10647, 4
    %v10664 = vrot.slane %v10648, 4
    %v10665 = vrot.slane %v10649, 4
    %v10666 = vrot.slane %v10650, 4
    %v10667 = vrot.slane %v10651, 4
    %v10668 = vrot.slane %v10652, 4
    %v10669 = vrot.slane %v10653, 4
    %v10678 = vmax.f32 %v10614, %v10662
    %v10679 = vmax.f32 %v10615, %v10663
    %v10680 = vmax.f32 %v10616, %v10664
    %v10681 = vmax.f32 %v10617, %v10665
    %v10682 = vmax.f32 %v10618, %v10666
    %v10683 = vmax.f32 %v10619, %v10667
    %v10684 = vmax.f32 %v10620, %v10668
    %v10685 = vmax.f32 %v10621, %v10669
    %v10694 = vrot.slane %v10387, 1
    %v10695 = vrot.slane %v10393, 1
    %v10696 = vrot.slane %v10399, 1
    %v10697 = vrot.slane %v10405, 1
    %v10698 = vrot.slane %v10411, 1
    %v10699 = vrot.slane %v10417, 1
    %v10700 = vrot.slane %v10423, 1
    %v10701 = vrot.slane %v10429, 1
    %v10710 = vmax.f32 %v10387, %v10694
    %v10711 = vmax.f32 %v10393, %v10695
    %v10712 = vmax.f32 %v10399, %v10696
    %v10713 = vmax.f32 %v10405, %v10697
    %v10714 = vmax.f32 %v10411, %v10698
    %v10715 = vmax.f32 %v10417, %v10699
    %v10716 = vmax.f32 %v10423, %v10700
    %v10717 = vmax.f32 %v10429, %v10701
    %v10726 = vrot.slane %v10710, 4
    %v10727 = vrot.slane %v10711, 4
    %v10728 = vrot.slane %v10712, 4
    %v10729 = vrot.slane %v10713, 4
    %v10730 = vrot.slane %v10714, 4
    %v10731 = vrot.slane %v10715, 4
    %v10732 = vrot.slane %v10716, 4
    %v10733 = vrot.slane %v10717, 4
    %v10742 = vmax.f32 %v10614, %v10726
    %v10743 = vmax.f32 %v10615, %v10727
    %v10744 = vmax.f32 %v10616, %v10728
    %v10745 = vmax.f32 %v10617, %v10729
    %v10746 = vmax.f32 %v10618, %v10730
    %v10747 = vmax.f32 %v10619, %v10731
    %v10748 = vmax.f32 %v10620, %v10732
    %v10749 = vmax.f32 %v10621, %v10733
    %v10758 = vrot.slane %v10519, 7
    %vm10759 = vcmask 1041409
    %v10760 = vsel %vm10759, %v10758, %v10518
    %v10761 = vrot.slane %v10520, 6
    %vm10762 = vcmask 1042434
    %v10763 = vsel %vm10762, %v10761, %v10760
    %v10764 = vrot.slane %v10521, 5
    %vm10765 = vcmask 1043459
    %v10766 = vsel %vm10765, %v10764, %v10763
    %v10767 = vrot.slane %v10522, 4
    %vm10768 = vcmask 1044484
    %v10769 = vsel %vm10768, %v10767, %v10766
    %v10770 = vrot.slane %v10523, 3
    %vm10771 = vcmask 1045509
    %v10772 = vsel %vm10771, %v10770, %v10769
    %v10773 = vrot.slane %v10524, 2
    %vm10774 = vcmask 1046534
    %v10775 = vsel %vm10774, %v10773, %v10772
    %v10776 = vrot.slane %v10525, 1
    %vm10777 = vcmask 1047559
    %v10778 = vsel %vm10777, %v10776, %v10775
    %v10780 = vrot.slane %v10518, 2
    %v10781 = vrot.slane %v10519, 1
    %v10782 = vsel %vm10759, %v10781, %v10780
    %v10783 = vsel %vm10762, %v10520, %v10782
    %v10784 = vrot.slane %v10521, 7
    %v10785 = vsel %vm10765, %v10784, %v10783
    %v10786 = vrot.slane %v10522, 6
    %v10787 = vsel %vm10768, %v10786, %v10785
    %v10788 = vrot.slane %v10523, 5
    %v10789 = vsel %vm10771, %v10788, %v10787
    %v10790 = vrot.slane %v10524, 4
    %v10791 = vsel %vm10774, %v10790, %v10789
    %v10792 = vrot.slane %v10525, 3
    %v10793 = vsel %vm10777, %v10792, %v10791
    %10794 = vrot.lane.b32.xlu0 %v10793, 64
    %v10795 = vpop.permute.xlu0 %10794
    %v10805 = vrot.slane %v10582, 4
    %v10806 = vrot.slane %v10583, 3
    %v10807 = vsel %vm10759, %v10806, %v10805
    %v10808 = vrot.slane %v10584, 2
    %v10809 = vsel %vm10762, %v10808, %v10807
    %v10810 = vrot.slane %v10585, 1
    %v10811 = vsel %vm10765, %v10810, %v10809
    %v10812 = vsel %vm10768, %v10586, %v10811
    %v10813 = vrot.slane %v10587, 7
    %v10814 = vsel %vm10771, %v10813, %v10812
    %v10815 = vrot.slane %v10588, 6
    %v10816 = vsel %vm10774, %v10815, %v10814
    %v10817 = vrot.slane %v10589, 5
    %v10818 = vsel %vm10777, %v10817, %v10816
    %v10820 = vrot.slane %v10582, 6
    %v10821 = vrot.slane %v10583, 5
    %v10822 = vsel %vm10759, %v10821, %v10820
    %v10823 = vrot.slane %v10584, 4
    %v10824 = vsel %vm10762, %v10823, %v10822
    %v10825 = vrot.slane %v10585, 3
    %v10826 = vsel %vm10765, %v10825, %v10824
    %v10827 = vrot.slane %v10586, 2
    %v10828 = vsel %vm10768, %v10827, %v10826
    %v10829 = vrot.slane %v10587, 1
    %v10830 = vsel %vm10771, %v10829, %v10828
    %v10831 = vsel %vm10774, %v10588, %v10830
    %v10832 = vrot.slane %v10589, 7
    %v10833 = vsel %vm10777, %v10832, %v10831
    %10834 = vrot.lane.b32.xlu0 %v10833, 64
    %v10835 = vpop.permute.xlu0 %10834
    %v10845 = vrot.slane %v10679, 7
    %v10846 = vsel %vm10759, %v10845, %v10678
    %v10847 = vrot.slane %v10680, 6
    %v10848 = vsel %vm10762, %v10847, %v10846
    %v10849 = vrot.slane %v10681, 5
    %v10850 = vsel %vm10765, %v10849, %v10848
    %v10851 = vrot.slane %v10682, 4
    %v10852 = vsel %vm10768, %v10851, %v10850
    %v10853 = vrot.slane %v10683, 3
    %v10854 = vsel %vm10771, %v10853, %v10852
    %v10855 = vrot.slane %v10684, 2
    %v10856 = vsel %vm10774, %v10855, %v10854
    %v10857 = vrot.slane %v10685, 1
    %v10858 = vsel %vm10777, %v10857, %v10856
    %v10860 = vrot.slane %v10678, 2
    %v10861 = vrot.slane %v10679, 1
    %v10862 = vsel %vm10759, %v10861, %v10860
    %v10863 = vsel %vm10762, %v10680, %v10862
    %v10864 = vrot.slane %v10681, 7
    %v10865 = vsel %vm10765, %v10864, %v10863
    %v10866 = vrot.slane %v10682, 6
    %v10867 = vsel %vm10768, %v10866, %v10865
    %v10868 = vrot.slane %v10683, 5
    %v10869 = vsel %vm10771, %v10868, %v10867
    %v10870 = vrot.slane %v10684, 4
    %v10871 = vsel %vm10774, %v10870, %v10869
    %v10872 = vrot.slane %v10685, 3
    %v10873 = vsel %vm10777, %v10872, %v10871
    %10874 = vrot.lane.b32.xlu0 %v10873, 64
    %v10875 = vpop.permute.xlu0 %10874
    %v10885 = vrot.slane %v10742, 4
    %v10886 = vrot.slane %v10743, 3
    %v10887 = vsel %vm10759, %v10886, %v10885
    %v10888 = vrot.slane %v10744, 2
    %v10889 = vsel %vm10762, %v10888, %v10887
    %v10890 = vrot.slane %v10745, 1
    %v10891 = vsel %vm10765, %v10890, %v10889
    %v10892 = vsel %vm10768, %v10746, %v10891
    %v10893 = vrot.slane %v10747, 7
    %v10894 = vsel %vm10771, %v10893, %v10892
    %v10895 = vrot.slane %v10748, 6
    %v10896 = vsel %vm10774, %v10895, %v10894
    %v10897 = vrot.slane %v10749, 5
    %v10898 = vsel %vm10777, %v10897, %v10896
    %v10900 = vrot.slane %v10742, 6
    %v10901 = vrot.slane %v10743, 5
    %v10902 = vsel %vm10759, %v10901, %v10900
    %v10903 = vrot.slane %v10744, 4
    %v10904 = vsel %vm10762, %v10903, %v10902
    %v10905 = vrot.slane %v10745, 3
    %v10906 = vsel %vm10765, %v10905, %v10904
    %v10907 = vrot.slane %v10746, 2
    %v10908 = vsel %vm10768, %v10907, %v10906
    %v10909 = vrot.slane %v10747, 1
    %v10910 = vsel %vm10771, %v10909, %v10908
    %v10911 = vsel %vm10774, %v10748, %v10910
    %v10912 = vrot.slane %v10749, 7
    %v10913 = vsel %vm10777, %v10912, %v10911
    %10914 = vrot.lane.b32.xlu0 %v10913, 64
    %v10915 = vpop.permute.xlu0 %10914
    %vm10917 = vcmask 523264
    %v10918 = vsel %vm10917, %v10778, %v10795
    %v10919 = vsel %vm10917, %v10818, %v10835
    %v10920 = vsel %vm10917, %v10858, %v10875
    %v10921 = vsel %vm10917, %v10898, %v10915
    %v10922 = vpack.c.bf16 %v10918, %v10918
    %v10923 = vpack.c.bf16 %v10919, %v10919
    %v10924 = vpack.c.bf16 %v10920, %v10920
    %v10925 = vpack.c.bf16 %v10921, %v10921
    %v10926 = vld [vmem:[#allocation5] sm:$0xf]
    %v10927 = vld [vmem:[#allocation5 + $0x4] sm:$0xf]
    %v10928 = vld [vmem:[#allocation5 + $0x8] sm:$0xf]
    %v10929 = vld [vmem:[#allocation5 + $0xc] sm:$0xf]
    %v10930 = vld [vmem:[#allocation5 + $0x10] sm:$0xf]
    %v10931 = vld [vmem:[#allocation5 + $0x14] sm:$0xf]
    %v10932 = vld [vmem:[#allocation5 + $0x18] sm:$0xf]
    %v10933 = vld [vmem:[#allocation5 + $0x1c] sm:$0xf]
    %v10934 = vld [vmem:[#allocation5 + $0x20] sm:$0xf]
    %v10935 = vld [vmem:[#allocation5 + $0x24] sm:$0xf]
    %v10936 = vld [vmem:[#allocation5 + $0x28] sm:$0xf]
    %v10937 = vld [vmem:[#allocation5 + $0x2c] sm:$0xf]
    %v10938 = vld [vmem:[#allocation5 + $0x30] sm:$0xf]
    %v10939 = vld [vmem:[#allocation5 + $0x34] sm:$0xf]
    %v10940 = vld [vmem:[#allocation5 + $0x38] sm:$0xf]
    %v10941 = vld [vmem:[#allocation5 + $0x3c] sm:$0xf]
    %v10942 = vld [vmem:[#allocation5 + $0x40] sm:$0xf]
    %v10943 = vld [vmem:[#allocation5 + $0x44] sm:$0xf]
    %v10944 = vld [vmem:[#allocation5 + $0x48] sm:$0xf]
    %v10945 = vld [vmem:[#allocation5 + $0x4c] sm:$0xf]
    %v10946 = vld [vmem:[#allocation5 + $0x50] sm:$0xf]
    %v10947 = vld [vmem:[#allocation5 + $0x54] sm:$0xf]
    %v10948 = vld [vmem:[#allocation5 + $0x58] sm:$0xf]
    %v10949 = vld [vmem:[#allocation5 + $0x5c] sm:$0xf]
    %v10950 = vld [vmem:[#allocation5 + $0x60] sm:$0xf]
    %v10951 = vld [vmem:[#allocation5 + $0x64] sm:$0xf]
    %v10952 = vld [vmem:[#allocation5 + $0x68] sm:$0xf]
    %v10953 = vld [vmem:[#allocation5 + $0x6c] sm:$0xf]
    %v10954 = vld [vmem:[#allocation5 + $0x70] sm:$0xf]
    %v10955 = vld [vmem:[#allocation5 + $0x74] sm:$0xf]
    %v10956 = vld [vmem:[#allocation5 + $0x78] sm:$0xf]
    %v10957 = vld [vmem:[#allocation5 + $0x7c] sm:$0xf]
    %v10958 = vld [vmem:[#allocation5 + $0x80] sm:$0xf]
    %v10959 = vld [vmem:[#allocation5 + $0x84] sm:$0xf]
    %v10960 = vld [vmem:[#allocation5 + $0x88] sm:$0xf]
    %v10961 = vld [vmem:[#allocation5 + $0x8c] sm:$0xf]
    %v10962 = vld [vmem:[#allocation5 + $0x90] sm:$0xf]
    %v10963 = vld [vmem:[#allocation5 + $0x94] sm:$0xf]
    %v10964 = vld [vmem:[#allocation5 + $0x98] sm:$0xf]
    %v10965 = vld [vmem:[#allocation5 + $0x9c] sm:$0xf]
    %v10966 = vld [vmem:[#allocation5 + $0xa0] sm:$0xf]
    %v10967 = vld [vmem:[#allocation5 + $0xa4] sm:$0xf]
    %v10968 = vld [vmem:[#allocation5 + $0xa8] sm:$0xf]
    %v10969 = vld [vmem:[#allocation5 + $0xac] sm:$0xf]
    %v10970 = vld [vmem:[#allocation5 + $0xb0] sm:$0xf]
    %v10971 = vld [vmem:[#allocation5 + $0xb4] sm:$0xf]
    %v10972 = vld [vmem:[#allocation5 + $0xb8] sm:$0xf]
    %v10973 = vld [vmem:[#allocation5 + $0xbc] sm:$0xf]
    %v10974 = vld [vmem:[#allocation5 + $0xc0] sm:$0xf]
    %v10975 = vld [vmem:[#allocation5 + $0xc4] sm:$0xf]
    %v10976 = vld [vmem:[#allocation5 + $0xc8] sm:$0xf]
    %v10977 = vld [vmem:[#allocation5 + $0xcc] sm:$0xf]
    %v10978 = vld [vmem:[#allocation5 + $0xd0] sm:$0xf]
    %v10979 = vld [vmem:[#allocation5 + $0xd4] sm:$0xf]
    %v10980 = vld [vmem:[#allocation5 + $0xd8] sm:$0xf]
    %v10981 = vld [vmem:[#allocation5 + $0xdc] sm:$0xf]
    %v10982 = vld [vmem:[#allocation5 + $0xe0] sm:$0xf]
    %v10983 = vld [vmem:[#allocation5 + $0xe4] sm:$0xf]
    %v10984 = vld [vmem:[#allocation5 + $0xe8] sm:$0xf]
    %v10985 = vld [vmem:[#allocation5 + $0xec] sm:$0xf]
    %v10986 = vld [vmem:[#allocation5 + $0xf0] sm:$0xf]
    %v10987 = vld [vmem:[#allocation5 + $0xf4] sm:$0xf]
    %v10988 = vld [vmem:[#allocation5 + $0xf8] sm:$0xf]
    %v10989 = vld [vmem:[#allocation5 + $0xfc] sm:$0xf]
    %v10990 = vld [vmem:[%s6] sm:$0x1]
    %v10992 = vlaneseq
    %v10993 = vshrl.u32 %v10992, 7
    %v10994 = vsub.s32 0, %v10993
    %v10995 = vrot.slane %v10990, %v10994
    %v11061 = vunpack.c.l.b16 %v10926
    %v11062 = vunpack.c.l.b16 %v10927
    %v11063 = vunpack.c.l.b16 %v10928
    %v11064 = vunpack.c.l.b16 %v10929
    %v11065 = vunpack.c.l.b16 %v10930
    %v11066 = vunpack.c.l.b16 %v10931
    %v11067 = vunpack.c.l.b16 %v10932
    %v11068 = vunpack.c.l.b16 %v10933
    %v11069 = vunpack.c.l.b16 %v10934
    %v11070 = vunpack.c.l.b16 %v10935
    %v11071 = vunpack.c.l.b16 %v10936
    %v11072 = vunpack.c.l.b16 %v10937
    %v11073 = vunpack.c.l.b16 %v10938
    %v11074 = vunpack.c.l.b16 %v10939
    %v11075 = vunpack.c.l.b16 %v10940
    %v11076 = vunpack.c.l.b16 %v10941
    %v11077 = vunpack.c.l.b16 %v10942
    %v11078 = vunpack.c.l.b16 %v10943
    %v11079 = vunpack.c.l.b16 %v10944
    %v11080 = vunpack.c.l.b16 %v10945
    %v11081 = vunpack.c.l.b16 %v10946
    %v11082 = vunpack.c.l.b16 %v10947
    %v11083 = vunpack.c.l.b16 %v10948
    %v11084 = vunpack.c.l.b16 %v10949
    %v11085 = vunpack.c.l.b16 %v10950
    %v11086 = vunpack.c.l.b16 %v10951
    %v11087 = vunpack.c.l.b16 %v10952
    %v11088 = vunpack.c.l.b16 %v10953
    %v11089 = vunpack.c.l.b16 %v10954
    %v11090 = vunpack.c.l.b16 %v10955
    %v11091 = vunpack.c.l.b16 %v10956
    %v11092 = vunpack.c.l.b16 %v10957
    %v11093 = vunpack.c.l.b16 %v10958
    %v11094 = vunpack.c.l.b16 %v10959
    %v11095 = vunpack.c.l.b16 %v10960
    %v11096 = vunpack.c.l.b16 %v10961
    %v11097 = vunpack.c.l.b16 %v10962
    %v11098 = vunpack.c.l.b16 %v10963
    %v11099 = vunpack.c.l.b16 %v10964
    %v11100 = vunpack.c.l.b16 %v10965
    %v11101 = vunpack.c.l.b16 %v10966
    %v11102 = vunpack.c.l.b16 %v10967
    %v11103 = vunpack.c.l.b16 %v10968
    %v11104 = vunpack.c.l.b16 %v10969
    %v11105 = vunpack.c.l.b16 %v10970
    %v11106 = vunpack.c.l.b16 %v10971
    %v11107 = vunpack.c.l.b16 %v10972
    %v11108 = vunpack.c.l.b16 %v10973
    %v11109 = vunpack.c.l.b16 %v10974
    %v11110 = vunpack.c.l.b16 %v10975
    %v11111 = vunpack.c.l.b16 %v10976
    %v11112 = vunpack.c.l.b16 %v10977
    %v11113 = vunpack.c.l.b16 %v10978
    %v11114 = vunpack.c.l.b16 %v10979
    %v11115 = vunpack.c.l.b16 %v10980
    %v11116 = vunpack.c.l.b16 %v10981
    %v11117 = vunpack.c.l.b16 %v10982
    %v11118 = vunpack.c.l.b16 %v10983
    %v11119 = vunpack.c.l.b16 %v10984
    %v11120 = vunpack.c.l.b16 %v10985
    %v11121 = vunpack.c.l.b16 %v10986
    %v11122 = vunpack.c.l.b16 %v10987
    %v11123 = vunpack.c.l.b16 %v10988
    %v11124 = vunpack.c.l.b16 %v10989
    %v11125 = vpack.c.b16 %v11062, %v11061
    %v11126 = vpack.c.b16 %v11064, %v11063
    %v11127 = vpack.c.b16 %v11066, %v11065
    %v11128 = vpack.c.b16 %v11068, %v11067
    %v11129 = vpack.c.b16 %v11070, %v11069
    %v11130 = vpack.c.b16 %v11072, %v11071
    %v11131 = vpack.c.b16 %v11074, %v11073
    %v11132 = vpack.c.b16 %v11076, %v11075
    %v11133 = vpack.c.b16 %v11078, %v11077
    %v11134 = vpack.c.b16 %v11080, %v11079
    %v11135 = vpack.c.b16 %v11082, %v11081
    %v11136 = vpack.c.b16 %v11084, %v11083
    %v11137 = vpack.c.b16 %v11086, %v11085
    %v11138 = vpack.c.b16 %v11088, %v11087
    %v11139 = vpack.c.b16 %v11090, %v11089
    %v11140 = vpack.c.b16 %v11092, %v11091
    %v11141 = vpack.c.b16 %v11094, %v11093
    %v11142 = vpack.c.b16 %v11096, %v11095
    %v11143 = vpack.c.b16 %v11098, %v11097
    %v11144 = vpack.c.b16 %v11100, %v11099
    %v11145 = vpack.c.b16 %v11102, %v11101
    %v11146 = vpack.c.b16 %v11104, %v11103
    %v11147 = vpack.c.b16 %v11106, %v11105
    %v11148 = vpack.c.b16 %v11108, %v11107
    %v11149 = vpack.c.b16 %v11110, %v11109
    %v11150 = vpack.c.b16 %v11112, %v11111
    %v11151 = vpack.c.b16 %v11114, %v11113
    %v11152 = vpack.c.b16 %v11116, %v11115
    %v11153 = vpack.c.b16 %v11118, %v11117
    %v11154 = vpack.c.b16 %v11120, %v11119
    %v11155 = vpack.c.b16 %v11122, %v11121
    %v11156 = vpack.c.b16 %v11124, %v11123
    %11189 = vmatprep.subr.bf16.mxu0 0
    %11190 = vmatpush1.bf16.msra.mxu0 %v11125
    %11191 = vmatprep.subr.bf16.mxu0 0
    %11192 = vmatpush1.bf16.msra.mxu0 %v11126
    %11193 = vmatprep.subr.bf16.mxu0 0
    %11194 = vmatpush1.bf16.msra.mxu0 %v11127
    %11195 = vmatprep.subr.bf16.mxu0 0
    %11196 = vmatpush1.bf16.msra.mxu0 %v11128
    %11197 = vmatprep.subr.bf16.mxu0 0
    %11198 = vmatpush1.bf16.msra.mxu0 %v11129
    %11199 = vmatprep.subr.bf16.mxu0 0
    %11200 = vmatpush1.bf16.msra.mxu0 %v11130
    %11201 = vmatprep.subr.bf16.mxu0 0
    %11202 = vmatpush1.bf16.msra.mxu0 %v11131
    %11203 = vmatprep.subr.bf16.mxu0 0
    %11204 = vmatpush1.bf16.msra.mxu0 %v11132
    %11205 = vmatprep.subr.bf16.mxu0 0
    %11206 = vmatpush1.bf16.msra.mxu0 %v11133
    %11207 = vmatprep.subr.bf16.mxu0 0
    %11208 = vmatpush1.bf16.msra.mxu0 %v11134
    %11209 = vmatprep.subr.bf16.mxu0 0
    %11210 = vmatpush1.bf16.msra.mxu0 %v11135
    %11211 = vmatprep.subr.bf16.mxu0 0
    %11212 = vmatpush1.bf16.msra.mxu0 %v11136
    %11213 = vmatprep.subr.bf16.mxu0 0
    %11214 = vmatpush1.bf16.msra.mxu0 %v11137
    %11215 = vmatprep.subr.bf16.mxu0 0
    %11216 = vmatpush1.bf16.msra.mxu0 %v11138
    %11217 = vmatprep.subr.bf16.mxu0 0
    %11218 = vmatpush1.bf16.msra.mxu0 %v11139
    %11219 = vmatprep.subr.bf16.mxu0 0
    %11220 = vmatpush1.bf16.msra.mxu0 %v11140
    %11221 = vmatprep.mubr.bf16.mxu0 %v10923
    %11222 = vmatmul.mubr.bf16.gmra.mrb[0].mxu0 %v10922
    %v11223 = vpop.f32.mrb[0].mxu0
    %v11224 = vadd.f32 %v10995, %v11223
    %v11225 = vpop.f32.mrb[0].mxu0
    %v11226 = vpop.f32.mrb[0].mxu0
    %v11227 = vpop.f32.mrb[0].mxu0
    %11228 = vdwg.mxu0
    %11229 = vmatprep.subr.bf16.mxu0 0
    %11230 = vmatpush1.bf16.msra.mxu0 %v11141
    %11231 = vmatprep.subr.bf16.mxu0 0
    %11232 = vmatpush1.bf16.msra.mxu0 %v11142
    %11233 = vmatprep.subr.bf16.mxu0 0
    %11234 = vmatpush1.bf16.msra.mxu0 %v11143
    %11235 = vmatprep.subr.bf16.mxu0 0
    %11236 = vmatpush1.bf16.msra.mxu0 %v11144
    %11237 = vmatprep.subr.bf16.mxu0 0
    %11238 = vmatpush1.bf16.msra.mxu0 %v11145
    %11239 = vmatprep.subr.bf16.mxu0 0
    %11240 = vmatpush1.bf16.msra.mxu0 %v11146
    %11241 = vmatprep.subr.bf16.mxu0 0
    %11242 = vmatpush1.bf16.msra.mxu0 %v11147
    %11243 = vmatprep.subr.bf16.mxu0 0
    %11244 = vmatpush1.bf16.msra.mxu0 %v11148
    %11245 = vmatprep.subr.bf16.mxu0 0
    %11246 = vmatpush1.bf16.msra.mxu0 %v11149
    %11247 = vmatprep.subr.bf16.mxu0 0
    %11248 = vmatpush1.bf16.msra.mxu0 %v11150
    %11249 = vmatprep.subr.bf16.mxu0 0
    %11250 = vmatpush1.bf16.msra.mxu0 %v11151
    %11251 = vmatprep.subr.bf16.mxu0 0
    %11252 = vmatpush1.bf16.msra.mxu0 %v11152
    %11253 = vmatprep.subr.bf16.mxu0 0
    %11254 = vmatpush1.bf16.msra.mxu0 %v11153
    %11255 = vmatprep.subr.bf16.mxu0 0
    %11256 = vmatpush1.bf16.msra.mxu0 %v11154
    %11257 = vmatprep.subr.bf16.mxu0 0
    %11258 = vmatpush1.bf16.msra.mxu0 %v11155
    %11259 = vmatprep.subr.bf16.mxu0 0
    %11260 = vmatpush1.bf16.msra.mxu0 %v11156
    %11261 = vmatprep.mubr.bf16.mxu0 %v10925
    %11262 = vmatmul.mubr.bf16.gmra.mrb[0].mxu0 %v10924
    %v11263 = vpop.f32.mrb[0].mxu0
    %v11264 = vadd.f32 %v11224, %v11263
    %v11265 = vpop.f32.mrb[0].mxu0
    %v11266 = vpop.f32.mrb[0].mxu0
    %v11267 = vpop.f32.mrb[0].mxu0
    %11268 = vdwg.mxu0
    %v11269 = vmax.f32 %v11264, 0.0
    %v11270 = vpack.c.bf16 %v11269, %v11269
    %v11271 = vld [vmem:[%s7] sm:$0xff]
    %v11272 = vld [vmem:[%s7 + $0x8] sm:$0xff]
    %v11273 = vld [vmem:[%s7 + $0x10] sm:$0xff]
    %v11274 = vld [vmem:[%s7 + $0x18] sm:$0xff]
    %v11275 = vld [vmem:[%s7 + $0x20] sm:$0xff]
    %v11276 = vld [vmem:[%s7 + $0x28] sm:$0xff]
    %v11277 = vld [vmem:[%s7 + $0x30] sm:$0xff]
    %v11278 = vld [vmem:[%s7 + $0x38] sm:$0xff]
    %v11279 = vld [vmem:[%s7 + $0x40] sm:$0xff]
    %v11280 = vld [vmem:[%s7 + $0x48] sm:$0xff]
    %v11281 = vld [vmem:[%s7 + $0x50] sm:$0xff]
    %v11282 = vld [vmem:[%s7 + $0x58] sm:$0xff]
    %v11283 = vld [vmem:[%s7 + $0x60] sm:$0xff]
    %v11284 = vld [vmem:[%s7 + $0x68] sm:$0xff]
    %v11285 = vld [vmem:[%s7 + $0x70] sm:$0xff]
    %v11286 = vld [vmem:[%s7 + $0x78] sm:$0xff]
    %v11287 = vld [vmem:[%s7 + $0x80] sm:$0xff]
    %v11288 = vld [vmem:[%s7 + $0x88] sm:$0xff]
    %v11289 = vld [vmem:[%s7 + $0x90] sm:$0xff]
    %v11290 = vld [vmem:[%s7 + $0x98] sm:$0xff]
    %v11291 = vld [vmem:[%s7 + $0xa0] sm:$0xff]
    %v11292 = vld [vmem:[%s7 + $0xa8] sm:$0xff]
    %v11293 = vld [vmem:[%s7 + $0xb0] sm:$0xff]
    %v11294 = vld [vmem:[%s7 + $0xb8] sm:$0xff]
    %v11295 = vld [vmem:[%s7 + $0xc0] sm:$0xff]
    %v11296 = vld [vmem:[%s7 + $0xc8] sm:$0xff]
    %v11297 = vld [vmem:[%s7 + $0xd0] sm:$0xff]
    %v11298 = vld [vmem:[%s7 + $0xd8] sm:$0xff]
    %v11299 = vld [vmem:[%s7 + $0xe0] sm:$0xff]
    %v11300 = vld [vmem:[%s7 + $0xe8] sm:$0xff]
    %v11301 = vld [vmem:[%s7 + $0xf0] sm:$0xff]
    %v11302 = vld [vmem:[%s7 + $0xf8] sm:$0xff]
    %v11303 = vld [vmem:[%s7 + $0x100] sm:$0xff]
    %v11304 = vld [vmem:[%s7 + $0x108] sm:$0xff]
    %v11305 = vld [vmem:[%s7 + $0x110] sm:$0xff]
    %v11306 = vld [vmem:[%s7 + $0x118] sm:$0xff]
    %v11307 = vld [vmem:[%s7 + $0x120] sm:$0xff]
    %v11308 = vld [vmem:[%s7 + $0x128] sm:$0xff]
    %v11309 = vld [vmem:[%s7 + $0x130] sm:$0xff]
    %v11310 = vld [vmem:[%s7 + $0x138] sm:$0xff]
    %v11311 = vld [vmem:[%s7 + $0x140] sm:$0xff]
    %v11312 = vld [vmem:[%s7 + $0x148] sm:$0xff]
    %v11313 = vld [vmem:[%s7 + $0x150] sm:$0xff]
    %v11314 = vld [vmem:[%s7 + $0x158] sm:$0xff]
    %v11315 = vld [vmem:[%s7 + $0x160] sm:$0xff]
    %v11316 = vld [vmem:[%s7 + $0x168] sm:$0xff]
    %v11317 = vld [vmem:[%s7 + $0x170] sm:$0xff]
    %v11318 = vld [vmem:[%s7 + $0x178] sm:$0xff]
    %v11319 = vld [vmem:[%s7 + $0x180] sm:$0xff]
    %v11320 = vld [vmem:[%s7 + $0x188] sm:$0xff]
    %v11321 = vld [vmem:[%s7 + $0x190] sm:$0xff]
    %v11322 = vld [vmem:[%s7 + $0x198] sm:$0xff]
    %v11323 = vld [vmem:[%s7 + $0x1a0] sm:$0xff]
    %v11324 = vld [vmem:[%s7 + $0x1a8] sm:$0xff]
    %v11325 = vld [vmem:[%s7 + $0x1b0] sm:$0xff]
    %v11326 = vld [vmem:[%s7 + $0x1b8] sm:$0xff]
    %v11327 = vld [vmem:[%s7 + $0x1c0] sm:$0xff]
    %v11328 = vld [vmem:[%s7 + $0x1c8] sm:$0xff]
    %v11329 = vld [vmem:[%s7 + $0x1d0] sm:$0xff]
    %v11330 = vld [vmem:[%s7 + $0x1d8] sm:$0xff]
    %v11331 = vld [vmem:[%s7 + $0x1e0] sm:$0xff]
    %v11332 = vld [vmem:[%s7 + $0x1e8] sm:$0xff]
    %v11333 = vld [vmem:[%s7 + $0x1f0] sm:$0xff]
    %v11334 = vld [vmem:[%s7 + $0x1f8] sm:$0xff]
    %v11335 = vld [vmem:[%s7 + $0x200] sm:$0xff]
    %v11336 = vld [vmem:[%s7 + $0x208] sm:$0xff]
    %v11337 = vld [vmem:[%s7 + $0x210] sm:$0xff]
    %v11338 = vld [vmem:[%s7 + $0x218] sm:$0xff]
    %v11339 = vld [vmem:[%s7 + $0x220] sm:$0xff]
    %v11340 = vld [vmem:[%s7 + $0x228] sm:$0xff]
    %v11341 = vld [vmem:[%s7 + $0x230] sm:$0xff]
    %v11342 = vld [vmem:[%s7 + $0x238] sm:$0xff]
    %v11343 = vld [vmem:[%s7 + $0x240] sm:$0xff]
    %v11344 = vld [vmem:[%s7 + $0x248] sm:$0xff]
    %v11345 = vld [vmem:[%s7 + $0x250] sm:$0xff]
    %v11346 = vld [vmem:[%s7 + $0x258] sm:$0xff]
    %v11347 = vld [vmem:[%s7 + $0x260] sm:$0xff]
    %v11348 = vld [vmem:[%s7 + $0x268] sm:$0xff]
    %v11349 = vld [vmem:[%s7 + $0x270] sm:$0xff]
    %v11350 = vld [vmem:[%s7 + $0x278] sm:$0xff]
    %v11351 = vld [vmem:[%s7 + $0x280] sm:$0xff]
    %v11352 = vld [vmem:[%s7 + $0x288] sm:$0xff]
    %v11353 = vld [vmem:[%s7 + $0x290] sm:$0xff]
    %v11354 = vld [vmem:[%s7 + $0x298] sm:$0xff]
    %v11355 = vld [vmem:[%s7 + $0x2a0] sm:$0xff]
    %v11356 = vld [vmem:[%s7 + $0x2a8] sm:$0xff]
    %v11357 = vld [vmem:[%s7 + $0x2b0] sm:$0xff]
    %v11358 = vld [vmem:[%s7 + $0x2b8] sm:$0xff]
    %v11359 = vld [vmem:[%s7 + $0x2c0] sm:$0xff]
    %v11360 = vld [vmem:[%s7 + $0x2c8] sm:$0xff]
    %v11361 = vld [vmem:[%s7 + $0x2d0] sm:$0xff]
    %v11362 = vld [vmem:[%s7 + $0x2d8] sm:$0xff]
    %v11363 = vld [vmem:[%s7 + $0x2e0] sm:$0xff]
    %v11364 = vld [vmem:[%s7 + $0x2e8] sm:$0xff]
    %v11365 = vld [vmem:[%s7 + $0x2f0] sm:$0xff]
    %v11366 = vld [vmem:[%s7 + $0x2f8] sm:$0xff]
    %v11367 = vld [vmem:[%s7 + $0x300] sm:$0xff]
    %v11368 = vld [vmem:[%s7 + $0x308] sm:$0xff]
    %v11369 = vld [vmem:[%s7 + $0x310] sm:$0xff]
    %v11370 = vld [vmem:[%s7 + $0x318] sm:$0xff]
    %v11371 = vld [vmem:[%s7 + $0x320] sm:$0xff]
    %v11372 = vld [vmem:[%s7 + $0x328] sm:$0xff]
    %v11373 = vld [vmem:[%s7 + $0x330] sm:$0xff]
    %v11374 = vld [vmem:[%s7 + $0x338] sm:$0xff]
    %v11375 = vld [vmem:[%s7 + $0x340] sm:$0xff]
    %v11376 = vld [vmem:[%s7 + $0x348] sm:$0xff]
    %v11377 = vld [vmem:[%s7 + $0x350] sm:$0xff]
    %v11378 = vld [vmem:[%s7 + $0x358] sm:$0xff]
    %v11379 = vld [vmem:[%s7 + $0x360] sm:$0xff]
    %v11380 = vld [vmem:[%s7 + $0x368] sm:$0xff]
    %v11381 = vld [vmem:[%s7 + $0x370] sm:$0xff]
    %v11382 = vld [vmem:[%s7 + $0x378] sm:$0xff]
    %v11383 = vld [vmem:[%s7 + $0x380] sm:$0xff]
    %v11384 = vld [vmem:[%s7 + $0x388] sm:$0xff]
    %v11385 = vld [vmem:[%s7 + $0x390] sm:$0xff]
    %v11386 = vld [vmem:[%s7 + $0x398] sm:$0xff]
    %v11387 = vld [vmem:[%s7 + $0x3a0] sm:$0xff]
    %v11388 = vld [vmem:[%s7 + $0x3a8] sm:$0xff]
    %v11389 = vld [vmem:[%s7 + $0x3b0] sm:$0xff]
    %v11390 = vld [vmem:[%s7 + $0x3b8] sm:$0xff]
    %v11391 = vld [vmem:[%s7 + $0x3c0] sm:$0xff]
    %v11392 = vld [vmem:[%s7 + $0x3c8] sm:$0xff]
    %v11393 = vld [vmem:[%s7 + $0x3d0] sm:$0xff]
    %v11394 = vld [vmem:[%s7 + $0x3d8] sm:$0xff]
    %v11395 = vld [vmem:[%s7 + $0x3e0] sm:$0xff]
    %v11396 = vld [vmem:[%s7 + $0x3e8] sm:$0xff]
    %v11397 = vld [vmem:[%s7 + $0x3f0] sm:$0xff]
    %v11398 = vld [vmem:[%s7 + $0x3f8] sm:$0xff]
    %v11399 = vld [vmem:[%s8] sm:$0xff]
    %v11400 = vld [vmem:[%s8 + $0x8] sm:$0xff]
    %v11403 = vlaneseq
    %v11404 = vshrl.u32 %v11403, 7
    %v11405 = vsub.s32 0, %v11404
    %v11406 = vrot.slane %v11399, %v11405
    %v11407 = vlaneseq
    %v11408 = vshrl.u32 %v11407, 7
    %v11409 = vsub.s32 1, %v11408
    %v11410 = vrot.slane %v11399, %v11409
    %v11411 = vlaneseq
    %v11412 = vshrl.u32 %v11411, 7
    %v11413 = vsub.s32 2, %v11412
    %v11414 = vrot.slane %v11399, %v11413
    %v11415 = vlaneseq
    %v11416 = vshrl.u32 %v11415, 7
    %v11417 = vsub.s32 3, %v11416
    %v11418 = vrot.slane %v11399, %v11417
    %v11419 = vlaneseq
    %v11420 = vshrl.u32 %v11419, 7
    %v11421 = vsub.s32 4, %v11420
    %v11422 = vrot.slane %v11399, %v11421
    %v11423 = vlaneseq
    %v11424 = vshrl.u32 %v11423, 7
    %v11425 = vsub.s32 5, %v11424
    %v11426 = vrot.slane %v11399, %v11425
    %v11427 = vlaneseq
    %v11428 = vshrl.u32 %v11427, 7
    %v11429 = vsub.s32 6, %v11428
    %v11430 = vrot.slane %v11399, %v11429
    %v11431 = vlaneseq
    %v11432 = vshrl.u32 %v11431, 7
    %v11433 = vsub.s32 7, %v11432
    %v11434 = vrot.slane %v11399, %v11433
    %v11435 = vlaneseq
    %v11436 = vshrl.u32 %v11435, 7
    %v11437 = vsub.s32 0, %v11436
    %v11438 = vrot.slane %v11400, %v11437
    %v11439 = vlaneseq
    %v11440 = vshrl.u32 %v11439, 7
    %v11441 = vsub.s32 1, %v11440
    %v11442 = vrot.slane %v11400, %v11441
    %v11443 = vlaneseq
    %v11444 = vshrl.u32 %v11443, 7
    %v11445 = vsub.s32 2, %v11444
    %v11446 = vrot.slane %v11400, %v11445
    %v11447 = vlaneseq
    %v11448 = vshrl.u32 %v11447, 7
    %v11449 = vsub.s32 3, %v11448
    %v11450 = vrot.slane %v11400, %v11449
    %v11451 = vlaneseq
    %v11452 = vshrl.u32 %v11451, 7
    %v11453 = vsub.s32 4, %v11452
    %v11454 = vrot.slane %v11400, %v11453
    %v11455 = vlaneseq
    %v11456 = vshrl.u32 %v11455, 7
    %v11457 = vsub.s32 5, %v11456
    %v11458 = vrot.slane %v11400, %v11457
    %v11459 = vlaneseq
    %v11460 = vshrl.u32 %v11459, 7
    %v11461 = vsub.s32 6, %v11460
    %v11462 = vrot.slane %v11400, %v11461
    %v11463 = vlaneseq
    %v11464 = vshrl.u32 %v11463, 7
    %v11465 = vsub.s32 7, %v11464
    %v11466 = vrot.slane %v11400, %v11465
    %v11611 = vunpack.c.l.b16 %v11271
    %v11612 = vunpack.c.h.b16 %v11271
    %v11613 = vunpack.c.l.b16 %v11272
    %v11614 = vunpack.c.h.b16 %v11272
    %v11615 = vunpack.c.l.b16 %v11273
    %v11616 = vunpack.c.h.b16 %v11273
    %v11617 = vunpack.c.l.b16 %v11274
    %v11618 = vunpack.c.h.b16 %v11274
    %v11619 = vunpack.c.l.b16 %v11275
    %v11620 = vunpack.c.h.b16 %v11275
    %v11621 = vunpack.c.l.b16 %v11276
    %v11622 = vunpack.c.h.b16 %v11276
    %v11623 = vunpack.c.l.b16 %v11277
    %v11624 = vunpack.c.h.b16 %v11277
    %v11625 = vunpack.c.l.b16 %v11278
    %v11626 = vunpack.c.h.b16 %v11278
    %v11627 = vunpack.c.l.b16 %v11279
    %v11628 = vunpack.c.h.b16 %v11279
    %v11629 = vunpack.c.l.b16 %v11280
    %v11630 = vunpack.c.h.b16 %v11280
    %v11631 = vunpack.c.l.b16 %v11281
    %v11632 = vunpack.c.h.b16 %v11281
    %v11633 = vunpack.c.l.b16 %v11282
    %v11634 = vunpack.c.h.b16 %v11282
    %v11635 = vunpack.c.l.b16 %v11283
    %v11636 = vunpack.c.h.b16 %v11283
    %v11637 = vunpack.c.l.b16 %v11284
    %v11638 = vunpack.c.h.b16 %v11284
    %v11639 = vunpack.c.l.b16 %v11285
    %v11640 = vunpack.c.h.b16 %v11285
    %v11641 = vunpack.c.l.b16 %v11286
    %v11642 = vunpack.c.h.b16 %v11286
    %v11643 = vunpack.c.l.b16 %v11287
    %v11644 = vunpack.c.h.b16 %v11287
    %v11645 = vunpack.c.l.b16 %v11288
    %v11646 = vunpack.c.h.b16 %v11288
    %v11647 = vunpack.c.l.b16 %v11289
    %v11648 = vunpack.c.h.b16 %v11289
    %v11649 = vunpack.c.l.b16 %v11290
    %v11650 = vunpack.c.h.b16 %v11290
    %v11651 = vunpack.c.l.b16 %v11291
    %v11652 = vunpack.c.h.b16 %v11291
    %v11653 = vunpack.c.l.b16 %v11292
    %v11654 = vunpack.c.h.b16 %v11292
    %v11655 = vunpack.c.l.b16 %v11293
    %v11656 = vunpack.c.h.b16 %v11293
    %v11657 = vunpack.c.l.b16 %v11294
    %v11658 = vunpack.c.h.b16 %v11294
    %v11659 = vunpack.c.l.b16 %v11295
    %v11660 = vunpack.c.h.b16 %v11295
    %v11661 = vunpack.c.l.b16 %v11296
    %v11662 = vunpack.c.h.b16 %v11296
    %v11663 = vunpack.c.l.b16 %v11297
    %v11664 = vunpack.c.h.b16 %v11297
    %v11665 = vunpack.c.l.b16 %v11298
    %v11666 = vunpack.c.h.b16 %v11298
    %v11667 = vunpack.c.l.b16 %v11299
    %v11668 = vunpack.c.h.b16 %v11299
    %v11669 = vunpack.c.l.b16 %v11300
    %v11670 = vunpack.c.h.b16 %v11300
    %v11671 = vunpack.c.l.b16 %v11301
    %v11672 = vunpack.c.h.b16 %v11301
    %v11673 = vunpack.c.l.b16 %v11302
    %v11674 = vunpack.c.h.b16 %v11302
    %v11675 = vunpack.c.l.b16 %v11303
    %v11676 = vunpack.c.h.b16 %v11303
    %v11677 = vunpack.c.l.b16 %v11304
    %v11678 = vunpack.c.h.b16 %v11304
    %v11679 = vunpack.c.l.b16 %v11305
    %v11680 = vunpack.c.h.b16 %v11305
    %v11681 = vunpack.c.l.b16 %v11306
    %v11682 = vunpack.c.h.b16 %v11306
    %v11683 = vunpack.c.l.b16 %v11307
    %v11684 = vunpack.c.h.b16 %v11307
    %v11685 = vunpack.c.l.b16 %v11308
    %v11686 = vunpack.c.h.b16 %v11308
    %v11687 = vunpack.c.l.b16 %v11309
    %v11688 = vunpack.c.h.b16 %v11309
    %v11689 = vunpack.c.l.b16 %v11310
    %v11690 = vunpack.c.h.b16 %v11310
    %v11691 = vunpack.c.l.b16 %v11311
    %v11692 = vunpack.c.h.b16 %v11311
    %v11693 = vunpack.c.l.b16 %v11312
    %v11694 = vunpack.c.h.b16 %v11312
    %v11695 = vunpack.c.l.b16 %v11313
    %v11696 = vunpack.c.h.b16 %v11313
    %v11697 = vunpack.c.l.b16 %v11314
    %v11698 = vunpack.c.h.b16 %v11314
    %v11699 = vunpack.c.l.b16 %v11315
    %v11700 = vunpack.c.h.b16 %v11315
    %v11701 = vunpack.c.l.b16 %v11316
    %v11702 = vunpack.c.h.b16 %v11316
    %v11703 = vunpack.c.l.b16 %v11317
    %v11704 = vunpack.c.h.b16 %v11317
    %v11705 = vunpack.c.l.b16 %v11318
    %v11706 = vunpack.c.h.b16 %v11318
    %v11707 = vunpack.c.l.b16 %v11319
    %v11708 = vunpack.c.h.b16 %v11319
    %v11709 = vunpack.c.l.b16 %v11320
    %v11710 = vunpack.c.h.b16 %v11320
    %v11711 = vunpack.c.l.b16 %v11321
    %v11712 = vunpack.c.h.b16 %v11321
    %v11713 = vunpack.c.l.b16 %v11322
    %v11714 = vunpack.c.h.b16 %v11322
    %v11715 = vunpack.c.l.b16 %v11323
    %v11716 = vunpack.c.h.b16 %v11323
    %v11717 = vunpack.c.l.b16 %v11324
    %v11718 = vunpack.c.h.b16 %v11324
    %v11719 = vunpack.c.l.b16 %v11325
    %v11720 = vunpack.c.h.b16 %v11325
    %v11721 = vunpack.c.l.b16 %v11326
    %v11722 = vunpack.c.h.b16 %v11326
    %v11723 = vunpack.c.l.b16 %v11327
    %v11724 = vunpack.c.h.b16 %v11327
    %v11725 = vunpack.c.l.b16 %v11328
    %v11726 = vunpack.c.h.b16 %v11328
    %v11727 = vunpack.c.l.b16 %v11329
    %v11728 = vunpack.c.h.b16 %v11329
    %v11729 = vunpack.c.l.b16 %v11330
    %v11730 = vunpack.c.h.b16 %v11330
    %v11731 = vunpack.c.l.b16 %v11331
    %v11732 = vunpack.c.h.b16 %v11331
    %v11733 = vunpack.c.l.b16 %v11332
    %v11734 = vunpack.c.h.b16 %v11332
    %v11735 = vunpack.c.l.b16 %v11333
    %v11736 = vunpack.c.h.b16 %v11333
    %v11737 = vunpack.c.l.b16 %v11334
    %v11738 = vunpack.c.h.b16 %v11334
    %v11739 = vunpack.c.l.b16 %v11335
    %v11740 = vunpack.c.h.b16 %v11335
    %v11741 = vunpack.c.l.b16 %v11336
    %v11742 = vunpack.c.h.b16 %v11336
    %v11743 = vunpack.c.l.b16 %v11337
    %v11744 = vunpack.c.h.b16 %v11337
    %v11745 = vunpack.c.l.b16 %v11338
    %v11746 = vunpack.c.h.b16 %v11338
    %v11747 = vunpack.c.l.b16 %v11339
    %v11748 = vunpack.c.h.b16 %v11339
    %v11749 = vunpack.c.l.b16 %v11340
    %v11750 = vunpack.c.h.b16 %v11340
    %v11751 = vunpack.c.l.b16 %v11341
    %v11752 = vunpack.c.h.b16 %v11341
    %v11753 = vunpack.c.l.b16 %v11342
    %v11754 = vunpack.c.h.b16 %v11342
    %v11755 = vunpack.c.l.b16 %v11343
    %v11756 = vunpack.c.h.b16 %v11343
    %v11757 = vunpack.c.l.b16 %v11344
    %v11758 = vunpack.c.h.b16 %v11344
    %v11759 = vunpack.c.l.b16 %v11345
    %v11760 = vunpack.c.h.b16 %v11345
    %v11761 = vunpack.c.l.b16 %v11346
    %v11762 = vunpack.c.h.b16 %v11346
    %v11763 = vunpack.c.l.b16 %v11347
    %v11764 = vunpack.c.h.b16 %v11347
    %v11765 = vunpack.c.l.b16 %v11348
    %v11766 = vunpack.c.h.b16 %v11348
    %v11767 = vunpack.c.l.b16 %v11349
    %v11768 = vunpack.c.h.b16 %v11349
    %v11769 = vunpack.c.l.b16 %v11350
    %v11770 = vunpack.c.h.b16 %v11350
    %v11771 = vunpack.c.l.b16 %v11351
    %v11772 = vunpack.c.h.b16 %v11351
    %v11773 = vunpack.c.l.b16 %v11352
    %v11774 = vunpack.c.h.b16 %v11352
    %v11775 = vunpack.c.l.b16 %v11353
    %v11776 = vunpack.c.h.b16 %v11353
    %v11777 = vunpack.c.l.b16 %v11354
    %v11778 = vunpack.c.h.b16 %v11354
    %v11779 = vunpack.c.l.b16 %v11355
    %v11780 = vunpack.c.h.b16 %v11355
    %v11781 = vunpack.c.l.b16 %v11356
    %v11782 = vunpack.c.h.b16 %v11356
    %v11783 = vunpack.c.l.b16 %v11357
    %v11784 = vunpack.c.h.b16 %v11357
    %v11785 = vunpack.c.l.b16 %v11358
    %v11786 = vunpack.c.h.b16 %v11358
    %v11787 = vunpack.c.l.b16 %v11359
    %v11788 = vunpack.c.h.b16 %v11359
    %v11789 = vunpack.c.l.b16 %v11360
    %v11790 = vunpack.c.h.b16 %v11360
    %v11791 = vunpack.c.l.b16 %v11361
    %v11792 = vunpack.c.h.b16 %v11361
    %v11793 = vunpack.c.l.b16 %v11362
    %v11794 = vunpack.c.h.b16 %v11362
    %v11795 = vunpack.c.l.b16 %v11363
    %v11796 = vunpack.c.h.b16 %v11363
    %v11797 = vunpack.c.l.b16 %v11364
    %v11798 = vunpack.c.h.b16 %v11364
    %v11799 = vunpack.c.l.b16 %v11365
    %v11800 = vunpack.c.h.b16 %v11365
    %v11801 = vunpack.c.l.b16 %v11366
    %v11802 = vunpack.c.h.b16 %v11366
    %v11803 = vunpack.c.l.b16 %v11367
    %v11804 = vunpack.c.h.b16 %v11367
    %v11805 = vunpack.c.l.b16 %v11368
    %v11806 = vunpack.c.h.b16 %v11368
    %v11807 = vunpack.c.l.b16 %v11369
    %v11808 = vunpack.c.h.b16 %v11369
    %v11809 = vunpack.c.l.b16 %v11370
    %v11810 = vunpack.c.h.b16 %v11370
    %v11811 = vunpack.c.l.b16 %v11371
    %v11812 = vunpack.c.h.b16 %v11371
    %v11813 = vunpack.c.l.b16 %v11372
    %v11814 = vunpack.c.h.b16 %v11372
    %v11815 = vunpack.c.l.b16 %v11373
    %v11816 = vunpack.c.h.b16 %v11373
    %v11817 = vunpack.c.l.b16 %v11374
    %v11818 = vunpack.c.h.b16 %v11374
    %v11819 = vunpack.c.l.b16 %v11375
    %v11820 = vunpack.c.h.b16 %v11375
    %v11821 = vunpack.c.l.b16 %v11376
    %v11822 = vunpack.c.h.b16 %v11376
    %v11823 = vunpack.c.l.b16 %v11377
    %v11824 = vunpack.c.h.b16 %v11377
    %v11825 = vunpack.c.l.b16 %v11378
    %v11826 = vunpack.c.h.b16 %v11378
    %v11827 = vunpack.c.l.b16 %v11379
    %v11828 = vunpack.c.h.b16 %v11379
    %v11829 = vunpack.c.l.b16 %v11380
    %v11830 = vunpack.c.h.b16 %v11380
    %v11831 = vunpack.c.l.b16 %v11381
    %v11832 = vunpack.c.h.b16 %v11381
    %v11833 = vunpack.c.l.b16 %v11382
    %v11834 = vunpack.c.h.b16 %v11382
    %v11835 = vunpack.c.l.b16 %v11383
    %v11836 = vunpack.c.h.b16 %v11383
    %v11837 = vunpack.c.l.b16 %v11384
    %v11838 = vunpack.c.h.b16 %v11384
    %v11839 = vunpack.c.l.b16 %v11385
    %v11840 = vunpack.c.h.b16 %v11385
    %v11841 = vunpack.c.l.b16 %v11386
    %v11842 = vunpack.c.h.b16 %v11386
    %v11843 = vunpack.c.l.b16 %v11387
    %v11844 = vunpack.c.h.b16 %v11387
    %v11845 = vunpack.c.l.b16 %v11388
    %v11846 = vunpack.c.h.b16 %v11388
    %v11847 = vunpack.c.l.b16 %v11389
    %v11848 = vunpack.c.h.b16 %v11389
    %v11849 = vunpack.c.l.b16 %v11390
    %v11850 = vunpack.c.h.b16 %v11390
    %v11851 = vunpack.c.l.b16 %v11391
    %v11852 = vunpack.c.h.b16 %v11391
    %v11853 = vunpack.c.l.b16 %v11392
    %v11854 = vunpack.c.h.b16 %v11392
    %v11855 = vunpack.c.l.b16 %v11393
    %v11856 = vunpack.c.h.b16 %v11393
    %v11857 = vunpack.c.l.b16 %v11394
    %v11858 = vunpack.c.h.b16 %v11394
    %v11859 = vunpack.c.l.b16 %v11395
    %v11860 = vunpack.c.h.b16 %v11395
    %v11861 = vunpack.c.l.b16 %v11396
    %v11862 = vunpack.c.h.b16 %v11396
    %v11863 = vunpack.c.l.b16 %v11397
    %v11864 = vunpack.c.h.b16 %v11397
    %v11865 = vunpack.c.l.b16 %v11398
    %v11866 = vunpack.c.h.b16 %v11398
    %v11867 = vpack.c.b16 %v11627, %v11611
    %v11868 = vpack.c.b16 %v11628, %v11612
    %v11869 = vpack.c.b16 %v11629, %v11613
    %v11870 = vpack.c.b16 %v11630, %v11614
    %v11871 = vpack.c.b16 %v11631, %v11615
    %v11872 = vpack.c.b16 %v11632, %v11616
    %v11873 = vpack.c.b16 %v11633, %v11617
    %v11874 = vpack.c.b16 %v11634, %v11618
    %v11875 = vpack.c.b16 %v11635, %v11619
    %v11876 = vpack.c.b16 %v11636, %v11620
    %v11877 = vpack.c.b16 %v11637, %v11621
    %v11878 = vpack.c.b16 %v11638, %v11622
    %v11879 = vpack.c.b16 %v11639, %v11623
    %v11880 = vpack.c.b16 %v11640, %v11624
    %v11881 = vpack.c.b16 %v11641, %v11625
    %v11882 = vpack.c.b16 %v11642, %v11626
    %v11883 = vpack.c.b16 %v11659, %v11643
    %v11884 = vpack.c.b16 %v11660, %v11644
    %v11885 = vpack.c.b16 %v11661, %v11645
    %v11886 = vpack.c.b16 %v11662, %v11646
    %v11887 = vpack.c.b16 %v11663, %v11647
    %v11888 = vpack.c.b16 %v11664, %v11648
    %v11889 = vpack.c.b16 %v11665, %v11649
    %v11890 = vpack.c.b16 %v11666, %v11650
    %v11891 = vpack.c.b16 %v11667, %v11651
    %v11892 = vpack.c.b16 %v11668, %v11652
    %v11893 = vpack.c.b16 %v11669, %v11653
    %v11894 = vpack.c.b16 %v11670, %v11654
    %v11895 = vpack.c.b16 %v11671, %v11655
    %v11896 = vpack.c.b16 %v11672, %v11656
    %v11897 = vpack.c.b16 %v11673, %v11657
    %v11898 = vpack.c.b16 %v11674, %v11658
    %v11899 = vpack.c.b16 %v11691, %v11675
    %v11900 = vpack.c.b16 %v11692, %v11676
    %v11901 = vpack.c.b16 %v11693, %v11677
    %v11902 = vpack.c.b16 %v11694, %v11678
    %v11903 = vpack.c.b16 %v11695, %v11679
    %v11904 = vpack.c.b16 %v11696, %v11680
    %v11905 = vpack.c.b16 %v11697, %v11681
    %v11906 = vpack.c.b16 %v11698, %v11682
    %v11907 = vpack.c.b16 %v11699, %v11683
    %v11908 = vpack.c.b16 %v11700, %v11684
    %v11909 = vpack.c.b16 %v11701, %v11685
    %v11910 = vpack.c.b16 %v11702, %v11686
    %v11911 = vpack.c.b16 %v11703, %v11687
    %v11912 = vpack.c.b16 %v11704, %v11688
    %v11913 = vpack.c.b16 %v11705, %v11689
    %v11914 = vpack.c.b16 %v11706, %v11690
    %v11915 = vpack.c.b16 %v11723, %v11707
    %v11916 = vpack.c.b16 %v11724, %v11708
    %v11917 = vpack.c.b16 %v11725, %v11709
    %v11918 = vpack.c.b16 %v11726, %v11710
    %v11919 = vpack.c.b16 %v11727, %v11711
    %v11920 = vpack.c.b16 %v11728, %v11712
    %v11921 = vpack.c.b16 %v11729, %v11713
    %v11922 = vpack.c.b16 %v11730, %v11714
    %v11923 = vpack.c.b16 %v11731, %v11715
    %v11924 = vpack.c.b16 %v11732, %v11716
    %v11925 = vpack.c.b16 %v11733, %v11717
    %v11926 = vpack.c.b16 %v11734, %v11718
    %v11927 = vpack.c.b16 %v11735, %v11719
    %v11928 = vpack.c.b16 %v11736, %v11720
    %v11929 = vpack.c.b16 %v11737, %v11721
    %v11930 = vpack.c.b16 %v11738, %v11722
    %v11931 = vpack.c.b16 %v11755, %v11739
    %v11932 = vpack.c.b16 %v11756, %v11740
    %v11933 = vpack.c.b16 %v11757, %v11741
    %v11934 = vpack.c.b16 %v11758, %v11742
    %v11935 = vpack.c.b16 %v11759, %v11743
    %v11936 = vpack.c.b16 %v11760, %v11744
    %v11937 = vpack.c.b16 %v11761, %v11745
    %v11938 = vpack.c.b16 %v11762, %v11746
    %v11939 = vpack.c.b16 %v11763, %v11747
    %v11940 = vpack.c.b16 %v11764, %v11748
    %v11941 = vpack.c.b16 %v11765, %v11749
    %v11942 = vpack.c.b16 %v11766, %v11750
    %v11943 = vpack.c.b16 %v11767, %v11751
    %v11944 = vpack.c.b16 %v11768, %v11752
    %v11945 = vpack.c.b16 %v11769, %v11753
    %v11946 = vpack.c.b16 %v11770, %v11754
    %v11947 = vpack.c.b16 %v11787, %v11771
    %v11948 = vpack.c.b16 %v11788, %v11772
    %v11949 = vpack.c.b16 %v11789, %v11773
    %v11950 = vpack.c.b16 %v11790, %v11774
    %v11951 = vpack.c.b16 %v11791, %v11775
    %v11952 = vpack.c.b16 %v11792, %v11776
    %v11953 = vpack.c.b16 %v11793, %v11777
    %v11954 = vpack.c.b16 %v11794, %v11778
    %v11955 = vpack.c.b16 %v11795, %v11779
    %v11956 = vpack.c.b16 %v11796, %v11780
    %v11957 = vpack.c.b16 %v11797, %v11781
    %v11958 = vpack.c.b16 %v11798, %v11782
    %v11959 = vpack.c.b16 %v11799, %v11783
    %v11960 = vpack.c.b16 %v11800, %v11784
    %v11961 = vpack.c.b16 %v11801, %v11785
    %v11962 = vpack.c.b16 %v11802, %v11786
    %v11963 = vpack.c.b16 %v11819, %v11803
    %v11964 = vpack.c.b16 %v11820, %v11804
    %v11965 = vpack.c.b16 %v11821, %v11805
    %v11966 = vpack.c.b16 %v11822, %v11806
    %v11967 = vpack.c.b16 %v11823, %v11807
    %v11968 = vpack.c.b16 %v11824, %v11808
    %v11969 = vpack.c.b16 %v11825, %v11809
    %v11970 = vpack.c.b16 %v11826, %v11810
    %v11971 = vpack.c.b16 %v11827, %v11811
    %v11972 = vpack.c.b16 %v11828, %v11812
    %v11973 = vpack.c.b16 %v11829, %v11813
    %v11974 = vpack.c.b16 %v11830, %v11814
    %v11975 = vpack.c.b16 %v11831, %v11815
    %v11976 = vpack.c.b16 %v11832, %v11816
    %v11977 = vpack.c.b16 %v11833, %v11817
    %v11978 = vpack.c.b16 %v11834, %v11818
    %v11979 = vpack.c.b16 %v11851, %v11835
    %v11980 = vpack.c.b16 %v11852, %v11836
    %v11981 = vpack.c.b16 %v11853, %v11837
    %v11982 = vpack.c.b16 %v11854, %v11838
    %v11983 = vpack.c.b16 %v11855, %v11839
    %v11984 = vpack.c.b16 %v11856, %v11840
    %v11985 = vpack.c.b16 %v11857, %v11841
    %v11986 = vpack.c.b16 %v11858, %v11842
    %v11987 = vpack.c.b16 %v11859, %v11843
    %v11988 = vpack.c.b16 %v11860, %v11844
    %v11989 = vpack.c.b16 %v11861, %v11845
    %v11990 = vpack.c.b16 %v11862, %v11846
    %v11991 = vpack.c.b16 %v11863, %v11847
    %v11992 = vpack.c.b16 %v11864, %v11848
    %v11993 = vpack.c.b16 %v11865, %v11849
    %v11994 = vpack.c.b16 %v11866, %v11850
    %12123 = vmatprep.subr.bf16.mxu0 %v11868
    %12124 = vmatpush1.bf16.msra.mxu0 %v11867
    %12125 = vmatprep.subr.bf16.mxu0 %v11884
    %12126 = vmatpush1.bf16.msra.mxu0 %v11883
    %12127 = vmatprep.subr.bf16.mxu0 %v11900
    %12128 = vmatpush1.bf16.msra.mxu0 %v11899
    %12129 = vmatprep.subr.bf16.mxu0 %v11916
    %12130 = vmatpush1.bf16.msra.mxu0 %v11915
    %12131 = vmatprep.subr.bf16.mxu0 %v11932
    %12132 = vmatpush1.bf16.msra.mxu0 %v11931
    %12133 = vmatprep.subr.bf16.mxu0 %v11948
    %12134 = vmatpush1.bf16.msra.mxu0 %v11947
    %12135 = vmatprep.subr.bf16.mxu0 %v11964
    %12136 = vmatpush1.bf16.msra.mxu0 %v11963
    %12137 = vmatprep.subr.bf16.mxu0 %v11980
    %12138 = vmatpush1.bf16.msra.mxu0 %v11979
    %12139 = vmatprep.subr.bf16.mxu0 0
    %12140 = vmatpush1.bf16.msra.mxu0 0
    %12141 = vmatprep.subr.bf16.mxu0 0
    %12142 = vmatpush1.bf16.msra.mxu0 0
    %12143 = vmatprep.subr.bf16.mxu0 0
    %12144 = vmatpush1.bf16.msra.mxu0 0
    %12145 = vmatprep.subr.bf16.mxu0 0
    %12146 = vmatpush1.bf16.msra.mxu0 0
    %12147 = vmatprep.subr.bf16.mxu0 0
    %12148 = vmatpush1.bf16.msra.mxu0 0
    %12149 = vmatprep.subr.bf16.mxu0 0
    %12150 = vmatpush1.bf16.msra.mxu0 0
    %12151 = vmatprep.subr.bf16.mxu0 0
    %12152 = vmatpush1.bf16.msra.mxu0 0
    %12153 = vmatprep.subr.bf16.mxu0 0
    %12154 = vmatpush1.bf16.msra.mxu0 0
    %12155 = vmatprep.mubr.bf16.mxu0 0
    %12156 = vmatmul.mubr.bf16.gmra.mrb[0].mxu0 %v11270
    %v12157 = vpop.f32.mrb[0].mxu0
    %v12158 = vadd.f32 %v11406, %v12157
    %v12159 = vpop.f32.mrb[0].mxu0
    %v12160 = vadd.f32 %v11410, %v12159
    %v12161 = vpop.f32.mrb[0].mxu0
    %v12162 = vpop.f32.mrb[0].mxu0
    %12163 = vdwg.mxu0
    %12164 = vmatprep.subr.bf16.mxu0 %v11870
    %12165 = vmatpush1.bf16.msra.mxu0 %v11869
    %12166 = vmatprep.subr.bf16.mxu0 %v11886
    %12167 = vmatpush1.bf16.msra.mxu0 %v11885
    %12168 = vmatprep.subr.bf16.mxu0 %v11902
    %12169 = vmatpush1.bf16.msra.mxu0 %v11901
    %12170 = vmatprep.subr.bf16.mxu0 %v11918
    %12171 = vmatpush1.bf16.msra.mxu0 %v11917
    %12172 = vmatprep.subr.bf16.mxu0 %v11934
    %12173 = vmatpush1.bf16.msra.mxu0 %v11933
    %12174 = vmatprep.subr.bf16.mxu0 %v11950
    %12175 = vmatpush1.bf16.msra.mxu0 %v11949
    %12176 = vmatprep.subr.bf16.mxu0 %v11966
    %12177 = vmatpush1.bf16.msra.mxu0 %v11965
    %12178 = vmatprep.subr.bf16.mxu0 %v11982
    %12179 = vmatpush1.bf16.msra.mxu0 %v11981
    %12180 = vmatprep.subr.bf16.mxu0 0
    %12181 = vmatpush1.bf16.msra.mxu0 0
    %12182 = vmatprep.subr.bf16.mxu0 0
    %12183 = vmatpush1.bf16.msra.mxu0 0
    %12184 = vmatprep.subr.bf16.mxu0 0
    %12185 = vmatpush1.bf16.msra.mxu0 0
    %12186 = vmatprep.subr.bf16.mxu0 0
    %12187 = vmatpush1.bf16.msra.mxu0 0
    %12188 = vmatprep.subr.bf16.mxu0 0
    %12189 = vmatpush1.bf16.msra.mxu0 0
    %12190 = vmatprep.subr.bf16.mxu0 0
    %12191 = vmatpush1.bf16.msra.mxu0 0
    %12192 = vmatprep.subr.bf16.mxu0 0
    %12193 = vmatpush1.bf16.msra.mxu0 0
    %12194 = vmatprep.subr.bf16.mxu0 0
    %12195 = vmatpush1.bf16.msra.mxu0 0
    %12196 = vmatprep.mubr.bf16.mxu0 0
    %12197 = vmatmul.mubr.bf16.gmra.mrb[0].mxu0 %v11270
    %v12198 = vpop.f32.mrb[0].mxu0
    %v12199 = vadd.f32 %v11414, %v12198
    %v12200 = vpop.f32.mrb[0].mxu0
    %v12201 = vadd.f32 %v11418, %v12200
    %v12202 = vpop.f32.mrb[0].mxu0
    %v12203 = vpop.f32.mrb[0].mxu0
    %12204 = vdwg.mxu0
    %12205 = vmatprep.subr.bf16.mxu0 %v11872
    %12206 = vmatpush1.bf16.msra.mxu0 %v11871
    %12207 = vmatprep.subr.bf16.mxu0 %v11888
    %12208 = vmatpush1.bf16.msra.mxu0 %v11887
    %12209 = vmatprep.subr.bf16.mxu0 %v11904
    %12210 = vmatpush1.bf16.msra.mxu0 %v11903
    %12211 = vmatprep.subr.bf16.mxu0 %v11920
    %12212 = vmatpush1.bf16.msra.mxu0 %v11919
    %12213 = vmatprep.subr.bf16.mxu0 %v11936
    %12214 = vmatpush1.bf16.msra.mxu0 %v11935
    %12215 = vmatprep.subr.bf16.mxu0 %v11952
    %12216 = vmatpush1.bf16.msra.mxu0 %v11951
    %12217 = vmatprep.subr.bf16.mxu0 %v11968
    %12218 = vmatpush1.bf16.msra.mxu0 %v11967
    %12219 = vmatprep.subr.bf16.mxu0 %v11984
    %12220 = vmatpush1.bf16.msra.mxu0 %v11983
    %12221 = vmatprep.subr.bf16.mxu0 0
    %12222 = vmatpush1.bf16.msra.mxu0 0
    %12223 = vmatprep.subr.bf16.mxu0 0
    %12224 = vmatpush1.bf16.msra.mxu0 0
    %12225 = vmatprep.subr.bf16.mxu0 0
    %12226 = vmatpush1.bf16.msra.mxu0 0
    %12227 = vmatprep.subr.bf16.mxu0 0
    %12228 = vmatpush1.bf16.msra.mxu0 0
    %12229 = vmatprep.subr.bf16.mxu0 0
    %12230 = vmatpush1.bf16.msra.mxu0 0
    %12231 = vmatprep.subr.bf16.mxu0 0
    %12232 = vmatpush1.bf16.msra.mxu0 0
    %12233 = vmatprep.subr.bf16.mxu0 0
    %12234 = vmatpush1.bf16.msra.mxu0 0
    %12235 = vmatprep.subr.bf16.mxu0 0
    %12236 = vmatpush1.bf16.msra.mxu0 0
    %12237 = vmatprep.mubr.bf16.mxu0 0
    %12238 = vmatmul.mubr.bf16.gmra.mrb[0].mxu0 %v11270
    %v12239 = vpop.f32.mrb[0].mxu0
    %v12240 = vadd.f32 %v11422, %v12239
    %v12241 = vpop.f32.mrb[0].mxu0
    %v12242 = vadd.f32 %v11426, %v12241
    %v12243 = vpop.f32.mrb[0].mxu0
    %v12244 = vpop.f32.mrb[0].mxu0
    %12245 = vdwg.mxu0
    %12246 = vmatprep.subr.bf16.mxu0 %v11874
    %12247 = vmatpush1.bf16.msra.mxu0 %v11873
    %12248 = vmatprep.subr.bf16.mxu0 %v11890
    %12249 = vmatpush1.bf16.msra.mxu0 %v11889
    %12250 = vmatprep.subr.bf16.mxu0 %v11906
    %12251 = vmatpush1.bf16.msra.mxu0 %v11905
    %12252 = vmatprep.subr.bf16.mxu0 %v11922
    %12253 = vmatpush1.bf16.msra.mxu0 %v11921
    %12254 = vmatprep.subr.bf16.mxu0 %v11938
    %12255 = vmatpush1.bf16.msra.mxu0 %v11937
    %12256 = vmatprep.subr.bf16.mxu0 %v11954
    %12257 = vmatpush1.bf16.msra.mxu0 %v11953
    %12258 = vmatprep.subr.bf16.mxu0 %v11970
    %12259 = vmatpush1.bf16.msra.mxu0 %v11969
    %12260 = vmatprep.subr.bf16.mxu0 %v11986
    %12261 = vmatpush1.bf16.msra.mxu0 %v11985
    %12262 = vmatprep.subr.bf16.mxu0 0
    %12263 = vmatpush1.bf16.msra.mxu0 0
    %12264 = vmatprep.subr.bf16.mxu0 0
    %12265 = vmatpush1.bf16.msra.mxu0 0
    %12266 = vmatprep.subr.bf16.mxu0 0
    %12267 = vmatpush1.bf16.msra.mxu0 0
    %12268 = vmatprep.subr.bf16.mxu0 0
    %12269 = vmatpush1.bf16.msra.mxu0 0
    %12270 = vmatprep.subr.bf16.mxu0 0
    %12271 = vmatpush1.bf16.msra.mxu0 0
    %12272 = vmatprep.subr.bf16.mxu0 0
    %12273 = vmatpush1.bf16.msra.mxu0 0
    %12274 = vmatprep.subr.bf16.mxu0 0
    %12275 = vmatpush1.bf16.msra.mxu0 0
    %12276 = vmatprep.subr.bf16.mxu0 0
    %12277 = vmatpush1.bf16.msra.mxu0 0
    %12278 = vmatprep.mubr.bf16.mxu0 0
    %12279 = vmatmul.mubr.bf16.gmra.mrb[0].mxu0 %v11270
    %v12280 = vpop.f32.mrb[0].mxu0
    %v12281 = vadd.f32 %v11430, %v12280
    %v12282 = vpop.f32.mrb[0].mxu0
    %v12283 = vadd.f32 %v11434, %v12282
    %v12284 = vpop.f32.mrb[0].mxu0
    %v12285 = vpop.f32.mrb[0].mxu0
    %12286 = vdwg.mxu0
    %12287 = vmatprep.subr.bf16.mxu0 %v11876
    %12288 = vmatpush1.bf16.msra.mxu0 %v11875
    %12289 = vmatprep.subr.bf16.mxu0 %v11892
    %12290 = vmatpush1.bf16.msra.mxu0 %v11891
    %12291 = vmatprep.subr.bf16.mxu0 %v11908
    %12292 = vmatpush1.bf16.msra.mxu0 %v11907
    %12293 = vmatprep.subr.bf16.mxu0 %v11924
    %12294 = vmatpush1.bf16.msra.mxu0 %v11923
    %12295 = vmatprep.subr.bf16.mxu0 %v11940
    %12296 = vmatpush1.bf16.msra.mxu0 %v11939
    %12297 = vmatprep.subr.bf16.mxu0 %v11956
    %12298 = vmatpush1.bf16.msra.mxu0 %v11955
    %12299 = vmatprep.subr.bf16.mxu0 %v11972
    %12300 = vmatpush1.bf16.msra.mxu0 %v11971
    %12301 = vmatprep.subr.bf16.mxu0 %v11988
    %12302 = vmatpush1.bf16.msra.mxu0 %v11987
    %12303 = vmatprep.subr.bf16.mxu0 0
    %12304 = vmatpush1.bf16.msra.mxu0 0
    %12305 = vmatprep.subr.bf16.mxu0 0
    %12306 = vmatpush1.bf16.msra.mxu0 0
    %12307 = vmatprep.subr.bf16.mxu0 0
    %12308 = vmatpush1.bf16.msra.mxu0 0
    %12309 = vmatprep.subr.bf16.mxu0 0
    %12310 = vmatpush1.bf16.msra.mxu0 0
    %12311 = vmatprep.subr.bf16.mxu0 0
    %12312 = vmatpush1.bf16.msra.mxu0 0
    %12313 = vmatprep.subr.bf16.mxu0 0
    %12314 = vmatpush1.bf16.msra.mxu0 0
    %12315 = vmatprep.subr.bf16.mxu0 0
    %12316 = vmatpush1.bf16.msra.mxu0 0
    %12317 = vmatprep.subr.bf16.mxu0 0
    %12318 = vmatpush1.bf16.msra.mxu0 0
    %12319 = vmatprep.mubr.bf16.mxu0 0
    %12320 = vmatmul.mubr.bf16.gmra.mrb[0].mxu0 %v11270
    %v12321 = vpop.f32.mrb[0].mxu0
    %v12322 = vadd.f32 %v11438, %v12321
    %v12323 = vpop.f32.mrb[0].mxu0
    %v12324 = vadd.f32 %v11442, %v12323
    %v12325 = vpop.f32.mrb[0].mxu0
    %v12326 = vpop.f32.mrb[0].mxu0
    %12327 = vdwg.mxu0
    %12328 = vmatprep.subr.bf16.mxu0 %v11878
    %12329 = vmatpush1.bf16.msra.mxu0 %v11877
    %12330 = vmatprep.subr.bf16.mxu0 %v11894
    %12331 = vmatpush1.bf16.msra.mxu0 %v11893
    %12332 = vmatprep.subr.bf16.mxu0 %v11910
    %12333 = vmatpush1.bf16.msra.mxu0 %v11909
    %12334 = vmatprep.subr.bf16.mxu0 %v11926
    %12335 = vmatpush1.bf16.msra.mxu0 %v11925
    %12336 = vmatprep.subr.bf16.mxu0 %v11942
    %12337 = vmatpush1.bf16.msra.mxu0 %v11941
    %12338 = vmatprep.subr.bf16.mxu0 %v11958
    %12339 = vmatpush1.bf16.msra.mxu0 %v11957
    %12340 = vmatprep.subr.bf16.mxu0 %v11974
    %12341 = vmatpush1.bf16.msra.mxu0 %v11973
    %12342 = vmatprep.subr.bf16.mxu0 %v11990
    %12343 = vmatpush1.bf16.msra.mxu0 %v11989
    %12344 = vmatprep.subr.bf16.mxu0 0
    %12345 = vmatpush1.bf16.msra.mxu0 0
    %12346 = vmatprep.subr.bf16.mxu0 0
    %12347 = vmatpush1.bf16.msra.mxu0 0
    %12348 = vmatprep.subr.bf16.mxu0 0
    %12349 = vmatpush1.bf16.msra.mxu0 0
    %12350 = vmatprep.subr.bf16.mxu0 0
    %12351 = vmatpush1.bf16.msra.mxu0 0
    %12352 = vmatprep.subr.bf16.mxu0 0
    %12353 = vmatpush1.bf16.msra.mxu0 0
    %12354 = vmatprep.subr.bf16.mxu0 0
    %12355 = vmatpush1.bf16.msra.mxu0 0
    %12356 = vmatprep.subr.bf16.mxu0 0
    %12357 = vmatpush1.bf16.msra.mxu0 0
    %12358 = vmatprep.subr.bf16.mxu0 0
    %12359 = vmatpush1.bf16.msra.mxu0 0
    %12360 = vmatprep.mubr.bf16.mxu0 0
    %12361 = vmatmul.mubr.bf16.gmra.mrb[0].mxu0 %v11270
    %v12362 = vpop.f32.mrb[0].mxu0
    %v12363 = vadd.f32 %v11446, %v12362
    %v12364 = vpop.f32.mrb[0].mxu0
    %v12365 = vadd.f32 %v11450, %v12364
    %v12366 = vpop.f32.mrb[0].mxu0
    %v12367 = vpop.f32.mrb[0].mxu0
    %12368 = vdwg.mxu0
    %12369 = vmatprep.subr.bf16.mxu0 %v11880
    %12370 = vmatpush1.bf16.msra.mxu0 %v11879
    %12371 = vmatprep.subr.bf16.mxu0 %v11896
    %12372 = vmatpush1.bf16.msra.mxu0 %v11895
    %12373 = vmatprep.subr.bf16.mxu0 %v11912
    %12374 = vmatpush1.bf16.msra.mxu0 %v11911
    %12375 = vmatprep.subr.bf16.mxu0 %v11928
    %12376 = vmatpush1.bf16.msra.mxu0 %v11927
    %12377 = vmatprep.subr.bf16.mxu0 %v11944
    %12378 = vmatpush1.bf16.msra.mxu0 %v11943
    %12379 = vmatprep.subr.bf16.mxu0 %v11960
    %12380 = vmatpush1.bf16.msra.mxu0 %v11959
    %12381 = vmatprep.subr.bf16.mxu0 %v11976
    %12382 = vmatpush1.bf16.msra.mxu0 %v11975
    %12383 = vmatprep.subr.bf16.mxu0 %v11992
    %12384 = vmatpush1.bf16.msra.mxu0 %v11991
    %12385 = vmatprep.subr.bf16.mxu0 0
    %12386 = vmatpush1.bf16.msra.mxu0 0
    %12387 = vmatprep.subr.bf16.mxu0 0
    %12388 = vmatpush1.bf16.msra.mxu0 0
    %12389 = vmatprep.subr.bf16.mxu0 0
    %12390 = vmatpush1.bf16.msra.mxu0 0
    %12391 = vmatprep.subr.bf16.mxu0 0
    %12392 = vmatpush1.bf16.msra.mxu0 0
    %12393 = vmatprep.subr.bf16.mxu0 0
    %12394 = vmatpush1.bf16.msra.mxu0 0
    %12395 = vmatprep.subr.bf16.mxu0 0
    %12396 = vmatpush1.bf16.msra.mxu0 0
    %12397 = vmatprep.subr.bf16.mxu0 0
    %12398 = vmatpush1.bf16.msra.mxu0 0
    %12399 = vmatprep.subr.bf16.mxu0 0
    %12400 = vmatpush1.bf16.msra.mxu0 0
    %12401 = vmatprep.mubr.bf16.mxu0 0
    %12402 = vmatmul.mubr.bf16.gmra.mrb[0].mxu0 %v11270
    %v12403 = vpop.f32.mrb[0].mxu0
    %v12404 = vadd.f32 %v11454, %v12403
    %v12405 = vpop.f32.mrb[0].mxu0
    %v12406 = vadd.f32 %v11458, %v12405
    %v12407 = vpop.f32.mrb[0].mxu0
    %v12408 = vpop.f32.mrb[0].mxu0
    %12409 = vdwg.mxu0
    %12410 = vmatprep.subr.bf16.mxu0 %v11882
    %12411 = vmatpush1.bf16.msra.mxu0 %v11881
    %12412 = vmatprep.subr.bf16.mxu0 %v11898
    %12413 = vmatpush1.bf16.msra.mxu0 %v11897
    %12414 = vmatprep.subr.bf16.mxu0 %v11914
    %12415 = vmatpush1.bf16.msra.mxu0 %v11913
    %12416 = vmatprep.subr.bf16.mxu0 %v11930
    %12417 = vmatpush1.bf16.msra.mxu0 %v11929
    %12418 = vmatprep.subr.bf16.mxu0 %v11946
    %12419 = vmatpush1.bf16.msra.mxu0 %v11945
    %12420 = vmatprep.subr.bf16.mxu0 %v11962
    %12421 = vmatpush1.bf16.msra.mxu0 %v11961
    %12422 = vmatprep.subr.bf16.mxu0 %v11978
    %12423 = vmatpush1.bf16.msra.mxu0 %v11977
    %12424 = vmatprep.subr.bf16.mxu0 %v11994
    %12425 = vmatpush1.bf16.msra.mxu0 %v11993
    %12426 = vmatprep.subr.bf16.mxu0 0
    %12427 = vmatpush1.bf16.msra.mxu0 0
    %12428 = vmatprep.subr.bf16.mxu0 0
    %12429 = vmatpush1.bf16.msra.mxu0 0
    %12430 = vmatprep.subr.bf16.mxu0 0
    %12431 = vmatpush1.bf16.msra.mxu0 0
    %12432 = vmatprep.subr.bf16.mxu0 0
    %12433 = vmatpush1.bf16.msra.mxu0 0
    %12434 = vmatprep.subr.bf16.mxu0 0
    %12435 = vmatpush1.bf16.msra.mxu0 0
    %12436 = vmatprep.subr.bf16.mxu0 0
    %12437 = vmatpush1.bf16.msra.mxu0 0
    %12438 = vmatprep.subr.bf16.mxu0 0
    %12439 = vmatpush1.bf16.msra.mxu0 0
    %12440 = vmatprep.subr.bf16.mxu0 0
    %12441 = vmatpush1.bf16.msra.mxu0 0
    %12442 = vmatprep.mubr.bf16.mxu0 0
    %12443 = vmatmul.mubr.bf16.gmra.mrb[0].mxu0 %v11270
    %v12444 = vpop.f32.mrb[0].mxu0
    %v12445 = vadd.f32 %v11462, %v12444
    %v12446 = vpop.f32.mrb[0].mxu0
    %v12447 = vadd.f32 %v11466, %v12446
    %v12448 = vpop.f32.mrb[0].mxu0
    %v12449 = vpop.f32.mrb[0].mxu0
    %12450 = vdwg.mxu0
    %v12451 = vmax.f32 %v12158, %v12240
    %v12452 = vmax.f32 %v12160, %v12242
    %v12453 = vmax.f32 %v12199, %v12281
    %v12454 = vmax.f32 %v12201, %v12283
    %v12455 = vmax.f32 %v12451, %v12322
    %v12456 = vmax.f32 %v12452, %v12324
    %v12457 = vmax.f32 %v12453, %v12363
    %v12458 = vmax.f32 %v12454, %v12365
    %v12459 = vmax.f32 %v12455, %v12404
    %v12460 = vmax.f32 %v12456, %v12406
    %v12461 = vmax.f32 %v12457, %v12445
    %v12462 = vmax.f32 %v12458, %v12447
    %v12463 = vmax.f32 %v12459, %v12460
    %v12464 = vmax.f32 %v12461, %v12462
    %v12465 = vmax.f32 %v12463, %v12464
    %12466 = vmax.xlane.f32.xlu0 %v12465
    %v12467 = vpop.xlane.xlu0 %12466
    %v12468 = vsub.f32 %v12158, %v12467
    %v12469 = vsub.f32 %v12160, %v12467
    %v12470 = vsub.f32 %v12199, %v12467
    %v12471 = vsub.f32 %v12201, %v12467
    %v12472 = vsub.f32 %v12240, %v12467
    %v12473 = vsub.f32 %v12242, %v12467
    %v12474 = vsub.f32 %v12281, %v12467
    %v12475 = vsub.f32 %v12283, %v12467
    %v12476 = vsub.f32 %v12322, %v12467
    %v12477 = vsub.f32 %v12324, %v12467
    %v12478 = vsub.f32 %v12363, %v12467
    %v12479 = vsub.f32 %v12365, %v12467
    %v12480 = vsub.f32 %v12404, %v12467
    %v12481 = vsub.f32 %v12406, %v12467
    %v12482 = vsub.f32 %v12445, %v12467
    %v12483 = vsub.f32 %v12447, %v12467
    %v12484 = vmul.f32 %v12468, 1.442695
    %v12485 = vpow.pop %v12484
    %v12486 = vmul.f32 %v12469, 1.442695
    %v12487 = vpow.pop %v12486
    %v12488 = vmul.f32 %v12470, 1.442695
    %v12489 = vpow.pop %v12488
    %v12490 = vmul.f32 %v12471, 1.442695
    %v12491 = vpow.pop %v12490
    %v12492 = vmul.f32 %v12472, 1.442695
    %v12493 = vpow.pop %v12492
    %v12494 = vmul.f32 %v12473, 1.442695
    %v12495 = vpow.pop %v12494
    %v12496 = vmul.f32 %v12474, 1.442695
    %v12497 = vpow.pop %v12496
    %v12498 = vmul.f32 %v12475, 1.442695
    %v12499 = vpow.pop %v12498
    %v12500 = vmul.f32 %v12476, 1.442695
    %v12501 = vpow.pop %v12500
    %v12502 = vmul.f32 %v12477, 1.442695
    %v12503 = vpow.pop %v12502
    %v12504 = vmul.f32 %v12478, 1.442695
    %v12505 = vpow.pop %v12504
    %v12506 = vmul.f32 %v12479, 1.442695
    %v12507 = vpow.pop %v12506
    %v12508 = vmul.f32 %v12480, 1.442695
    %v12509 = vpow.pop %v12508
    %v12510 = vmul.f32 %v12481, 1.442695
    %v12511 = vpow.pop %v12510
    %v12512 = vmul.f32 %v12482, 1.442695
    %v12513 = vpow.pop %v12512
    %v12514 = vmul.f32 %v12483, 1.442695
    %v12515 = vpow.pop %v12514
    %v12516 = vadd.f32 %v12485, %v12487
    %v12517 = vadd.f32 %v12516, %v12489
    %v12518 = vadd.f32 %v12517, %v12491
    %v12519 = vadd.f32 %v12518, %v12493
    %v12520 = vadd.f32 %v12519, %v12495
    %v12521 = vadd.f32 %v12520, %v12497
    %v12522 = vadd.f32 %v12521, %v12499
    %v12523 = vadd.f32 %v12522, %v12501
    %v12524 = vadd.f32 %v12523, %v12503
    %v12525 = vadd.f32 %v12524, %v12505
    %v12526 = vadd.f32 %v12525, %v12507
    %v12527 = vadd.f32 %v12526, %v12509
    %v12528 = vadd.f32 %v12527, %v12511
    %v12529 = vadd.f32 %v12528, %v12513
    %v12530 = vadd.f32 %v12529, %v12515
    %12531 = vadd.xlane.f32.xlu0 %v12530
    %v12532 = vpop.xlane.xlu0 %12531
    %v12533 = vlog2.pop %v12532
    %v12534 = vmul.f32 %v12533, 0.6931472
    %v12535 = vsub.f32 %v12468, %v12534
    %v12536 = vsub.f32 %v12469, %v12534
    %v12537 = vsub.f32 %v12470, %v12534
    %v12538 = vsub.f32 %v12471, %v12534
    %v12539 = vsub.f32 %v12472, %v12534
    %v12540 = vsub.f32 %v12473, %v12534
    %v12541 = vsub.f32 %v12474, %v12534
    %v12542 = vsub.f32 %v12475, %v12534
    %v12543 = vsub.f32 %v12476, %v12534
    %v12544 = vsub.f32 %v12477, %v12534
    %v12545 = vsub.f32 %v12478, %v12534
    %v12546 = vsub.f32 %v12479, %v12534
    %v12547 = vsub.f32 %v12480, %v12534
    %v12548 = vsub.f32 %v12481, %v12534
    %v12549 = vsub.f32 %v12482, %v12534
    %v12550 = vsub.f32 %v12483, %v12534
    %12551 = vst [vmem:[%s9] sm:$0xff] %v12535
    %12552 = vst [vmem:[%s9 + $0x8] sm:$0xff] %v12536
    %12553 = vst [vmem:[%s9 + $0x10] sm:$0xff] %v12537
    %12554 = vst [vmem:[%s9 + $0x18] sm:$0xff] %v12538
    %12555 = vst [vmem:[%s9 + $0x20] sm:$0xff] %v12539
    %12556 = vst [vmem:[%s9 + $0x28] sm:$0xff] %v12540
    %12557 = vst [vmem:[%s9 + $0x30] sm:$0xff] %v12541
    %12558 = vst [vmem:[%s9 + $0x38] sm:$0xff] %v12542
    %12559 = vst [vmem:[%s9 + $0x40] sm:$0xff] %v12543
    %12560 = vst [vmem:[%s9 + $0x48] sm:$0xff] %v12544
    %12561 = vst [vmem:[%s9 + $0x50] sm:$0xff] %v12545
    %12562 = vst [vmem:[%s9 + $0x58] sm:$0xff] %v12546
    %12563 = vst [vmem:[%s9 + $0x60] sm:$0xff] %v12547
    %12564 = vst [vmem:[%s9 + $0x68] sm:$0xff] %v12548
    %12565 = vst [vmem:[%s9 + $0x70] sm:$0xff] %v12549
    %12566 = vst [vmem:[%s9 + $0x78] sm:$0xff] %v12550
    // Predicated region
    $region42: #{net_forward.1} parent=1 // pred_check
      _
    $region43: #{net_forward.1} parent=1 // pred_check_branch
      %12568 = sbr.rel (0) target = $region45
    $region44: #{net_forward.1} parent=1 // pred_region
      _
    $region45: #{net_forward.1} parent=1 // pred_fallthru
      _
    // Predicated region
    $region46: #{net_forward.1} parent=1 // pred_check
      _
    $region47: #{net_forward.1} parent=1 // pred_check_branch
      %12570 = sbr.rel (0) target = $region49
    $region48: #{net_forward.1} parent=1 // pred_region
      _
    $region49: #{net_forward.1} parent=1 // pred_fallthru
      _
    %12571 = vsyncpa [#allocation6], 1

</llo_original>
